<compile_context>
chip_gen: v6e
topology: v6e:2x2x1
jax: 0.10.0
libtpu: 0.0.40
codegen_flags: <defaults>
</compile_context>

<pallas_src>
import functools
import math

import jax
import jax.numpy as jnp
from jax import lax
from jax.experimental import pallas as pl
from jax.experimental.pallas import tpu as pltpu

# ----------------------------- small config ---------------------------------
B = 2             # batch
S = 8             # sequence length
HIDDEN = 128      # stand-in for 768
N_HEADS = 2
D_HEAD = HIDDEN // N_HEADS
N_LAYERS = 4      # need >= 3 so hidden_states[-3] exists past embeddings
INTER = 4 * HIDDEN
VOCAB = 50
MAX_POS = 32
LEAKY_SLOPE = 0.01   # nn.LeakyReLU default
OUT_PAD = 128        # lane-dense padded width for the 2 QA logits
NEG_BIG = -1.0e9     # cross-batch attention block mask


# ------------------------------ helpers --------------------------------------
def _layer_norm(x, g, b, eps=1e-12):
    mu = jnp.mean(x, axis=-1, keepdims=True)
    var = jnp.mean(jnp.square(x - mu), axis=-1, keepdims=True)
    return (x - mu) * lax.rsqrt(var + eps) * g + b


def _gelu_tanh(y):
    # TODO(synk): HF bert-base uses exact erf GELU; tanh approximation used here.
    c = 0.7978845608028654  # sqrt(2/pi)
    return 0.5 * y * (1.0 + jnp.tanh(c * (y + 0.044715 * y * y * y)))


# --------------------------- fused model kernel ------------------------------
def qa_model_kernel(x0_ref, bias_ref,
                    wqkv_ref, bqkv_ref, wo_ref, bo_ref, ln1g_ref, ln1b_ref,
                    w_in_ref, b_in_ref, w_out_ref, b_out_ref, ln2g_ref, ln2b_ref,
                    w1a_ref, w1b_ref, b1_ref, w2_ref, b2_ref,
                    o_ref, *, n_layers):
    """Whole forward pass in one grid-less invocation (toy-scale weights fit VMEM)."""
    x = x0_ref[...]          # (M, H) f32 residual stream (embedding output)
    bias = bias_ref[...]     # (M, M) f32 additive mask (padding + cross-batch blocks)

    # Per-head lane-selection masks, built ONCE (hoisted out of the unrolled
    # layer loop; JAX does not CSE broadcasts).
    lane = lax.broadcasted_iota(jnp.int32, (1, HIDDEN), 1)
    head_sel_bf16, head_sel_f32 = [], []
    for h in range(N_HEADS):
        sel = jnp.logical_and(lane >= h * D_HEAD, lane < (h + 1) * D_HEAD)
        head_sel_bf16.append(sel.astype(jnp.bfloat16))
        head_sel_f32.append(sel.astype(jnp.float32))

    h_m3 = None  # hidden_states[-3]

    for l in range(n_layers):                       # static unroll (toy scale)
        xb = x.astype(jnp.bfloat16)

        # ---- fused QKV projection: one (M,H) @ (H,3H) matmul ----------------
        # (1/sqrt(d_head) already folded into the Q columns at init.)
        qkv = (jnp.dot(xb, wqkv_ref[l], preferred_element_type=jnp.float32)
               + bqkv_ref[l])
        # 128-aligned lane slices only.
        q = qkv[:, 0:HIDDEN].astype(jnp.bfloat16)
        k = qkv[:, HIDDEN:2 * HIDDEN].astype(jnp.bfloat16)
        v = qkv[:, 2 * HIDDEN:3 * HIDDEN].astype(jnp.bfloat16)

        # ---- multi-head attention, batches merged into one score matmul -----
        ctx = None
        for h in range(N_HEADS):
            # zero the other head's Q lanes (VPU) -> contraction over all 128
            # lanes equals q_h @ k_h^T; no 64-offset slices, no per-batch loop.
            qh = q * head_sel_bf16[h]
            s = lax.dot_general(qh, k, (((1,), (1,)), ((), ())),
                                preferred_element_type=jnp.float32)   # (M, M)
            s = s + bias
            s = s - jnp.max(s, axis=-1, keepdims=True)
            p = jnp.exp(s)
            p = p * pl.reciprocal(jnp.sum(p, axis=-1, keepdims=True), approx=True)
            # P @ V_full gives head-h's result in its own lane range; select it
            # with a lane-mask multiply (no lane concatenate / relayout).
            r = jnp.dot(p.astype(jnp.bfloat16), v,
                        preferred_element_type=jnp.float32)           # (M, H)
            r = r * head_sel_f32[h]
            ctx = r if ctx is None else ctx + r

        # ---- attention output projection + residual + LayerNorm -------------
        attn_out = (jnp.dot(ctx.astype(jnp.bfloat16), wo_ref[l],
                            preferred_element_type=jnp.float32) + bo_ref[l])
        x1 = _layer_norm(attn_out + x, ln1g_ref[l], ln1b_ref[l])

        # ---- feed-forward (GELU) + residual + LayerNorm ----------------------
        ff = (jnp.dot(x1.astype(jnp.bfloat16), w_in_ref[l],
                      preferred_element_type=jnp.float32) + b_in_ref[l])
        ff = _gelu_tanh(ff)
        ff = (jnp.dot(ff.astype(jnp.bfloat16), w_out_ref[l],
                      preferred_element_type=jnp.float32) + b_out_ref[l])
        x = _layer_norm(ff + x1, ln2g_ref[l], ln2b_ref[l])

        # hidden_states == [emb, h1, ..., hL]; [-3] is layer (L-2)'s output,
        # produced at unrolled step l == L-3.
        if l == n_layers - 3:
            h_m3 = x

    # ---- QA head: fc2(LeakyReLU(fc1(concat(h[-1], h[-3])))) ------------------
    h1 = x.astype(jnp.bfloat16)         # hidden_states[-1]
    h2 = h_m3.astype(jnp.bfloat16)      # hidden_states[-3]
    # concat folded into the first matmul: [h1|h2] @ W1 = h1@W1a + h2@W1b
    y = (jnp.dot(h1, w1a_ref[...], preferred_element_type=jnp.float32)
         + jnp.dot(h2, w1b_ref[...], preferred_element_type=jnp.float32)
         + b1_ref[...])
    y = jnp.where(y > 0, y, LEAKY_SLOPE * y)     # LeakyReLU (dropout = identity)
    z = (jnp.dot(y.astype(jnp.bfloat16), w2_ref[...],
                 preferred_element_type=jnp.float32) + b2_ref[...])
    o_ref[...] = z                                # lane-dense (M, 128)


# ------------------------------ forward pass ---------------------------------
def qa_forward(params, input_ids, attention_mask, token_type_ids):
    Bq, Sq = input_ids.shape
    Mrows = Bq * Sq
    assert N_LAYERS >= 3, "hidden_states[-3] requires >= 3 encoder layers"

    # embeddings + embedding LayerNorm (JAX glue: gathers don't map to BlockSpec)
    emb = (params["word_emb"][input_ids]
           + params["pos_emb"][jnp.arange(Sq)][None, :, :]
           + params["type_emb"][token_type_ids])
    x0 = _layer_norm(emb, params["emb_ln_g"], params["emb_ln_b"])
    x0 = x0.reshape(Mrows, HIDDEN).astype(jnp.float32)

    # Lane-aligned merged-batch additive attention bias (M, M):
    #   same batch & unmasked key -> 0 ; same batch & padded key -> -1e4 ;
    #   different batch           -> -1e9 (blocks cross-batch attention).
    row_batch = jnp.repeat(jnp.arange(Bq), Sq)                       # (M,)
    same_batch = row_batch[:, None] == row_batch[None, :]            # (M, M)
    key_mask = attention_mask.reshape(-1).astype(jnp.float32)        # (M,)
    pad_bias = (1.0 - key_mask)[None, :] * -10000.0
    attn_bias = jnp.where(same_batch, pad_bias, NEG_BIG).astype(jnp.float32)

    kernel = functools.partial(qa_model_kernel, n_layers=N_LAYERS)

    # Single grid-less pallas_call: every operand is a whole-array VMEM block.
    logits_pad = pl.pallas_call(
        kernel,
        out_shape=jax.ShapeDtypeStruct((Mrows, OUT_PAD), jnp.float32),
        compiler_params=pltpu.CompilerParams(vmem_limit_bytes=32 * 1024 * 1024),
    )(x0, attn_bias,
      params["wqkv"], params["bqkv"], params["wo"], params["bo"],
      params["ln1_g"], params["ln1_b"],
      params["w_in"], params["b_in"], params["w_out"], params["b_out"],
      params["ln2_g"], params["ln2_b"],
      params["fc1_wa"], params["fc1_wb"], params["fc1_b"],
      params["fc2_w"], params["fc2_b"])

    logits = logits_pad[:, :2].reshape(Bq, Sq, 2)
    start_logits = logits[..., 0]
    end_logits = logits[..., 1]
    return start_logits, end_logits


# --------------------------- parameter init ----------------------------------
def init_params(key):
    keys = iter(jax.random.split(key, 64))

    def w(shape):
        return 0.02 * jax.random.normal(next(keys), shape, jnp.float32)

    params = {
        "word_emb": w((VOCAB, HIDDEN)),
        "pos_emb": w((MAX_POS, HIDDEN)),
        "type_emb": w((2, HIDDEN)),
        "emb_ln_g": jnp.ones((HIDDEN,), jnp.float32),
        "emb_ln_b": jnp.zeros((HIDDEN,), jnp.float32),
    }

    # stacked per-layer encoder weights; matmul weights stored [in, out] bf16,
    # biases / LayerNorm params in f32.  1/sqrt(d_head) is folded into the Q
    # projection columns (would also scale the Q bias; it is zero-init here).
    scale = 1.0 / math.sqrt(D_HEAD)
    wqkv, wo, win, wout = [], [], [], []
    for _ in range(N_LAYERS):
        wqkv.append(jnp.concatenate([w((HIDDEN, HIDDEN)) * scale,   # Q (pre-scaled)
                                     w((HIDDEN, HIDDEN)),           # K
                                     w((HIDDEN, HIDDEN))], axis=1)) # V
        wo.append(w((HIDDEN, HIDDEN)))
        win.append(w((HIDDEN, INTER)))
        wout.append(w((INTER, HIDDEN)))
    params["wqkv"] = jnp.stack(wqkv).astype(jnp.bfloat16)
    params["wo"] = jnp.stack(wo).astype(jnp.bfloat16)
    params["w_in"] = jnp.stack(win).astype(jnp.bfloat16)
    params["w_out"] = jnp.stack(wout).astype(jnp.bfloat16)
    params["bqkv"] = jnp.zeros((N_LAYERS, 1, 3 * HIDDEN), jnp.float32)
    params["bo"] = jnp.zeros((N_LAYERS, 1, HIDDEN), jnp.float32)
    params["b_in"] = jnp.zeros((N_LAYERS, 1, INTER), jnp.float32)
    params["b_out"] = jnp.zeros((N_LAYERS, 1, HIDDEN), jnp.float32)
    params["ln1_g"] = jnp.ones((N_LAYERS, 1, HIDDEN), jnp.float32)
    params["ln1_b"] = jnp.zeros((N_LAYERS, 1, HIDDEN), jnp.float32)
    params["ln2_g"] = jnp.ones((N_LAYERS, 1, HIDDEN), jnp.float32)
    params["ln2_b"] = jnp.zeros((N_LAYERS, 1, HIDDEN), jnp.float32)

    # QA head: fc1 split into the two halves of the concat at init time
    # (first half multiplies hidden_states[-1], second half hidden_states[-3],
    # matching torch.cat((h[-1], h[-3]), dim=-1)); fc2 padded to 128 lanes.
    fc1_w = w((2 * HIDDEN, 2 * HIDDEN))
    params["fc1_wa"] = fc1_w[:HIDDEN].astype(jnp.bfloat16)
    params["fc1_wb"] = fc1_w[HIDDEN:].astype(jnp.bfloat16)
    params["fc1_b"] = jnp.zeros((1, 2 * HIDDEN), jnp.float32)
    fc2_w = w((2 * HIDDEN, 2))
    fc2_pad = jnp.zeros((2 * HIDDEN, OUT_PAD), jnp.float32).at[:, :2].set(fc2_w)
    params["fc2_w"] = fc2_pad.astype(jnp.bfloat16)
    params["fc2_b"] = jnp.zeros((1, OUT_PAD), jnp.float32)
    return params


# --------------------------------- main ---------------------------------------
if __name__ == "__main__":
    key = jax.random.PRNGKey(0)
    k_params, k_ids = jax.random.split(key)

    params = init_params(k_params)

    input_ids = jax.random.randint(k_ids, (B, S), 0, VOCAB, dtype=jnp.int32)
    attention_mask = jnp.concatenate(
        [jnp.ones((B, S - 2), jnp.int32), jnp.zeros((B, 2), jnp.int32)], axis=-1)
    token_type_ids = jnp.concatenate(
        [jnp.zeros((B, S // 2), jnp.int32), jnp.ones((B, S // 2), jnp.int32)], axis=-1)

    fwd = jax.jit(qa_forward)
    start_logits, end_logits = fwd(params, input_ids, attention_mask, token_type_ids)
    jax.block_until_ready((start_logits, end_logits))

    assert start_logits.shape == (B, S) and end_logits.shape == (B, S)
    assert start_logits.dtype == jnp.float32 and end_logits.dtype == jnp.float32
    assert bool(jnp.all(jnp.isfinite(start_logits))) and bool(jnp.all(jnp.isfinite(end_logits)))
    print("KERNEL_OK")
</pallas_src>

<mosaic_0001>
module attributes {stable_mosaic.version = 11 : i64} {
  func.func @qa_model_kernel(%arg0: memref<16x128xf32, #tpu.memory_space<vmem>>, %arg1: memref<16x16xf32, #tpu.memory_space<vmem>>, %arg2: memref<4x128x384xbf16, #tpu.memory_space<vmem>>, %arg3: memref<4x1x384xf32, #tpu.memory_space<vmem>>, %arg4: memref<4x128x128xbf16, #tpu.memory_space<vmem>>, %arg5: memref<4x1x128xf32, #tpu.memory_space<vmem>>, %arg6: memref<4x1x128xf32, #tpu.memory_space<vmem>>, %arg7: memref<4x1x128xf32, #tpu.memory_space<vmem>>, %arg8: memref<4x128x512xbf16, #tpu.memory_space<vmem>>, %arg9: memref<4x1x512xf32, #tpu.memory_space<vmem>>, %arg10: memref<4x512x128xbf16, #tpu.memory_space<vmem>>, %arg11: memref<4x1x128xf32, #tpu.memory_space<vmem>>, %arg12: memref<4x1x128xf32, #tpu.memory_space<vmem>>, %arg13: memref<4x1x128xf32, #tpu.memory_space<vmem>>, %arg14: memref<128x256xbf16, #tpu.memory_space<vmem>>, %arg15: memref<128x256xbf16, #tpu.memory_space<vmem>>, %arg16: memref<1x256xf32, #tpu.memory_space<vmem>>, %arg17: memref<256x128xbf16, #tpu.memory_space<vmem>>, %arg18: memref<1x128xf32, #tpu.memory_space<vmem>>, %arg19: memref<16x128xf32, #tpu.memory_space<vmem>>) attributes {dimension_semantics = [], scalar_prefetch = 0 : i64, scratch_operands = 0 : i64, tpu.core_type = #tpu.core_type<tc>} {
    %c0 = arith.constant 0 : index
    %c0_0 = arith.constant 0 : index
    %0 = vector.load %arg0[%c0, %c0_0] : memref<16x128xf32, #tpu.memory_space<vmem>>, vector<16x128xf32>
    %c0_1 = arith.constant 0 : index
    %c0_2 = arith.constant 0 : index
    %1 = vector.load %arg1[%c0_1, %c0_2] : memref<16x16xf32, #tpu.memory_space<vmem>>, vector<16x16xf32>
    %2 = tpu.iota {dimensions = array<i32: 1>} : vector<1x128xi32>
    %c0_i32 = arith.constant 0 : i32
    %3 = vector.broadcast %c0_i32 : i32 to vector<1x128xi32>
    %4 = arith.cmpi sge, %2, %3 : vector<1x128xi32>
    %c64_i32 = arith.constant 64 : i32
    %5 = vector.broadcast %c64_i32 : i32 to vector<1x128xi32>
    %6 = arith.cmpi slt, %2, %5 : vector<1x128xi32>
    %7 = arith.andi %4, %6 : vector<1x128xi1>
    %8 = arith.extui %7 : vector<1x128xi1> to vector<1x128xi32>
    %9 = arith.sitofp %8 : vector<1x128xi32> to vector<1x128xf32>
    %10 = arith.truncf %9 : vector<1x128xf32> to vector<1x128xbf16>
    %11 = arith.extui %7 : vector<1x128xi1> to vector<1x128xi32>
    %12 = arith.sitofp %11 : vector<1x128xi32> to vector<1x128xf32>
    %c64_i32_3 = arith.constant 64 : i32
    %13 = vector.broadcast %c64_i32_3 : i32 to vector<1x128xi32>
    %14 = arith.cmpi sge, %2, %13 : vector<1x128xi32>
    %c128_i32 = arith.constant 128 : i32
    %15 = vector.broadcast %c128_i32 : i32 to vector<1x128xi32>
    %16 = arith.cmpi slt, %2, %15 : vector<1x128xi32>
    %17 = arith.andi %14, %16 : vector<1x128xi1>
    %18 = arith.extui %17 : vector<1x128xi1> to vector<1x128xi32>
    %19 = arith.sitofp %18 : vector<1x128xi32> to vector<1x128xf32>
    %20 = arith.truncf %19 : vector<1x128xf32> to vector<1x128xbf16>
    %21 = arith.extui %17 : vector<1x128xi1> to vector<1x128xi32>
    %22 = arith.sitofp %21 : vector<1x128xi32> to vector<1x128xf32>
    %23 = arith.truncf %0 : vector<16x128xf32> to vector<16x128xbf16>
    %c0_4 = arith.constant 0 : index
    %c0_5 = arith.constant 0 : index
    %c0_6 = arith.constant 0 : index
    %24 = vector.load %arg2[%c0_4, %c0_5, %c0_6] : memref<4x128x384xbf16, #tpu.memory_space<vmem>>, vector<1x128x384xbf16>
    %25 = vector.shape_cast %24 : vector<1x128x384xbf16> to vector<128x384xbf16>
    %cst = arith.constant dense<0.000000e+00> : vector<16x384xf32>
    %26 = tpu.matmul %23, %25, %cst {dimension_numbers = #tpu.dot_dimension_numbers<[1], [0], [0], [1], [0, 0, 1, 1], [], []>} : vector<16x128xbf16>, vector<128x384xbf16>, vector<16x384xf32> -> vector<16x384xf32>
    %c0_7 = arith.constant 0 : index
    %c0_8 = arith.constant 0 : index
    %c0_9 = arith.constant 0 : index
    %27 = vector.load %arg3[%c0_7, %c0_8, %c0_9] : memref<4x1x384xf32, #tpu.memory_space<vmem>>, vector<1x1x384xf32>
    %28 = vector.shape_cast %27 : vector<1x1x384xf32> to vector<1x384xf32>
    %29 = vector.broadcast %28 : vector<1x384xf32> to vector<16x384xf32>
    %30 = arith.addf %26, %29 : vector<16x384xf32>
    %31 = vector.extract_strided_slice %30 {offsets = [0, 0], sizes = [16, 128], strides = [1, 1]} : vector<16x384xf32> to vector<16x128xf32>
    %32 = arith.truncf %31 : vector<16x128xf32> to vector<16x128xbf16>
    %33 = vector.extract_strided_slice %30 {offsets = [0, 128], sizes = [16, 128], strides = [1, 1]} : vector<16x384xf32> to vector<16x128xf32>
    %34 = arith.truncf %33 : vector<16x128xf32> to vector<16x128xbf16>
    %35 = vector.extract_strided_slice %30 {offsets = [0, 256], sizes = [16, 128], strides = [1, 1]} : vector<16x384xf32> to vector<16x128xf32>
    %36 = arith.truncf %35 : vector<16x128xf32> to vector<16x128xbf16>
    %37 = vector.broadcast %10 : vector<1x128xbf16> to vector<16x128xbf16>
    %38 = arith.mulf %32, %37 : vector<16x128xbf16>
    %cst_10 = arith.constant dense<0.000000e+00> : vector<16x16xf32>
    %39 = tpu.matmul %38, %34, %cst_10 {dimension_numbers = #tpu.dot_dimension_numbers<[1], [1], [0], [0], [0, 0, 1, 0], [], []>} : vector<16x128xbf16>, vector<16x128xbf16>, vector<16x16xf32> -> vector<16x16xf32>
    %40 = arith.addf %39, %1 : vector<16x16xf32>
    %cst_11 = arith.constant dense<0xFF800000> : vector<16xf32>
    %41 = vector.multi_reduction <maximumf>, %40, %cst_11 [1] : vector<16x16xf32> to vector<16xf32>
    %42 = vector.shape_cast %41 : vector<16xf32> to vector<16x1xf32>
    %43 = vector.broadcast %42 : vector<16x1xf32> to vector<16x16xf32>
    %44 = arith.subf %40, %43 : vector<16x16xf32>
    %45 = math.exp %44 : vector<16x16xf32>
    %cst_12 = arith.constant dense<0.000000e+00> : vector<16xf32>
    %46 = vector.multi_reduction <add>, %45, %cst_12 [1] : vector<16x16xf32> to vector<16xf32>
    %47 = vector.shape_cast %46 : vector<16xf32> to vector<16x1xf32>
    %48 = tpu.reciprocal %47 {approx = true} : vector<16x1xf32> -> vector<16x1xf32>
    %49 = vector.broadcast %48 : vector<16x1xf32> to vector<16x16xf32>
    %50 = arith.mulf %45, %49 : vector<16x16xf32>
    %51 = arith.truncf %50 : vector<16x16xf32> to vector<16x16xbf16>
    %cst_13 = arith.constant dense<0.000000e+00> : vector<16x128xf32>
    %52 = tpu.matmul %51, %36, %cst_13 {dimension_numbers = #tpu.dot_dimension_numbers<[1], [0], [0], [1], [0, 0, 1, 1], [], []>} : vector<16x16xbf16>, vector<16x128xbf16>, vector<16x128xf32> -> vector<16x128xf32>
    %53 = vector.broadcast %12 : vector<1x128xf32> to vector<16x128xf32>
    %54 = arith.mulf %52, %53 : vector<16x128xf32>
    %55 = vector.broadcast %20 : vector<1x128xbf16> to vector<16x128xbf16>
    %56 = arith.mulf %32, %55 : vector<16x128xbf16>
    %cst_14 = arith.constant dense<0.000000e+00> : vector<16x16xf32>
    %57 = tpu.matmul %56, %34, %cst_14 {dimension_numbers = #tpu.dot_dimension_numbers<[1], [1], [0], [0], [0, 0, 1, 0], [], []>} : vector<16x128xbf16>, vector<16x128xbf16>, vector<16x16xf32> -> vector<16x16xf32>
    %58 = arith.addf %57, %1 : vector<16x16xf32>
    %cst_15 = arith.constant dense<0xFF800000> : vector<16xf32>
    %59 = vector.multi_reduction <maximumf>, %58, %cst_15 [1] : vector<16x16xf32> to vector<16xf32>
    %60 = vector.shape_cast %59 : vector<16xf32> to vector<16x1xf32>
    %61 = vector.broadcast %60 : vector<16x1xf32> to vector<16x16xf32>
    %62 = arith.subf %58, %61 : vector<16x16xf32>
    %63 = math.exp %62 : vector<16x16xf32>
    %cst_16 = arith.constant dense<0.000000e+00> : vector<16xf32>
    %64 = vector.multi_reduction <add>, %63, %cst_16 [1] : vector<16x16xf32> to vector<16xf32>
    %65 = vector.shape_cast %64 : vector<16xf32> to vector<16x1xf32>
    %66 = tpu.reciprocal %65 {approx = true} : vector<16x1xf32> -> vector<16x1xf32>
    %67 = vector.broadcast %66 : vector<16x1xf32> to vector<16x16xf32>
    %68 = arith.mulf %63, %67 : vector<16x16xf32>
    %69 = arith.truncf %68 : vector<16x16xf32> to vector<16x16xbf16>
    %cst_17 = arith.constant dense<0.000000e+00> : vector<16x128xf32>
    %70 = tpu.matmul %69, %36, %cst_17 {dimension_numbers = #tpu.dot_dimension_numbers<[1], [0], [0], [1], [0, 0, 1, 1], [], []>} : vector<16x16xbf16>, vector<16x128xbf16>, vector<16x128xf32> -> vector<16x128xf32>
    %71 = vector.broadcast %22 : vector<1x128xf32> to vector<16x128xf32>
    %72 = arith.mulf %70, %71 : vector<16x128xf32>
    %73 = arith.addf %54, %72 : vector<16x128xf32>
    %74 = arith.truncf %73 : vector<16x128xf32> to vector<16x128xbf16>
    %c0_18 = arith.constant 0 : index
    %c0_19 = arith.constant 0 : index
    %c0_20 = arith.constant 0 : index
    %75 = vector.load %arg4[%c0_18, %c0_19, %c0_20] : memref<4x128x128xbf16, #tpu.memory_space<vmem>>, vector<1x128x128xbf16>
    %76 = vector.shape_cast %75 : vector<1x128x128xbf16> to vector<128x128xbf16>
    %cst_21 = arith.constant dense<0.000000e+00> : vector<16x128xf32>
    %77 = tpu.matmul %74, %76, %cst_21 {dimension_numbers = #tpu.dot_dimension_numbers<[1], [0], [0], [1], [0, 0, 1, 1], [], []>} : vector<16x128xbf16>, vector<128x128xbf16>, vector<16x128xf32> -> vector<16x128xf32>
    %c0_22 = arith.constant 0 : index
    %c0_23 = arith.constant 0 : index
    %c0_24 = arith.constant 0 : index
    %78 = vector.load %arg5[%c0_22, %c0_23, %c0_24] : memref<4x1x128xf32, #tpu.memory_space<vmem>>, vector<1x1x128xf32>
    %79 = vector.shape_cast %78 : vector<1x1x128xf32> to vector<1x128xf32>
    %80 = vector.broadcast %79 : vector<1x128xf32> to vector<16x128xf32>
    %81 = arith.addf %77, %80 : vector<16x128xf32>
    %82 = arith.addf %81, %0 : vector<16x128xf32>
    %c0_25 = arith.constant 0 : index
    %c0_26 = arith.constant 0 : index
    %c0_27 = arith.constant 0 : index
    %83 = vector.load %arg6[%c0_25, %c0_26, %c0_27] : memref<4x1x128xf32, #tpu.memory_space<vmem>>, vector<1x1x128xf32>
    %84 = vector.shape_cast %83 : vector<1x1x128xf32> to vector<1x128xf32>
    %c0_28 = arith.constant 0 : index
    %c0_29 = arith.constant 0 : index
    %c0_30 = arith.constant 0 : index
    %85 = vector.load %arg7[%c0_28, %c0_29, %c0_30] : memref<4x1x128xf32, #tpu.memory_space<vmem>>, vector<1x1x128xf32>
    %86 = vector.shape_cast %85 : vector<1x1x128xf32> to vector<1x128xf32>
    %cst_31 = arith.constant dense<0.000000e+00> : vector<16xf32>
    %87 = vector.multi_reduction <add>, %82, %cst_31 [1] : vector<16x128xf32> to vector<16xf32>
    %88 = vector.shape_cast %87 : vector<16xf32> to vector<16x1xf32>
    %cst_32 = arith.constant 1.280000e+02 : f32
    %89 = vector.broadcast %cst_32 : f32 to vector<16x1xf32>
    %90 = arith.divf %88, %89 : vector<16x1xf32>
    %91 = vector.broadcast %90 : vector<16x1xf32> to vector<16x128xf32>
    %92 = arith.subf %82, %91 : vector<16x128xf32>
    %93 = arith.mulf %92, %92 : vector<16x128xf32>
    %cst_33 = arith.constant dense<0.000000e+00> : vector<16xf32>
    %94 = vector.multi_reduction <add>, %93, %cst_33 [1] : vector<16x128xf32> to vector<16xf32>
    %95 = vector.shape_cast %94 : vector<16xf32> to vector<16x1xf32>
    %cst_34 = arith.constant 1.280000e+02 : f32
    %96 = vector.broadcast %cst_34 : f32 to vector<16x1xf32>
    %97 = arith.divf %95, %96 : vector<16x1xf32>
    %98 = vector.broadcast %90 : vector<16x1xf32> to vector<16x128xf32>
    %99 = arith.subf %82, %98 : vector<16x128xf32>
    %cst_35 = arith.constant 9.99999996E-13 : f32
    %100 = vector.broadcast %cst_35 : f32 to vector<16x1xf32>
    %101 = arith.addf %97, %100 : vector<16x1xf32>
    %102 = math.rsqrt %101 : vector<16x1xf32>
    %103 = vector.broadcast %102 : vector<16x1xf32> to vector<16x128xf32>
    %104 = arith.mulf %99, %103 : vector<16x128xf32>
    %105 = vector.broadcast %84 : vector<1x128xf32> to vector<16x128xf32>
    %106 = arith.mulf %104, %105 : vector<16x128xf32>
    %107 = vector.broadcast %86 : vector<1x128xf32> to vector<16x128xf32>
    %108 = arith.addf %106, %107 : vector<16x128xf32>
    %109 = arith.truncf %108 : vector<16x128xf32> to vector<16x128xbf16>
    %c0_36 = arith.constant 0 : index
    %c0_37 = arith.constant 0 : index
    %c0_38 = arith.constant 0 : index
    %110 = vector.load %arg8[%c0_36, %c0_37, %c0_38] : memref<4x128x512xbf16, #tpu.memory_space<vmem>>, vector<1x128x512xbf16>
    %111 = vector.shape_cast %110 : vector<1x128x512xbf16> to vector<128x512xbf16>
    %cst_39 = arith.constant dense<0.000000e+00> : vector<16x512xf32>
    %112 = tpu.matmul %109, %111, %cst_39 {dimension_numbers = #tpu.dot_dimension_numbers<[1], [0], [0], [1], [0, 0, 1, 1], [], []>} : vector<16x128xbf16>, vector<128x512xbf16>, vector<16x512xf32> -> vector<16x512xf32>
    %c0_40 = arith.constant 0 : index
    %c0_41 = arith.constant 0 : index
    %c0_42 = arith.constant 0 : index
    %113 = vector.load %arg9[%c0_40, %c0_41, %c0_42] : memref<4x1x512xf32, #tpu.memory_space<vmem>>, vector<1x1x512xf32>
    %114 = vector.shape_cast %113 : vector<1x1x512xf32> to vector<1x512xf32>
    %115 = vector.broadcast %114 : vector<1x512xf32> to vector<16x512xf32>
    %116 = arith.addf %112, %115 : vector<16x512xf32>
    %cst_43 = arith.constant 5.000000e-01 : f32
    %117 = vector.broadcast %cst_43 : f32 to vector<16x512xf32>
    %118 = arith.mulf %117, %116 : vector<16x512xf32>
    %cst_44 = arith.constant 4.471500e-02 : f32
    %119 = vector.broadcast %cst_44 : f32 to vector<16x512xf32>
    %120 = arith.mulf %119, %116 : vector<16x512xf32>
    %121 = arith.mulf %120, %116 : vector<16x512xf32>
    %122 = arith.mulf %121, %116 : vector<16x512xf32>
    %123 = arith.addf %116, %122 : vector<16x512xf32>
    %cst_45 = arith.constant 0.797884583 : f32
    %124 = vector.broadcast %cst_45 : f32 to vector<16x512xf32>
    %125 = arith.mulf %124, %123 : vector<16x512xf32>
    %126 = math.tanh %125 : vector<16x512xf32>
    %cst_46 = arith.constant 1.000000e+00 : f32
    %127 = vector.broadcast %cst_46 : f32 to vector<16x512xf32>
    %128 = arith.addf %127, %126 : vector<16x512xf32>
    %129 = arith.mulf %118, %128 : vector<16x512xf32>
    %130 = arith.truncf %129 : vector<16x512xf32> to vector<16x512xbf16>
    %c0_47 = arith.constant 0 : index
    %c0_48 = arith.constant 0 : index
    %c0_49 = arith.constant 0 : index
    %131 = vector.load %arg10[%c0_47, %c0_48, %c0_49] : memref<4x512x128xbf16, #tpu.memory_space<vmem>>, vector<1x512x128xbf16>
    %132 = vector.shape_cast %131 : vector<1x512x128xbf16> to vector<512x128xbf16>
    %cst_50 = arith.constant dense<0.000000e+00> : vector<16x128xf32>
    %133 = tpu.matmul %130, %132, %cst_50 {dimension_numbers = #tpu.dot_dimension_numbers<[1], [0], [0], [1], [0, 0, 1, 1], [], []>} : vector<16x512xbf16>, vector<512x128xbf16>, vector<16x128xf32> -> vector<16x128xf32>
    %c0_51 = arith.constant 0 : index
    %c0_52 = arith.constant 0 : index
    %c0_53 = arith.constant 0 : index
    %134 = vector.load %arg11[%c0_51, %c0_52, %c0_53] : memref<4x1x128xf32, #tpu.memory_space<vmem>>, vector<1x1x128xf32>
    %135 = vector.shape_cast %134 : vector<1x1x128xf32> to vector<1x128xf32>
    %136 = vector.broadcast %135 : vector<1x128xf32> to vector<16x128xf32>
    %137 = arith.addf %133, %136 : vector<16x128xf32>
    %138 = arith.addf %137, %108 : vector<16x128xf32>
    %c0_54 = arith.constant 0 : index
    %c0_55 = arith.constant 0 : index
    %c0_56 = arith.constant 0 : index
    %139 = vector.load %arg12[%c0_54, %c0_55, %c0_56] : memref<4x1x128xf32, #tpu.memory_space<vmem>>, vector<1x1x128xf32>
    %140 = vector.shape_cast %139 : vector<1x1x128xf32> to vector<1x128xf32>
    %c0_57 = arith.constant 0 : index
    %c0_58 = arith.constant 0 : index
    %c0_59 = arith.constant 0 : index
    %141 = vector.load %arg13[%c0_57, %c0_58, %c0_59] : memref<4x1x128xf32, #tpu.memory_space<vmem>>, vector<1x1x128xf32>
    %142 = vector.shape_cast %141 : vector<1x1x128xf32> to vector<1x128xf32>
    %cst_60 = arith.constant dense<0.000000e+00> : vector<16xf32>
    %143 = vector.multi_reduction <add>, %138, %cst_60 [1] : vector<16x128xf32> to vector<16xf32>
    %144 = vector.shape_cast %143 : vector<16xf32> to vector<16x1xf32>
    %cst_61 = arith.constant 1.280000e+02 : f32
    %145 = vector.broadcast %cst_61 : f32 to vector<16x1xf32>
    %146 = arith.divf %144, %145 : vector<16x1xf32>
    %147 = vector.broadcast %146 : vector<16x1xf32> to vector<16x128xf32>
    %148 = arith.subf %138, %147 : vector<16x128xf32>
    %149 = arith.mulf %148, %148 : vector<16x128xf32>
    %cst_62 = arith.constant dense<0.000000e+00> : vector<16xf32>
    %150 = vector.multi_reduction <add>, %149, %cst_62 [1] : vector<16x128xf32> to vector<16xf32>
    %151 = vector.shape_cast %150 : vector<16xf32> to vector<16x1xf32>
    %cst_63 = arith.constant 1.280000e+02 : f32
    %152 = vector.broadcast %cst_63 : f32 to vector<16x1xf32>
    %153 = arith.divf %151, %152 : vector<16x1xf32>
    %154 = vector.broadcast %146 : vector<16x1xf32> to vector<16x128xf32>
    %155 = arith.subf %138, %154 : vector<16x128xf32>
    %cst_64 = arith.constant 9.99999996E-13 : f32
    %156 = vector.broadcast %cst_64 : f32 to vector<16x1xf32>
    %157 = arith.addf %153, %156 : vector<16x1xf32>
    %158 = math.rsqrt %157 : vector<16x1xf32>
    %159 = vector.broadcast %158 : vector<16x1xf32> to vector<16x128xf32>
    %160 = arith.mulf %155, %159 : vector<16x128xf32>
    %161 = vector.broadcast %140 : vector<1x128xf32> to vector<16x128xf32>
    %162 = arith.mulf %160, %161 : vector<16x128xf32>
    %163 = vector.broadcast %142 : vector<1x128xf32> to vector<16x128xf32>
    %164 = arith.addf %162, %163 : vector<16x128xf32>
    %165 = arith.truncf %164 : vector<16x128xf32> to vector<16x128xbf16>
    %c1 = arith.constant 1 : index
    %c0_65 = arith.constant 0 : index
    %c0_66 = arith.constant 0 : index
    %166 = vector.load %arg2[%c1, %c0_65, %c0_66] : memref<4x128x384xbf16, #tpu.memory_space<vmem>>, vector<1x128x384xbf16>
    %167 = vector.shape_cast %166 : vector<1x128x384xbf16> to vector<128x384xbf16>
    %cst_67 = arith.constant dense<0.000000e+00> : vector<16x384xf32>
    %168 = tpu.matmul %165, %167, %cst_67 {dimension_numbers = #tpu.dot_dimension_numbers<[1], [0], [0], [1], [0, 0, 1, 1], [], []>} : vector<16x128xbf16>, vector<128x384xbf16>, vector<16x384xf32> -> vector<16x384xf32>
    %c1_68 = arith.constant 1 : index
    %c0_69 = arith.constant 0 : index
    %c0_70 = arith.constant 0 : index
    %169 = vector.load %arg3[%c1_68, %c0_69, %c0_70] : memref<4x1x384xf32, #tpu.memory_space<vmem>>, vector<1x1x384xf32>
    %170 = vector.shape_cast %169 : vector<1x1x384xf32> to vector<1x384xf32>
    %171 = vector.broadcast %170 : vector<1x384xf32> to vector<16x384xf32>
    %172 = arith.addf %168, %171 : vector<16x384xf32>
    %173 = vector.extract_strided_slice %172 {offsets = [0, 0], sizes = [16, 128], strides = [1, 1]} : vector<16x384xf32> to vector<16x128xf32>
    %174 = arith.truncf %173 : vector<16x128xf32> to vector<16x128xbf16>
    %175 = vector.extract_strided_slice %172 {offsets = [0, 128], sizes = [16, 128], strides = [1, 1]} : vector<16x384xf32> to vector<16x128xf32>
    %176 = arith.truncf %175 : vector<16x128xf32> to vector<16x128xbf16>
    %177 = vector.extract_strided_slice %172 {offsets = [0, 256], sizes = [16, 128], strides = [1, 1]} : vector<16x384xf32> to vector<16x128xf32>
    %178 = arith.truncf %177 : vector<16x128xf32> to vector<16x128xbf16>
    %179 = vector.broadcast %10 : vector<1x128xbf16> to vector<16x128xbf16>
    %180 = arith.mulf %174, %179 : vector<16x128xbf16>
    %cst_71 = arith.constant dense<0.000000e+00> : vector<16x16xf32>
    %181 = tpu.matmul %180, %176, %cst_71 {dimension_numbers = #tpu.dot_dimension_numbers<[1], [1], [0], [0], [0, 0, 1, 0], [], []>} : vector<16x128xbf16>, vector<16x128xbf16>, vector<16x16xf32> -> vector<16x16xf32>
    %182 = arith.addf %181, %1 : vector<16x16xf32>
    %cst_72 = arith.constant dense<0xFF800000> : vector<16xf32>
    %183 = vector.multi_reduction <maximumf>, %182, %cst_72 [1] : vector<16x16xf32> to vector<16xf32>
    %184 = vector.shape_cast %183 : vector<16xf32> to vector<16x1xf32>
    %185 = vector.broadcast %184 : vector<16x1xf32> to vector<16x16xf32>
    %186 = arith.subf %182, %185 : vector<16x16xf32>
    %187 = math.exp %186 : vector<16x16xf32>
    %cst_73 = arith.constant dense<0.000000e+00> : vector<16xf32>
    %188 = vector.multi_reduction <add>, %187, %cst_73 [1] : vector<16x16xf32> to vector<16xf32>
    %189 = vector.shape_cast %188 : vector<16xf32> to vector<16x1xf32>
    %190 = tpu.reciprocal %189 {approx = true} : vector<16x1xf32> -> vector<16x1xf32>
    %191 = vector.broadcast %190 : vector<16x1xf32> to vector<16x16xf32>
    %192 = arith.mulf %187, %191 : vector<16x16xf32>
    %193 = arith.truncf %192 : vector<16x16xf32> to vector<16x16xbf16>
    %cst_74 = arith.constant dense<0.000000e+00> : vector<16x128xf32>
    %194 = tpu.matmul %193, %178, %cst_74 {dimension_numbers = #tpu.dot_dimension_numbers<[1], [0], [0], [1], [0, 0, 1, 1], [], []>} : vector<16x16xbf16>, vector<16x128xbf16>, vector<16x128xf32> -> vector<16x128xf32>
    %195 = vector.broadcast %12 : vector<1x128xf32> to vector<16x128xf32>
    %196 = arith.mulf %194, %195 : vector<16x128xf32>
    %197 = vector.broadcast %20 : vector<1x128xbf16> to vector<16x128xbf16>
    %198 = arith.mulf %174, %197 : vector<16x128xbf16>
    %cst_75 = arith.constant dense<0.000000e+00> : vector<16x16xf32>
    %199 = tpu.matmul %198, %176, %cst_75 {dimension_numbers = #tpu.dot_dimension_numbers<[1], [1], [0], [0], [0, 0, 1, 0], [], []>} : vector<16x128xbf16>, vector<16x128xbf16>, vector<16x16xf32> -> vector<16x16xf32>
    %200 = arith.addf %199, %1 : vector<16x16xf32>
    %cst_76 = arith.constant dense<0xFF800000> : vector<16xf32>
    %201 = vector.multi_reduction <maximumf>, %200, %cst_76 [1] : vector<16x16xf32> to vector<16xf32>
    %202 = vector.shape_cast %201 : vector<16xf32> to vector<16x1xf32>
    %203 = vector.broadcast %202 : vector<16x1xf32> to vector<16x16xf32>
    %204 = arith.subf %200, %203 : vector<16x16xf32>
    %205 = math.exp %204 : vector<16x16xf32>
    %cst_77 = arith.constant dense<0.000000e+00> : vector<16xf32>
    %206 = vector.multi_reduction <add>, %205, %cst_77 [1] : vector<16x16xf32> to vector<16xf32>
    %207 = vector.shape_cast %206 : vector<16xf32> to vector<16x1xf32>
    %208 = tpu.reciprocal %207 {approx = true} : vector<16x1xf32> -> vector<16x1xf32>
    %209 = vector.broadcast %208 : vector<16x1xf32> to vector<16x16xf32>
    %210 = arith.mulf %205, %209 : vector<16x16xf32>
    %211 = arith.truncf %210 : vector<16x16xf32> to vector<16x16xbf16>
    %cst_78 = arith.constant dense<0.000000e+00> : vector<16x128xf32>
    %212 = tpu.matmul %211, %178, %cst_78 {dimension_numbers = #tpu.dot_dimension_numbers<[1], [0], [0], [1], [0, 0, 1, 1], [], []>} : vector<16x16xbf16>, vector<16x128xbf16>, vector<16x128xf32> -> vector<16x128xf32>
    %213 = vector.broadcast %22 : vector<1x128xf32> to vector<16x128xf32>
    %214 = arith.mulf %212, %213 : vector<16x128xf32>
    %215 = arith.addf %196, %214 : vector<16x128xf32>
    %216 = arith.truncf %215 : vector<16x128xf32> to vector<16x128xbf16>
    %c1_79 = arith.constant 1 : index
    %c0_80 = arith.constant 0 : index
    %c0_81 = arith.constant 0 : index
    %217 = vector.load %arg4[%c1_79, %c0_80, %c0_81] : memref<4x128x128xbf16, #tpu.memory_space<vmem>>, vector<1x128x128xbf16>
    %218 = vector.shape_cast %217 : vector<1x128x128xbf16> to vector<128x128xbf16>
    %cst_82 = arith.constant dense<0.000000e+00> : vector<16x128xf32>
    %219 = tpu.matmul %216, %218, %cst_82 {dimension_numbers = #tpu.dot_dimension_numbers<[1], [0], [0], [1], [0, 0, 1, 1], [], []>} : vector<16x128xbf16>, vector<128x128xbf16>, vector<16x128xf32> -> vector<16x128xf32>
    %c1_83 = arith.constant 1 : index
    %c0_84 = arith.constant 0 : index
    %c0_85 = arith.constant 0 : index
    %220 = vector.load %arg5[%c1_83, %c0_84, %c0_85] : memref<4x1x128xf32, #tpu.memory_space<vmem>>, vector<1x1x128xf32>
    %221 = vector.shape_cast %220 : vector<1x1x128xf32> to vector<1x128xf32>
    %222 = vector.broadcast %221 : vector<1x128xf32> to vector<16x128xf32>
    %223 = arith.addf %219, %222 : vector<16x128xf32>
    %224 = arith.addf %223, %164 : vector<16x128xf32>
    %c1_86 = arith.constant 1 : index
    %c0_87 = arith.constant 0 : index
    %c0_88 = arith.constant 0 : index
    %225 = vector.load %arg6[%c1_86, %c0_87, %c0_88] : memref<4x1x128xf32, #tpu.memory_space<vmem>>, vector<1x1x128xf32>
    %226 = vector.shape_cast %225 : vector<1x1x128xf32> to vector<1x128xf32>
    %c1_89 = arith.constant 1 : index
    %c0_90 = arith.constant 0 : index
    %c0_91 = arith.constant 0 : index
    %227 = vector.load %arg7[%c1_89, %c0_90, %c0_91] : memref<4x1x128xf32, #tpu.memory_space<vmem>>, vector<1x1x128xf32>
    %228 = vector.shape_cast %227 : vector<1x1x128xf32> to vector<1x128xf32>
    %cst_92 = arith.constant dense<0.000000e+00> : vector<16xf32>
    %229 = vector.multi_reduction <add>, %224, %cst_92 [1] : vector<16x128xf32> to vector<16xf32>
    %230 = vector.shape_cast %229 : vector<16xf32> to vector<16x1xf32>
    %cst_93 = arith.constant 1.280000e+02 : f32
    %231 = vector.broadcast %cst_93 : f32 to vector<16x1xf32>
    %232 = arith.divf %230, %231 : vector<16x1xf32>
    %233 = vector.broadcast %232 : vector<16x1xf32> to vector<16x128xf32>
    %234 = arith.subf %224, %233 : vector<16x128xf32>
    %235 = arith.mulf %234, %234 : vector<16x128xf32>
    %cst_94 = arith.constant dense<0.000000e+00> : vector<16xf32>
    %236 = vector.multi_reduction <add>, %235, %cst_94 [1] : vector<16x128xf32> to vector<16xf32>
    %237 = vector.shape_cast %236 : vector<16xf32> to vector<16x1xf32>
    %cst_95 = arith.constant 1.280000e+02 : f32
    %238 = vector.broadcast %cst_95 : f32 to vector<16x1xf32>
    %239 = arith.divf %237, %238 : vector<16x1xf32>
    %240 = vector.broadcast %232 : vector<16x1xf32> to vector<16x128xf32>
    %241 = arith.subf %224, %240 : vector<16x128xf32>
    %cst_96 = arith.constant 9.99999996E-13 : f32
    %242 = vector.broadcast %cst_96 : f32 to vector<16x1xf32>
    %243 = arith.addf %239, %242 : vector<16x1xf32>
    %244 = math.rsqrt %243 : vector<16x1xf32>
    %245 = vector.broadcast %244 : vector<16x1xf32> to vector<16x128xf32>
    %246 = arith.mulf %241, %245 : vector<16x128xf32>
    %247 = vector.broadcast %226 : vector<1x128xf32> to vector<16x128xf32>
    %248 = arith.mulf %246, %247 : vector<16x128xf32>
    %249 = vector.broadcast %228 : vector<1x128xf32> to vector<16x128xf32>
    %250 = arith.addf %248, %249 : vector<16x128xf32>
    %251 = arith.truncf %250 : vector<16x128xf32> to vector<16x128xbf16>
    %c1_97 = arith.constant 1 : index
    %c0_98 = arith.constant 0 : index
    %c0_99 = arith.constant 0 : index
    %252 = vector.load %arg8[%c1_97, %c0_98, %c0_99] : memref<4x128x512xbf16, #tpu.memory_space<vmem>>, vector<1x128x512xbf16>
    %253 = vector.shape_cast %252 : vector<1x128x512xbf16> to vector<128x512xbf16>
    %cst_100 = arith.constant dense<0.000000e+00> : vector<16x512xf32>
    %254 = tpu.matmul %251, %253, %cst_100 {dimension_numbers = #tpu.dot_dimension_numbers<[1], [0], [0], [1], [0, 0, 1, 1], [], []>} : vector<16x128xbf16>, vector<128x512xbf16>, vector<16x512xf32> -> vector<16x512xf32>
    %c1_101 = arith.constant 1 : index
    %c0_102 = arith.constant 0 : index
    %c0_103 = arith.constant 0 : index
    %255 = vector.load %arg9[%c1_101, %c0_102, %c0_103] : memref<4x1x512xf32, #tpu.memory_space<vmem>>, vector<1x1x512xf32>
    %256 = vector.shape_cast %255 : vector<1x1x512xf32> to vector<1x512xf32>
    %257 = vector.broadcast %256 : vector<1x512xf32> to vector<16x512xf32>
    %258 = arith.addf %254, %257 : vector<16x512xf32>
    %cst_104 = arith.constant 5.000000e-01 : f32
    %259 = vector.broadcast %cst_104 : f32 to vector<16x512xf32>
    %260 = arith.mulf %259, %258 : vector<16x512xf32>
    %cst_105 = arith.constant 4.471500e-02 : f32
    %261 = vector.broadcast %cst_105 : f32 to vector<16x512xf32>
    %262 = arith.mulf %261, %258 : vector<16x512xf32>
    %263 = arith.mulf %262, %258 : vector<16x512xf32>
    %264 = arith.mulf %263, %258 : vector<16x512xf32>
    %265 = arith.addf %258, %264 : vector<16x512xf32>
    %cst_106 = arith.constant 0.797884583 : f32
    %266 = vector.broadcast %cst_106 : f32 to vector<16x512xf32>
    %267 = arith.mulf %266, %265 : vector<16x512xf32>
    %268 = math.tanh %267 : vector<16x512xf32>
    %cst_107 = arith.constant 1.000000e+00 : f32
    %269 = vector.broadcast %cst_107 : f32 to vector<16x512xf32>
    %270 = arith.addf %269, %268 : vector<16x512xf32>
    %271 = arith.mulf %260, %270 : vector<16x512xf32>
    %272 = arith.truncf %271 : vector<16x512xf32> to vector<16x512xbf16>
    %c1_108 = arith.constant 1 : index
    %c0_109 = arith.constant 0 : index
    %c0_110 = arith.constant 0 : index
    %273 = vector.load %arg10[%c1_108, %c0_109, %c0_110] : memref<4x512x128xbf16, #tpu.memory_space<vmem>>, vector<1x512x128xbf16>
    %274 = vector.shape_cast %273 : vector<1x512x128xbf16> to vector<512x128xbf16>
    %cst_111 = arith.constant dense<0.000000e+00> : vector<16x128xf32>
    %275 = tpu.matmul %272, %274, %cst_111 {dimension_numbers = #tpu.dot_dimension_numbers<[1], [0], [0], [1], [0, 0, 1, 1], [], []>} : vector<16x512xbf16>, vector<512x128xbf16>, vector<16x128xf32> -> vector<16x128xf32>
    %c1_112 = arith.constant 1 : index
    %c0_113 = arith.constant 0 : index
    %c0_114 = arith.constant 0 : index
    %276 = vector.load %arg11[%c1_112, %c0_113, %c0_114] : memref<4x1x128xf32, #tpu.memory_space<vmem>>, vector<1x1x128xf32>
    %277 = vector.shape_cast %276 : vector<1x1x128xf32> to vector<1x128xf32>
    %278 = vector.broadcast %277 : vector<1x128xf32> to vector<16x128xf32>
    %279 = arith.addf %275, %278 : vector<16x128xf32>
    %280 = arith.addf %279, %250 : vector<16x128xf32>
    %c1_115 = arith.constant 1 : index
    %c0_116 = arith.constant 0 : index
    %c0_117 = arith.constant 0 : index
    %281 = vector.load %arg12[%c1_115, %c0_116, %c0_117] : memref<4x1x128xf32, #tpu.memory_space<vmem>>, vector<1x1x128xf32>
    %282 = vector.shape_cast %281 : vector<1x1x128xf32> to vector<1x128xf32>
    %c1_118 = arith.constant 1 : index
    %c0_119 = arith.constant 0 : index
    %c0_120 = arith.constant 0 : index
    %283 = vector.load %arg13[%c1_118, %c0_119, %c0_120] : memref<4x1x128xf32, #tpu.memory_space<vmem>>, vector<1x1x128xf32>
    %284 = vector.shape_cast %283 : vector<1x1x128xf32> to vector<1x128xf32>
    %cst_121 = arith.constant dense<0.000000e+00> : vector<16xf32>
    %285 = vector.multi_reduction <add>, %280, %cst_121 [1] : vector<16x128xf32> to vector<16xf32>
    %286 = vector.shape_cast %285 : vector<16xf32> to vector<16x1xf32>
    %cst_122 = arith.constant 1.280000e+02 : f32
    %287 = vector.broadcast %cst_122 : f32 to vector<16x1xf32>
    %288 = arith.divf %286, %287 : vector<16x1xf32>
    %289 = vector.broadcast %288 : vector<16x1xf32> to vector<16x128xf32>
    %290 = arith.subf %280, %289 : vector<16x128xf32>
    %291 = arith.mulf %290, %290 : vector<16x128xf32>
    %cst_123 = arith.constant dense<0.000000e+00> : vector<16xf32>
    %292 = vector.multi_reduction <add>, %291, %cst_123 [1] : vector<16x128xf32> to vector<16xf32>
    %293 = vector.shape_cast %292 : vector<16xf32> to vector<16x1xf32>
    %cst_124 = arith.constant 1.280000e+02 : f32
    %294 = vector.broadcast %cst_124 : f32 to vector<16x1xf32>
    %295 = arith.divf %293, %294 : vector<16x1xf32>
    %296 = vector.broadcast %288 : vector<16x1xf32> to vector<16x128xf32>
    %297 = arith.subf %280, %296 : vector<16x128xf32>
    %cst_125 = arith.constant 9.99999996E-13 : f32
    %298 = vector.broadcast %cst_125 : f32 to vector<16x1xf32>
    %299 = arith.addf %295, %298 : vector<16x1xf32>
    %300 = math.rsqrt %299 : vector<16x1xf32>
    %301 = vector.broadcast %300 : vector<16x1xf32> to vector<16x128xf32>
    %302 = arith.mulf %297, %301 : vector<16x128xf32>
    %303 = vector.broadcast %282 : vector<1x128xf32> to vector<16x128xf32>
    %304 = arith.mulf %302, %303 : vector<16x128xf32>
    %305 = vector.broadcast %284 : vector<1x128xf32> to vector<16x128xf32>
    %306 = arith.addf %304, %305 : vector<16x128xf32>
    %307 = arith.truncf %306 : vector<16x128xf32> to vector<16x128xbf16>
    %c2 = arith.constant 2 : index
    %c0_126 = arith.constant 0 : index
    %c0_127 = arith.constant 0 : index
    %308 = vector.load %arg2[%c2, %c0_126, %c0_127] : memref<4x128x384xbf16, #tpu.memory_space<vmem>>, vector<1x128x384xbf16>
    %309 = vector.shape_cast %308 : vector<1x128x384xbf16> to vector<128x384xbf16>
    %cst_128 = arith.constant dense<0.000000e+00> : vector<16x384xf32>
    %310 = tpu.matmul %307, %309, %cst_128 {dimension_numbers = #tpu.dot_dimension_numbers<[1], [0], [0], [1], [0, 0, 1, 1], [], []>} : vector<16x128xbf16>, vector<128x384xbf16>, vector<16x384xf32> -> vector<16x384xf32>
    %c2_129 = arith.constant 2 : index
    %c0_130 = arith.constant 0 : index
    %c0_131 = arith.constant 0 : index
    %311 = vector.load %arg3[%c2_129, %c0_130, %c0_131] : memref<4x1x384xf32, #tpu.memory_space<vmem>>, vector<1x1x384xf32>
    %312 = vector.shape_cast %311 : vector<1x1x384xf32> to vector<1x384xf32>
    %313 = vector.broadcast %312 : vector<1x384xf32> to vector<16x384xf32>
    %314 = arith.addf %310, %313 : vector<16x384xf32>
    %315 = vector.extract_strided_slice %314 {offsets = [0, 0], sizes = [16, 128], strides = [1, 1]} : vector<16x384xf32> to vector<16x128xf32>
    %316 = arith.truncf %315 : vector<16x128xf32> to vector<16x128xbf16>
    %317 = vector.extract_strided_slice %314 {offsets = [0, 128], sizes = [16, 128], strides = [1, 1]} : vector<16x384xf32> to vector<16x128xf32>
    %318 = arith.truncf %317 : vector<16x128xf32> to vector<16x128xbf16>
    %319 = vector.extract_strided_slice %314 {offsets = [0, 256], sizes = [16, 128], strides = [1, 1]} : vector<16x384xf32> to vector<16x128xf32>
    %320 = arith.truncf %319 : vector<16x128xf32> to vector<16x128xbf16>
    %321 = vector.broadcast %10 : vector<1x128xbf16> to vector<16x128xbf16>
    %322 = arith.mulf %316, %321 : vector<16x128xbf16>
    %cst_132 = arith.constant dense<0.000000e+00> : vector<16x16xf32>
    %323 = tpu.matmul %322, %318, %cst_132 {dimension_numbers = #tpu.dot_dimension_numbers<[1], [1], [0], [0], [0, 0, 1, 0], [], []>} : vector<16x128xbf16>, vector<16x128xbf16>, vector<16x16xf32> -> vector<16x16xf32>
    %324 = arith.addf %323, %1 : vector<16x16xf32>
    %cst_133 = arith.constant dense<0xFF800000> : vector<16xf32>
    %325 = vector.multi_reduction <maximumf>, %324, %cst_133 [1] : vector<16x16xf32> to vector<16xf32>
    %326 = vector.shape_cast %325 : vector<16xf32> to vector<16x1xf32>
    %327 = vector.broadcast %326 : vector<16x1xf32> to vector<16x16xf32>
    %328 = arith.subf %324, %327 : vector<16x16xf32>
    %329 = math.exp %328 : vector<16x16xf32>
    %cst_134 = arith.constant dense<0.000000e+00> : vector<16xf32>
    %330 = vector.multi_reduction <add>, %329, %cst_134 [1] : vector<16x16xf32> to vector<16xf32>
    %331 = vector.shape_cast %330 : vector<16xf32> to vector<16x1xf32>
    %332 = tpu.reciprocal %331 {approx = true} : vector<16x1xf32> -> vector<16x1xf32>
    %333 = vector.broadcast %332 : vector<16x1xf32> to vector<16x16xf32>
    %334 = arith.mulf %329, %333 : vector<16x16xf32>
    %335 = arith.truncf %334 : vector<16x16xf32> to vector<16x16xbf16>
    %cst_135 = arith.constant dense<0.000000e+00> : vector<16x128xf32>
    %336 = tpu.matmul %335, %320, %cst_135 {dimension_numbers = #tpu.dot_dimension_numbers<[1], [0], [0], [1], [0, 0, 1, 1], [], []>} : vector<16x16xbf16>, vector<16x128xbf16>, vector<16x128xf32> -> vector<16x128xf32>
    %337 = vector.broadcast %12 : vector<1x128xf32> to vector<16x128xf32>
    %338 = arith.mulf %336, %337 : vector<16x128xf32>
    %339 = vector.broadcast %20 : vector<1x128xbf16> to vector<16x128xbf16>
    %340 = arith.mulf %316, %339 : vector<16x128xbf16>
    %cst_136 = arith.constant dense<0.000000e+00> : vector<16x16xf32>
    %341 = tpu.matmul %340, %318, %cst_136 {dimension_numbers = #tpu.dot_dimension_numbers<[1], [1], [0], [0], [0, 0, 1, 0], [], []>} : vector<16x128xbf16>, vector<16x128xbf16>, vector<16x16xf32> -> vector<16x16xf32>
    %342 = arith.addf %341, %1 : vector<16x16xf32>
    %cst_137 = arith.constant dense<0xFF800000> : vector<16xf32>
    %343 = vector.multi_reduction <maximumf>, %342, %cst_137 [1] : vector<16x16xf32> to vector<16xf32>
    %344 = vector.shape_cast %343 : vector<16xf32> to vector<16x1xf32>
    %345 = vector.broadcast %344 : vector<16x1xf32> to vector<16x16xf32>
    %346 = arith.subf %342, %345 : vector<16x16xf32>
    %347 = math.exp %346 : vector<16x16xf32>
    %cst_138 = arith.constant dense<0.000000e+00> : vector<16xf32>
    %348 = vector.multi_reduction <add>, %347, %cst_138 [1] : vector<16x16xf32> to vector<16xf32>
    %349 = vector.shape_cast %348 : vector<16xf32> to vector<16x1xf32>
    %350 = tpu.reciprocal %349 {approx = true} : vector<16x1xf32> -> vector<16x1xf32>
    %351 = vector.broadcast %350 : vector<16x1xf32> to vector<16x16xf32>
    %352 = arith.mulf %347, %351 : vector<16x16xf32>
    %353 = arith.truncf %352 : vector<16x16xf32> to vector<16x16xbf16>
    %cst_139 = arith.constant dense<0.000000e+00> : vector<16x128xf32>
    %354 = tpu.matmul %353, %320, %cst_139 {dimension_numbers = #tpu.dot_dimension_numbers<[1], [0], [0], [1], [0, 0, 1, 1], [], []>} : vector<16x16xbf16>, vector<16x128xbf16>, vector<16x128xf32> -> vector<16x128xf32>
    %355 = vector.broadcast %22 : vector<1x128xf32> to vector<16x128xf32>
    %356 = arith.mulf %354, %355 : vector<16x128xf32>
    %357 = arith.addf %338, %356 : vector<16x128xf32>
    %358 = arith.truncf %357 : vector<16x128xf32> to vector<16x128xbf16>
    %c2_140 = arith.constant 2 : index
    %c0_141 = arith.constant 0 : index
    %c0_142 = arith.constant 0 : index
    %359 = vector.load %arg4[%c2_140, %c0_141, %c0_142] : memref<4x128x128xbf16, #tpu.memory_space<vmem>>, vector<1x128x128xbf16>
    %360 = vector.shape_cast %359 : vector<1x128x128xbf16> to vector<128x128xbf16>
    %cst_143 = arith.constant dense<0.000000e+00> : vector<16x128xf32>
    %361 = tpu.matmul %358, %360, %cst_143 {dimension_numbers = #tpu.dot_dimension_numbers<[1], [0], [0], [1], [0, 0, 1, 1], [], []>} : vector<16x128xbf16>, vector<128x128xbf16>, vector<16x128xf32> -> vector<16x128xf32>
    %c2_144 = arith.constant 2 : index
    %c0_145 = arith.constant 0 : index
    %c0_146 = arith.constant 0 : index
    %362 = vector.load %arg5[%c2_144, %c0_145, %c0_146] : memref<4x1x128xf32, #tpu.memory_space<vmem>>, vector<1x1x128xf32>
    %363 = vector.shape_cast %362 : vector<1x1x128xf32> to vector<1x128xf32>
    %364 = vector.broadcast %363 : vector<1x128xf32> to vector<16x128xf32>
    %365 = arith.addf %361, %364 : vector<16x128xf32>
    %366 = arith.addf %365, %306 : vector<16x128xf32>
    %c2_147 = arith.constant 2 : index
    %c0_148 = arith.constant 0 : index
    %c0_149 = arith.constant 0 : index
    %367 = vector.load %arg6[%c2_147, %c0_148, %c0_149] : memref<4x1x128xf32, #tpu.memory_space<vmem>>, vector<1x1x128xf32>
    %368 = vector.shape_cast %367 : vector<1x1x128xf32> to vector<1x128xf32>
    %c2_150 = arith.constant 2 : index
    %c0_151 = arith.constant 0 : index
    %c0_152 = arith.constant 0 : index
    %369 = vector.load %arg7[%c2_150, %c0_151, %c0_152] : memref<4x1x128xf32, #tpu.memory_space<vmem>>, vector<1x1x128xf32>
    %370 = vector.shape_cast %369 : vector<1x1x128xf32> to vector<1x128xf32>
    %cst_153 = arith.constant dense<0.000000e+00> : vector<16xf32>
    %371 = vector.multi_reduction <add>, %366, %cst_153 [1] : vector<16x128xf32> to vector<16xf32>
    %372 = vector.shape_cast %371 : vector<16xf32> to vector<16x1xf32>
    %cst_154 = arith.constant 1.280000e+02 : f32
    %373 = vector.broadcast %cst_154 : f32 to vector<16x1xf32>
    %374 = arith.divf %372, %373 : vector<16x1xf32>
    %375 = vector.broadcast %374 : vector<16x1xf32> to vector<16x128xf32>
    %376 = arith.subf %366, %375 : vector<16x128xf32>
    %377 = arith.mulf %376, %376 : vector<16x128xf32>
    %cst_155 = arith.constant dense<0.000000e+00> : vector<16xf32>
    %378 = vector.multi_reduction <add>, %377, %cst_155 [1] : vector<16x128xf32> to vector<16xf32>
    %379 = vector.shape_cast %378 : vector<16xf32> to vector<16x1xf32>
    %cst_156 = arith.constant 1.280000e+02 : f32
    %380 = vector.broadcast %cst_156 : f32 to vector<16x1xf32>
    %381 = arith.divf %379, %380 : vector<16x1xf32>
    %382 = vector.broadcast %374 : vector<16x1xf32> to vector<16x128xf32>
    %383 = arith.subf %366, %382 : vector<16x128xf32>
    %cst_157 = arith.constant 9.99999996E-13 : f32
    %384 = vector.broadcast %cst_157 : f32 to vector<16x1xf32>
    %385 = arith.addf %381, %384 : vector<16x1xf32>
    %386 = math.rsqrt %385 : vector<16x1xf32>
    %387 = vector.broadcast %386 : vector<16x1xf32> to vector<16x128xf32>
    %388 = arith.mulf %383, %387 : vector<16x128xf32>
    %389 = vector.broadcast %368 : vector<1x128xf32> to vector<16x128xf32>
    %390 = arith.mulf %388, %389 : vector<16x128xf32>
    %391 = vector.broadcast %370 : vector<1x128xf32> to vector<16x128xf32>
    %392 = arith.addf %390, %391 : vector<16x128xf32>
    %393 = arith.truncf %392 : vector<16x128xf32> to vector<16x128xbf16>
    %c2_158 = arith.constant 2 : index
    %c0_159 = arith.constant 0 : index
    %c0_160 = arith.constant 0 : index
    %394 = vector.load %arg8[%c2_158, %c0_159, %c0_160] : memref<4x128x512xbf16, #tpu.memory_space<vmem>>, vector<1x128x512xbf16>
    %395 = vector.shape_cast %394 : vector<1x128x512xbf16> to vector<128x512xbf16>
    %cst_161 = arith.constant dense<0.000000e+00> : vector<16x512xf32>
    %396 = tpu.matmul %393, %395, %cst_161 {dimension_numbers = #tpu.dot_dimension_numbers<[1], [0], [0], [1], [0, 0, 1, 1], [], []>} : vector<16x128xbf16>, vector<128x512xbf16>, vector<16x512xf32> -> vector<16x512xf32>
    %c2_162 = arith.constant 2 : index
    %c0_163 = arith.constant 0 : index
    %c0_164 = arith.constant 0 : index
    %397 = vector.load %arg9[%c2_162, %c0_163, %c0_164] : memref<4x1x512xf32, #tpu.memory_space<vmem>>, vector<1x1x512xf32>
    %398 = vector.shape_cast %397 : vector<1x1x512xf32> to vector<1x512xf32>
    %399 = vector.broadcast %398 : vector<1x512xf32> to vector<16x512xf32>
    %400 = arith.addf %396, %399 : vector<16x512xf32>
    %cst_165 = arith.constant 5.000000e-01 : f32
    %401 = vector.broadcast %cst_165 : f32 to vector<16x512xf32>
    %402 = arith.mulf %401, %400 : vector<16x512xf32>
    %cst_166 = arith.constant 4.471500e-02 : f32
    %403 = vector.broadcast %cst_166 : f32 to vector<16x512xf32>
    %404 = arith.mulf %403, %400 : vector<16x512xf32>
    %405 = arith.mulf %404, %400 : vector<16x512xf32>
    %406 = arith.mulf %405, %400 : vector<16x512xf32>
    %407 = arith.addf %400, %406 : vector<16x512xf32>
    %cst_167 = arith.constant 0.797884583 : f32
    %408 = vector.broadcast %cst_167 : f32 to vector<16x512xf32>
    %409 = arith.mulf %408, %407 : vector<16x512xf32>
    %410 = math.tanh %409 : vector<16x512xf32>
    %cst_168 = arith.constant 1.000000e+00 : f32
    %411 = vector.broadcast %cst_168 : f32 to vector<16x512xf32>
    %412 = arith.addf %411, %410 : vector<16x512xf32>
    %413 = arith.mulf %402, %412 : vector<16x512xf32>
    %414 = arith.truncf %413 : vector<16x512xf32> to vector<16x512xbf16>
    %c2_169 = arith.constant 2 : index
    %c0_170 = arith.constant 0 : index
    %c0_171 = arith.constant 0 : index
    %415 = vector.load %arg10[%c2_169, %c0_170, %c0_171] : memref<4x512x128xbf16, #tpu.memory_space<vmem>>, vector<1x512x128xbf16>
    %416 = vector.shape_cast %415 : vector<1x512x128xbf16> to vector<512x128xbf16>
    %cst_172 = arith.constant dense<0.000000e+00> : vector<16x128xf32>
    %417 = tpu.matmul %414, %416, %cst_172 {dimension_numbers = #tpu.dot_dimension_numbers<[1], [0], [0], [1], [0, 0, 1, 1], [], []>} : vector<16x512xbf16>, vector<512x128xbf16>, vector<16x128xf32> -> vector<16x128xf32>
    %c2_173 = arith.constant 2 : index
    %c0_174 = arith.constant 0 : index
    %c0_175 = arith.constant 0 : index
    %418 = vector.load %arg11[%c2_173, %c0_174, %c0_175] : memref<4x1x128xf32, #tpu.memory_space<vmem>>, vector<1x1x128xf32>
    %419 = vector.shape_cast %418 : vector<1x1x128xf32> to vector<1x128xf32>
    %420 = vector.broadcast %419 : vector<1x128xf32> to vector<16x128xf32>
    %421 = arith.addf %417, %420 : vector<16x128xf32>
    %422 = arith.addf %421, %392 : vector<16x128xf32>
    %c2_176 = arith.constant 2 : index
    %c0_177 = arith.constant 0 : index
    %c0_178 = arith.constant 0 : index
    %423 = vector.load %arg12[%c2_176, %c0_177, %c0_178] : memref<4x1x128xf32, #tpu.memory_space<vmem>>, vector<1x1x128xf32>
    %424 = vector.shape_cast %423 : vector<1x1x128xf32> to vector<1x128xf32>
    %c2_179 = arith.constant 2 : index
    %c0_180 = arith.constant 0 : index
    %c0_181 = arith.constant 0 : index
    %425 = vector.load %arg13[%c2_179, %c0_180, %c0_181] : memref<4x1x128xf32, #tpu.memory_space<vmem>>, vector<1x1x128xf32>
    %426 = vector.shape_cast %425 : vector<1x1x128xf32> to vector<1x128xf32>
    %cst_182 = arith.constant dense<0.000000e+00> : vector<16xf32>
    %427 = vector.multi_reduction <add>, %422, %cst_182 [1] : vector<16x128xf32> to vector<16xf32>
    %428 = vector.shape_cast %427 : vector<16xf32> to vector<16x1xf32>
    %cst_183 = arith.constant 1.280000e+02 : f32
    %429 = vector.broadcast %cst_183 : f32 to vector<16x1xf32>
    %430 = arith.divf %428, %429 : vector<16x1xf32>
    %431 = vector.broadcast %430 : vector<16x1xf32> to vector<16x128xf32>
    %432 = arith.subf %422, %431 : vector<16x128xf32>
    %433 = arith.mulf %432, %432 : vector<16x128xf32>
    %cst_184 = arith.constant dense<0.000000e+00> : vector<16xf32>
    %434 = vector.multi_reduction <add>, %433, %cst_184 [1] : vector<16x128xf32> to vector<16xf32>
    %435 = vector.shape_cast %434 : vector<16xf32> to vector<16x1xf32>
    %cst_185 = arith.constant 1.280000e+02 : f32
    %436 = vector.broadcast %cst_185 : f32 to vector<16x1xf32>
    %437 = arith.divf %435, %436 : vector<16x1xf32>
    %438 = vector.broadcast %430 : vector<16x1xf32> to vector<16x128xf32>
    %439 = arith.subf %422, %438 : vector<16x128xf32>
    %cst_186 = arith.constant 9.99999996E-13 : f32
    %440 = vector.broadcast %cst_186 : f32 to vector<16x1xf32>
    %441 = arith.addf %437, %440 : vector<16x1xf32>
    %442 = math.rsqrt %441 : vector<16x1xf32>
    %443 = vector.broadcast %442 : vector<16x1xf32> to vector<16x128xf32>
    %444 = arith.mulf %439, %443 : vector<16x128xf32>
    %445 = vector.broadcast %424 : vector<1x128xf32> to vector<16x128xf32>
    %446 = arith.mulf %444, %445 : vector<16x128xf32>
    %447 = vector.broadcast %426 : vector<1x128xf32> to vector<16x128xf32>
    %448 = arith.addf %446, %447 : vector<16x128xf32>
    %449 = arith.truncf %448 : vector<16x128xf32> to vector<16x128xbf16>
    %c3 = arith.constant 3 : index
    %c0_187 = arith.constant 0 : index
    %c0_188 = arith.constant 0 : index
    %450 = vector.load %arg2[%c3, %c0_187, %c0_188] : memref<4x128x384xbf16, #tpu.memory_space<vmem>>, vector<1x128x384xbf16>
    %451 = vector.shape_cast %450 : vector<1x128x384xbf16> to vector<128x384xbf16>
    %cst_189 = arith.constant dense<0.000000e+00> : vector<16x384xf32>
    %452 = tpu.matmul %449, %451, %cst_189 {dimension_numbers = #tpu.dot_dimension_numbers<[1], [0], [0], [1], [0, 0, 1, 1], [], []>} : vector<16x128xbf16>, vector<128x384xbf16>, vector<16x384xf32> -> vector<16x384xf32>
    %c3_190 = arith.constant 3 : index
    %c0_191 = arith.constant 0 : index
    %c0_192 = arith.constant 0 : index
    %453 = vector.load %arg3[%c3_190, %c0_191, %c0_192] : memref<4x1x384xf32, #tpu.memory_space<vmem>>, vector<1x1x384xf32>
    %454 = vector.shape_cast %453 : vector<1x1x384xf32> to vector<1x384xf32>
    %455 = vector.broadcast %454 : vector<1x384xf32> to vector<16x384xf32>
    %456 = arith.addf %452, %455 : vector<16x384xf32>
    %457 = vector.extract_strided_slice %456 {offsets = [0, 0], sizes = [16, 128], strides = [1, 1]} : vector<16x384xf32> to vector<16x128xf32>
    %458 = arith.truncf %457 : vector<16x128xf32> to vector<16x128xbf16>
    %459 = vector.extract_strided_slice %456 {offsets = [0, 128], sizes = [16, 128], strides = [1, 1]} : vector<16x384xf32> to vector<16x128xf32>
    %460 = arith.truncf %459 : vector<16x128xf32> to vector<16x128xbf16>
    %461 = vector.extract_strided_slice %456 {offsets = [0, 256], sizes = [16, 128], strides = [1, 1]} : vector<16x384xf32> to vector<16x128xf32>
    %462 = arith.truncf %461 : vector<16x128xf32> to vector<16x128xbf16>
    %463 = vector.broadcast %10 : vector<1x128xbf16> to vector<16x128xbf16>
    %464 = arith.mulf %458, %463 : vector<16x128xbf16>
    %cst_193 = arith.constant dense<0.000000e+00> : vector<16x16xf32>
    %465 = tpu.matmul %464, %460, %cst_193 {dimension_numbers = #tpu.dot_dimension_numbers<[1], [1], [0], [0], [0, 0, 1, 0], [], []>} : vector<16x128xbf16>, vector<16x128xbf16>, vector<16x16xf32> -> vector<16x16xf32>
    %466 = arith.addf %465, %1 : vector<16x16xf32>
    %cst_194 = arith.constant dense<0xFF800000> : vector<16xf32>
    %467 = vector.multi_reduction <maximumf>, %466, %cst_194 [1] : vector<16x16xf32> to vector<16xf32>
    %468 = vector.shape_cast %467 : vector<16xf32> to vector<16x1xf32>
    %469 = vector.broadcast %468 : vector<16x1xf32> to vector<16x16xf32>
    %470 = arith.subf %466, %469 : vector<16x16xf32>
    %471 = math.exp %470 : vector<16x16xf32>
    %cst_195 = arith.constant dense<0.000000e+00> : vector<16xf32>
    %472 = vector.multi_reduction <add>, %471, %cst_195 [1] : vector<16x16xf32> to vector<16xf32>
    %473 = vector.shape_cast %472 : vector<16xf32> to vector<16x1xf32>
    %474 = tpu.reciprocal %473 {approx = true} : vector<16x1xf32> -> vector<16x1xf32>
    %475 = vector.broadcast %474 : vector<16x1xf32> to vector<16x16xf32>
    %476 = arith.mulf %471, %475 : vector<16x16xf32>
    %477 = arith.truncf %476 : vector<16x16xf32> to vector<16x16xbf16>
    %cst_196 = arith.constant dense<0.000000e+00> : vector<16x128xf32>
    %478 = tpu.matmul %477, %462, %cst_196 {dimension_numbers = #tpu.dot_dimension_numbers<[1], [0], [0], [1], [0, 0, 1, 1], [], []>} : vector<16x16xbf16>, vector<16x128xbf16>, vector<16x128xf32> -> vector<16x128xf32>
    %479 = vector.broadcast %12 : vector<1x128xf32> to vector<16x128xf32>
    %480 = arith.mulf %478, %479 : vector<16x128xf32>
    %481 = vector.broadcast %20 : vector<1x128xbf16> to vector<16x128xbf16>
    %482 = arith.mulf %458, %481 : vector<16x128xbf16>
    %cst_197 = arith.constant dense<0.000000e+00> : vector<16x16xf32>
    %483 = tpu.matmul %482, %460, %cst_197 {dimension_numbers = #tpu.dot_dimension_numbers<[1], [1], [0], [0], [0, 0, 1, 0], [], []>} : vector<16x128xbf16>, vector<16x128xbf16>, vector<16x16xf32> -> vector<16x16xf32>
    %484 = arith.addf %483, %1 : vector<16x16xf32>
    %cst_198 = arith.constant dense<0xFF800000> : vector<16xf32>
    %485 = vector.multi_reduction <maximumf>, %484, %cst_198 [1] : vector<16x16xf32> to vector<16xf32>
    %486 = vector.shape_cast %485 : vector<16xf32> to vector<16x1xf32>
    %487 = vector.broadcast %486 : vector<16x1xf32> to vector<16x16xf32>
    %488 = arith.subf %484, %487 : vector<16x16xf32>
    %489 = math.exp %488 : vector<16x16xf32>
    %cst_199 = arith.constant dense<0.000000e+00> : vector<16xf32>
    %490 = vector.multi_reduction <add>, %489, %cst_199 [1] : vector<16x16xf32> to vector<16xf32>
    %491 = vector.shape_cast %490 : vector<16xf32> to vector<16x1xf32>
    %492 = tpu.reciprocal %491 {approx = true} : vector<16x1xf32> -> vector<16x1xf32>
    %493 = vector.broadcast %492 : vector<16x1xf32> to vector<16x16xf32>
    %494 = arith.mulf %489, %493 : vector<16x16xf32>
    %495 = arith.truncf %494 : vector<16x16xf32> to vector<16x16xbf16>
    %cst_200 = arith.constant dense<0.000000e+00> : vector<16x128xf32>
    %496 = tpu.matmul %495, %462, %cst_200 {dimension_numbers = #tpu.dot_dimension_numbers<[1], [0], [0], [1], [0, 0, 1, 1], [], []>} : vector<16x16xbf16>, vector<16x128xbf16>, vector<16x128xf32> -> vector<16x128xf32>
    %497 = vector.broadcast %22 : vector<1x128xf32> to vector<16x128xf32>
    %498 = arith.mulf %496, %497 : vector<16x128xf32>
    %499 = arith.addf %480, %498 : vector<16x128xf32>
    %500 = arith.truncf %499 : vector<16x128xf32> to vector<16x128xbf16>
    %c3_201 = arith.constant 3 : index
    %c0_202 = arith.constant 0 : index
    %c0_203 = arith.constant 0 : index
    %501 = vector.load %arg4[%c3_201, %c0_202, %c0_203] : memref<4x128x128xbf16, #tpu.memory_space<vmem>>, vector<1x128x128xbf16>
    %502 = vector.shape_cast %501 : vector<1x128x128xbf16> to vector<128x128xbf16>
    %cst_204 = arith.constant dense<0.000000e+00> : vector<16x128xf32>
    %503 = tpu.matmul %500, %502, %cst_204 {dimension_numbers = #tpu.dot_dimension_numbers<[1], [0], [0], [1], [0, 0, 1, 1], [], []>} : vector<16x128xbf16>, vector<128x128xbf16>, vector<16x128xf32> -> vector<16x128xf32>
    %c3_205 = arith.constant 3 : index
    %c0_206 = arith.constant 0 : index
    %c0_207 = arith.constant 0 : index
    %504 = vector.load %arg5[%c3_205, %c0_206, %c0_207] : memref<4x1x128xf32, #tpu.memory_space<vmem>>, vector<1x1x128xf32>
    %505 = vector.shape_cast %504 : vector<1x1x128xf32> to vector<1x128xf32>
    %506 = vector.broadcast %505 : vector<1x128xf32> to vector<16x128xf32>
    %507 = arith.addf %503, %506 : vector<16x128xf32>
    %508 = arith.addf %507, %448 : vector<16x128xf32>
    %c3_208 = arith.constant 3 : index
    %c0_209 = arith.constant 0 : index
    %c0_210 = arith.constant 0 : index
    %509 = vector.load %arg6[%c3_208, %c0_209, %c0_210] : memref<4x1x128xf32, #tpu.memory_space<vmem>>, vector<1x1x128xf32>
    %510 = vector.shape_cast %509 : vector<1x1x128xf32> to vector<1x128xf32>
    %c3_211 = arith.constant 3 : index
    %c0_212 = arith.constant 0 : index
    %c0_213 = arith.constant 0 : index
    %511 = vector.load %arg7[%c3_211, %c0_212, %c0_213] : memref<4x1x128xf32, #tpu.memory_space<vmem>>, vector<1x1x128xf32>
    %512 = vector.shape_cast %511 : vector<1x1x128xf32> to vector<1x128xf32>
    %cst_214 = arith.constant dense<0.000000e+00> : vector<16xf32>
    %513 = vector.multi_reduction <add>, %508, %cst_214 [1] : vector<16x128xf32> to vector<16xf32>
    %514 = vector.shape_cast %513 : vector<16xf32> to vector<16x1xf32>
    %cst_215 = arith.constant 1.280000e+02 : f32
    %515 = vector.broadcast %cst_215 : f32 to vector<16x1xf32>
    %516 = arith.divf %514, %515 : vector<16x1xf32>
    %517 = vector.broadcast %516 : vector<16x1xf32> to vector<16x128xf32>
    %518 = arith.subf %508, %517 : vector<16x128xf32>
    %519 = arith.mulf %518, %518 : vector<16x128xf32>
    %cst_216 = arith.constant dense<0.000000e+00> : vector<16xf32>
    %520 = vector.multi_reduction <add>, %519, %cst_216 [1] : vector<16x128xf32> to vector<16xf32>
    %521 = vector.shape_cast %520 : vector<16xf32> to vector<16x1xf32>
    %cst_217 = arith.constant 1.280000e+02 : f32
    %522 = vector.broadcast %cst_217 : f32 to vector<16x1xf32>
    %523 = arith.divf %521, %522 : vector<16x1xf32>
    %524 = vector.broadcast %516 : vector<16x1xf32> to vector<16x128xf32>
    %525 = arith.subf %508, %524 : vector<16x128xf32>
    %cst_218 = arith.constant 9.99999996E-13 : f32
    %526 = vector.broadcast %cst_218 : f32 to vector<16x1xf32>
    %527 = arith.addf %523, %526 : vector<16x1xf32>
    %528 = math.rsqrt %527 : vector<16x1xf32>
    %529 = vector.broadcast %528 : vector<16x1xf32> to vector<16x128xf32>
    %530 = arith.mulf %525, %529 : vector<16x128xf32>
    %531 = vector.broadcast %510 : vector<1x128xf32> to vector<16x128xf32>
    %532 = arith.mulf %530, %531 : vector<16x128xf32>
    %533 = vector.broadcast %512 : vector<1x128xf32> to vector<16x128xf32>
    %534 = arith.addf %532, %533 : vector<16x128xf32>
    %535 = arith.truncf %534 : vector<16x128xf32> to vector<16x128xbf16>
    %c3_219 = arith.constant 3 : index
    %c0_220 = arith.constant 0 : index
    %c0_221 = arith.constant 0 : index
    %536 = vector.load %arg8[%c3_219, %c0_220, %c0_221] : memref<4x128x512xbf16, #tpu.memory_space<vmem>>, vector<1x128x512xbf16>
    %537 = vector.shape_cast %536 : vector<1x128x512xbf16> to vector<128x512xbf16>
    %cst_222 = arith.constant dense<0.000000e+00> : vector<16x512xf32>
    %538 = tpu.matmul %535, %537, %cst_222 {dimension_numbers = #tpu.dot_dimension_numbers<[1], [0], [0], [1], [0, 0, 1, 1], [], []>} : vector<16x128xbf16>, vector<128x512xbf16>, vector<16x512xf32> -> vector<16x512xf32>
    %c3_223 = arith.constant 3 : index
    %c0_224 = arith.constant 0 : index
    %c0_225 = arith.constant 0 : index
    %539 = vector.load %arg9[%c3_223, %c0_224, %c0_225] : memref<4x1x512xf32, #tpu.memory_space<vmem>>, vector<1x1x512xf32>
    %540 = vector.shape_cast %539 : vector<1x1x512xf32> to vector<1x512xf32>
    %541 = vector.broadcast %540 : vector<1x512xf32> to vector<16x512xf32>
    %542 = arith.addf %538, %541 : vector<16x512xf32>
    %cst_226 = arith.constant 5.000000e-01 : f32
    %543 = vector.broadcast %cst_226 : f32 to vector<16x512xf32>
    %544 = arith.mulf %543, %542 : vector<16x512xf32>
    %cst_227 = arith.constant 4.471500e-02 : f32
    %545 = vector.broadcast %cst_227 : f32 to vector<16x512xf32>
    %546 = arith.mulf %545, %542 : vector<16x512xf32>
    %547 = arith.mulf %546, %542 : vector<16x512xf32>
    %548 = arith.mulf %547, %542 : vector<16x512xf32>
    %549 = arith.addf %542, %548 : vector<16x512xf32>
    %cst_228 = arith.constant 0.797884583 : f32
    %550 = vector.broadcast %cst_228 : f32 to vector<16x512xf32>
    %551 = arith.mulf %550, %549 : vector<16x512xf32>
    %552 = math.tanh %551 : vector<16x512xf32>
    %cst_229 = arith.constant 1.000000e+00 : f32
    %553 = vector.broadcast %cst_229 : f32 to vector<16x512xf32>
    %554 = arith.addf %553, %552 : vector<16x512xf32>
    %555 = arith.mulf %544, %554 : vector<16x512xf32>
    %556 = arith.truncf %555 : vector<16x512xf32> to vector<16x512xbf16>
    %c3_230 = arith.constant 3 : index
    %c0_231 = arith.constant 0 : index
    %c0_232 = arith.constant 0 : index
    %557 = vector.load %arg10[%c3_230, %c0_231, %c0_232] : memref<4x512x128xbf16, #tpu.memory_space<vmem>>, vector<1x512x128xbf16>
    %558 = vector.shape_cast %557 : vector<1x512x128xbf16> to vector<512x128xbf16>
    %cst_233 = arith.constant dense<0.000000e+00> : vector<16x128xf32>
    %559 = tpu.matmul %556, %558, %cst_233 {dimension_numbers = #tpu.dot_dimension_numbers<[1], [0], [0], [1], [0, 0, 1, 1], [], []>} : vector<16x512xbf16>, vector<512x128xbf16>, vector<16x128xf32> -> vector<16x128xf32>
    %c3_234 = arith.constant 3 : index
    %c0_235 = arith.constant 0 : index
    %c0_236 = arith.constant 0 : index
    %560 = vector.load %arg11[%c3_234, %c0_235, %c0_236] : memref<4x1x128xf32, #tpu.memory_space<vmem>>, vector<1x1x128xf32>
    %561 = vector.shape_cast %560 : vector<1x1x128xf32> to vector<1x128xf32>
    %562 = vector.broadcast %561 : vector<1x128xf32> to vector<16x128xf32>
    %563 = arith.addf %559, %562 : vector<16x128xf32>
    %564 = arith.addf %563, %534 : vector<16x128xf32>
    %c3_237 = arith.constant 3 : index
    %c0_238 = arith.constant 0 : index
    %c0_239 = arith.constant 0 : index
    %565 = vector.load %arg12[%c3_237, %c0_238, %c0_239] : memref<4x1x128xf32, #tpu.memory_space<vmem>>, vector<1x1x128xf32>
    %566 = vector.shape_cast %565 : vector<1x1x128xf32> to vector<1x128xf32>
    %c3_240 = arith.constant 3 : index
    %c0_241 = arith.constant 0 : index
    %c0_242 = arith.constant 0 : index
    %567 = vector.load %arg13[%c3_240, %c0_241, %c0_242] : memref<4x1x128xf32, #tpu.memory_space<vmem>>, vector<1x1x128xf32>
    %568 = vector.shape_cast %567 : vector<1x1x128xf32> to vector<1x128xf32>
    %cst_243 = arith.constant dense<0.000000e+00> : vector<16xf32>
    %569 = vector.multi_reduction <add>, %564, %cst_243 [1] : vector<16x128xf32> to vector<16xf32>
    %570 = vector.shape_cast %569 : vector<16xf32> to vector<16x1xf32>
    %cst_244 = arith.constant 1.280000e+02 : f32
    %571 = vector.broadcast %cst_244 : f32 to vector<16x1xf32>
    %572 = arith.divf %570, %571 : vector<16x1xf32>
    %573 = vector.broadcast %572 : vector<16x1xf32> to vector<16x128xf32>
    %574 = arith.subf %564, %573 : vector<16x128xf32>
    %575 = arith.mulf %574, %574 : vector<16x128xf32>
    %cst_245 = arith.constant dense<0.000000e+00> : vector<16xf32>
    %576 = vector.multi_reduction <add>, %575, %cst_245 [1] : vector<16x128xf32> to vector<16xf32>
    %577 = vector.shape_cast %576 : vector<16xf32> to vector<16x1xf32>
    %cst_246 = arith.constant 1.280000e+02 : f32
    %578 = vector.broadcast %cst_246 : f32 to vector<16x1xf32>
    %579 = arith.divf %577, %578 : vector<16x1xf32>
    %580 = vector.broadcast %572 : vector<16x1xf32> to vector<16x128xf32>
    %581 = arith.subf %564, %580 : vector<16x128xf32>
    %cst_247 = arith.constant 9.99999996E-13 : f32
    %582 = vector.broadcast %cst_247 : f32 to vector<16x1xf32>
    %583 = arith.addf %579, %582 : vector<16x1xf32>
    %584 = math.rsqrt %583 : vector<16x1xf32>
    %585 = vector.broadcast %584 : vector<16x1xf32> to vector<16x128xf32>
    %586 = arith.mulf %581, %585 : vector<16x128xf32>
    %587 = vector.broadcast %566 : vector<1x128xf32> to vector<16x128xf32>
    %588 = arith.mulf %586, %587 : vector<16x128xf32>
    %589 = vector.broadcast %568 : vector<1x128xf32> to vector<16x128xf32>
    %590 = arith.addf %588, %589 : vector<16x128xf32>
    %591 = arith.truncf %590 : vector<16x128xf32> to vector<16x128xbf16>
    %592 = arith.truncf %306 : vector<16x128xf32> to vector<16x128xbf16>
    %c0_248 = arith.constant 0 : index
    %c0_249 = arith.constant 0 : index
    %593 = vector.load %arg14[%c0_248, %c0_249] : memref<128x256xbf16, #tpu.memory_space<vmem>>, vector<128x256xbf16>
    %cst_250 = arith.constant dense<0.000000e+00> : vector<16x256xf32>
    %594 = tpu.matmul %591, %593, %cst_250 {dimension_numbers = #tpu.dot_dimension_numbers<[1], [0], [0], [1], [0, 0, 1, 1], [], []>} : vector<16x128xbf16>, vector<128x256xbf16>, vector<16x256xf32> -> vector<16x256xf32>
    %c0_251 = arith.constant 0 : index
    %c0_252 = arith.constant 0 : index
    %595 = vector.load %arg15[%c0_251, %c0_252] : memref<128x256xbf16, #tpu.memory_space<vmem>>, vector<128x256xbf16>
    %cst_253 = arith.constant dense<0.000000e+00> : vector<16x256xf32>
    %596 = tpu.matmul %592, %595, %cst_253 {dimension_numbers = #tpu.dot_dimension_numbers<[1], [0], [0], [1], [0, 0, 1, 1], [], []>} : vector<16x128xbf16>, vector<128x256xbf16>, vector<16x256xf32> -> vector<16x256xf32>
    %597 = arith.addf %594, %596 : vector<16x256xf32>
    %c0_254 = arith.constant 0 : index
    %c0_255 = arith.constant 0 : index
    %598 = vector.load %arg16[%c0_254, %c0_255] : memref<1x256xf32, #tpu.memory_space<vmem>>, vector<1x256xf32>
    %599 = vector.broadcast %598 : vector<1x256xf32> to vector<16x256xf32>
    %600 = arith.addf %597, %599 : vector<16x256xf32>
    %cst_256 = arith.constant 0.000000e+00 : f32
    %601 = vector.broadcast %cst_256 : f32 to vector<16x256xf32>
    %602 = arith.cmpf ogt, %600, %601 : vector<16x256xf32>
    %cst_257 = arith.constant 0.00999999977 : f32
    %603 = vector.broadcast %cst_257 : f32 to vector<16x256xf32>
    %604 = arith.mulf %603, %600 : vector<16x256xf32>
    %605 = arith.select %602, %600, %604 : vector<16x256xi1>, vector<16x256xf32>
    %606 = arith.truncf %605 : vector<16x256xf32> to vector<16x256xbf16>
    %c0_258 = arith.constant 0 : index
    %c0_259 = arith.constant 0 : index
    %607 = vector.load %arg17[%c0_258, %c0_259] : memref<256x128xbf16, #tpu.memory_space<vmem>>, vector<256x128xbf16>
    %cst_260 = arith.constant dense<0.000000e+00> : vector<16x128xf32>
    %608 = tpu.matmul %606, %607, %cst_260 {dimension_numbers = #tpu.dot_dimension_numbers<[1], [0], [0], [1], [0, 0, 1, 1], [], []>} : vector<16x256xbf16>, vector<256x128xbf16>, vector<16x128xf32> -> vector<16x128xf32>
    %c0_261 = arith.constant 0 : index
    %c0_262 = arith.constant 0 : index
    %609 = vector.load %arg18[%c0_261, %c0_262] : memref<1x128xf32, #tpu.memory_space<vmem>>, vector<1x128xf32>
    %610 = vector.broadcast %609 : vector<1x128xf32> to vector<16x128xf32>
    %611 = arith.addf %608, %610 : vector<16x128xf32>
    %c0_263 = arith.constant 0 : index
    %c0_264 = arith.constant 0 : index
    %612 = vector.load %arg19[%c0_263, %c0_264] : memref<16x128xf32, #tpu.memory_space<vmem>>, vector<16x128xf32>
    tpu.vector_store %arg19[%c0_263, %c0_264], %611 {strides = array<i32>} : memref<16x128xf32, #tpu.memory_space<vmem>>, vector<16x128xf32>,
    return
  }
}

</mosaic_0001>

<llo_original>
// kernel: qa_forward.1
$region0: #{qa_forward.1}
  #allocation0 [shape = 'u32[]', space=smem, size = 0x4, offset = 0x4, fixed_abs, tag = 'smem constant byte address 0x4 - core index']
  #allocation1 [shape = 'u32[144,128]{1,0:T(1,128)}', space=vmem, size = 0x12000, scoped, tag = 'internal scratch']
  %s0 = inlined_call_operand.vmem [shape: f32[16,128], index: 0, kind: input, shape index: {}]
  %s1 = inlined_call_operand.vmem [shape: f32[16,16], index: 1, kind: input, shape index: {}]
  %s2 = inlined_call_operand.hbm [shape: bf16[4,128,384], index: 2, kind: input, shape index: {}]
  %s3 = inlined_call_operand.vmem [shape: f32[4,1,384], index: 3, kind: input, shape index: {}]
  %s4 = inlined_call_operand.vmem [shape: bf16[4,128,128], index: 4, kind: input, shape index: {}]
  %s5 = inlined_call_operand.vmem [shape: f32[4,1,128], index: 5, kind: input, shape index: {}]
  %s6 = inlined_call_operand.vmem [shape: f32[4,1,128], index: 6, kind: input, shape index: {}]
  %s7 = inlined_call_operand.hbm [shape: f32[4,1,128], index: 7, kind: input, shape index: {}]
  %s8 = inlined_call_operand.hbm [shape: bf16[4,128,512], index: 8, kind: input, shape index: {}]
  %s9 = inlined_call_operand.vmem [shape: f32[4,1,512], index: 9, kind: input, shape index: {}]
  %s10 = inlined_call_operand.hbm [shape: bf16[4,512,128], index: 10, kind: input, shape index: {}]
  %s11 = inlined_call_operand.vmem [shape: f32[4,1,128], index: 11, kind: input, shape index: {}]
  %s12 = inlined_call_operand.hbm [shape: f32[4,1,128], index: 12, kind: input, shape index: {}]
  %s13 = inlined_call_operand.hbm [shape: f32[4,1,128], index: 13, kind: input, shape index: {}]
  %s14 = inlined_call_operand.vmem [shape: bf16[128,256], index: 14, kind: input, shape index: {}]
  %s15 = inlined_call_operand.vmem [shape: bf16[128,256], index: 15, kind: input, shape index: {}]
  %s16 = inlined_call_operand.vmem [shape: f32[1,256], index: 16, kind: input, shape index: {}]
  %s17 = inlined_call_operand.hbm [shape: bf16[256,128], index: 17, kind: input, shape index: {}]
  %s18 = inlined_call_operand.hbm [shape: f32[1,128], index: 18, kind: input, shape index: {}]
  %s19 = inlined_call_operand.vmem [shape: f32[16,128], index: 19, kind: output, shape index: {}]
  %s20 = sld [smem:[#allocation0]]
  $region118: #{qa_forward.1} parent=0
    _
  %s22 = ssub.s32 1, %s20
  %s23 = scalar_select 0, %s22, %s20
  $region1: #{qa_forward.1} parent=0
    #allocation2 [shape = 'u8[393216]{0}', space=vmem, size = 0x60000, scoped, tag = 'input window, operand 2, single buffered']
    #allocation3 [shape = 's32[1]{0}', space=sflag, size = 0x4, scoped, tag = 'scoped memory for qa_forward.1']
    #allocation4 [shape = 'u8[2048]{0}', space=vmem, size = 0x800, scoped, tag = 'input window, operand 7, single buffered']
    #allocation5 [shape = 's32[1]{0}', space=sflag, size = 0x4, scoped, tag = 'scoped memory for qa_forward.1']
    #allocation6 [shape = 'u8[524288]{0}', space=vmem, size = 0x80000, scoped, tag = 'input window, operand 8, single buffered']
    #allocation7 [shape = 'u8[524288]{0}', space=vmem, size = 0x80000, scoped, tag = 'input window, operand 10, single buffered']
    #allocation8 [shape = 's32[1]{0}', space=sflag, size = 0x4, scoped, tag = 'scoped memory for qa_forward.1']
    #allocation9 [shape = 'u8[2048]{0}', space=vmem, size = 0x800, scoped, tag = 'input window, operand 12, single buffered']
    #allocation10 [shape = 'u8[2048]{0}', space=vmem, size = 0x800, scoped, tag = 'input window, operand 13, single buffered']
    #allocation11 [shape = 's32[1]{0}', space=sflag, size = 0x4, scoped, tag = 'scoped memory for qa_forward.1']
    #allocation12 [shape = 'u8[65536]{0}', space=vmem, size = 0x10000, scoped, tag = 'input window, operand 17, single buffered']
    #allocation13 [shape = 'u8[512]{0}', space=vmem, size = 0x400, scoped, tag = 'input window, operand 18, single buffered']
    #allocation14 [shape = 's32[1]{0}', space=sflag, size = 0x4, scoped, tag = 'scoped memory for qa_forward.1']
    %24 = vsyncpa [#allocation3], 0
    %25 = vsyncpa [#allocation5], 0
    %26 = vsyncpa [#allocation8], 0
    %27 = vsyncpa [#allocation11], 0
    %28 = vsyncpa [#allocation14], 0
    // Predicated region
    $region2: #{qa_forward.1} parent=1 // pred_check
      _
    $region3: #{qa_forward.1} parent=1 // pred_check_branch
      %30 = sbr.rel (0) target = $region5
    $region4: #{qa_forward.1} parent=1 // pred_region
      _
    $region5: #{qa_forward.1} parent=1 // pred_fallthru
      _
    // Predicated region
    $region6: #{qa_forward.1} parent=1 // pred_check
      _
    $region7: #{qa_forward.1} parent=1 // pred_check_branch
      %32 = sbr.rel (0) target = $region9
    $region8: #{qa_forward.1} parent=1 // pred_region
      _
    $region9: #{qa_forward.1} parent=1 // pred_fallthru
      _
    // Predicated region
    $region10: #{qa_forward.1} parent=1 // pred_check
      _
    $region11: #{qa_forward.1} parent=1 // pred_check_branch
      %34 = sbr.rel (0) target = $region13
    $region12: #{qa_forward.1} parent=1 // pred_region
      %s36 = ssub.s32 12288, 12288
      %37 = vsyncadd [#allocation3], %s36
      %s38 = sshll.u32 [#allocation2], 4
      %s39 = int_to_ptr.vmem [resolvable:$true] %s38
      %44 = dma.hbm_to_vmem [thread:$0]  %s2, 12288, %s39, [#allocation3], 192, 192, 12
    $region13: #{qa_forward.1} parent=1 // pred_fallthru
      _
    // Predicated region
    $region14: #{qa_forward.1} parent=1 // pred_check
      _
    $region15: #{qa_forward.1} parent=1 // pred_check_branch
      %46 = sbr.rel (0) target = $region17
    $region16: #{qa_forward.1} parent=1 // pred_region
      _
    $region17: #{qa_forward.1} parent=1 // pred_fallthru
      _
    // Predicated region
    $region18: #{qa_forward.1} parent=1 // pred_check
      _
    $region19: #{qa_forward.1} parent=1 // pred_check_branch
      %48 = sbr.rel (0) target = $region21
    $region20: #{qa_forward.1} parent=1 // pred_region
      _
    $region21: #{qa_forward.1} parent=1 // pred_fallthru
      _
    // Predicated region
    $region22: #{qa_forward.1} parent=1 // pred_check
      _
    $region23: #{qa_forward.1} parent=1 // pred_check_branch
      %50 = sbr.rel (0) target = $region25
    $region24: #{qa_forward.1} parent=1 // pred_region
      _
    $region25: #{qa_forward.1} parent=1 // pred_fallthru
      _
    // Predicated region
    $region26: #{qa_forward.1} parent=1 // pred_check
      _
    $region27: #{qa_forward.1} parent=1 // pred_check_branch
      %52 = sbr.rel (0) target = $region29
    $region28: #{qa_forward.1} parent=1 // pred_region
      _
    $region29: #{qa_forward.1} parent=1 // pred_fallthru
      _
    // Predicated region
    $region30: #{qa_forward.1} parent=1 // pred_check
      _
    $region31: #{qa_forward.1} parent=1 // pred_check_branch
      %54 = sbr.rel (0) target = $region33
    $region32: #{qa_forward.1} parent=1 // pred_region
      %s56 = ssub.s32 64, 64
      %57 = vsyncadd [#allocation5], %s56
      %s58 = sshll.u32 [#allocation4], 4
      %s59 = int_to_ptr.vmem [resolvable:$true] %s58
      %64 = dma.hbm_to_vmem [thread:$0]  %s7, 64, %s59, [#allocation5], 16, 16, 1
    $region33: #{qa_forward.1} parent=1 // pred_fallthru
      _
    // Predicated region
    $region34: #{qa_forward.1} parent=1 // pred_check
      _
    $region35: #{qa_forward.1} parent=1 // pred_check_branch
      %66 = sbr.rel (0) target = $region37
    $region36: #{qa_forward.1} parent=1 // pred_region
      %s68 = ssub.s32 16384, 16384
      %69 = vsyncadd [#allocation5], %s68
      %s70 = sshll.u32 [#allocation6], 4
      %s71 = int_to_ptr.vmem [resolvable:$true] %s70
      %76 = dma.hbm_to_vmem [thread:$0]  %s8, 16384, %s71, [#allocation5], 256, 256, 16
    $region37: #{qa_forward.1} parent=1 // pred_fallthru
      _
    // Predicated region
    $region38: #{qa_forward.1} parent=1 // pred_check
      _
    $region39: #{qa_forward.1} parent=1 // pred_check_branch
      %78 = sbr.rel (0) target = $region41
    $region40: #{qa_forward.1} parent=1 // pred_region
      _
    $region41: #{qa_forward.1} parent=1 // pred_fallthru
      _
    // Predicated region
    $region42: #{qa_forward.1} parent=1 // pred_check
      _
    $region43: #{qa_forward.1} parent=1 // pred_check_branch
      %80 = sbr.rel (0) target = $region45
    $region44: #{qa_forward.1} parent=1 // pred_region
      %s82 = ssub.s32 16384, 16384
      %83 = vsyncadd [#allocation8], %s82
      %s84 = sshll.u32 [#allocation7], 4
      %s85 = int_to_ptr.vmem [resolvable:$true] %s84
      %90 = dma.hbm_to_vmem [thread:$0]  %s10, 16384, %s85, [#allocation8], 64, 64, 4
    $region45: #{qa_forward.1} parent=1 // pred_fallthru
      _
    // Predicated region
    $region46: #{qa_forward.1} parent=1 // pred_check
      _
    $region47: #{qa_forward.1} parent=1 // pred_check_branch
      %92 = sbr.rel (0) target = $region49
    $region48: #{qa_forward.1} parent=1 // pred_region
      _
    $region49: #{qa_forward.1} parent=1 // pred_fallthru
      _
    // Predicated region
    $region50: #{qa_forward.1} parent=1 // pred_check
      _
    $region51: #{qa_forward.1} parent=1 // pred_check_branch
      %94 = sbr.rel (0) target = $region53
    $region52: #{qa_forward.1} parent=1 // pred_region
      %s96 = ssub.s32 64, 64
      %97 = vsyncadd [#allocation8], %s96
      %s98 = sshll.u32 [#allocation9], 4
      %s99 = int_to_ptr.vmem [resolvable:$true] %s98
      %104 = dma.hbm_to_vmem [thread:$0]  %s12, 64, %s99, [#allocation8], 16, 16, 1
    $region53: #{qa_forward.1} parent=1 // pred_fallthru
      _
    // Predicated region
    $region54: #{qa_forward.1} parent=1 // pred_check
      _
    $region55: #{qa_forward.1} parent=1 // pred_check_branch
      %106 = sbr.rel (0) target = $region57
    $region56: #{qa_forward.1} parent=1 // pred_region
      %s108 = ssub.s32 64, 64
      %109 = vsyncadd [#allocation11], %s108
      %s110 = sshll.u32 [#allocation10], 4
      %s111 = int_to_ptr.vmem [resolvable:$true] %s110
      %116 = dma.hbm_to_vmem [thread:$0]  %s13, 64, %s111, [#allocation11], 16, 16, 1
    $region57: #{qa_forward.1} parent=1 // pred_fallthru
      _
    // Predicated region
    $region58: #{qa_forward.1} parent=1 // pred_check
      _
    $region59: #{qa_forward.1} parent=1 // pred_check_branch
      %118 = sbr.rel (0) target = $region61
    $region60: #{qa_forward.1} parent=1 // pred_region
      _
    $region61: #{qa_forward.1} parent=1 // pred_fallthru
      _
    // Predicated region
    $region62: #{qa_forward.1} parent=1 // pred_check
      _
    $region63: #{qa_forward.1} parent=1 // pred_check_branch
      %120 = sbr.rel (0) target = $region65
    $region64: #{qa_forward.1} parent=1 // pred_region
      _
    $region65: #{qa_forward.1} parent=1 // pred_fallthru
      _
    // Predicated region
    $region66: #{qa_forward.1} parent=1 // pred_check
      _
    $region67: #{qa_forward.1} parent=1 // pred_check_branch
      %122 = sbr.rel (0) target = $region69
    $region68: #{qa_forward.1} parent=1 // pred_region
      _
    $region69: #{qa_forward.1} parent=1 // pred_fallthru
      _
    // Predicated region
    $region70: #{qa_forward.1} parent=1 // pred_check
      _
    $region71: #{qa_forward.1} parent=1 // pred_check_branch
      %124 = sbr.rel (0) target = $region73
    $region72: #{qa_forward.1} parent=1 // pred_region
      %s126 = ssub.s32 2048, 2048
      %127 = vsyncadd [#allocation11], %s126
      %s128 = sshll.u32 [#allocation12], 4
      %s129 = int_to_ptr.vmem [resolvable:$true] %s128
      %134 = dma.hbm_to_vmem [thread:$0]  %s17, 2048, %s129, [#allocation11], 64, 64, 4
    $region73: #{qa_forward.1} parent=1 // pred_fallthru
      _
    // Predicated region
    $region74: #{qa_forward.1} parent=1 // pred_check
      _
    $region75: #{qa_forward.1} parent=1 // pred_check_branch
      %136 = sbr.rel (0) target = $region77
    $region76: #{qa_forward.1} parent=1 // pred_region
      %s138 = ssub.s32 16, 16
      %139 = vsyncadd [#allocation14], %s138
      %s141 = sshll.u32 [#allocation13], 4
      %s142 = int_to_ptr.vmem [resolvable:$true] %s141
      %144 = dma.hbm_to_vmem [thread:$0]  %s18, 16, %s142, [#allocation14]
    $region77: #{qa_forward.1} parent=1 // pred_fallthru
      _
    // Predicated region
    $region78: #{qa_forward.1} parent=1 // pred_check
      _
    $region79: #{qa_forward.1} parent=1 // pred_check_branch
      %146 = sbr.rel (0) target = $region81
    $region80: #{qa_forward.1} parent=1 // pred_region
      %147 = dma.done [#allocation3], 12288
    $region81: #{qa_forward.1} parent=1 // pred_fallthru
      _
    // Predicated region
    $region82: #{qa_forward.1} parent=1 // pred_check
      _
    $region83: #{qa_forward.1} parent=1 // pred_check_branch
      %149 = sbr.rel (0) target = $region85
    $region84: #{qa_forward.1} parent=1 // pred_region
      %150 = dma.done [#allocation5], 64
    $region85: #{qa_forward.1} parent=1 // pred_fallthru
      _
    // Predicated region
    $region86: #{qa_forward.1} parent=1 // pred_check
      _
    $region87: #{qa_forward.1} parent=1 // pred_check_branch
      %152 = sbr.rel (0) target = $region89
    $region88: #{qa_forward.1} parent=1 // pred_region
      %153 = dma.done [#allocation5], 16384
    $region89: #{qa_forward.1} parent=1 // pred_fallthru
      _
    // Predicated region
    $region90: #{qa_forward.1} parent=1 // pred_check
      _
    $region91: #{qa_forward.1} parent=1 // pred_check_branch
      %155 = sbr.rel (0) target = $region93
    $region92: #{qa_forward.1} parent=1 // pred_region
      %156 = dma.done [#allocation8], 16384
    $region93: #{qa_forward.1} parent=1 // pred_fallthru
      _
    // Predicated region
    $region94: #{qa_forward.1} parent=1 // pred_check
      _
    $region95: #{qa_forward.1} parent=1 // pred_check_branch
      %158 = sbr.rel (0) target = $region97
    $region96: #{qa_forward.1} parent=1 // pred_region
      %159 = dma.done [#allocation8], 64
    $region97: #{qa_forward.1} parent=1 // pred_fallthru
      _
    // Predicated region
    $region98: #{qa_forward.1} parent=1 // pred_check
      _
    $region99: #{qa_forward.1} parent=1 // pred_check_branch
      %161 = sbr.rel (0) target = $region101
    $region100: #{qa_forward.1} parent=1 // pred_region
      %162 = dma.done [#allocation11], 64
    $region101: #{qa_forward.1} parent=1 // pred_fallthru
      _
    // Predicated region
    $region102: #{qa_forward.1} parent=1 // pred_check
      _
    $region103: #{qa_forward.1} parent=1 // pred_check_branch
      %164 = sbr.rel (0) target = $region105
    $region104: #{qa_forward.1} parent=1 // pred_region
      %165 = dma.done [#allocation11], 2048
    $region105: #{qa_forward.1} parent=1 // pred_fallthru
      _
    // Predicated region
    $region106: #{qa_forward.1} parent=1 // pred_check
      _
    $region107: #{qa_forward.1} parent=1 // pred_check_branch
      %167 = sbr.rel (0) target = $region109
    $region108: #{qa_forward.1} parent=1 // pred_region
      %168 = dma.done [#allocation14], 16
    $region109: #{qa_forward.1} parent=1 // pred_fallthru
      _
    %v170 = vld [vmem:[%s0] sm:$0xff]
    %v171 = vld [vmem:[%s0 + $0x8] sm:$0xff]
    %v172 = vld [vmem:[%s1] sm:$0xff]
    %v173 = vld [vmem:[%s1 + $0x8] sm:$0xff]
    %v174 = vlaneseq
    %v175 = vand.u32 %v174, 127
    %vm176 = vcmp.ge.s32.totalorder %v175, 0
    %vm177 = vcmp.lt.s32.totalorder %v175, 64
    %vm178 = vmand %vm176, %vm177
    %v179 = vsel %vm178, 1, 0
    %v180 = vcvt.s32.f32 %v179
    %v181 = vpack.c.bf16 %v180, %v180
    %vm182 = vcmp.ge.s32.totalorder %v175, 64
    %vm183 = vcmp.lt.s32.totalorder %v175, 128
    %vm184 = vmand %vm182, %vm183
    %v185 = vsel %vm184, 1, 0
    %v186 = vcvt.s32.f32 %v185
    %v187 = vpack.c.bf16 %v186, %v186
    %v188 = vpack.c.bf16 %v171, %v170
    %v189 = vld [vmem:[#allocation2] sm:$0xff]
    %v190 = vld [vmem:[#allocation2 + $0x8] sm:$0xf]
    %v191 = vld [vmem:[#allocation2 + $0xc] sm:$0xff]
    %v192 = vld [vmem:[#allocation2 + $0x14] sm:$0xf]
    %v193 = vld [vmem:[#allocation2 + $0x18] sm:$0xff]
    %v194 = vld [vmem:[#allocation2 + $0x20] sm:$0xf]
    %v195 = vld [vmem:[#allocation2 + $0x24] sm:$0xff]
    %v196 = vld [vmem:[#allocation2 + $0x2c] sm:$0xf]
    %v197 = vld [vmem:[#allocation2 + $0x30] sm:$0xff]
    %v198 = vld [vmem:[#allocation2 + $0x38] sm:$0xf]
    %v199 = vld [vmem:[#allocation2 + $0x3c] sm:$0xff]
    %v200 = vld [vmem:[#allocation2 + $0x44] sm:$0xf]
    %v201 = vld [vmem:[#allocation2 + $0x48] sm:$0xff]
    %v202 = vld [vmem:[#allocation2 + $0x50] sm:$0xf]
    %v203 = vld [vmem:[#allocation2 + $0x54] sm:$0xff]
    %v204 = vld [vmem:[#allocation2 + $0x5c] sm:$0xf]
    %v205 = vld [vmem:[#allocation2 + $0x60] sm:$0xff]
    %v206 = vld [vmem:[#allocation2 + $0x68] sm:$0xf]
    %v207 = vld [vmem:[#allocation2 + $0x6c] sm:$0xff]
    %v208 = vld [vmem:[#allocation2 + $0x74] sm:$0xf]
    %v209 = vld [vmem:[#allocation2 + $0x78] sm:$0xff]
    %v210 = vld [vmem:[#allocation2 + $0x80] sm:$0xf]
    %v211 = vld [vmem:[#allocation2 + $0x84] sm:$0xff]
    %v212 = vld [vmem:[#allocation2 + $0x8c] sm:$0xf]
    %v213 = vld [vmem:[#allocation2 + $0x90] sm:$0xff]
    %v214 = vld [vmem:[#allocation2 + $0x98] sm:$0xf]
    %v215 = vld [vmem:[#allocation2 + $0x9c] sm:$0xff]
    %v216 = vld [vmem:[#allocation2 + $0xa4] sm:$0xf]
    %v217 = vld [vmem:[#allocation2 + $0xa8] sm:$0xff]
    %v218 = vld [vmem:[#allocation2 + $0xb0] sm:$0xf]
    %v219 = vld [vmem:[#allocation2 + $0xb4] sm:$0xff]
    %v220 = vld [vmem:[#allocation2 + $0xbc] sm:$0xf]
    %v221 = vld [vmem:[%s3] sm:$0x7]
    %v223 = vlaneseq
    %v224 = vshrl.u32 %v223, 7
    %v225 = vsub.s32 0, %v224
    %v226 = vrot.slane %v221, %v225
    %v227 = vlaneseq
    %v228 = vshrl.u32 %v227, 7
    %v229 = vsub.s32 1, %v228
    %v230 = vrot.slane %v221, %v229
    %v231 = vlaneseq
    %v232 = vshrl.u32 %v231, 7
    %v233 = vsub.s32 2, %v232
    %v234 = vrot.slane %v221, %v233
    %v270 = vunpack.c.l.b16 %v189
    %v271 = vunpack.c.h.b16 %v189
    %v272 = vunpack.c.l.b16 %v190
    %v273 = vunpack.c.l.b16 %v191
    %v274 = vunpack.c.h.b16 %v191
    %v275 = vunpack.c.l.b16 %v192
    %v276 = vunpack.c.l.b16 %v193
    %v277 = vunpack.c.h.b16 %v193
    %v278 = vunpack.c.l.b16 %v194
    %v279 = vunpack.c.l.b16 %v195
    %v280 = vunpack.c.h.b16 %v195
    %v281 = vunpack.c.l.b16 %v196
    %v282 = vunpack.c.l.b16 %v197
    %v283 = vunpack.c.h.b16 %v197
    %v284 = vunpack.c.l.b16 %v198
    %v285 = vunpack.c.l.b16 %v199
    %v286 = vunpack.c.h.b16 %v199
    %v287 = vunpack.c.l.b16 %v200
    %v288 = vunpack.c.l.b16 %v201
    %v289 = vunpack.c.h.b16 %v201
    %v290 = vunpack.c.l.b16 %v202
    %v291 = vunpack.c.l.b16 %v203
    %v292 = vunpack.c.h.b16 %v203
    %v293 = vunpack.c.l.b16 %v204
    %v294 = vunpack.c.l.b16 %v205
    %v295 = vunpack.c.h.b16 %v205
    %v296 = vunpack.c.l.b16 %v206
    %v297 = vunpack.c.l.b16 %v207
    %v298 = vunpack.c.h.b16 %v207
    %v299 = vunpack.c.l.b16 %v208
    %v300 = vunpack.c.l.b16 %v209
    %v301 = vunpack.c.h.b16 %v209
    %v302 = vunpack.c.l.b16 %v210
    %v303 = vunpack.c.l.b16 %v211
    %v304 = vunpack.c.h.b16 %v211
    %v305 = vunpack.c.l.b16 %v212
    %v306 = vunpack.c.l.b16 %v213
    %v307 = vunpack.c.h.b16 %v213
    %v308 = vunpack.c.l.b16 %v214
    %v309 = vunpack.c.l.b16 %v215
    %v310 = vunpack.c.h.b16 %v215
    %v311 = vunpack.c.l.b16 %v216
    %v312 = vunpack.c.l.b16 %v217
    %v313 = vunpack.c.h.b16 %v217
    %v314 = vunpack.c.l.b16 %v218
    %v315 = vunpack.c.l.b16 %v219
    %v316 = vunpack.c.h.b16 %v219
    %v317 = vunpack.c.l.b16 %v220
    %v318 = vpack.c.b16 %v273, %v270
    %v319 = vpack.c.b16 %v274, %v271
    %v320 = vpack.c.b16 %v275, %v272
    %v321 = vpack.c.b16 %v279, %v276
    %v322 = vpack.c.b16 %v280, %v277
    %v323 = vpack.c.b16 %v281, %v278
    %v324 = vpack.c.b16 %v285, %v282
    %v325 = vpack.c.b16 %v286, %v283
    %v326 = vpack.c.b16 %v287, %v284
    %v327 = vpack.c.b16 %v291, %v288
    %v328 = vpack.c.b16 %v292, %v289
    %v329 = vpack.c.b16 %v293, %v290
    %v330 = vpack.c.b16 %v297, %v294
    %v331 = vpack.c.b16 %v298, %v295
    %v332 = vpack.c.b16 %v299, %v296
    %v333 = vpack.c.b16 %v303, %v300
    %v334 = vpack.c.b16 %v304, %v301
    %v335 = vpack.c.b16 %v305, %v302
    %v336 = vpack.c.b16 %v309, %v306
    %v337 = vpack.c.b16 %v310, %v307
    %v338 = vpack.c.b16 %v311, %v308
    %v339 = vpack.c.b16 %v315, %v312
    %v340 = vpack.c.b16 %v316, %v313
    %v341 = vpack.c.b16 %v317, %v314
    %366 = vmatprep.subr.bf16.mxu0 %v340
    %367 = vmatpush1.bf16.msra.mxu0 %v339
    %368 = vmatprep.subr.bf16.mxu0 %v337
    %369 = vmatpush1.bf16.msra.mxu0 %v336
    %370 = vmatprep.subr.bf16.mxu0 %v334
    %371 = vmatpush1.bf16.msra.mxu0 %v333
    %372 = vmatprep.subr.bf16.mxu0 %v331
    %373 = vmatpush1.bf16.msra.mxu0 %v330
    %374 = vmatprep.subr.bf16.mxu0 %v328
    %375 = vmatpush1.bf16.msra.mxu0 %v327
    %376 = vmatprep.subr.bf16.mxu0 %v325
    %377 = vmatpush1.bf16.msra.mxu0 %v324
    %378 = vmatprep.subr.bf16.mxu0 %v322
    %379 = vmatpush1.bf16.msra.mxu0 %v321
    %380 = vmatprep.subr.bf16.mxu0 %v319
    %381 = vmatpush1.bf16.msra.mxu0 %v318
    %382 = vmatprep.subr.bf16.mxu0 0
    %383 = vmatpush2.bf16.msra.mxu0 0
    %384 = vmatprep.subr.bf16.mxu0 0
    %385 = vmatpush2.bf16.msra.mxu0 0
    %386 = vmatprep.subr.bf16.mxu0 0
    %387 = vmatpush2.bf16.msra.mxu0 0
    %388 = vmatprep.subr.bf16.mxu0 0
    %389 = vmatpush2.bf16.msra.mxu0 0
    %390 = vmatprep.subr.bf16.mxu0 0
    %391 = vmatpush2.bf16.msra.mxu0 0
    %392 = vmatprep.subr.bf16.mxu0 0
    %393 = vmatpush2.bf16.msra.mxu0 0
    %394 = vmatprep.subr.bf16.mxu0 0
    %395 = vmatpush2.bf16.msra.mxu0 0
    %396 = vmatprep.subr.bf16.mxu0 0
    %397 = vmatpush2.bf16.msra.mxu0 0
    %398 = vmatprep.mubr.bf16.mxu0 0
    %399 = vmatmul.mubr.bf16.gmra.mxu0 %v188
    %v400 = vpop.f32.mrf.mxu0
    %v401 = vadd.f32 %v226, %v400
    %v402 = vpop.f32.mrf.mxu0
    %v403 = vadd.f32 %v230, %v402
    %v404 = vpop.f32.mrf.mxu0
    %v405 = vadd.f32 %v226, %v404
    %v406 = vpop.f32.mrf.mxu0
    %v407 = vadd.f32 %v230, %v406
    %408 = vdwg.mxu0
    %409 = vmatprep.subr.bf16.mxu0 0
    %410 = vmatpush1.bf16.msra.mxu0 %v341
    %411 = vmatprep.subr.bf16.mxu0 0
    %412 = vmatpush1.bf16.msra.mxu0 %v338
    %413 = vmatprep.subr.bf16.mxu0 0
    %414 = vmatpush1.bf16.msra.mxu0 %v335
    %415 = vmatprep.subr.bf16.mxu0 0
    %416 = vmatpush1.bf16.msra.mxu0 %v332
    %417 = vmatprep.subr.bf16.mxu0 0
    %418 = vmatpush1.bf16.msra.mxu0 %v329
    %419 = vmatprep.subr.bf16.mxu0 0
    %420 = vmatpush1.bf16.msra.mxu0 %v326
    %421 = vmatprep.subr.bf16.mxu0 0
    %422 = vmatpush1.bf16.msra.mxu0 %v323
    %423 = vmatprep.subr.bf16.mxu0 0
    %424 = vmatpush1.bf16.msra.mxu0 %v320
    %425 = vmatprep.subr.bf16.mxu0 0
    %426 = vmatpush2.bf16.msra.mxu0 0
    %427 = vmatprep.subr.bf16.mxu0 0
    %428 = vmatpush2.bf16.msra.mxu0 0
    %429 = vmatprep.subr.bf16.mxu0 0
    %430 = vmatpush2.bf16.msra.mxu0 0
    %431 = vmatprep.subr.bf16.mxu0 0
    %432 = vmatpush2.bf16.msra.mxu0 0
    %433 = vmatprep.subr.bf16.mxu0 0
    %434 = vmatpush2.bf16.msra.mxu0 0
    %435 = vmatprep.subr.bf16.mxu0 0
    %436 = vmatpush2.bf16.msra.mxu0 0
    %437 = vmatprep.subr.bf16.mxu0 0
    %438 = vmatpush2.bf16.msra.mxu0 0
    %439 = vmatprep.subr.bf16.mxu0 0
    %440 = vmatpush2.bf16.msra.mxu0 0
    %441 = vmatprep.mubr.bf16.mxu0 0
    %442 = vmatmul.mubr.bf16.gmra.mxu0 %v188
    %v443 = vpop.f32.mrf.mxu0
    %v444 = vadd.f32 %v234, %v443
    %v445 = vpop.f32.mrf.mxu0
    %v446 = vpop.f32.mrf.mxu0
    %v447 = vadd.f32 %v234, %v446
    %v448 = vpop.f32.mrf.mxu0
    %449 = vdwg.mxu0
    %v450 = vpack.c.bf16 %v405, %v401
    %v451 = vpack.c.bf16 %v407, %v403
    %v452 = vpack.c.bf16 %v447, %v444
    %v453 = vmul.bf16 %v450, %v181
    %454 = vmatprep.subr.bf16.mxu0 0
    %455 = vmatpush1.bf16.xpose.msra.mxu0 0
    %456 = vmatprep.subr.bf16.mxu0 0
    %457 = vmatpush1.bf16.xpose.msra.mxu0 0
    %458 = vmatprep.subr.bf16.mxu0 0
    %459 = vmatpush1.bf16.xpose.msra.mxu0 0
    %460 = vmatprep.subr.bf16.mxu0 0
    %461 = vmatpush1.bf16.xpose.msra.mxu0 0
    %462 = vmatprep.subr.bf16.mxu0 0
    %463 = vmatpush1.bf16.xpose.msra.mxu0 0
    %464 = vmatprep.subr.bf16.mxu0 0
    %465 = vmatpush1.bf16.xpose.msra.mxu0 0
    %466 = vmatprep.subr.bf16.mxu0 0
    %467 = vmatpush1.bf16.xpose.msra.mxu0 0
    %468 = vmatprep.subr.bf16.mxu0 0
    %469 = vmatpush1.bf16.xpose.msra.mxu0 %v451
    %470 = vmatprep.subr.bf16.mxu0 0
    %471 = vmatpush2.bf16.xpose.msra.mxu0 0
    %472 = vmatprep.subr.bf16.mxu0 0
    %473 = vmatpush2.bf16.xpose.msra.mxu0 0
    %474 = vmatprep.subr.bf16.mxu0 0
    %475 = vmatpush2.bf16.xpose.msra.mxu0 0
    %476 = vmatprep.subr.bf16.mxu0 0
    %477 = vmatpush2.bf16.xpose.msra.mxu0 0
    %478 = vmatprep.subr.bf16.mxu0 0
    %479 = vmatpush2.bf16.xpose.msra.mxu0 0
    %480 = vmatprep.subr.bf16.mxu0 0
    %481 = vmatpush2.bf16.xpose.msra.mxu0 0
    %482 = vmatprep.subr.bf16.mxu0 0
    %483 = vmatpush2.bf16.xpose.msra.mxu0 0
    %484 = vmatprep.subr.bf16.mxu0 0
    %485 = vmatpush2.bf16.xpose.msra.mxu0 0
    %486 = vmatprep.mubr.bf16.mxu0 0
    %487 = vmatmul.mubr.bf16.gmra.mxu0 %v453
    %v488 = vpop.f32.mrf.mxu0
    %v489 = vadd.f32 %v172, %v488
    %v490 = vpop.f32.mrf.mxu0
    %v491 = vpop.f32.mrf.mxu0
    %v492 = vadd.f32 %v173, %v491
    %v493 = vpop.f32.mrf.mxu0
    %494 = vdwg.mxu0
    %vm495 = vcmask 130048
    %v496 = vsel %vm495, %v489, -inf
    %497 = vmax.xlane.f32.xlu0 %v496
    %v498 = vpop.xlane.xlu0 %497
    %v499 = vsel %vm495, %v492, -inf
    %500 = vmax.xlane.f32.xlu0 %v499
    %v501 = vpop.xlane.xlu0 %500
    %v502 = vsub.f32 %v489, %v498
    %v503 = vsub.f32 %v492, %v501
    %v504 = vmul.f32 %v502, 1.442695
    %v505 = vpow.pop %v504
    %v506 = vmul.f32 %v503, 1.442695
    %v507 = vpow.pop %v506
    %v508 = vsel %vm495, %v505, 0.0
    %509 = vadd.xlane.f32.xlu0 %v508
    %v510 = vpop.xlane.xlu0 %509
    %v511 = vsel %vm495, %v507, 0.0
    %512 = vadd.xlane.f32.xlu0 %v511
    %v513 = vpop.xlane.xlu0 %512
    %v514 = vrcp.pop %v510
    %v515 = vrcp.pop %v513
    %v516 = vmul.f32 %v505, %v514
    %v517 = vmul.f32 %v507, %v515
    %v518 = vpack.c.bf16 %v517, %v516
    %v520 = vsel %vm495, %v518, 0
    %522 = vmatprep.subr.bf16.mxu0 0
    %523 = vmatpush1.bf16.msra.mxu0 0
    %524 = vmatprep.subr.bf16.mxu0 0
    %525 = vmatpush1.bf16.msra.mxu0 0
    %526 = vmatprep.subr.bf16.mxu0 0
    %527 = vmatpush1.bf16.msra.mxu0 0
    %528 = vmatprep.subr.bf16.mxu0 0
    %529 = vmatpush1.bf16.msra.mxu0 0
    %530 = vmatprep.subr.bf16.mxu0 0
    %531 = vmatpush1.bf16.msra.mxu0 0
    %532 = vmatprep.subr.bf16.mxu0 0
    %533 = vmatpush1.bf16.msra.mxu0 0
    %534 = vmatprep.subr.bf16.mxu0 0
    %535 = vmatpush1.bf16.msra.mxu0 0
    %536 = vmatprep.subr.bf16.mxu0 0
    %537 = vmatpush1.bf16.msra.mxu0 %v452
    %538 = vmatprep.subr.bf16.mxu0 0
    %539 = vmatpush2.bf16.msra.mxu0 0
    %540 = vmatprep.subr.bf16.mxu0 0
    %541 = vmatpush2.bf16.msra.mxu0 0
    %542 = vmatprep.subr.bf16.mxu0 0
    %543 = vmatpush2.bf16.msra.mxu0 0
    %544 = vmatprep.subr.bf16.mxu0 0
    %545 = vmatpush2.bf16.msra.mxu0 0
    %546 = vmatprep.subr.bf16.mxu0 0
    %547 = vmatpush2.bf16.msra.mxu0 0
    %548 = vmatprep.subr.bf16.mxu0 0
    %549 = vmatpush2.bf16.msra.mxu0 0
    %550 = vmatprep.subr.bf16.mxu0 0
    %551 = vmatpush2.bf16.msra.mxu0 0
    %552 = vmatprep.subr.bf16.mxu0 0
    %553 = vmatpush2.bf16.msra.mxu0 0
    %554 = vmatprep.mubr.bf16.mxu0 0
    %555 = vmatmul.mubr.bf16.gmra.mxu0 %v520
    %v556 = vpop.f32.mrf.mxu0
    %v557 = vadd.f32 0.0, %v556
    %v558 = vpop.f32.mrf.mxu0
    %v559 = vpop.f32.mrf.mxu0
    %v560 = vadd.f32 0.0, %v559
    %v561 = vpop.f32.mrf.mxu0
    %562 = vdwg.mxu0
    %v563 = vmul.f32 %v557, %v180
    %v564 = vmul.f32 %v560, %v180
    %v565 = vmul.bf16 %v450, %v187
    %566 = vmatprep.subr.bf16.mxu0 0
    %567 = vmatpush1.bf16.xpose.msra.mxu0 0
    %568 = vmatprep.subr.bf16.mxu0 0
    %569 = vmatpush1.bf16.xpose.msra.mxu0 0
    %570 = vmatprep.subr.bf16.mxu0 0
    %571 = vmatpush1.bf16.xpose.msra.mxu0 0
    %572 = vmatprep.subr.bf16.mxu0 0
    %573 = vmatpush1.bf16.xpose.msra.mxu0 0
    %574 = vmatprep.subr.bf16.mxu0 0
    %575 = vmatpush1.bf16.xpose.msra.mxu0 0
    %576 = vmatprep.subr.bf16.mxu0 0
    %577 = vmatpush1.bf16.xpose.msra.mxu0 0
    %578 = vmatprep.subr.bf16.mxu0 0
    %579 = vmatpush1.bf16.xpose.msra.mxu0 0
    %580 = vmatprep.subr.bf16.mxu0 0
    %581 = vmatpush1.bf16.xpose.msra.mxu0 %v451
    %582 = vmatprep.subr.bf16.mxu0 0
    %583 = vmatpush2.bf16.xpose.msra.mxu0 0
    %584 = vmatprep.subr.bf16.mxu0 0
    %585 = vmatpush2.bf16.xpose.msra.mxu0 0
    %586 = vmatprep.subr.bf16.mxu0 0
    %587 = vmatpush2.bf16.xpose.msra.mxu0 0
    %588 = vmatprep.subr.bf16.mxu0 0
    %589 = vmatpush2.bf16.xpose.msra.mxu0 0
    %590 = vmatprep.subr.bf16.mxu0 0
    %591 = vmatpush2.bf16.xpose.msra.mxu0 0
    %592 = vmatprep.subr.bf16.mxu0 0
    %593 = vmatpush2.bf16.xpose.msra.mxu0 0
    %594 = vmatprep.subr.bf16.mxu0 0
    %595 = vmatpush2.bf16.xpose.msra.mxu0 0
    %596 = vmatprep.subr.bf16.mxu0 0
    %597 = vmatpush2.bf16.xpose.msra.mxu0 0
    %598 = vmatprep.mubr.bf16.mxu0 0
    %599 = vmatmul.mubr.bf16.gmra.mxu0 %v565
    %v600 = vpop.f32.mrf.mxu0
    %v601 = vadd.f32 %v172, %v600
    %v602 = vpop.f32.mrf.mxu0
    %v603 = vpop.f32.mrf.mxu0
    %v604 = vadd.f32 %v173, %v603
    %v605 = vpop.f32.mrf.mxu0
    %606 = vdwg.mxu0
    %v607 = vsel %vm495, %v601, -inf
    %608 = vmax.xlane.f32.xlu0 %v607
    %v609 = vpop.xlane.xlu0 %608
    %v610 = vsel %vm495, %v604, -inf
    %611 = vmax.xlane.f32.xlu0 %v610
    %v612 = vpop.xlane.xlu0 %611
    %v613 = vsub.f32 %v601, %v609
    %v614 = vsub.f32 %v604, %v612
    %v615 = vmul.f32 %v613, 1.442695
    %v616 = vpow.pop %v615
    %v617 = vmul.f32 %v614, 1.442695
    %v618 = vpow.pop %v617
    %v619 = vsel %vm495, %v616, 0.0
    %620 = vadd.xlane.f32.xlu0 %v619
    %v621 = vpop.xlane.xlu0 %620
    %v622 = vsel %vm495, %v618, 0.0
    %623 = vadd.xlane.f32.xlu0 %v622
    %v624 = vpop.xlane.xlu0 %623
    %v625 = vrcp.pop %v621
    %v626 = vrcp.pop %v624
    %v627 = vmul.f32 %v616, %v625
    %v628 = vmul.f32 %v618, %v626
    %v629 = vpack.c.bf16 %v628, %v627
    %v631 = vsel %vm495, %v629, 0
    %633 = vmatprep.subr.bf16.mxu0 0
    %634 = vmatpush1.bf16.msra.mxu0 0
    %635 = vmatprep.subr.bf16.mxu0 0
    %636 = vmatpush1.bf16.msra.mxu0 0
    %637 = vmatprep.subr.bf16.mxu0 0
    %638 = vmatpush1.bf16.msra.mxu0 0
    %639 = vmatprep.subr.bf16.mxu0 0
    %640 = vmatpush1.bf16.msra.mxu0 0
    %641 = vmatprep.subr.bf16.mxu0 0
    %642 = vmatpush1.bf16.msra.mxu0 0
    %643 = vmatprep.subr.bf16.mxu0 0
    %644 = vmatpush1.bf16.msra.mxu0 0
    %645 = vmatprep.subr.bf16.mxu0 0
    %646 = vmatpush1.bf16.msra.mxu0 0
    %647 = vmatprep.subr.bf16.mxu0 0
    %648 = vmatpush1.bf16.msra.mxu0 %v452
    %649 = vmatprep.subr.bf16.mxu0 0
    %650 = vmatpush2.bf16.msra.mxu0 0
    %651 = vmatprep.subr.bf16.mxu0 0
    %652 = vmatpush2.bf16.msra.mxu0 0
    %653 = vmatprep.subr.bf16.mxu0 0
    %654 = vmatpush2.bf16.msra.mxu0 0
    %655 = vmatprep.subr.bf16.mxu0 0
    %656 = vmatpush2.bf16.msra.mxu0 0
    %657 = vmatprep.subr.bf16.mxu0 0
    %658 = vmatpush2.bf16.msra.mxu0 0
    %659 = vmatprep.subr.bf16.mxu0 0
    %660 = vmatpush2.bf16.msra.mxu0 0
    %661 = vmatprep.subr.bf16.mxu0 0
    %662 = vmatpush2.bf16.msra.mxu0 0
    %663 = vmatprep.subr.bf16.mxu0 0
    %664 = vmatpush2.bf16.msra.mxu0 0
    %665 = vmatprep.mubr.bf16.mxu0 0
    %666 = vmatmul.mubr.bf16.gmra.mxu0 %v631
    %v667 = vpop.f32.mrf.mxu0
    %v668 = vadd.f32 0.0, %v667
    %v669 = vpop.f32.mrf.mxu0
    %v670 = vpop.f32.mrf.mxu0
    %v671 = vadd.f32 0.0, %v670
    %v672 = vpop.f32.mrf.mxu0
    %673 = vdwg.mxu0
    %v674 = vmul.f32 %v668, %v186
    %v675 = vmul.f32 %v671, %v186
    %v676 = vadd.f32 %v563, %v674
    %v677 = vadd.f32 %v564, %v675
    %v678 = vpack.c.bf16 %v677, %v676
    %v679 = vld [vmem:[%s4] sm:$0xf]
    %v680 = vld [vmem:[%s4 + $0x4] sm:$0xf]
    %v681 = vld [vmem:[%s4 + $0x8] sm:$0xf]
    %v682 = vld [vmem:[%s4 + $0xc] sm:$0xf]
    %v683 = vld [vmem:[%s4 + $0x10] sm:$0xf]
    %v684 = vld [vmem:[%s4 + $0x14] sm:$0xf]
    %v685 = vld [vmem:[%s4 + $0x18] sm:$0xf]
    %v686 = vld [vmem:[%s4 + $0x1c] sm:$0xf]
    %v687 = vld [vmem:[%s4 + $0x20] sm:$0xf]
    %v688 = vld [vmem:[%s4 + $0x24] sm:$0xf]
    %v689 = vld [vmem:[%s4 + $0x28] sm:$0xf]
    %v690 = vld [vmem:[%s4 + $0x2c] sm:$0xf]
    %v691 = vld [vmem:[%s4 + $0x30] sm:$0xf]
    %v692 = vld [vmem:[%s4 + $0x34] sm:$0xf]
    %v693 = vld [vmem:[%s4 + $0x38] sm:$0xf]
    %v694 = vld [vmem:[%s4 + $0x3c] sm:$0xf]
    %v695 = vld [vmem:[%s5] sm:$0x1]
    %v697 = vlaneseq
    %v698 = vshrl.u32 %v697, 7
    %v699 = vsub.s32 0, %v698
    %v700 = vrot.slane %v695, %v699
    %v718 = vunpack.c.l.b16 %v679
    %v719 = vunpack.c.l.b16 %v680
    %v720 = vunpack.c.l.b16 %v681
    %v721 = vunpack.c.l.b16 %v682
    %v722 = vunpack.c.l.b16 %v683
    %v723 = vunpack.c.l.b16 %v684
    %v724 = vunpack.c.l.b16 %v685
    %v725 = vunpack.c.l.b16 %v686
    %v726 = vunpack.c.l.b16 %v687
    %v727 = vunpack.c.l.b16 %v688
    %v728 = vunpack.c.l.b16 %v689
    %v729 = vunpack.c.l.b16 %v690
    %v730 = vunpack.c.l.b16 %v691
    %v731 = vunpack.c.l.b16 %v692
    %v732 = vunpack.c.l.b16 %v693
    %v733 = vunpack.c.l.b16 %v694
    %v734 = vpack.c.b16 %v719, %v718
    %v735 = vpack.c.b16 %v721, %v720
    %v736 = vpack.c.b16 %v723, %v722
    %v737 = vpack.c.b16 %v725, %v724
    %v738 = vpack.c.b16 %v727, %v726
    %v739 = vpack.c.b16 %v729, %v728
    %v740 = vpack.c.b16 %v731, %v730
    %v741 = vpack.c.b16 %v733, %v732
    %750 = vmatprep.subr.bf16.mxu0 0
    %751 = vmatpush1.bf16.msra.mxu0 %v741
    %752 = vmatprep.subr.bf16.mxu0 0
    %753 = vmatpush1.bf16.msra.mxu0 %v740
    %754 = vmatprep.subr.bf16.mxu0 0
    %755 = vmatpush1.bf16.msra.mxu0 %v739
    %756 = vmatprep.subr.bf16.mxu0 0
    %757 = vmatpush1.bf16.msra.mxu0 %v738
    %758 = vmatprep.subr.bf16.mxu0 0
    %759 = vmatpush1.bf16.msra.mxu0 %v737
    %760 = vmatprep.subr.bf16.mxu0 0
    %761 = vmatpush1.bf16.msra.mxu0 %v736
    %762 = vmatprep.subr.bf16.mxu0 0
    %763 = vmatpush1.bf16.msra.mxu0 %v735
    %764 = vmatprep.subr.bf16.mxu0 0
    %765 = vmatpush1.bf16.msra.mxu0 %v734
    %766 = vmatprep.subr.bf16.mxu0 0
    %767 = vmatpush2.bf16.msra.mxu0 0
    %768 = vmatprep.subr.bf16.mxu0 0
    %769 = vmatpush2.bf16.msra.mxu0 0
    %770 = vmatprep.subr.bf16.mxu0 0
    %771 = vmatpush2.bf16.msra.mxu0 0
    %772 = vmatprep.subr.bf16.mxu0 0
    %773 = vmatpush2.bf16.msra.mxu0 0
    %774 = vmatprep.subr.bf16.mxu0 0
    %775 = vmatpush2.bf16.msra.mxu0 0
    %776 = vmatprep.subr.bf16.mxu0 0
    %777 = vmatpush2.bf16.msra.mxu0 0
    %778 = vmatprep.subr.bf16.mxu0 0
    %779 = vmatpush2.bf16.msra.mxu0 0
    %780 = vmatprep.subr.bf16.mxu0 0
    %781 = vmatpush2.bf16.msra.mxu0 0
    %782 = vmatprep.mubr.bf16.mxu0 0
    %783 = vmatmul.mubr.bf16.gmra.mxu0 %v678
    %v784 = vpop.f32.mrf.mxu0
    %v785 = vadd.f32 %v700, %v784
    %v786 = vpop.f32.mrf.mxu0
    %v787 = vpop.f32.mrf.mxu0
    %v788 = vadd.f32 %v700, %v787
    %v789 = vpop.f32.mrf.mxu0
    %790 = vdwg.mxu0
    %v791 = vadd.f32 %v785, %v170
    %v792 = vadd.f32 %v788, %v171
    %v793 = vld [vmem:[%s6] sm:$0x1]
    %v794 = vld [vmem:[#allocation4] sm:$0x1]
    %795 = vadd.xlane.f32.xlu0 %v791
    %v796 = vpop.xlane.xlu0 %795
    %797 = vadd.xlane.f32.xlu0 %v792
    %v798 = vpop.xlane.xlu0 %797
    %v799 = vrcp.pop 128.0
    %v800 = vmul.f32 %v796, %v799
    %v801 = vmul.f32 %v798, %v799
    %v802 = vsub.f32 %v791, %v800
    %v803 = vsub.f32 %v792, %v801
    %v804 = vmul.f32 %v802, %v802
    %v805 = vmul.f32 %v803, %v803
    %806 = vadd.xlane.f32.xlu0 %v804
    %v807 = vpop.xlane.xlu0 %806
    %808 = vadd.xlane.f32.xlu0 %v805
    %v809 = vpop.xlane.xlu0 %808
    %v810 = vmul.f32 %v807, %v799
    %v811 = vmul.f32 %v809, %v799
    %v812 = vadd.f32 %v810, 1e-12
    %v813 = vadd.f32 %v811, 1e-12
    %v814 = vrsqrt.pop %v812
    %v815 = vrsqrt.pop %v813
    %v816 = vmul.f32 %v802, %v814
    %v817 = vmul.f32 %v803, %v815
    %v819 = vlaneseq
    %v820 = vshrl.u32 %v819, 7
    %v821 = vsub.s32 0, %v820
    %v822 = vrot.slane %v793, %v821
    %v824 = vmul.f32 %v816, %v822
    %v825 = vmul.f32 %v817, %v822
    %v827 = vlaneseq
    %v828 = vshrl.u32 %v827, 7
    %v829 = vsub.s32 0, %v828
    %v830 = vrot.slane %v794, %v829
    %v832 = vadd.f32 %v824, %v830
    %v833 = vadd.f32 %v825, %v830
    %v834 = vpack.c.bf16 %v833, %v832
    %v835 = vld [vmem:[#allocation6] sm:$0xff]
    %v836 = vld [vmem:[#allocation6 + $0x8] sm:$0xff]
    %v837 = vld [vmem:[#allocation6 + $0x10] sm:$0xff]
    %v838 = vld [vmem:[#allocation6 + $0x18] sm:$0xff]
    %v839 = vld [vmem:[#allocation6 + $0x20] sm:$0xff]
    %v840 = vld [vmem:[#allocation6 + $0x28] sm:$0xff]
    %v841 = vld [vmem:[#allocation6 + $0x30] sm:$0xff]
    %v842 = vld [vmem:[#allocation6 + $0x38] sm:$0xff]
    %v843 = vld [vmem:[#allocation6 + $0x40] sm:$0xff]
    %v844 = vld [vmem:[#allocation6 + $0x48] sm:$0xff]
    %v845 = vld [vmem:[#allocation6 + $0x50] sm:$0xff]
    %v846 = vld [vmem:[#allocation6 + $0x58] sm:$0xff]
    %v847 = vld [vmem:[#allocation6 + $0x60] sm:$0xff]
    %v848 = vld [vmem:[#allocation6 + $0x68] sm:$0xff]
    %v849 = vld [vmem:[#allocation6 + $0x70] sm:$0xff]
    %v850 = vld [vmem:[#allocation6 + $0x78] sm:$0xff]
    %v851 = vld [vmem:[#allocation6 + $0x80] sm:$0xff]
    %v852 = vld [vmem:[#allocation6 + $0x88] sm:$0xff]
    %v853 = vld [vmem:[#allocation6 + $0x90] sm:$0xff]
    %v854 = vld [vmem:[#allocation6 + $0x98] sm:$0xff]
    %v855 = vld [vmem:[#allocation6 + $0xa0] sm:$0xff]
    %v856 = vld [vmem:[#allocation6 + $0xa8] sm:$0xff]
    %v857 = vld [vmem:[#allocation6 + $0xb0] sm:$0xff]
    %v858 = vld [vmem:[#allocation6 + $0xb8] sm:$0xff]
    %v859 = vld [vmem:[#allocation6 + $0xc0] sm:$0xff]
    %v860 = vld [vmem:[#allocation6 + $0xc8] sm:$0xff]
    %v861 = vld [vmem:[#allocation6 + $0xd0] sm:$0xff]
    %v862 = vld [vmem:[#allocation6 + $0xd8] sm:$0xff]
    %v863 = vld [vmem:[#allocation6 + $0xe0] sm:$0xff]
    %v864 = vld [vmem:[#allocation6 + $0xe8] sm:$0xff]
    %v865 = vld [vmem:[#allocation6 + $0xf0] sm:$0xff]
    %v866 = vld [vmem:[#allocation6 + $0xf8] sm:$0xff]
    %v867 = vld [vmem:[%s9] sm:$0xf]
    %v869 = vlaneseq
    %v870 = vshrl.u32 %v869, 7
    %v871 = vsub.s32 0, %v870
    %v872 = vrot.slane %v867, %v871
    %v873 = vlaneseq
    %v874 = vshrl.u32 %v873, 7
    %v875 = vsub.s32 1, %v874
    %v876 = vrot.slane %v867, %v875
    %v877 = vlaneseq
    %v878 = vshrl.u32 %v877, 7
    %v879 = vsub.s32 2, %v878
    %v880 = vrot.slane %v867, %v879
    %v881 = vlaneseq
    %v882 = vshrl.u32 %v881, 7
    %v883 = vsub.s32 3, %v882
    %v884 = vrot.slane %v867, %v883
    %v921 = vunpack.c.l.b16 %v835
    %v922 = vunpack.c.h.b16 %v835
    %v923 = vunpack.c.l.b16 %v836
    %v924 = vunpack.c.h.b16 %v836
    %v925 = vunpack.c.l.b16 %v837
    %v926 = vunpack.c.h.b16 %v837
    %v927 = vunpack.c.l.b16 %v838
    %v928 = vunpack.c.h.b16 %v838
    %v929 = vunpack.c.l.b16 %v839
    %v930 = vunpack.c.h.b16 %v839
    %v931 = vunpack.c.l.b16 %v840
    %v932 = vunpack.c.h.b16 %v840
    %v933 = vunpack.c.l.b16 %v841
    %v934 = vunpack.c.h.b16 %v841
    %v935 = vunpack.c.l.b16 %v842
    %v936 = vunpack.c.h.b16 %v842
    %v937 = vunpack.c.l.b16 %v843
    %v938 = vunpack.c.h.b16 %v843
    %v939 = vunpack.c.l.b16 %v844
    %v940 = vunpack.c.h.b16 %v844
    %v941 = vunpack.c.l.b16 %v845
    %v942 = vunpack.c.h.b16 %v845
    %v943 = vunpack.c.l.b16 %v846
    %v944 = vunpack.c.h.b16 %v846
    %v945 = vunpack.c.l.b16 %v847
    %v946 = vunpack.c.h.b16 %v847
    %v947 = vunpack.c.l.b16 %v848
    %v948 = vunpack.c.h.b16 %v848
    %v949 = vunpack.c.l.b16 %v849
    %v950 = vunpack.c.h.b16 %v849
    %v951 = vunpack.c.l.b16 %v850
    %v952 = vunpack.c.h.b16 %v850
    %v953 = vunpack.c.l.b16 %v851
    %v954 = vunpack.c.h.b16 %v851
    %v955 = vunpack.c.l.b16 %v852
    %v956 = vunpack.c.h.b16 %v852
    %v957 = vunpack.c.l.b16 %v853
    %v958 = vunpack.c.h.b16 %v853
    %v959 = vunpack.c.l.b16 %v854
    %v960 = vunpack.c.h.b16 %v854
    %v961 = vunpack.c.l.b16 %v855
    %v962 = vunpack.c.h.b16 %v855
    %v963 = vunpack.c.l.b16 %v856
    %v964 = vunpack.c.h.b16 %v856
    %v965 = vunpack.c.l.b16 %v857
    %v966 = vunpack.c.h.b16 %v857
    %v967 = vunpack.c.l.b16 %v858
    %v968 = vunpack.c.h.b16 %v858
    %v969 = vunpack.c.l.b16 %v859
    %v970 = vunpack.c.h.b16 %v859
    %v971 = vunpack.c.l.b16 %v860
    %v972 = vunpack.c.h.b16 %v860
    %v973 = vunpack.c.l.b16 %v861
    %v974 = vunpack.c.h.b16 %v861
    %v975 = vunpack.c.l.b16 %v862
    %v976 = vunpack.c.h.b16 %v862
    %v977 = vunpack.c.l.b16 %v863
    %v978 = vunpack.c.h.b16 %v863
    %v979 = vunpack.c.l.b16 %v864
    %v980 = vunpack.c.h.b16 %v864
    %v981 = vunpack.c.l.b16 %v865
    %v982 = vunpack.c.h.b16 %v865
    %v983 = vunpack.c.l.b16 %v866
    %v984 = vunpack.c.h.b16 %v866
    %v985 = vpack.c.b16 %v925, %v921
    %v986 = vpack.c.b16 %v926, %v922
    %v987 = vpack.c.b16 %v927, %v923
    %v988 = vpack.c.b16 %v928, %v924
    %v989 = vpack.c.b16 %v933, %v929
    %v990 = vpack.c.b16 %v934, %v930
    %v991 = vpack.c.b16 %v935, %v931
    %v992 = vpack.c.b16 %v936, %v932
    %v993 = vpack.c.b16 %v941, %v937
    %v994 = vpack.c.b16 %v942, %v938
    %v995 = vpack.c.b16 %v943, %v939
    %v996 = vpack.c.b16 %v944, %v940
    %v997 = vpack.c.b16 %v949, %v945
    %v998 = vpack.c.b16 %v950, %v946
    %v999 = vpack.c.b16 %v951, %v947
    %v1000 = vpack.c.b16 %v952, %v948
    %v1001 = vpack.c.b16 %v957, %v953
    %v1002 = vpack.c.b16 %v958, %v954
    %v1003 = vpack.c.b16 %v959, %v955
    %v1004 = vpack.c.b16 %v960, %v956
    %v1005 = vpack.c.b16 %v965, %v961
    %v1006 = vpack.c.b16 %v966, %v962
    %v1007 = vpack.c.b16 %v967, %v963
    %v1008 = vpack.c.b16 %v968, %v964
    %v1009 = vpack.c.b16 %v973, %v969
    %v1010 = vpack.c.b16 %v974, %v970
    %v1011 = vpack.c.b16 %v975, %v971
    %v1012 = vpack.c.b16 %v976, %v972
    %v1013 = vpack.c.b16 %v981, %v977
    %v1014 = vpack.c.b16 %v982, %v978
    %v1015 = vpack.c.b16 %v983, %v979
    %v1016 = vpack.c.b16 %v984, %v980
    %1049 = vmatprep.subr.bf16.mxu0 %v1014
    %1050 = vmatpush1.bf16.msra.mxu0 %v1013
    %1051 = vmatprep.subr.bf16.mxu0 %v1010
    %1052 = vmatpush1.bf16.msra.mxu0 %v1009
    %1053 = vmatprep.subr.bf16.mxu0 %v1006
    %1054 = vmatpush1.bf16.msra.mxu0 %v1005
    %1055 = vmatprep.subr.bf16.mxu0 %v1002
    %1056 = vmatpush1.bf16.msra.mxu0 %v1001
    %1057 = vmatprep.subr.bf16.mxu0 %v998
    %1058 = vmatpush1.bf16.msra.mxu0 %v997
    %1059 = vmatprep.subr.bf16.mxu0 %v994
    %1060 = vmatpush1.bf16.msra.mxu0 %v993
    %1061 = vmatprep.subr.bf16.mxu0 %v990
    %1062 = vmatpush1.bf16.msra.mxu0 %v989
    %1063 = vmatprep.subr.bf16.mxu0 %v986
    %1064 = vmatpush1.bf16.msra.mxu0 %v985
    %1065 = vmatprep.subr.bf16.mxu0 0
    %1066 = vmatpush2.bf16.msra.mxu0 0
    %1067 = vmatprep.subr.bf16.mxu0 0
    %1068 = vmatpush2.bf16.msra.mxu0 0
    %1069 = vmatprep.subr.bf16.mxu0 0
    %1070 = vmatpush2.bf16.msra.mxu0 0
    %1071 = vmatprep.subr.bf16.mxu0 0
    %1072 = vmatpush2.bf16.msra.mxu0 0
    %1073 = vmatprep.subr.bf16.mxu0 0
    %1074 = vmatpush2.bf16.msra.mxu0 0
    %1075 = vmatprep.subr.bf16.mxu0 0
    %1076 = vmatpush2.bf16.msra.mxu0 0
    %1077 = vmatprep.subr.bf16.mxu0 0
    %1078 = vmatpush2.bf16.msra.mxu0 0
    %1079 = vmatprep.subr.bf16.mxu0 0
    %1080 = vmatpush2.bf16.msra.mxu0 0
    %1081 = vmatprep.mubr.bf16.mxu0 0
    %1082 = vmatmul.mubr.bf16.gmra.mxu0 %v834
    %v1083 = vpop.f32.mrf.mxu0
    %v1084 = vadd.f32 %v872, %v1083
    %v1085 = vpop.f32.mrf.mxu0
    %v1086 = vadd.f32 %v876, %v1085
    %v1087 = vpop.f32.mrf.mxu0
    %v1088 = vadd.f32 %v872, %v1087
    %v1089 = vpop.f32.mrf.mxu0
    %v1090 = vadd.f32 %v876, %v1089
    %1091 = vdwg.mxu0
    %1092 = vmatprep.subr.bf16.mxu0 %v1016
    %1093 = vmatpush1.bf16.msra.mxu0 %v1015
    %1094 = vmatprep.subr.bf16.mxu0 %v1012
    %1095 = vmatpush1.bf16.msra.mxu0 %v1011
    %1096 = vmatprep.subr.bf16.mxu0 %v1008
    %1097 = vmatpush1.bf16.msra.mxu0 %v1007
    %1098 = vmatprep.subr.bf16.mxu0 %v1004
    %1099 = vmatpush1.bf16.msra.mxu0 %v1003
    %1100 = vmatprep.subr.bf16.mxu0 %v1000
    %1101 = vmatpush1.bf16.msra.mxu0 %v999
    %1102 = vmatprep.subr.bf16.mxu0 %v996
    %1103 = vmatpush1.bf16.msra.mxu0 %v995
    %1104 = vmatprep.subr.bf16.mxu0 %v992
    %1105 = vmatpush1.bf16.msra.mxu0 %v991
    %1106 = vmatprep.subr.bf16.mxu0 %v988
    %1107 = vmatpush1.bf16.msra.mxu0 %v987
    %1108 = vmatprep.subr.bf16.mxu0 0
    %1109 = vmatpush2.bf16.msra.mxu0 0
    %1110 = vmatprep.subr.bf16.mxu0 0
    %1111 = vmatpush2.bf16.msra.mxu0 0
    %1112 = vmatprep.subr.bf16.mxu0 0
    %1113 = vmatpush2.bf16.msra.mxu0 0
    %1114 = vmatprep.subr.bf16.mxu0 0
    %1115 = vmatpush2.bf16.msra.mxu0 0
    %1116 = vmatprep.subr.bf16.mxu0 0
    %1117 = vmatpush2.bf16.msra.mxu0 0
    %1118 = vmatprep.subr.bf16.mxu0 0
    %1119 = vmatpush2.bf16.msra.mxu0 0
    %1120 = vmatprep.subr.bf16.mxu0 0
    %1121 = vmatpush2.bf16.msra.mxu0 0
    %1122 = vmatprep.subr.bf16.mxu0 0
    %1123 = vmatpush2.bf16.msra.mxu0 0
    %1124 = vmatprep.mubr.bf16.mxu0 0
    %1125 = vmatmul.mubr.bf16.gmra.mxu0 %v834
    %v1126 = vpop.f32.mrf.mxu0
    %v1127 = vadd.f32 %v880, %v1126
    %v1128 = vpop.f32.mrf.mxu0
    %v1129 = vadd.f32 %v884, %v1128
    %v1130 = vpop.f32.mrf.mxu0
    %v1131 = vadd.f32 %v880, %v1130
    %v1132 = vpop.f32.mrf.mxu0
    %v1133 = vadd.f32 %v884, %v1132
    %1134 = vdwg.mxu0
    %v1135 = vmul.f32 %v1084, 0.5
    %v1136 = vmul.f32 %v1086, 0.5
    %v1137 = vmul.f32 %v1127, 0.5
    %v1138 = vmul.f32 %v1129, 0.5
    %v1139 = vmul.f32 %v1088, 0.5
    %v1140 = vmul.f32 %v1090, 0.5
    %v1141 = vmul.f32 %v1131, 0.5
    %v1142 = vmul.f32 %v1133, 0.5
    %v1143 = vmul.f32 %v1084, 0.044715
    %v1144 = vmul.f32 %v1086, 0.044715
    %v1145 = vmul.f32 %v1127, 0.044715
    %v1146 = vmul.f32 %v1129, 0.044715
    %v1147 = vmul.f32 %v1088, 0.044715
    %v1148 = vmul.f32 %v1090, 0.044715
    %v1149 = vmul.f32 %v1131, 0.044715
    %v1150 = vmul.f32 %v1133, 0.044715
    %v1151 = vmul.f32 %v1143, %v1084
    %v1152 = vmul.f32 %v1144, %v1086
    %v1153 = vmul.f32 %v1145, %v1127
    %v1154 = vmul.f32 %v1146, %v1129
    %v1155 = vmul.f32 %v1147, %v1088
    %v1156 = vmul.f32 %v1148, %v1090
    %v1157 = vmul.f32 %v1149, %v1131
    %v1158 = vmul.f32 %v1150, %v1133
    %v1159 = vmul.f32 %v1151, %v1084
    %v1160 = vmul.f32 %v1152, %v1086
    %v1161 = vmul.f32 %v1153, %v1127
    %v1162 = vmul.f32 %v1154, %v1129
    %v1163 = vmul.f32 %v1155, %v1088
    %v1164 = vmul.f32 %v1156, %v1090
    %v1165 = vmul.f32 %v1157, %v1131
    %v1166 = vmul.f32 %v1158, %v1133
    %v1167 = vadd.f32 %v1084, %v1159
    %v1168 = vadd.f32 %v1086, %v1160
    %v1169 = vadd.f32 %v1127, %v1161
    %v1170 = vadd.f32 %v1129, %v1162
    %v1171 = vadd.f32 %v1088, %v1163
    %v1172 = vadd.f32 %v1090, %v1164
    %v1173 = vadd.f32 %v1131, %v1165
    %v1174 = vadd.f32 %v1133, %v1166
    %v1175 = vmul.f32 %v1167, 0.7978846
    %v1176 = vmul.f32 %v1168, 0.7978846
    %v1177 = vmul.f32 %v1169, 0.7978846
    %v1178 = vmul.f32 %v1170, 0.7978846
    %v1179 = vmul.f32 %v1171, 0.7978846
    %v1180 = vmul.f32 %v1172, 0.7978846
    %v1181 = vmul.f32 %v1173, 0.7978846
    %v1182 = vmul.f32 %v1174, 0.7978846
    %v1183 = vtanh.pop %v1175
    %v1184 = vtanh.pop %v1176
    %v1185 = vtanh.pop %v1177
    %v1186 = vtanh.pop %v1178
    %v1187 = vtanh.pop %v1179
    %v1188 = vtanh.pop %v1180
    %v1189 = vtanh.pop %v1181
    %v1190 = vtanh.pop %v1182
    %v1191 = vadd.f32 %v1183, 1.0
    %v1192 = vadd.f32 %v1184, 1.0
    %v1193 = vadd.f32 %v1185, 1.0
    %v1194 = vadd.f32 %v1186, 1.0
    %v1195 = vadd.f32 %v1187, 1.0
    %v1196 = vadd.f32 %v1188, 1.0
    %v1197 = vadd.f32 %v1189, 1.0
    %v1198 = vadd.f32 %v1190, 1.0
    %v1199 = vmul.f32 %v1135, %v1191
    %v1200 = vmul.f32 %v1136, %v1192
    %v1201 = vmul.f32 %v1137, %v1193
    %v1202 = vmul.f32 %v1138, %v1194
    %v1203 = vmul.f32 %v1139, %v1195
    %v1204 = vmul.f32 %v1140, %v1196
    %v1205 = vmul.f32 %v1141, %v1197
    %v1206 = vmul.f32 %v1142, %v1198
    %v1207 = vpack.c.bf16 %v1203, %v1199
    %v1208 = vpack.c.bf16 %v1204, %v1200
    %v1209 = vpack.c.bf16 %v1205, %v1201
    %v1210 = vpack.c.bf16 %v1206, %v1202
    %v1211 = vld [vmem:[#allocation7] sm:$0xf]
    %v1212 = vld [vmem:[#allocation7 + $0x4] sm:$0xf]
    %v1213 = vld [vmem:[#allocation7 + $0x8] sm:$0xf]
    %v1214 = vld [vmem:[#allocation7 + $0xc] sm:$0xf]
    %v1215 = vld [vmem:[#allocation7 + $0x10] sm:$0xf]
    %v1216 = vld [vmem:[#allocation7 + $0x14] sm:$0xf]
    %v1217 = vld [vmem:[#allocation7 + $0x18] sm:$0xf]
    %v1218 = vld [vmem:[#allocation7 + $0x1c] sm:$0xf]
    %v1219 = vld [vmem:[#allocation7 + $0x20] sm:$0xf]
    %v1220 = vld [vmem:[#allocation7 + $0x24] sm:$0xf]
    %v1221 = vld [vmem:[#allocation7 + $0x28] sm:$0xf]
    %v1222 = vld [vmem:[#allocation7 + $0x2c] sm:$0xf]
    %v1223 = vld [vmem:[#allocation7 + $0x30] sm:$0xf]
    %v1224 = vld [vmem:[#allocation7 + $0x34] sm:$0xf]
    %v1225 = vld [vmem:[#allocation7 + $0x38] sm:$0xf]
    %v1226 = vld [vmem:[#allocation7 + $0x3c] sm:$0xf]
    %v1227 = vld [vmem:[#allocation7 + $0x40] sm:$0xf]
    %v1228 = vld [vmem:[#allocation7 + $0x44] sm:$0xf]
    %v1229 = vld [vmem:[#allocation7 + $0x48] sm:$0xf]
    %v1230 = vld [vmem:[#allocation7 + $0x4c] sm:$0xf]
    %v1231 = vld [vmem:[#allocation7 + $0x50] sm:$0xf]
    %v1232 = vld [vmem:[#allocation7 + $0x54] sm:$0xf]
    %v1233 = vld [vmem:[#allocation7 + $0x58] sm:$0xf]
    %v1234 = vld [vmem:[#allocation7 + $0x5c] sm:$0xf]
    %v1235 = vld [vmem:[#allocation7 + $0x60] sm:$0xf]
    %v1236 = vld [vmem:[#allocation7 + $0x64] sm:$0xf]
    %v1237 = vld [vmem:[#allocation7 + $0x68] sm:$0xf]
    %v1238 = vld [vmem:[#allocation7 + $0x6c] sm:$0xf]
    %v1239 = vld [vmem:[#allocation7 + $0x70] sm:$0xf]
    %v1240 = vld [vmem:[#allocation7 + $0x74] sm:$0xf]
    %v1241 = vld [vmem:[#allocation7 + $0x78] sm:$0xf]
    %v1242 = vld [vmem:[#allocation7 + $0x7c] sm:$0xf]
    %v1243 = vld [vmem:[#allocation7 + $0x80] sm:$0xf]
    %v1244 = vld [vmem:[#allocation7 + $0x84] sm:$0xf]
    %v1245 = vld [vmem:[#allocation7 + $0x88] sm:$0xf]
    %v1246 = vld [vmem:[#allocation7 + $0x8c] sm:$0xf]
    %v1247 = vld [vmem:[#allocation7 + $0x90] sm:$0xf]
    %v1248 = vld [vmem:[#allocation7 + $0x94] sm:$0xf]
    %v1249 = vld [vmem:[#allocation7 + $0x98] sm:$0xf]
    %v1250 = vld [vmem:[#allocation7 + $0x9c] sm:$0xf]
    %v1251 = vld [vmem:[#allocation7 + $0xa0] sm:$0xf]
    %v1252 = vld [vmem:[#allocation7 + $0xa4] sm:$0xf]
    %v1253 = vld [vmem:[#allocation7 + $0xa8] sm:$0xf]
    %v1254 = vld [vmem:[#allocation7 + $0xac] sm:$0xf]
    %v1255 = vld [vmem:[#allocation7 + $0xb0] sm:$0xf]
    %v1256 = vld [vmem:[#allocation7 + $0xb4] sm:$0xf]
    %v1257 = vld [vmem:[#allocation7 + $0xb8] sm:$0xf]
    %v1258 = vld [vmem:[#allocation7 + $0xbc] sm:$0xf]
    %v1259 = vld [vmem:[#allocation7 + $0xc0] sm:$0xf]
    %v1260 = vld [vmem:[#allocation7 + $0xc4] sm:$0xf]
    %v1261 = vld [vmem:[#allocation7 + $0xc8] sm:$0xf]
    %v1262 = vld [vmem:[#allocation7 + $0xcc] sm:$0xf]
    %v1263 = vld [vmem:[#allocation7 + $0xd0] sm:$0xf]
    %v1264 = vld [vmem:[#allocation7 + $0xd4] sm:$0xf]
    %v1265 = vld [vmem:[#allocation7 + $0xd8] sm:$0xf]
    %v1266 = vld [vmem:[#allocation7 + $0xdc] sm:$0xf]
    %v1267 = vld [vmem:[#allocation7 + $0xe0] sm:$0xf]
    %v1268 = vld [vmem:[#allocation7 + $0xe4] sm:$0xf]
    %v1269 = vld [vmem:[#allocation7 + $0xe8] sm:$0xf]
    %v1270 = vld [vmem:[#allocation7 + $0xec] sm:$0xf]
    %v1271 = vld [vmem:[#allocation7 + $0xf0] sm:$0xf]
    %v1272 = vld [vmem:[#allocation7 + $0xf4] sm:$0xf]
    %v1273 = vld [vmem:[#allocation7 + $0xf8] sm:$0xf]
    %v1274 = vld [vmem:[#allocation7 + $0xfc] sm:$0xf]
    %v1275 = vld [vmem:[%s11] sm:$0x1]
    %v1277 = vlaneseq
    %v1278 = vshrl.u32 %v1277, 7
    %v1279 = vsub.s32 0, %v1278
    %v1280 = vrot.slane %v1275, %v1279
    %v1346 = vunpack.c.l.b16 %v1211
    %v1347 = vunpack.c.l.b16 %v1212
    %v1348 = vunpack.c.l.b16 %v1213
    %v1349 = vunpack.c.l.b16 %v1214
    %v1350 = vunpack.c.l.b16 %v1215
    %v1351 = vunpack.c.l.b16 %v1216
    %v1352 = vunpack.c.l.b16 %v1217
    %v1353 = vunpack.c.l.b16 %v1218
    %v1354 = vunpack.c.l.b16 %v1219
    %v1355 = vunpack.c.l.b16 %v1220
    %v1356 = vunpack.c.l.b16 %v1221
    %v1357 = vunpack.c.l.b16 %v1222
    %v1358 = vunpack.c.l.b16 %v1223
    %v1359 = vunpack.c.l.b16 %v1224
    %v1360 = vunpack.c.l.b16 %v1225
    %v1361 = vunpack.c.l.b16 %v1226
    %v1362 = vunpack.c.l.b16 %v1227
    %v1363 = vunpack.c.l.b16 %v1228
    %v1364 = vunpack.c.l.b16 %v1229
    %v1365 = vunpack.c.l.b16 %v1230
    %v1366 = vunpack.c.l.b16 %v1231
    %v1367 = vunpack.c.l.b16 %v1232
    %v1368 = vunpack.c.l.b16 %v1233
    %v1369 = vunpack.c.l.b16 %v1234
    %v1370 = vunpack.c.l.b16 %v1235
    %v1371 = vunpack.c.l.b16 %v1236
    %v1372 = vunpack.c.l.b16 %v1237
    %v1373 = vunpack.c.l.b16 %v1238
    %v1374 = vunpack.c.l.b16 %v1239
    %v1375 = vunpack.c.l.b16 %v1240
    %v1376 = vunpack.c.l.b16 %v1241
    %v1377 = vunpack.c.l.b16 %v1242
    %v1378 = vunpack.c.l.b16 %v1243
    %v1379 = vunpack.c.l.b16 %v1244
    %v1380 = vunpack.c.l.b16 %v1245
    %v1381 = vunpack.c.l.b16 %v1246
    %v1382 = vunpack.c.l.b16 %v1247
    %v1383 = vunpack.c.l.b16 %v1248
    %v1384 = vunpack.c.l.b16 %v1249
    %v1385 = vunpack.c.l.b16 %v1250
    %v1386 = vunpack.c.l.b16 %v1251
    %v1387 = vunpack.c.l.b16 %v1252
    %v1388 = vunpack.c.l.b16 %v1253
    %v1389 = vunpack.c.l.b16 %v1254
    %v1390 = vunpack.c.l.b16 %v1255
    %v1391 = vunpack.c.l.b16 %v1256
    %v1392 = vunpack.c.l.b16 %v1257
    %v1393 = vunpack.c.l.b16 %v1258
    %v1394 = vunpack.c.l.b16 %v1259
    %v1395 = vunpack.c.l.b16 %v1260
    %v1396 = vunpack.c.l.b16 %v1261
    %v1397 = vunpack.c.l.b16 %v1262
    %v1398 = vunpack.c.l.b16 %v1263
    %v1399 = vunpack.c.l.b16 %v1264
    %v1400 = vunpack.c.l.b16 %v1265
    %v1401 = vunpack.c.l.b16 %v1266
    %v1402 = vunpack.c.l.b16 %v1267
    %v1403 = vunpack.c.l.b16 %v1268
    %v1404 = vunpack.c.l.b16 %v1269
    %v1405 = vunpack.c.l.b16 %v1270
    %v1406 = vunpack.c.l.b16 %v1271
    %v1407 = vunpack.c.l.b16 %v1272
    %v1408 = vunpack.c.l.b16 %v1273
    %v1409 = vunpack.c.l.b16 %v1274
    %v1410 = vpack.c.b16 %v1347, %v1346
    %v1411 = vpack.c.b16 %v1349, %v1348
    %v1412 = vpack.c.b16 %v1351, %v1350
    %v1413 = vpack.c.b16 %v1353, %v1352
    %v1414 = vpack.c.b16 %v1355, %v1354
    %v1415 = vpack.c.b16 %v1357, %v1356
    %v1416 = vpack.c.b16 %v1359, %v1358
    %v1417 = vpack.c.b16 %v1361, %v1360
    %v1418 = vpack.c.b16 %v1363, %v1362
    %v1419 = vpack.c.b16 %v1365, %v1364
    %v1420 = vpack.c.b16 %v1367, %v1366
    %v1421 = vpack.c.b16 %v1369, %v1368
    %v1422 = vpack.c.b16 %v1371, %v1370
    %v1423 = vpack.c.b16 %v1373, %v1372
    %v1424 = vpack.c.b16 %v1375, %v1374
    %v1425 = vpack.c.b16 %v1377, %v1376
    %v1426 = vpack.c.b16 %v1379, %v1378
    %v1427 = vpack.c.b16 %v1381, %v1380
    %v1428 = vpack.c.b16 %v1383, %v1382
    %v1429 = vpack.c.b16 %v1385, %v1384
    %v1430 = vpack.c.b16 %v1387, %v1386
    %v1431 = vpack.c.b16 %v1389, %v1388
    %v1432 = vpack.c.b16 %v1391, %v1390
    %v1433 = vpack.c.b16 %v1393, %v1392
    %v1434 = vpack.c.b16 %v1395, %v1394
    %v1435 = vpack.c.b16 %v1397, %v1396
    %v1436 = vpack.c.b16 %v1399, %v1398
    %v1437 = vpack.c.b16 %v1401, %v1400
    %v1438 = vpack.c.b16 %v1403, %v1402
    %v1439 = vpack.c.b16 %v1405, %v1404
    %v1440 = vpack.c.b16 %v1407, %v1406
    %v1441 = vpack.c.b16 %v1409, %v1408
    %1474 = vmatprep.subr.bf16.mxu0 0
    %1475 = vmatpush1.bf16.msra.mxu0 %v1417
    %1476 = vmatprep.subr.bf16.mxu0 0
    %1477 = vmatpush1.bf16.msra.mxu0 %v1416
    %1478 = vmatprep.subr.bf16.mxu0 0
    %1479 = vmatpush1.bf16.msra.mxu0 %v1415
    %1480 = vmatprep.subr.bf16.mxu0 0
    %1481 = vmatpush1.bf16.msra.mxu0 %v1414
    %1482 = vmatprep.subr.bf16.mxu0 0
    %1483 = vmatpush1.bf16.msra.mxu0 %v1413
    %1484 = vmatprep.subr.bf16.mxu0 0
    %1485 = vmatpush1.bf16.msra.mxu0 %v1412
    %1486 = vmatprep.subr.bf16.mxu0 0
    %1487 = vmatpush1.bf16.msra.mxu0 %v1411
    %1488 = vmatprep.subr.bf16.mxu0 0
    %1489 = vmatpush1.bf16.msra.mxu0 %v1410
    %1490 = vmatprep.subr.bf16.mxu0 0
    %1491 = vmatpush2.bf16.msra.mxu0 %v1425
    %1492 = vmatprep.subr.bf16.mxu0 0
    %1493 = vmatpush2.bf16.msra.mxu0 %v1424
    %1494 = vmatprep.subr.bf16.mxu0 0
    %1495 = vmatpush2.bf16.msra.mxu0 %v1423
    %1496 = vmatprep.subr.bf16.mxu0 0
    %1497 = vmatpush2.bf16.msra.mxu0 %v1422
    %1498 = vmatprep.subr.bf16.mxu0 0
    %1499 = vmatpush2.bf16.msra.mxu0 %v1421
    %1500 = vmatprep.subr.bf16.mxu0 0
    %1501 = vmatpush2.bf16.msra.mxu0 %v1420
    %1502 = vmatprep.subr.bf16.mxu0 0
    %1503 = vmatpush2.bf16.msra.mxu0 %v1419
    %1504 = vmatprep.subr.bf16.mxu0 0
    %1505 = vmatpush2.bf16.msra.mxu0 %v1418
    %1506 = vmatprep.mubr.bf16.mxu0 %v1208
    %1507 = vmatmul.mubr.bf16.gmra.mxu0 %v1207
    %v1508 = vpop.f32.mrf.mxu0
    %v1509 = vadd.f32 %v1280, %v1508
    %v1510 = vpop.f32.mrf.mxu0
    %v1511 = vpop.f32.mrf.mxu0
    %v1512 = vadd.f32 %v1280, %v1511
    %v1513 = vpop.f32.mrf.mxu0
    %1514 = vdwg.mxu0
    %1515 = vmatprep.subr.bf16.mxu0 0
    %1516 = vmatpush1.bf16.msra.mxu0 %v1433
    %1517 = vmatprep.subr.bf16.mxu0 0
    %1518 = vmatpush1.bf16.msra.mxu0 %v1432
    %1519 = vmatprep.subr.bf16.mxu0 0
    %1520 = vmatpush1.bf16.msra.mxu0 %v1431
    %1521 = vmatprep.subr.bf16.mxu0 0
    %1522 = vmatpush1.bf16.msra.mxu0 %v1430
    %1523 = vmatprep.subr.bf16.mxu0 0
    %1524 = vmatpush1.bf16.msra.mxu0 %v1429
    %1525 = vmatprep.subr.bf16.mxu0 0
    %1526 = vmatpush1.bf16.msra.mxu0 %v1428
    %1527 = vmatprep.subr.bf16.mxu0 0
    %1528 = vmatpush1.bf16.msra.mxu0 %v1427
    %1529 = vmatprep.subr.bf16.mxu0 0
    %1530 = vmatpush1.bf16.msra.mxu0 %v1426
    %1531 = vmatprep.subr.bf16.mxu0 0
    %1532 = vmatpush2.bf16.msra.mxu0 %v1441
    %1533 = vmatprep.subr.bf16.mxu0 0
    %1534 = vmatpush2.bf16.msra.mxu0 %v1440
    %1535 = vmatprep.subr.bf16.mxu0 0
    %1536 = vmatpush2.bf16.msra.mxu0 %v1439
    %1537 = vmatprep.subr.bf16.mxu0 0
    %1538 = vmatpush2.bf16.msra.mxu0 %v1438
    %1539 = vmatprep.subr.bf16.mxu0 0
    %1540 = vmatpush2.bf16.msra.mxu0 %v1437
    %1541 = vmatprep.subr.bf16.mxu0 0
    %1542 = vmatpush2.bf16.msra.mxu0 %v1436
    %1543 = vmatprep.subr.bf16.mxu0 0
    %1544 = vmatpush2.bf16.msra.mxu0 %v1435
    %1545 = vmatprep.subr.bf16.mxu0 0
    %1546 = vmatpush2.bf16.msra.mxu0 %v1434
    %1547 = vmatprep.mubr.bf16.mxu0 %v1210
    %1548 = vmatmul.mubr.bf16.gmra.mxu0 %v1209
    %v1549 = vpop.f32.mrf.mxu0
    %v1550 = vadd.f32 %v1509, %v1549
    %v1551 = vpop.f32.mrf.mxu0
    %v1552 = vpop.f32.mrf.mxu0
    %v1553 = vadd.f32 %v1512, %v1552
    %v1554 = vpop.f32.mrf.mxu0
    %1555 = vdwg.mxu0
    %v1556 = vadd.f32 %v1550, %v832
    %v1557 = vadd.f32 %v1553, %v833
    %v1558 = vld [vmem:[#allocation9] sm:$0x1]
    %v1559 = vld [vmem:[#allocation10] sm:$0x1]
    %1560 = vadd.xlane.f32.xlu0 %v1556
    %v1561 = vpop.xlane.xlu0 %1560
    %1562 = vadd.xlane.f32.xlu0 %v1557
    %v1563 = vpop.xlane.xlu0 %1562
    %v1564 = vmul.f32 %v1561, %v799
    %v1565 = vmul.f32 %v1563, %v799
    %v1566 = vsub.f32 %v1556, %v1564
    %v1567 = vsub.f32 %v1557, %v1565
    %v1568 = vmul.f32 %v1566, %v1566
    %v1569 = vmul.f32 %v1567, %v1567
    %1570 = vadd.xlane.f32.xlu0 %v1568
    %v1571 = vpop.xlane.xlu0 %1570
    %1572 = vadd.xlane.f32.xlu0 %v1569
    %v1573 = vpop.xlane.xlu0 %1572
    %v1574 = vmul.f32 %v1571, %v799
    %v1575 = vmul.f32 %v1573, %v799
    %v1576 = vadd.f32 %v1574, 1e-12
    %v1577 = vadd.f32 %v1575, 1e-12
    %v1578 = vrsqrt.pop %v1576
    %v1579 = vrsqrt.pop %v1577
    %v1580 = vmul.f32 %v1566, %v1578
    %v1581 = vmul.f32 %v1567, %v1579
    %v1583 = vlaneseq
    %v1584 = vshrl.u32 %v1583, 7
    %v1585 = vsub.s32 0, %v1584
    %v1586 = vrot.slane %v1558, %v1585
    %v1588 = vmul.f32 %v1580, %v1586
    %v1589 = vmul.f32 %v1581, %v1586
    %v1591 = vlaneseq
    %v1592 = vshrl.u32 %v1591, 7
    %v1593 = vsub.s32 0, %v1592
    %v1594 = vrot.slane %v1559, %v1593
    %v1596 = vadd.f32 %v1588, %v1594
    %v1597 = vadd.f32 %v1589, %v1594
    %v1598 = vpack.c.bf16 %v1597, %v1596
    %s1599 = scalar_lea.vmem [#allocation2], 192
    %v1600 = vld [vmem:[%s1599] sm:$0xff]
    %v1601 = vld [vmem:[%s1599 + $0x8] sm:$0xf]
    %v1602 = vld [vmem:[%s1599 + $0xc] sm:$0xff]
    %v1603 = vld [vmem:[%s1599 + $0x14] sm:$0xf]
    %v1604 = vld [vmem:[%s1599 + $0x18] sm:$0xff]
    %v1605 = vld [vmem:[%s1599 + $0x20] sm:$0xf]
    %v1606 = vld [vmem:[%s1599 + $0x24] sm:$0xff]
    %v1607 = vld [vmem:[%s1599 + $0x2c] sm:$0xf]
    %v1608 = vld [vmem:[%s1599 + $0x30] sm:$0xff]
    %v1609 = vld [vmem:[%s1599 + $0x38] sm:$0xf]
    %v1610 = vld [vmem:[%s1599 + $0x3c] sm:$0xff]
    %v1611 = vld [vmem:[%s1599 + $0x44] sm:$0xf]
    %v1612 = vld [vmem:[%s1599 + $0x48] sm:$0xff]
    %v1613 = vld [vmem:[%s1599 + $0x50] sm:$0xf]
    %v1614 = vld [vmem:[%s1599 + $0x54] sm:$0xff]
    %v1615 = vld [vmem:[%s1599 + $0x5c] sm:$0xf]
    %v1616 = vld [vmem:[%s1599 + $0x60] sm:$0xff]
    %v1617 = vld [vmem:[%s1599 + $0x68] sm:$0xf]
    %v1618 = vld [vmem:[%s1599 + $0x6c] sm:$0xff]
    %v1619 = vld [vmem:[%s1599 + $0x74] sm:$0xf]
    %v1620 = vld [vmem:[%s1599 + $0x78] sm:$0xff]
    %v1621 = vld [vmem:[%s1599 + $0x80] sm:$0xf]
    %v1622 = vld [vmem:[%s1599 + $0x84] sm:$0xff]
    %v1623 = vld [vmem:[%s1599 + $0x8c] sm:$0xf]
    %v1624 = vld [vmem:[%s1599 + $0x90] sm:$0xff]
    %v1625 = vld [vmem:[%s1599 + $0x98] sm:$0xf]
    %v1626 = vld [vmem:[%s1599 + $0x9c] sm:$0xff]
    %v1627 = vld [vmem:[%s1599 + $0xa4] sm:$0xf]
    %v1628 = vld [vmem:[%s1599 + $0xa8] sm:$0xff]
    %v1629 = vld [vmem:[%s1599 + $0xb0] sm:$0xf]
    %v1630 = vld [vmem:[%s1599 + $0xb4] sm:$0xff]
    %v1631 = vld [vmem:[%s1599 + $0xbc] sm:$0xf]
    %s1632 = scalar_lea.vmem %s3, 3
    %v1633 = vld [vmem:[%s1632] sm:$0x7]
    %v1635 = vlaneseq
    %v1636 = vshrl.u32 %v1635, 7
    %v1637 = vsub.s32 0, %v1636
    %v1638 = vrot.slane %v1633, %v1637
    %v1639 = vlaneseq
    %v1640 = vshrl.u32 %v1639, 7
    %v1641 = vsub.s32 1, %v1640
    %v1642 = vrot.slane %v1633, %v1641
    %v1643 = vlaneseq
    %v1644 = vshrl.u32 %v1643, 7
    %v1645 = vsub.s32 2, %v1644
    %v1646 = vrot.slane %v1633, %v1645
    %v1682 = vunpack.c.l.b16 %v1600
    %v1683 = vunpack.c.h.b16 %v1600
    %v1684 = vunpack.c.l.b16 %v1601
    %v1685 = vunpack.c.l.b16 %v1602
    %v1686 = vunpack.c.h.b16 %v1602
    %v1687 = vunpack.c.l.b16 %v1603
    %v1688 = vunpack.c.l.b16 %v1604
    %v1689 = vunpack.c.h.b16 %v1604
    %v1690 = vunpack.c.l.b16 %v1605
    %v1691 = vunpack.c.l.b16 %v1606
    %v1692 = vunpack.c.h.b16 %v1606
    %v1693 = vunpack.c.l.b16 %v1607
    %v1694 = vunpack.c.l.b16 %v1608
    %v1695 = vunpack.c.h.b16 %v1608
    %v1696 = vunpack.c.l.b16 %v1609
    %v1697 = vunpack.c.l.b16 %v1610
    %v1698 = vunpack.c.h.b16 %v1610
    %v1699 = vunpack.c.l.b16 %v1611
    %v1700 = vunpack.c.l.b16 %v1612
    %v1701 = vunpack.c.h.b16 %v1612
    %v1702 = vunpack.c.l.b16 %v1613
    %v1703 = vunpack.c.l.b16 %v1614
    %v1704 = vunpack.c.h.b16 %v1614
    %v1705 = vunpack.c.l.b16 %v1615
    %v1706 = vunpack.c.l.b16 %v1616
    %v1707 = vunpack.c.h.b16 %v1616
    %v1708 = vunpack.c.l.b16 %v1617
    %v1709 = vunpack.c.l.b16 %v1618
    %v1710 = vunpack.c.h.b16 %v1618
    %v1711 = vunpack.c.l.b16 %v1619
    %v1712 = vunpack.c.l.b16 %v1620
    %v1713 = vunpack.c.h.b16 %v1620
    %v1714 = vunpack.c.l.b16 %v1621
    %v1715 = vunpack.c.l.b16 %v1622
    %v1716 = vunpack.c.h.b16 %v1622
    %v1717 = vunpack.c.l.b16 %v1623
    %v1718 = vunpack.c.l.b16 %v1624
    %v1719 = vunpack.c.h.b16 %v1624
    %v1720 = vunpack.c.l.b16 %v1625
    %v1721 = vunpack.c.l.b16 %v1626
    %v1722 = vunpack.c.h.b16 %v1626
    %v1723 = vunpack.c.l.b16 %v1627
    %v1724 = vunpack.c.l.b16 %v1628
    %v1725 = vunpack.c.h.b16 %v1628
    %v1726 = vunpack.c.l.b16 %v1629
    %v1727 = vunpack.c.l.b16 %v1630
    %v1728 = vunpack.c.h.b16 %v1630
    %v1729 = vunpack.c.l.b16 %v1631
    %v1730 = vpack.c.b16 %v1685, %v1682
    %v1731 = vpack.c.b16 %v1686, %v1683
    %v1732 = vpack.c.b16 %v1687, %v1684
    %v1733 = vpack.c.b16 %v1691, %v1688
    %v1734 = vpack.c.b16 %v1692, %v1689
    %v1735 = vpack.c.b16 %v1693, %v1690
    %v1736 = vpack.c.b16 %v1697, %v1694
    %v1737 = vpack.c.b16 %v1698, %v1695
    %v1738 = vpack.c.b16 %v1699, %v1696
    %v1739 = vpack.c.b16 %v1703, %v1700
    %v1740 = vpack.c.b16 %v1704, %v1701
    %v1741 = vpack.c.b16 %v1705, %v1702
    %v1742 = vpack.c.b16 %v1709, %v1706
    %v1743 = vpack.c.b16 %v1710, %v1707
    %v1744 = vpack.c.b16 %v1711, %v1708
    %v1745 = vpack.c.b16 %v1715, %v1712
    %v1746 = vpack.c.b16 %v1716, %v1713
    %v1747 = vpack.c.b16 %v1717, %v1714
    %v1748 = vpack.c.b16 %v1721, %v1718
    %v1749 = vpack.c.b16 %v1722, %v1719
    %v1750 = vpack.c.b16 %v1723, %v1720
    %v1751 = vpack.c.b16 %v1727, %v1724
    %v1752 = vpack.c.b16 %v1728, %v1725
    %v1753 = vpack.c.b16 %v1729, %v1726
    %1778 = vmatprep.subr.bf16.mxu0 %v1752
    %1779 = vmatpush1.bf16.msra.mxu0 %v1751
    %1780 = vmatprep.subr.bf16.mxu0 %v1749
    %1781 = vmatpush1.bf16.msra.mxu0 %v1748
    %1782 = vmatprep.subr.bf16.mxu0 %v1746
    %1783 = vmatpush1.bf16.msra.mxu0 %v1745
    %1784 = vmatprep.subr.bf16.mxu0 %v1743
    %1785 = vmatpush1.bf16.msra.mxu0 %v1742
    %1786 = vmatprep.subr.bf16.mxu0 %v1740
    %1787 = vmatpush1.bf16.msra.mxu0 %v1739
    %1788 = vmatprep.subr.bf16.mxu0 %v1737
    %1789 = vmatpush1.bf16.msra.mxu0 %v1736
    %1790 = vmatprep.subr.bf16.mxu0 %v1734
    %1791 = vmatpush1.bf16.msra.mxu0 %v1733
    %1792 = vmatprep.subr.bf16.mxu0 %v1731
    %1793 = vmatpush1.bf16.msra.mxu0 %v1730
    %1794 = vmatprep.subr.bf16.mxu0 0
    %1795 = vmatpush2.bf16.msra.mxu0 0
    %1796 = vmatprep.subr.bf16.mxu0 0
    %1797 = vmatpush2.bf16.msra.mxu0 0
    %1798 = vmatprep.subr.bf16.mxu0 0
    %1799 = vmatpush2.bf16.msra.mxu0 0
    %1800 = vmatprep.subr.bf16.mxu0 0
    %1801 = vmatpush2.bf16.msra.mxu0 0
    %1802 = vmatprep.subr.bf16.mxu0 0
    %1803 = vmatpush2.bf16.msra.mxu0 0
    %1804 = vmatprep.subr.bf16.mxu0 0
    %1805 = vmatpush2.bf16.msra.mxu0 0
    %1806 = vmatprep.subr.bf16.mxu0 0
    %1807 = vmatpush2.bf16.msra.mxu0 0
    %1808 = vmatprep.subr.bf16.mxu0 0
    %1809 = vmatpush2.bf16.msra.mxu0 0
    %1810 = vmatprep.mubr.bf16.mxu0 0
    %1811 = vmatmul.mubr.bf16.gmra.mxu0 %v1598
    %v1812 = vpop.f32.mrf.mxu0
    %v1813 = vadd.f32 %v1638, %v1812
    %v1814 = vpop.f32.mrf.mxu0
    %v1815 = vadd.f32 %v1642, %v1814
    %v1816 = vpop.f32.mrf.mxu0
    %v1817 = vadd.f32 %v1638, %v1816
    %v1818 = vpop.f32.mrf.mxu0
    %v1819 = vadd.f32 %v1642, %v1818
    %1820 = vdwg.mxu0
    %1821 = vmatprep.subr.bf16.mxu0 0
    %1822 = vmatpush1.bf16.msra.mxu0 %v1753
    %1823 = vmatprep.subr.bf16.mxu0 0
    %1824 = vmatpush1.bf16.msra.mxu0 %v1750
    %1825 = vmatprep.subr.bf16.mxu0 0
    %1826 = vmatpush1.bf16.msra.mxu0 %v1747
    %1827 = vmatprep.subr.bf16.mxu0 0
    %1828 = vmatpush1.bf16.msra.mxu0 %v1744
    %1829 = vmatprep.subr.bf16.mxu0 0
    %1830 = vmatpush1.bf16.msra.mxu0 %v1741
    %1831 = vmatprep.subr.bf16.mxu0 0
    %1832 = vmatpush1.bf16.msra.mxu0 %v1738
    %1833 = vmatprep.subr.bf16.mxu0 0
    %1834 = vmatpush1.bf16.msra.mxu0 %v1735
    %1835 = vmatprep.subr.bf16.mxu0 0
    %1836 = vmatpush1.bf16.msra.mxu0 %v1732
    %1837 = vmatprep.subr.bf16.mxu0 0
    %1838 = vmatpush2.bf16.msra.mxu0 0
    %1839 = vmatprep.subr.bf16.mxu0 0
    %1840 = vmatpush2.bf16.msra.mxu0 0
    %1841 = vmatprep.subr.bf16.mxu0 0
    %1842 = vmatpush2.bf16.msra.mxu0 0
    %1843 = vmatprep.subr.bf16.mxu0 0
    %1844 = vmatpush2.bf16.msra.mxu0 0
    %1845 = vmatprep.subr.bf16.mxu0 0
    %1846 = vmatpush2.bf16.msra.mxu0 0
    %1847 = vmatprep.subr.bf16.mxu0 0
    %1848 = vmatpush2.bf16.msra.mxu0 0
    %1849 = vmatprep.subr.bf16.mxu0 0
    %1850 = vmatpush2.bf16.msra.mxu0 0
    %1851 = vmatprep.subr.bf16.mxu0 0
    %1852 = vmatpush2.bf16.msra.mxu0 0
    %1853 = vmatprep.mubr.bf16.mxu0 0
    %1854 = vmatmul.mubr.bf16.gmra.mxu0 %v1598
    %v1855 = vpop.f32.mrf.mxu0
    %v1856 = vadd.f32 %v1646, %v1855
    %v1857 = vpop.f32.mrf.mxu0
    %v1858 = vpop.f32.mrf.mxu0
    %v1859 = vadd.f32 %v1646, %v1858
    %v1860 = vpop.f32.mrf.mxu0
    %1861 = vdwg.mxu0
    %v1862 = vpack.c.bf16 %v1817, %v1813
    %v1863 = vpack.c.bf16 %v1819, %v1815
    %v1864 = vpack.c.bf16 %v1859, %v1856
    %v1865 = vmul.bf16 %v1862, %v181
    %1866 = vmatprep.subr.bf16.mxu0 0
    %1867 = vmatpush1.bf16.xpose.msra.mxu0 0
    %1868 = vmatprep.subr.bf16.mxu0 0
    %1869 = vmatpush1.bf16.xpose.msra.mxu0 0
    %1870 = vmatprep.subr.bf16.mxu0 0
    %1871 = vmatpush1.bf16.xpose.msra.mxu0 0
    %1872 = vmatprep.subr.bf16.mxu0 0
    %1873 = vmatpush1.bf16.xpose.msra.mxu0 0
    %1874 = vmatprep.subr.bf16.mxu0 0
    %1875 = vmatpush1.bf16.xpose.msra.mxu0 0
    %1876 = vmatprep.subr.bf16.mxu0 0
    %1877 = vmatpush1.bf16.xpose.msra.mxu0 0
    %1878 = vmatprep.subr.bf16.mxu0 0
    %1879 = vmatpush1.bf16.xpose.msra.mxu0 0
    %1880 = vmatprep.subr.bf16.mxu0 0
    %1881 = vmatpush1.bf16.xpose.msra.mxu0 %v1863
    %1882 = vmatprep.subr.bf16.mxu0 0
    %1883 = vmatpush2.bf16.xpose.msra.mxu0 0
    %1884 = vmatprep.subr.bf16.mxu0 0
    %1885 = vmatpush2.bf16.xpose.msra.mxu0 0
    %1886 = vmatprep.subr.bf16.mxu0 0
    %1887 = vmatpush2.bf16.xpose.msra.mxu0 0
    %1888 = vmatprep.subr.bf16.mxu0 0
    %1889 = vmatpush2.bf16.xpose.msra.mxu0 0
    %1890 = vmatprep.subr.bf16.mxu0 0
    %1891 = vmatpush2.bf16.xpose.msra.mxu0 0
    %1892 = vmatprep.subr.bf16.mxu0 0
    %1893 = vmatpush2.bf16.xpose.msra.mxu0 0
    %1894 = vmatprep.subr.bf16.mxu0 0
    %1895 = vmatpush2.bf16.xpose.msra.mxu0 0
    %1896 = vmatprep.subr.bf16.mxu0 0
    %1897 = vmatpush2.bf16.xpose.msra.mxu0 0
    %1898 = vmatprep.mubr.bf16.mxu0 0
    %1899 = vmatmul.mubr.bf16.gmra.mxu0 %v1865
    %v1900 = vpop.f32.mrf.mxu0
    %v1901 = vadd.f32 %v172, %v1900
    %v1902 = vpop.f32.mrf.mxu0
    %v1903 = vpop.f32.mrf.mxu0
    %v1904 = vadd.f32 %v173, %v1903
    %v1905 = vpop.f32.mrf.mxu0
    %1906 = vdwg.mxu0
    %v1907 = vsel %vm495, %v1901, -inf
    %1908 = vmax.xlane.f32.xlu0 %v1907
    %v1909 = vpop.xlane.xlu0 %1908
    %v1910 = vsel %vm495, %v1904, -inf
    %1911 = vmax.xlane.f32.xlu0 %v1910
    %v1912 = vpop.xlane.xlu0 %1911
    %v1913 = vsub.f32 %v1901, %v1909
    %v1914 = vsub.f32 %v1904, %v1912
    %v1915 = vmul.f32 %v1913, 1.442695
    %v1916 = vpow.pop %v1915
    %v1917 = vmul.f32 %v1914, 1.442695
    %v1918 = vpow.pop %v1917
    %v1919 = vsel %vm495, %v1916, 0.0
    %1920 = vadd.xlane.f32.xlu0 %v1919
    %v1921 = vpop.xlane.xlu0 %1920
    %v1922 = vsel %vm495, %v1918, 0.0
    %1923 = vadd.xlane.f32.xlu0 %v1922
    %v1924 = vpop.xlane.xlu0 %1923
    %v1925 = vrcp.pop %v1921
    %v1926 = vrcp.pop %v1924
    %v1927 = vmul.f32 %v1916, %v1925
    %v1928 = vmul.f32 %v1918, %v1926
    %v1929 = vpack.c.bf16 %v1928, %v1927
    %v1931 = vsel %vm495, %v1929, 0
    %1933 = vmatprep.subr.bf16.mxu0 0
    %1934 = vmatpush1.bf16.msra.mxu0 0
    %1935 = vmatprep.subr.bf16.mxu0 0
    %1936 = vmatpush1.bf16.msra.mxu0 0
    %1937 = vmatprep.subr.bf16.mxu0 0
    %1938 = vmatpush1.bf16.msra.mxu0 0
    %1939 = vmatprep.subr.bf16.mxu0 0
    %1940 = vmatpush1.bf16.msra.mxu0 0
    %1941 = vmatprep.subr.bf16.mxu0 0
    %1942 = vmatpush1.bf16.msra.mxu0 0
    %1943 = vmatprep.subr.bf16.mxu0 0
    %1944 = vmatpush1.bf16.msra.mxu0 0
    %1945 = vmatprep.subr.bf16.mxu0 0
    %1946 = vmatpush1.bf16.msra.mxu0 0
    %1947 = vmatprep.subr.bf16.mxu0 0
    %1948 = vmatpush1.bf16.msra.mxu0 %v1864
    %1949 = vmatprep.subr.bf16.mxu0 0
    %1950 = vmatpush2.bf16.msra.mxu0 0
    %1951 = vmatprep.subr.bf16.mxu0 0
    %1952 = vmatpush2.bf16.msra.mxu0 0
    %1953 = vmatprep.subr.bf16.mxu0 0
    %1954 = vmatpush2.bf16.msra.mxu0 0
    %1955 = vmatprep.subr.bf16.mxu0 0
    %1956 = vmatpush2.bf16.msra.mxu0 0
    %1957 = vmatprep.subr.bf16.mxu0 0
    %1958 = vmatpush2.bf16.msra.mxu0 0
    %1959 = vmatprep.subr.bf16.mxu0 0
    %1960 = vmatpush2.bf16.msra.mxu0 0
    %1961 = vmatprep.subr.bf16.mxu0 0
    %1962 = vmatpush2.bf16.msra.mxu0 0
    %1963 = vmatprep.subr.bf16.mxu0 0
    %1964 = vmatpush2.bf16.msra.mxu0 0
    %1965 = vmatprep.mubr.bf16.mxu0 0
    %1966 = vmatmul.mubr.bf16.gmra.mxu0 %v1931
    %v1967 = vpop.f32.mrf.mxu0
    %v1968 = vadd.f32 0.0, %v1967
    %v1969 = vpop.f32.mrf.mxu0
    %v1970 = vpop.f32.mrf.mxu0
    %v1971 = vadd.f32 0.0, %v1970
    %v1972 = vpop.f32.mrf.mxu0
    %1973 = vdwg.mxu0
    %v1974 = vmul.f32 %v1968, %v180
    %v1975 = vmul.f32 %v1971, %v180
    %v1976 = vmul.bf16 %v1862, %v187
    %1977 = vmatprep.subr.bf16.mxu0 0
    %1978 = vmatpush1.bf16.xpose.msra.mxu0 0
    %1979 = vmatprep.subr.bf16.mxu0 0
    %1980 = vmatpush1.bf16.xpose.msra.mxu0 0
    %1981 = vmatprep.subr.bf16.mxu0 0
    %1982 = vmatpush1.bf16.xpose.msra.mxu0 0
    %1983 = vmatprep.subr.bf16.mxu0 0
    %1984 = vmatpush1.bf16.xpose.msra.mxu0 0
    %1985 = vmatprep.subr.bf16.mxu0 0
    %1986 = vmatpush1.bf16.xpose.msra.mxu0 0
    %1987 = vmatprep.subr.bf16.mxu0 0
    %1988 = vmatpush1.bf16.xpose.msra.mxu0 0
    %1989 = vmatprep.subr.bf16.mxu0 0
    %1990 = vmatpush1.bf16.xpose.msra.mxu0 0
    %1991 = vmatprep.subr.bf16.mxu0 0
    %1992 = vmatpush1.bf16.xpose.msra.mxu0 %v1863
    %1993 = vmatprep.subr.bf16.mxu0 0
    %1994 = vmatpush2.bf16.xpose.msra.mxu0 0
    %1995 = vmatprep.subr.bf16.mxu0 0
    %1996 = vmatpush2.bf16.xpose.msra.mxu0 0
    %1997 = vmatprep.subr.bf16.mxu0 0
    %1998 = vmatpush2.bf16.xpose.msra.mxu0 0
    %1999 = vmatprep.subr.bf16.mxu0 0
    %2000 = vmatpush2.bf16.xpose.msra.mxu0 0
    %2001 = vmatprep.subr.bf16.mxu0 0
    %2002 = vmatpush2.bf16.xpose.msra.mxu0 0
    %2003 = vmatprep.subr.bf16.mxu0 0
    %2004 = vmatpush2.bf16.xpose.msra.mxu0 0
    %2005 = vmatprep.subr.bf16.mxu0 0
    %2006 = vmatpush2.bf16.xpose.msra.mxu0 0
    %2007 = vmatprep.subr.bf16.mxu0 0
    %2008 = vmatpush2.bf16.xpose.msra.mxu0 0
    %2009 = vmatprep.mubr.bf16.mxu0 0
    %2010 = vmatmul.mubr.bf16.gmra.mxu0 %v1976
    %v2011 = vpop.f32.mrf.mxu0
    %v2012 = vadd.f32 %v172, %v2011
    %v2013 = vpop.f32.mrf.mxu0
    %v2014 = vpop.f32.mrf.mxu0
    %v2015 = vadd.f32 %v173, %v2014
    %v2016 = vpop.f32.mrf.mxu0
    %2017 = vdwg.mxu0
    %v2018 = vsel %vm495, %v2012, -inf
    %2019 = vmax.xlane.f32.xlu0 %v2018
    %v2020 = vpop.xlane.xlu0 %2019
    %v2021 = vsel %vm495, %v2015, -inf
    %2022 = vmax.xlane.f32.xlu0 %v2021
    %v2023 = vpop.xlane.xlu0 %2022
    %v2024 = vsub.f32 %v2012, %v2020
    %v2025 = vsub.f32 %v2015, %v2023
    %v2026 = vmul.f32 %v2024, 1.442695
    %v2027 = vpow.pop %v2026
    %v2028 = vmul.f32 %v2025, 1.442695
    %v2029 = vpow.pop %v2028
    %v2030 = vsel %vm495, %v2027, 0.0
    %2031 = vadd.xlane.f32.xlu0 %v2030
    %v2032 = vpop.xlane.xlu0 %2031
    %v2033 = vsel %vm495, %v2029, 0.0
    %2034 = vadd.xlane.f32.xlu0 %v2033
    %v2035 = vpop.xlane.xlu0 %2034
    %v2036 = vrcp.pop %v2032
    %v2037 = vrcp.pop %v2035
    %v2038 = vmul.f32 %v2027, %v2036
    %v2039 = vmul.f32 %v2029, %v2037
    %v2040 = vpack.c.bf16 %v2039, %v2038
    %v2042 = vsel %vm495, %v2040, 0
    %2044 = vmatprep.subr.bf16.mxu0 0
    %2045 = vmatpush1.bf16.msra.mxu0 0
    %2046 = vmatprep.subr.bf16.mxu0 0
    %2047 = vmatpush1.bf16.msra.mxu0 0
    %2048 = vmatprep.subr.bf16.mxu0 0
    %2049 = vmatpush1.bf16.msra.mxu0 0
    %2050 = vmatprep.subr.bf16.mxu0 0
    %2051 = vmatpush1.bf16.msra.mxu0 0
    %2052 = vmatprep.subr.bf16.mxu0 0
    %2053 = vmatpush1.bf16.msra.mxu0 0
    %2054 = vmatprep.subr.bf16.mxu0 0
    %2055 = vmatpush1.bf16.msra.mxu0 0
    %2056 = vmatprep.subr.bf16.mxu0 0
    %2057 = vmatpush1.bf16.msra.mxu0 0
    %2058 = vmatprep.subr.bf16.mxu0 0
    %2059 = vmatpush1.bf16.msra.mxu0 %v1864
    %2060 = vmatprep.subr.bf16.mxu0 0
    %2061 = vmatpush2.bf16.msra.mxu0 0
    %2062 = vmatprep.subr.bf16.mxu0 0
    %2063 = vmatpush2.bf16.msra.mxu0 0
    %2064 = vmatprep.subr.bf16.mxu0 0
    %2065 = vmatpush2.bf16.msra.mxu0 0
    %2066 = vmatprep.subr.bf16.mxu0 0
    %2067 = vmatpush2.bf16.msra.mxu0 0
    %2068 = vmatprep.subr.bf16.mxu0 0
    %2069 = vmatpush2.bf16.msra.mxu0 0
    %2070 = vmatprep.subr.bf16.mxu0 0
    %2071 = vmatpush2.bf16.msra.mxu0 0
    %2072 = vmatprep.subr.bf16.mxu0 0
    %2073 = vmatpush2.bf16.msra.mxu0 0
    %2074 = vmatprep.subr.bf16.mxu0 0
    %2075 = vmatpush2.bf16.msra.mxu0 0
    %2076 = vmatprep.mubr.bf16.mxu0 0
    %2077 = vmatmul.mubr.bf16.gmra.mxu0 %v2042
    %v2078 = vpop.f32.mrf.mxu0
    %v2079 = vadd.f32 0.0, %v2078
    %v2080 = vpop.f32.mrf.mxu0
    %v2081 = vpop.f32.mrf.mxu0
    %v2082 = vadd.f32 0.0, %v2081
    %v2083 = vpop.f32.mrf.mxu0
    %2084 = vdwg.mxu0
    %v2085 = vmul.f32 %v2079, %v186
    %v2086 = vmul.f32 %v2082, %v186
    %v2087 = vadd.f32 %v1974, %v2085
    %v2088 = vadd.f32 %v1975, %v2086
    %v2089 = vpack.c.bf16 %v2088, %v2087
    %s2090 = scalar_lea.vmem %s4, 64
    %v2091 = vld [vmem:[%s2090] sm:$0xf]
    %v2092 = vld [vmem:[%s2090 + $0x4] sm:$0xf]
    %v2093 = vld [vmem:[%s2090 + $0x8] sm:$0xf]
    %v2094 = vld [vmem:[%s2090 + $0xc] sm:$0xf]
    %v2095 = vld [vmem:[%s2090 + $0x10] sm:$0xf]
    %v2096 = vld [vmem:[%s2090 + $0x14] sm:$0xf]
    %v2097 = vld [vmem:[%s2090 + $0x18] sm:$0xf]
    %v2098 = vld [vmem:[%s2090 + $0x1c] sm:$0xf]
    %v2099 = vld [vmem:[%s2090 + $0x20] sm:$0xf]
    %v2100 = vld [vmem:[%s2090 + $0x24] sm:$0xf]
    %v2101 = vld [vmem:[%s2090 + $0x28] sm:$0xf]
    %v2102 = vld [vmem:[%s2090 + $0x2c] sm:$0xf]
    %v2103 = vld [vmem:[%s2090 + $0x30] sm:$0xf]
    %v2104 = vld [vmem:[%s2090 + $0x34] sm:$0xf]
    %v2105 = vld [vmem:[%s2090 + $0x38] sm:$0xf]
    %v2106 = vld [vmem:[%s2090 + $0x3c] sm:$0xf]
    %s2107 = scalar_lea.vmem %s5, 1
    %v2108 = vld [vmem:[%s2107] sm:$0x1]
    %v2110 = vlaneseq
    %v2111 = vshrl.u32 %v2110, 7
    %v2112 = vsub.s32 0, %v2111
    %v2113 = vrot.slane %v2108, %v2112
    %v2131 = vunpack.c.l.b16 %v2091
    %v2132 = vunpack.c.l.b16 %v2092
    %v2133 = vunpack.c.l.b16 %v2093
    %v2134 = vunpack.c.l.b16 %v2094
    %v2135 = vunpack.c.l.b16 %v2095
    %v2136 = vunpack.c.l.b16 %v2096
    %v2137 = vunpack.c.l.b16 %v2097
    %v2138 = vunpack.c.l.b16 %v2098
    %v2139 = vunpack.c.l.b16 %v2099
    %v2140 = vunpack.c.l.b16 %v2100
    %v2141 = vunpack.c.l.b16 %v2101
    %v2142 = vunpack.c.l.b16 %v2102
    %v2143 = vunpack.c.l.b16 %v2103
    %v2144 = vunpack.c.l.b16 %v2104
    %v2145 = vunpack.c.l.b16 %v2105
    %v2146 = vunpack.c.l.b16 %v2106
    %v2147 = vpack.c.b16 %v2132, %v2131
    %v2148 = vpack.c.b16 %v2134, %v2133
    %v2149 = vpack.c.b16 %v2136, %v2135
    %v2150 = vpack.c.b16 %v2138, %v2137
    %v2151 = vpack.c.b16 %v2140, %v2139
    %v2152 = vpack.c.b16 %v2142, %v2141
    %v2153 = vpack.c.b16 %v2144, %v2143
    %v2154 = vpack.c.b16 %v2146, %v2145
    %2163 = vmatprep.subr.bf16.mxu0 0
    %2164 = vmatpush1.bf16.msra.mxu0 %v2154
    %2165 = vmatprep.subr.bf16.mxu0 0
    %2166 = vmatpush1.bf16.msra.mxu0 %v2153
    %2167 = vmatprep.subr.bf16.mxu0 0
    %2168 = vmatpush1.bf16.msra.mxu0 %v2152
    %2169 = vmatprep.subr.bf16.mxu0 0
    %2170 = vmatpush1.bf16.msra.mxu0 %v2151
    %2171 = vmatprep.subr.bf16.mxu0 0
    %2172 = vmatpush1.bf16.msra.mxu0 %v2150
    %2173 = vmatprep.subr.bf16.mxu0 0
    %2174 = vmatpush1.bf16.msra.mxu0 %v2149
    %2175 = vmatprep.subr.bf16.mxu0 0
    %2176 = vmatpush1.bf16.msra.mxu0 %v2148
    %2177 = vmatprep.subr.bf16.mxu0 0
    %2178 = vmatpush1.bf16.msra.mxu0 %v2147
    %2179 = vmatprep.subr.bf16.mxu0 0
    %2180 = vmatpush2.bf16.msra.mxu0 0
    %2181 = vmatprep.subr.bf16.mxu0 0
    %2182 = vmatpush2.bf16.msra.mxu0 0
    %2183 = vmatprep.subr.bf16.mxu0 0
    %2184 = vmatpush2.bf16.msra.mxu0 0
    %2185 = vmatprep.subr.bf16.mxu0 0
    %2186 = vmatpush2.bf16.msra.mxu0 0
    %2187 = vmatprep.subr.bf16.mxu0 0
    %2188 = vmatpush2.bf16.msra.mxu0 0
    %2189 = vmatprep.subr.bf16.mxu0 0
    %2190 = vmatpush2.bf16.msra.mxu0 0
    %2191 = vmatprep.subr.bf16.mxu0 0
    %2192 = vmatpush2.bf16.msra.mxu0 0
    %2193 = vmatprep.subr.bf16.mxu0 0
    %2194 = vmatpush2.bf16.msra.mxu0 0
    %2195 = vmatprep.mubr.bf16.mxu0 0
    %2196 = vmatmul.mubr.bf16.gmra.mxu0 %v2089
    %v2197 = vpop.f32.mrf.mxu0
    %v2198 = vadd.f32 %v2113, %v2197
    %v2199 = vpop.f32.mrf.mxu0
    %v2200 = vpop.f32.mrf.mxu0
    %v2201 = vadd.f32 %v2113, %v2200
    %v2202 = vpop.f32.mrf.mxu0
    %2203 = vdwg.mxu0
    %v2204 = vadd.f32 %v2198, %v1596
    %v2205 = vadd.f32 %v2201, %v1597
    %s2206 = scalar_lea.vmem %s6, 1
    %v2207 = vld [vmem:[%s2206] sm:$0x1]
    %s2208 = scalar_lea.vmem [#allocation4], 1
    %v2209 = vld [vmem:[%s2208] sm:$0x1]
    %2210 = vadd.xlane.f32.xlu0 %v2204
    %v2211 = vpop.xlane.xlu0 %2210
    %2212 = vadd.xlane.f32.xlu0 %v2205
    %v2213 = vpop.xlane.xlu0 %2212
    %v2214 = vmul.f32 %v2211, %v799
    %v2215 = vmul.f32 %v2213, %v799
    %v2216 = vsub.f32 %v2204, %v2214
    %v2217 = vsub.f32 %v2205, %v2215
    %v2218 = vmul.f32 %v2216, %v2216
    %v2219 = vmul.f32 %v2217, %v2217
    %2220 = vadd.xlane.f32.xlu0 %v2218
    %v2221 = vpop.xlane.xlu0 %2220
    %2222 = vadd.xlane.f32.xlu0 %v2219
    %v2223 = vpop.xlane.xlu0 %2222
    %v2224 = vmul.f32 %v2221, %v799
    %v2225 = vmul.f32 %v2223, %v799
    %v2226 = vadd.f32 %v2224, 1e-12
    %v2227 = vadd.f32 %v2225, 1e-12
    %v2228 = vrsqrt.pop %v2226
    %v2229 = vrsqrt.pop %v2227
    %v2230 = vmul.f32 %v2216, %v2228
    %v2231 = vmul.f32 %v2217, %v2229
    %v2233 = vlaneseq
    %v2234 = vshrl.u32 %v2233, 7
    %v2235 = vsub.s32 0, %v2234
    %v2236 = vrot.slane %v2207, %v2235
    %v2238 = vmul.f32 %v2230, %v2236
    %v2239 = vmul.f32 %v2231, %v2236
    %v2241 = vlaneseq
    %v2242 = vshrl.u32 %v2241, 7
    %v2243 = vsub.s32 0, %v2242
    %v2244 = vrot.slane %v2209, %v2243
    %v2246 = vadd.f32 %v2238, %v2244
    %v2247 = vadd.f32 %v2239, %v2244
    %v2248 = vpack.c.bf16 %v2247, %v2246
    %s2249 = scalar_lea.vmem [#allocation6], 256
    %v2250 = vld [vmem:[%s2249] sm:$0xff]
    %v2251 = vld [vmem:[%s2249 + $0x8] sm:$0xff]
    %v2252 = vld [vmem:[%s2249 + $0x10] sm:$0xff]
    %v2253 = vld [vmem:[%s2249 + $0x18] sm:$0xff]
    %v2254 = vld [vmem:[%s2249 + $0x20] sm:$0xff]
    %v2255 = vld [vmem:[%s2249 + $0x28] sm:$0xff]
    %v2256 = vld [vmem:[%s2249 + $0x30] sm:$0xff]
    %v2257 = vld [vmem:[%s2249 + $0x38] sm:$0xff]
    %v2258 = vld [vmem:[%s2249 + $0x40] sm:$0xff]
    %v2259 = vld [vmem:[%s2249 + $0x48] sm:$0xff]
    %v2260 = vld [vmem:[%s2249 + $0x50] sm:$0xff]
    %v2261 = vld [vmem:[%s2249 + $0x58] sm:$0xff]
    %v2262 = vld [vmem:[%s2249 + $0x60] sm:$0xff]
    %v2263 = vld [vmem:[%s2249 + $0x68] sm:$0xff]
    %v2264 = vld [vmem:[%s2249 + $0x70] sm:$0xff]
    %v2265 = vld [vmem:[%s2249 + $0x78] sm:$0xff]
    %v2266 = vld [vmem:[%s2249 + $0x80] sm:$0xff]
    %v2267 = vld [vmem:[%s2249 + $0x88] sm:$0xff]
    %v2268 = vld [vmem:[%s2249 + $0x90] sm:$0xff]
    %v2269 = vld [vmem:[%s2249 + $0x98] sm:$0xff]
    %v2270 = vld [vmem:[%s2249 + $0xa0] sm:$0xff]
    %v2271 = vld [vmem:[%s2249 + $0xa8] sm:$0xff]
    %v2272 = vld [vmem:[%s2249 + $0xb0] sm:$0xff]
    %v2273 = vld [vmem:[%s2249 + $0xb8] sm:$0xff]
    %v2274 = vld [vmem:[%s2249 + $0xc0] sm:$0xff]
    %v2275 = vld [vmem:[%s2249 + $0xc8] sm:$0xff]
    %v2276 = vld [vmem:[%s2249 + $0xd0] sm:$0xff]
    %v2277 = vld [vmem:[%s2249 + $0xd8] sm:$0xff]
    %v2278 = vld [vmem:[%s2249 + $0xe0] sm:$0xff]
    %v2279 = vld [vmem:[%s2249 + $0xe8] sm:$0xff]
    %v2280 = vld [vmem:[%s2249 + $0xf0] sm:$0xff]
    %v2281 = vld [vmem:[%s2249 + $0xf8] sm:$0xff]
    %s2282 = scalar_lea.vmem %s9, 4
    %v2283 = vld [vmem:[%s2282] sm:$0xf]
    %v2285 = vlaneseq
    %v2286 = vshrl.u32 %v2285, 7
    %v2287 = vsub.s32 0, %v2286
    %v2288 = vrot.slane %v2283, %v2287
    %v2289 = vlaneseq
    %v2290 = vshrl.u32 %v2289, 7
    %v2291 = vsub.s32 1, %v2290
    %v2292 = vrot.slane %v2283, %v2291
    %v2293 = vlaneseq
    %v2294 = vshrl.u32 %v2293, 7
    %v2295 = vsub.s32 2, %v2294
    %v2296 = vrot.slane %v2283, %v2295
    %v2297 = vlaneseq
    %v2298 = vshrl.u32 %v2297, 7
    %v2299 = vsub.s32 3, %v2298
    %v2300 = vrot.slane %v2283, %v2299
    %v2337 = vunpack.c.l.b16 %v2250
    %v2338 = vunpack.c.h.b16 %v2250
    %v2339 = vunpack.c.l.b16 %v2251
    %v2340 = vunpack.c.h.b16 %v2251
    %v2341 = vunpack.c.l.b16 %v2252
    %v2342 = vunpack.c.h.b16 %v2252
    %v2343 = vunpack.c.l.b16 %v2253
    %v2344 = vunpack.c.h.b16 %v2253
    %v2345 = vunpack.c.l.b16 %v2254
    %v2346 = vunpack.c.h.b16 %v2254
    %v2347 = vunpack.c.l.b16 %v2255
    %v2348 = vunpack.c.h.b16 %v2255
    %v2349 = vunpack.c.l.b16 %v2256
    %v2350 = vunpack.c.h.b16 %v2256
    %v2351 = vunpack.c.l.b16 %v2257
    %v2352 = vunpack.c.h.b16 %v2257
    %v2353 = vunpack.c.l.b16 %v2258
    %v2354 = vunpack.c.h.b16 %v2258
    %v2355 = vunpack.c.l.b16 %v2259
    %v2356 = vunpack.c.h.b16 %v2259
    %v2357 = vunpack.c.l.b16 %v2260
    %v2358 = vunpack.c.h.b16 %v2260
    %v2359 = vunpack.c.l.b16 %v2261
    %v2360 = vunpack.c.h.b16 %v2261
    %v2361 = vunpack.c.l.b16 %v2262
    %v2362 = vunpack.c.h.b16 %v2262
    %v2363 = vunpack.c.l.b16 %v2263
    %v2364 = vunpack.c.h.b16 %v2263
    %v2365 = vunpack.c.l.b16 %v2264
    %v2366 = vunpack.c.h.b16 %v2264
    %v2367 = vunpack.c.l.b16 %v2265
    %v2368 = vunpack.c.h.b16 %v2265
    %v2369 = vunpack.c.l.b16 %v2266
    %v2370 = vunpack.c.h.b16 %v2266
    %v2371 = vunpack.c.l.b16 %v2267
    %v2372 = vunpack.c.h.b16 %v2267
    %v2373 = vunpack.c.l.b16 %v2268
    %v2374 = vunpack.c.h.b16 %v2268
    %v2375 = vunpack.c.l.b16 %v2269
    %v2376 = vunpack.c.h.b16 %v2269
    %v2377 = vunpack.c.l.b16 %v2270
    %v2378 = vunpack.c.h.b16 %v2270
    %v2379 = vunpack.c.l.b16 %v2271
    %v2380 = vunpack.c.h.b16 %v2271
    %v2381 = vunpack.c.l.b16 %v2272
    %v2382 = vunpack.c.h.b16 %v2272
    %v2383 = vunpack.c.l.b16 %v2273
    %v2384 = vunpack.c.h.b16 %v2273
    %v2385 = vunpack.c.l.b16 %v2274
    %v2386 = vunpack.c.h.b16 %v2274
    %v2387 = vunpack.c.l.b16 %v2275
    %v2388 = vunpack.c.h.b16 %v2275
    %v2389 = vunpack.c.l.b16 %v2276
    %v2390 = vunpack.c.h.b16 %v2276
    %v2391 = vunpack.c.l.b16 %v2277
    %v2392 = vunpack.c.h.b16 %v2277
    %v2393 = vunpack.c.l.b16 %v2278
    %v2394 = vunpack.c.h.b16 %v2278
    %v2395 = vunpack.c.l.b16 %v2279
    %v2396 = vunpack.c.h.b16 %v2279
    %v2397 = vunpack.c.l.b16 %v2280
    %v2398 = vunpack.c.h.b16 %v2280
    %v2399 = vunpack.c.l.b16 %v2281
    %v2400 = vunpack.c.h.b16 %v2281
    %v2401 = vpack.c.b16 %v2341, %v2337
    %v2402 = vpack.c.b16 %v2342, %v2338
    %v2403 = vpack.c.b16 %v2343, %v2339
    %v2404 = vpack.c.b16 %v2344, %v2340
    %v2405 = vpack.c.b16 %v2349, %v2345
    %v2406 = vpack.c.b16 %v2350, %v2346
    %v2407 = vpack.c.b16 %v2351, %v2347
    %v2408 = vpack.c.b16 %v2352, %v2348
    %v2409 = vpack.c.b16 %v2357, %v2353
    %v2410 = vpack.c.b16 %v2358, %v2354
    %v2411 = vpack.c.b16 %v2359, %v2355
    %v2412 = vpack.c.b16 %v2360, %v2356
    %v2413 = vpack.c.b16 %v2365, %v2361
    %v2414 = vpack.c.b16 %v2366, %v2362
    %v2415 = vpack.c.b16 %v2367, %v2363
    %v2416 = vpack.c.b16 %v2368, %v2364
    %v2417 = vpack.c.b16 %v2373, %v2369
    %v2418 = vpack.c.b16 %v2374, %v2370
    %v2419 = vpack.c.b16 %v2375, %v2371
    %v2420 = vpack.c.b16 %v2376, %v2372
    %v2421 = vpack.c.b16 %v2381, %v2377
    %v2422 = vpack.c.b16 %v2382, %v2378
    %v2423 = vpack.c.b16 %v2383, %v2379
    %v2424 = vpack.c.b16 %v2384, %v2380
    %v2425 = vpack.c.b16 %v2389, %v2385
    %v2426 = vpack.c.b16 %v2390, %v2386
    %v2427 = vpack.c.b16 %v2391, %v2387
    %v2428 = vpack.c.b16 %v2392, %v2388
    %v2429 = vpack.c.b16 %v2397, %v2393
    %v2430 = vpack.c.b16 %v2398, %v2394
    %v2431 = vpack.c.b16 %v2399, %v2395
    %v2432 = vpack.c.b16 %v2400, %v2396
    %2465 = vmatprep.subr.bf16.mxu0 %v2430
    %2466 = vmatpush1.bf16.msra.mxu0 %v2429
    %2467 = vmatprep.subr.bf16.mxu0 %v2426
    %2468 = vmatpush1.bf16.msra.mxu0 %v2425
    %2469 = vmatprep.subr.bf16.mxu0 %v2422
    %2470 = vmatpush1.bf16.msra.mxu0 %v2421
    %2471 = vmatprep.subr.bf16.mxu0 %v2418
    %2472 = vmatpush1.bf16.msra.mxu0 %v2417
    %2473 = vmatprep.subr.bf16.mxu0 %v2414
    %2474 = vmatpush1.bf16.msra.mxu0 %v2413
    %2475 = vmatprep.subr.bf16.mxu0 %v2410
    %2476 = vmatpush1.bf16.msra.mxu0 %v2409
    %2477 = vmatprep.subr.bf16.mxu0 %v2406
    %2478 = vmatpush1.bf16.msra.mxu0 %v2405
    %2479 = vmatprep.subr.bf16.mxu0 %v2402
    %2480 = vmatpush1.bf16.msra.mxu0 %v2401
    %2481 = vmatprep.subr.bf16.mxu0 0
    %2482 = vmatpush2.bf16.msra.mxu0 0
    %2483 = vmatprep.subr.bf16.mxu0 0
    %2484 = vmatpush2.bf16.msra.mxu0 0
    %2485 = vmatprep.subr.bf16.mxu0 0
    %2486 = vmatpush2.bf16.msra.mxu0 0
    %2487 = vmatprep.subr.bf16.mxu0 0
    %2488 = vmatpush2.bf16.msra.mxu0 0
    %2489 = vmatprep.subr.bf16.mxu0 0
    %2490 = vmatpush2.bf16.msra.mxu0 0
    %2491 = vmatprep.subr.bf16.mxu0 0
    %2492 = vmatpush2.bf16.msra.mxu0 0
    %2493 = vmatprep.subr.bf16.mxu0 0
    %2494 = vmatpush2.bf16.msra.mxu0 0
    %2495 = vmatprep.subr.bf16.mxu0 0
    %2496 = vmatpush2.bf16.msra.mxu0 0
    %2497 = vmatprep.mubr.bf16.mxu0 0
    %2498 = vmatmul.mubr.bf16.gmra.mxu0 %v2248
    %v2499 = vpop.f32.mrf.mxu0
    %v2500 = vadd.f32 %v2288, %v2499
    %v2501 = vpop.f32.mrf.mxu0
    %v2502 = vadd.f32 %v2292, %v2501
    %v2503 = vpop.f32.mrf.mxu0
    %v2504 = vadd.f32 %v2288, %v2503
    %v2505 = vpop.f32.mrf.mxu0
    %v2506 = vadd.f32 %v2292, %v2505
    %2507 = vdwg.mxu0
    %2508 = vmatprep.subr.bf16.mxu0 %v2432
    %2509 = vmatpush1.bf16.msra.mxu0 %v2431
    %2510 = vmatprep.subr.bf16.mxu0 %v2428
    %2511 = vmatpush1.bf16.msra.mxu0 %v2427
    %2512 = vmatprep.subr.bf16.mxu0 %v2424
    %2513 = vmatpush1.bf16.msra.mxu0 %v2423
    %2514 = vmatprep.subr.bf16.mxu0 %v2420
    %2515 = vmatpush1.bf16.msra.mxu0 %v2419
    %2516 = vmatprep.subr.bf16.mxu0 %v2416
    %2517 = vmatpush1.bf16.msra.mxu0 %v2415
    %2518 = vmatprep.subr.bf16.mxu0 %v2412
    %2519 = vmatpush1.bf16.msra.mxu0 %v2411
    %2520 = vmatprep.subr.bf16.mxu0 %v2408
    %2521 = vmatpush1.bf16.msra.mxu0 %v2407
    %2522 = vmatprep.subr.bf16.mxu0 %v2404
    %2523 = vmatpush1.bf16.msra.mxu0 %v2403
    %2524 = vmatprep.subr.bf16.mxu0 0
    %2525 = vmatpush2.bf16.msra.mxu0 0
    %2526 = vmatprep.subr.bf16.mxu0 0
    %2527 = vmatpush2.bf16.msra.mxu0 0
    %2528 = vmatprep.subr.bf16.mxu0 0
    %2529 = vmatpush2.bf16.msra.mxu0 0
    %2530 = vmatprep.subr.bf16.mxu0 0
    %2531 = vmatpush2.bf16.msra.mxu0 0
    %2532 = vmatprep.subr.bf16.mxu0 0
    %2533 = vmatpush2.bf16.msra.mxu0 0
    %2534 = vmatprep.subr.bf16.mxu0 0
    %2535 = vmatpush2.bf16.msra.mxu0 0
    %2536 = vmatprep.subr.bf16.mxu0 0
    %2537 = vmatpush2.bf16.msra.mxu0 0
    %2538 = vmatprep.subr.bf16.mxu0 0
    %2539 = vmatpush2.bf16.msra.mxu0 0
    %2540 = vmatprep.mubr.bf16.mxu0 0
    %2541 = vmatmul.mubr.bf16.gmra.mxu0 %v2248
    %v2542 = vpop.f32.mrf.mxu0
    %v2543 = vadd.f32 %v2296, %v2542
    %v2544 = vpop.f32.mrf.mxu0
    %v2545 = vadd.f32 %v2300, %v2544
    %v2546 = vpop.f32.mrf.mxu0
    %v2547 = vadd.f32 %v2296, %v2546
    %v2548 = vpop.f32.mrf.mxu0
    %v2549 = vadd.f32 %v2300, %v2548
    %2550 = vdwg.mxu0
    %v2551 = vmul.f32 %v2500, 0.5
    %v2552 = vmul.f32 %v2502, 0.5
    %v2553 = vmul.f32 %v2543, 0.5
    %v2554 = vmul.f32 %v2545, 0.5
    %v2555 = vmul.f32 %v2504, 0.5
    %v2556 = vmul.f32 %v2506, 0.5
    %v2557 = vmul.f32 %v2547, 0.5
    %v2558 = vmul.f32 %v2549, 0.5
    %v2559 = vmul.f32 %v2500, 0.044715
    %v2560 = vmul.f32 %v2502, 0.044715
    %v2561 = vmul.f32 %v2543, 0.044715
    %v2562 = vmul.f32 %v2545, 0.044715
    %v2563 = vmul.f32 %v2504, 0.044715
    %v2564 = vmul.f32 %v2506, 0.044715
    %v2565 = vmul.f32 %v2547, 0.044715
    %v2566 = vmul.f32 %v2549, 0.044715
    %v2567 = vmul.f32 %v2559, %v2500
    %v2568 = vmul.f32 %v2560, %v2502
    %v2569 = vmul.f32 %v2561, %v2543
    %v2570 = vmul.f32 %v2562, %v2545
    %v2571 = vmul.f32 %v2563, %v2504
    %v2572 = vmul.f32 %v2564, %v2506
    %v2573 = vmul.f32 %v2565, %v2547
    %v2574 = vmul.f32 %v2566, %v2549
    %v2575 = vmul.f32 %v2567, %v2500
    %v2576 = vmul.f32 %v2568, %v2502
    %v2577 = vmul.f32 %v2569, %v2543
    %v2578 = vmul.f32 %v2570, %v2545
    %v2579 = vmul.f32 %v2571, %v2504
    %v2580 = vmul.f32 %v2572, %v2506
    %v2581 = vmul.f32 %v2573, %v2547
    %v2582 = vmul.f32 %v2574, %v2549
    %v2583 = vadd.f32 %v2500, %v2575
    %v2584 = vadd.f32 %v2502, %v2576
    %v2585 = vadd.f32 %v2543, %v2577
    %v2586 = vadd.f32 %v2545, %v2578
    %v2587 = vadd.f32 %v2504, %v2579
    %v2588 = vadd.f32 %v2506, %v2580
    %v2589 = vadd.f32 %v2547, %v2581
    %v2590 = vadd.f32 %v2549, %v2582
    %v2591 = vmul.f32 %v2583, 0.7978846
    %v2592 = vmul.f32 %v2584, 0.7978846
    %v2593 = vmul.f32 %v2585, 0.7978846
    %v2594 = vmul.f32 %v2586, 0.7978846
    %v2595 = vmul.f32 %v2587, 0.7978846
    %v2596 = vmul.f32 %v2588, 0.7978846
    %v2597 = vmul.f32 %v2589, 0.7978846
    %v2598 = vmul.f32 %v2590, 0.7978846
    %v2599 = vtanh.pop %v2591
    %v2600 = vtanh.pop %v2592
    %v2601 = vtanh.pop %v2593
    %v2602 = vtanh.pop %v2594
    %v2603 = vtanh.pop %v2595
    %v2604 = vtanh.pop %v2596
    %v2605 = vtanh.pop %v2597
    %v2606 = vtanh.pop %v2598
    %v2607 = vadd.f32 %v2599, 1.0
    %v2608 = vadd.f32 %v2600, 1.0
    %v2609 = vadd.f32 %v2601, 1.0
    %v2610 = vadd.f32 %v2602, 1.0
    %v2611 = vadd.f32 %v2603, 1.0
    %v2612 = vadd.f32 %v2604, 1.0
    %v2613 = vadd.f32 %v2605, 1.0
    %v2614 = vadd.f32 %v2606, 1.0
    %v2615 = vmul.f32 %v2551, %v2607
    %v2616 = vmul.f32 %v2552, %v2608
    %v2617 = vmul.f32 %v2553, %v2609
    %v2618 = vmul.f32 %v2554, %v2610
    %v2619 = vmul.f32 %v2555, %v2611
    %v2620 = vmul.f32 %v2556, %v2612
    %v2621 = vmul.f32 %v2557, %v2613
    %v2622 = vmul.f32 %v2558, %v2614
    %v2623 = vpack.c.bf16 %v2619, %v2615
    %v2624 = vpack.c.bf16 %v2620, %v2616
    %v2625 = vpack.c.bf16 %v2621, %v2617
    %v2626 = vpack.c.bf16 %v2622, %v2618
    %s2627 = scalar_lea.vmem [#allocation7], 256
    %v2628 = vld [vmem:[%s2627] sm:$0xf]
    %v2629 = vld [vmem:[%s2627 + $0x4] sm:$0xf]
    %v2630 = vld [vmem:[%s2627 + $0x8] sm:$0xf]
    %v2631 = vld [vmem:[%s2627 + $0xc] sm:$0xf]
    %v2632 = vld [vmem:[%s2627 + $0x10] sm:$0xf]
    %v2633 = vld [vmem:[%s2627 + $0x14] sm:$0xf]
    %v2634 = vld [vmem:[%s2627 + $0x18] sm:$0xf]
    %v2635 = vld [vmem:[%s2627 + $0x1c] sm:$0xf]
    %v2636 = vld [vmem:[%s2627 + $0x20] sm:$0xf]
    %v2637 = vld [vmem:[%s2627 + $0x24] sm:$0xf]
    %v2638 = vld [vmem:[%s2627 + $0x28] sm:$0xf]
    %v2639 = vld [vmem:[%s2627 + $0x2c] sm:$0xf]
    %v2640 = vld [vmem:[%s2627 + $0x30] sm:$0xf]
    %v2641 = vld [vmem:[%s2627 + $0x34] sm:$0xf]
    %v2642 = vld [vmem:[%s2627 + $0x38] sm:$0xf]
    %v2643 = vld [vmem:[%s2627 + $0x3c] sm:$0xf]
    %v2644 = vld [vmem:[%s2627 + $0x40] sm:$0xf]
    %v2645 = vld [vmem:[%s2627 + $0x44] sm:$0xf]
    %v2646 = vld [vmem:[%s2627 + $0x48] sm:$0xf]
    %v2647 = vld [vmem:[%s2627 + $0x4c] sm:$0xf]
    %v2648 = vld [vmem:[%s2627 + $0x50] sm:$0xf]
    %v2649 = vld [vmem:[%s2627 + $0x54] sm:$0xf]
    %v2650 = vld [vmem:[%s2627 + $0x58] sm:$0xf]
    %v2651 = vld [vmem:[%s2627 + $0x5c] sm:$0xf]
    %v2652 = vld [vmem:[%s2627 + $0x60] sm:$0xf]
    %v2653 = vld [vmem:[%s2627 + $0x64] sm:$0xf]
    %v2654 = vld [vmem:[%s2627 + $0x68] sm:$0xf]
    %v2655 = vld [vmem:[%s2627 + $0x6c] sm:$0xf]
    %v2656 = vld [vmem:[%s2627 + $0x70] sm:$0xf]
    %v2657 = vld [vmem:[%s2627 + $0x74] sm:$0xf]
    %v2658 = vld [vmem:[%s2627 + $0x78] sm:$0xf]
    %v2659 = vld [vmem:[%s2627 + $0x7c] sm:$0xf]
    %v2660 = vld [vmem:[%s2627 + $0x80] sm:$0xf]
    %v2661 = vld [vmem:[%s2627 + $0x84] sm:$0xf]
    %v2662 = vld [vmem:[%s2627 + $0x88] sm:$0xf]
    %v2663 = vld [vmem:[%s2627 + $0x8c] sm:$0xf]
    %v2664 = vld [vmem:[%s2627 + $0x90] sm:$0xf]
    %v2665 = vld [vmem:[%s2627 + $0x94] sm:$0xf]
    %v2666 = vld [vmem:[%s2627 + $0x98] sm:$0xf]
    %v2667 = vld [vmem:[%s2627 + $0x9c] sm:$0xf]
    %v2668 = vld [vmem:[%s2627 + $0xa0] sm:$0xf]
    %v2669 = vld [vmem:[%s2627 + $0xa4] sm:$0xf]
    %v2670 = vld [vmem:[%s2627 + $0xa8] sm:$0xf]
    %v2671 = vld [vmem:[%s2627 + $0xac] sm:$0xf]
    %v2672 = vld [vmem:[%s2627 + $0xb0] sm:$0xf]
    %v2673 = vld [vmem:[%s2627 + $0xb4] sm:$0xf]
    %v2674 = vld [vmem:[%s2627 + $0xb8] sm:$0xf]
    %v2675 = vld [vmem:[%s2627 + $0xbc] sm:$0xf]
    %v2676 = vld [vmem:[%s2627 + $0xc0] sm:$0xf]
    %v2677 = vld [vmem:[%s2627 + $0xc4] sm:$0xf]
    %v2678 = vld [vmem:[%s2627 + $0xc8] sm:$0xf]
    %v2679 = vld [vmem:[%s2627 + $0xcc] sm:$0xf]
    %v2680 = vld [vmem:[%s2627 + $0xd0] sm:$0xf]
    %v2681 = vld [vmem:[%s2627 + $0xd4] sm:$0xf]
    %v2682 = vld [vmem:[%s2627 + $0xd8] sm:$0xf]
    %v2683 = vld [vmem:[%s2627 + $0xdc] sm:$0xf]
    %v2684 = vld [vmem:[%s2627 + $0xe0] sm:$0xf]
    %v2685 = vld [vmem:[%s2627 + $0xe4] sm:$0xf]
    %v2686 = vld [vmem:[%s2627 + $0xe8] sm:$0xf]
    %v2687 = vld [vmem:[%s2627 + $0xec] sm:$0xf]
    %v2688 = vld [vmem:[%s2627 + $0xf0] sm:$0xf]
    %v2689 = vld [vmem:[%s2627 + $0xf4] sm:$0xf]
    %v2690 = vld [vmem:[%s2627 + $0xf8] sm:$0xf]
    %v2691 = vld [vmem:[%s2627 + $0xfc] sm:$0xf]
    %s2692 = scalar_lea.vmem %s11, 1
    %v2693 = vld [vmem:[%s2692] sm:$0x1]
    %v2695 = vlaneseq
    %v2696 = vshrl.u32 %v2695, 7
    %v2697 = vsub.s32 0, %v2696
    %v2698 = vrot.slane %v2693, %v2697
    %v2764 = vunpack.c.l.b16 %v2628
    %v2765 = vunpack.c.l.b16 %v2629
    %v2766 = vunpack.c.l.b16 %v2630
    %v2767 = vunpack.c.l.b16 %v2631
    %v2768 = vunpack.c.l.b16 %v2632
    %v2769 = vunpack.c.l.b16 %v2633
    %v2770 = vunpack.c.l.b16 %v2634
    %v2771 = vunpack.c.l.b16 %v2635
    %v2772 = vunpack.c.l.b16 %v2636
    %v2773 = vunpack.c.l.b16 %v2637
    %v2774 = vunpack.c.l.b16 %v2638
    %v2775 = vunpack.c.l.b16 %v2639
    %v2776 = vunpack.c.l.b16 %v2640
    %v2777 = vunpack.c.l.b16 %v2641
    %v2778 = vunpack.c.l.b16 %v2642
    %v2779 = vunpack.c.l.b16 %v2643
    %v2780 = vunpack.c.l.b16 %v2644
    %v2781 = vunpack.c.l.b16 %v2645
    %v2782 = vunpack.c.l.b16 %v2646
    %v2783 = vunpack.c.l.b16 %v2647
    %v2784 = vunpack.c.l.b16 %v2648
    %v2785 = vunpack.c.l.b16 %v2649
    %v2786 = vunpack.c.l.b16 %v2650
    %v2787 = vunpack.c.l.b16 %v2651
    %v2788 = vunpack.c.l.b16 %v2652
    %v2789 = vunpack.c.l.b16 %v2653
    %v2790 = vunpack.c.l.b16 %v2654
    %v2791 = vunpack.c.l.b16 %v2655
    %v2792 = vunpack.c.l.b16 %v2656
    %v2793 = vunpack.c.l.b16 %v2657
    %v2794 = vunpack.c.l.b16 %v2658
    %v2795 = vunpack.c.l.b16 %v2659
    %v2796 = vunpack.c.l.b16 %v2660
    %v2797 = vunpack.c.l.b16 %v2661
    %v2798 = vunpack.c.l.b16 %v2662
    %v2799 = vunpack.c.l.b16 %v2663
    %v2800 = vunpack.c.l.b16 %v2664
    %v2801 = vunpack.c.l.b16 %v2665
    %v2802 = vunpack.c.l.b16 %v2666
    %v2803 = vunpack.c.l.b16 %v2667
    %v2804 = vunpack.c.l.b16 %v2668
    %v2805 = vunpack.c.l.b16 %v2669
    %v2806 = vunpack.c.l.b16 %v2670
    %v2807 = vunpack.c.l.b16 %v2671
    %v2808 = vunpack.c.l.b16 %v2672
    %v2809 = vunpack.c.l.b16 %v2673
    %v2810 = vunpack.c.l.b16 %v2674
    %v2811 = vunpack.c.l.b16 %v2675
    %v2812 = vunpack.c.l.b16 %v2676
    %v2813 = vunpack.c.l.b16 %v2677
    %v2814 = vunpack.c.l.b16 %v2678
    %v2815 = vunpack.c.l.b16 %v2679
    %v2816 = vunpack.c.l.b16 %v2680
    %v2817 = vunpack.c.l.b16 %v2681
    %v2818 = vunpack.c.l.b16 %v2682
    %v2819 = vunpack.c.l.b16 %v2683
    %v2820 = vunpack.c.l.b16 %v2684
    %v2821 = vunpack.c.l.b16 %v2685
    %v2822 = vunpack.c.l.b16 %v2686
    %v2823 = vunpack.c.l.b16 %v2687
    %v2824 = vunpack.c.l.b16 %v2688
    %v2825 = vunpack.c.l.b16 %v2689
    %v2826 = vunpack.c.l.b16 %v2690
    %v2827 = vunpack.c.l.b16 %v2691
    %v2828 = vpack.c.b16 %v2765, %v2764
    %v2829 = vpack.c.b16 %v2767, %v2766
    %v2830 = vpack.c.b16 %v2769, %v2768
    %v2831 = vpack.c.b16 %v2771, %v2770
    %v2832 = vpack.c.b16 %v2773, %v2772
    %v2833 = vpack.c.b16 %v2775, %v2774
    %v2834 = vpack.c.b16 %v2777, %v2776
    %v2835 = vpack.c.b16 %v2779, %v2778
    %v2836 = vpack.c.b16 %v2781, %v2780
    %v2837 = vpack.c.b16 %v2783, %v2782
    %v2838 = vpack.c.b16 %v2785, %v2784
    %v2839 = vpack.c.b16 %v2787, %v2786
    %v2840 = vpack.c.b16 %v2789, %v2788
    %v2841 = vpack.c.b16 %v2791, %v2790
    %v2842 = vpack.c.b16 %v2793, %v2792
    %v2843 = vpack.c.b16 %v2795, %v2794
    %v2844 = vpack.c.b16 %v2797, %v2796
    %v2845 = vpack.c.b16 %v2799, %v2798
    %v2846 = vpack.c.b16 %v2801, %v2800
    %v2847 = vpack.c.b16 %v2803, %v2802
    %v2848 = vpack.c.b16 %v2805, %v2804
    %v2849 = vpack.c.b16 %v2807, %v2806
    %v2850 = vpack.c.b16 %v2809, %v2808
    %v2851 = vpack.c.b16 %v2811, %v2810
    %v2852 = vpack.c.b16 %v2813, %v2812
    %v2853 = vpack.c.b16 %v2815, %v2814
    %v2854 = vpack.c.b16 %v2817, %v2816
    %v2855 = vpack.c.b16 %v2819, %v2818
    %v2856 = vpack.c.b16 %v2821, %v2820
    %v2857 = vpack.c.b16 %v2823, %v2822
    %v2858 = vpack.c.b16 %v2825, %v2824
    %v2859 = vpack.c.b16 %v2827, %v2826
    %2892 = vmatprep.subr.bf16.mxu0 0
    %2893 = vmatpush1.bf16.msra.mxu0 %v2835
    %2894 = vmatprep.subr.bf16.mxu0 0
    %2895 = vmatpush1.bf16.msra.mxu0 %v2834
    %2896 = vmatprep.subr.bf16.mxu0 0
    %2897 = vmatpush1.bf16.msra.mxu0 %v2833
    %2898 = vmatprep.subr.bf16.mxu0 0
    %2899 = vmatpush1.bf16.msra.mxu0 %v2832
    %2900 = vmatprep.subr.bf16.mxu0 0
    %2901 = vmatpush1.bf16.msra.mxu0 %v2831
    %2902 = vmatprep.subr.bf16.mxu0 0
    %2903 = vmatpush1.bf16.msra.mxu0 %v2830
    %2904 = vmatprep.subr.bf16.mxu0 0
    %2905 = vmatpush1.bf16.msra.mxu0 %v2829
    %2906 = vmatprep.subr.bf16.mxu0 0
    %2907 = vmatpush1.bf16.msra.mxu0 %v2828
    %2908 = vmatprep.subr.bf16.mxu0 0
    %2909 = vmatpush2.bf16.msra.mxu0 %v2843
    %2910 = vmatprep.subr.bf16.mxu0 0
    %2911 = vmatpush2.bf16.msra.mxu0 %v2842
    %2912 = vmatprep.subr.bf16.mxu0 0
    %2913 = vmatpush2.bf16.msra.mxu0 %v2841
    %2914 = vmatprep.subr.bf16.mxu0 0
    %2915 = vmatpush2.bf16.msra.mxu0 %v2840
    %2916 = vmatprep.subr.bf16.mxu0 0
    %2917 = vmatpush2.bf16.msra.mxu0 %v2839
    %2918 = vmatprep.subr.bf16.mxu0 0
    %2919 = vmatpush2.bf16.msra.mxu0 %v2838
    %2920 = vmatprep.subr.bf16.mxu0 0
    %2921 = vmatpush2.bf16.msra.mxu0 %v2837
    %2922 = vmatprep.subr.bf16.mxu0 0
    %2923 = vmatpush2.bf16.msra.mxu0 %v2836
    %2924 = vmatprep.mubr.bf16.mxu0 %v2624
    %2925 = vmatmul.mubr.bf16.gmra.mxu0 %v2623
    %v2926 = vpop.f32.mrf.mxu0
    %v2927 = vadd.f32 %v2698, %v2926
    %v2928 = vpop.f32.mrf.mxu0
    %v2929 = vpop.f32.mrf.mxu0
    %v2930 = vadd.f32 %v2698, %v2929
    %v2931 = vpop.f32.mrf.mxu0
    %2932 = vdwg.mxu0
    %2933 = vmatprep.subr.bf16.mxu0 0
    %2934 = vmatpush1.bf16.msra.mxu0 %v2851
    %2935 = vmatprep.subr.bf16.mxu0 0
    %2936 = vmatpush1.bf16.msra.mxu0 %v2850
    %2937 = vmatprep.subr.bf16.mxu0 0
    %2938 = vmatpush1.bf16.msra.mxu0 %v2849
    %2939 = vmatprep.subr.bf16.mxu0 0
    %2940 = vmatpush1.bf16.msra.mxu0 %v2848
    %2941 = vmatprep.subr.bf16.mxu0 0
    %2942 = vmatpush1.bf16.msra.mxu0 %v2847
    %2943 = vmatprep.subr.bf16.mxu0 0
    %2944 = vmatpush1.bf16.msra.mxu0 %v2846
    %2945 = vmatprep.subr.bf16.mxu0 0
    %2946 = vmatpush1.bf16.msra.mxu0 %v2845
    %2947 = vmatprep.subr.bf16.mxu0 0
    %2948 = vmatpush1.bf16.msra.mxu0 %v2844
    %2949 = vmatprep.subr.bf16.mxu0 0
    %2950 = vmatpush2.bf16.msra.mxu0 %v2859
    %2951 = vmatprep.subr.bf16.mxu0 0
    %2952 = vmatpush2.bf16.msra.mxu0 %v2858
    %2953 = vmatprep.subr.bf16.mxu0 0
    %2954 = vmatpush2.bf16.msra.mxu0 %v2857
    %2955 = vmatprep.subr.bf16.mxu0 0
    %2956 = vmatpush2.bf16.msra.mxu0 %v2856
    %2957 = vmatprep.subr.bf16.mxu0 0
    %2958 = vmatpush2.bf16.msra.mxu0 %v2855
    %2959 = vmatprep.subr.bf16.mxu0 0
    %2960 = vmatpush2.bf16.msra.mxu0 %v2854
    %2961 = vmatprep.subr.bf16.mxu0 0
    %2962 = vmatpush2.bf16.msra.mxu0 %v2853
    %2963 = vmatprep.subr.bf16.mxu0 0
    %2964 = vmatpush2.bf16.msra.mxu0 %v2852
    %2965 = vmatprep.mubr.bf16.mxu0 %v2626
    %2966 = vmatmul.mubr.bf16.gmra.mxu0 %v2625
    %v2967 = vpop.f32.mrf.mxu0
    %v2968 = vadd.f32 %v2927, %v2967
    %v2969 = vpop.f32.mrf.mxu0
    %v2970 = vpop.f32.mrf.mxu0
    %v2971 = vadd.f32 %v2930, %v2970
    %v2972 = vpop.f32.mrf.mxu0
    %2973 = vdwg.mxu0
    %v2974 = vadd.f32 %v2968, %v2246
    %v2975 = vadd.f32 %v2971, %v2247
    %s2976 = scalar_lea.vmem [#allocation9], 1
    %v2977 = vld [vmem:[%s2976] sm:$0x1]
    %s2978 = scalar_lea.vmem [#allocation10], 1
    %v2979 = vld [vmem:[%s2978] sm:$0x1]
    %2980 = vadd.xlane.f32.xlu0 %v2974
    %v2981 = vpop.xlane.xlu0 %2980
    %2982 = vadd.xlane.f32.xlu0 %v2975
    %v2983 = vpop.xlane.xlu0 %2982
    %v2984 = vmul.f32 %v2981, %v799
    %v2985 = vmul.f32 %v2983, %v799
    %v2986 = vsub.f32 %v2974, %v2984
    %v2987 = vsub.f32 %v2975, %v2985
    %v2988 = vmul.f32 %v2986, %v2986
    %v2989 = vmul.f32 %v2987, %v2987
    %2990 = vadd.xlane.f32.xlu0 %v2988
    %v2991 = vpop.xlane.xlu0 %2990
    %2992 = vadd.xlane.f32.xlu0 %v2989
    %v2993 = vpop.xlane.xlu0 %2992
    %v2994 = vmul.f32 %v2991, %v799
    %v2995 = vmul.f32 %v2993, %v799
    %v2996 = vadd.f32 %v2994, 1e-12
    %v2997 = vadd.f32 %v2995, 1e-12
    %v2998 = vrsqrt.pop %v2996
    %v2999 = vrsqrt.pop %v2997
    %v3000 = vmul.f32 %v2986, %v2998
    %v3001 = vmul.f32 %v2987, %v2999
    %v3003 = vlaneseq
    %v3004 = vshrl.u32 %v3003, 7
    %v3005 = vsub.s32 0, %v3004
    %v3006 = vrot.slane %v2977, %v3005
    %v3008 = vmul.f32 %v3000, %v3006
    %v3009 = vmul.f32 %v3001, %v3006
    %v3011 = vlaneseq
    %v3012 = vshrl.u32 %v3011, 7
    %v3013 = vsub.s32 0, %v3012
    %v3014 = vrot.slane %v2979, %v3013
    %v3016 = vadd.f32 %v3008, %v3014
    %v3017 = vadd.f32 %v3009, %v3014
    %v3018 = vpack.c.bf16 %v3017, %v3016
    %s3019 = scalar_lea.vmem [#allocation2], 384
    %v3020 = vld [vmem:[%s3019] sm:$0xff]
    %v3021 = vld [vmem:[%s3019 + $0x8] sm:$0xf]
    %v3022 = vld [vmem:[%s3019 + $0xc] sm:$0xff]
    %v3023 = vld [vmem:[%s3019 + $0x14] sm:$0xf]
    %v3024 = vld [vmem:[%s3019 + $0x18] sm:$0xff]
    %v3025 = vld [vmem:[%s3019 + $0x20] sm:$0xf]
    %v3026 = vld [vmem:[%s3019 + $0x24] sm:$0xff]
    %v3027 = vld [vmem:[%s3019 + $0x2c] sm:$0xf]
    %v3028 = vld [vmem:[%s3019 + $0x30] sm:$0xff]
    %v3029 = vld [vmem:[%s3019 + $0x38] sm:$0xf]
    %v3030 = vld [vmem:[%s3019 + $0x3c] sm:$0xff]
    %v3031 = vld [vmem:[%s3019 + $0x44] sm:$0xf]
    %v3032 = vld [vmem:[%s3019 + $0x48] sm:$0xff]
    %v3033 = vld [vmem:[%s3019 + $0x50] sm:$0xf]
    %v3034 = vld [vmem:[%s3019 + $0x54] sm:$0xff]
    %v3035 = vld [vmem:[%s3019 + $0x5c] sm:$0xf]
    %v3036 = vld [vmem:[%s3019 + $0x60] sm:$0xff]
    %v3037 = vld [vmem:[%s3019 + $0x68] sm:$0xf]
    %v3038 = vld [vmem:[%s3019 + $0x6c] sm:$0xff]
    %v3039 = vld [vmem:[%s3019 + $0x74] sm:$0xf]
    %v3040 = vld [vmem:[%s3019 + $0x78] sm:$0xff]
    %v3041 = vld [vmem:[%s3019 + $0x80] sm:$0xf]
    %v3042 = vld [vmem:[%s3019 + $0x84] sm:$0xff]
    %v3043 = vld [vmem:[%s3019 + $0x8c] sm:$0xf]
    %v3044 = vld [vmem:[%s3019 + $0x90] sm:$0xff]
    %v3045 = vld [vmem:[%s3019 + $0x98] sm:$0xf]
    %v3046 = vld [vmem:[%s3019 + $0x9c] sm:$0xff]
    %v3047 = vld [vmem:[%s3019 + $0xa4] sm:$0xf]
    %v3048 = vld [vmem:[%s3019 + $0xa8] sm:$0xff]
    %v3049 = vld [vmem:[%s3019 + $0xb0] sm:$0xf]
    %v3050 = vld [vmem:[%s3019 + $0xb4] sm:$0xff]
    %v3051 = vld [vmem:[%s3019 + $0xbc] sm:$0xf]
    %s3052 = scalar_lea.vmem %s3, 6
    %v3053 = vld [vmem:[%s3052] sm:$0x7]
    %v3055 = vlaneseq
    %v3056 = vshrl.u32 %v3055, 7
    %v3057 = vsub.s32 0, %v3056
    %v3058 = vrot.slane %v3053, %v3057
    %v3059 = vlaneseq
    %v3060 = vshrl.u32 %v3059, 7
    %v3061 = vsub.s32 1, %v3060
    %v3062 = vrot.slane %v3053, %v3061
    %v3063 = vlaneseq
    %v3064 = vshrl.u32 %v3063, 7
    %v3065 = vsub.s32 2, %v3064
    %v3066 = vrot.slane %v3053, %v3065
    %v3102 = vunpack.c.l.b16 %v3020
    %v3103 = vunpack.c.h.b16 %v3020
    %v3104 = vunpack.c.l.b16 %v3021
    %v3105 = vunpack.c.l.b16 %v3022
    %v3106 = vunpack.c.h.b16 %v3022
    %v3107 = vunpack.c.l.b16 %v3023
    %v3108 = vunpack.c.l.b16 %v3024
    %v3109 = vunpack.c.h.b16 %v3024
    %v3110 = vunpack.c.l.b16 %v3025
    %v3111 = vunpack.c.l.b16 %v3026
    %v3112 = vunpack.c.h.b16 %v3026
    %v3113 = vunpack.c.l.b16 %v3027
    %v3114 = vunpack.c.l.b16 %v3028
    %v3115 = vunpack.c.h.b16 %v3028
    %v3116 = vunpack.c.l.b16 %v3029
    %v3117 = vunpack.c.l.b16 %v3030
    %v3118 = vunpack.c.h.b16 %v3030
    %v3119 = vunpack.c.l.b16 %v3031
    %v3120 = vunpack.c.l.b16 %v3032
    %v3121 = vunpack.c.h.b16 %v3032
    %v3122 = vunpack.c.l.b16 %v3033
    %v3123 = vunpack.c.l.b16 %v3034
    %v3124 = vunpack.c.h.b16 %v3034
    %v3125 = vunpack.c.l.b16 %v3035
    %v3126 = vunpack.c.l.b16 %v3036
    %v3127 = vunpack.c.h.b16 %v3036
    %v3128 = vunpack.c.l.b16 %v3037
    %v3129 = vunpack.c.l.b16 %v3038
    %v3130 = vunpack.c.h.b16 %v3038
    %v3131 = vunpack.c.l.b16 %v3039
    %v3132 = vunpack.c.l.b16 %v3040
    %v3133 = vunpack.c.h.b16 %v3040
    %v3134 = vunpack.c.l.b16 %v3041
    %v3135 = vunpack.c.l.b16 %v3042
    %v3136 = vunpack.c.h.b16 %v3042
    %v3137 = vunpack.c.l.b16 %v3043
    %v3138 = vunpack.c.l.b16 %v3044
    %v3139 = vunpack.c.h.b16 %v3044
    %v3140 = vunpack.c.l.b16 %v3045
    %v3141 = vunpack.c.l.b16 %v3046
    %v3142 = vunpack.c.h.b16 %v3046
    %v3143 = vunpack.c.l.b16 %v3047
    %v3144 = vunpack.c.l.b16 %v3048
    %v3145 = vunpack.c.h.b16 %v3048
    %v3146 = vunpack.c.l.b16 %v3049
    %v3147 = vunpack.c.l.b16 %v3050
    %v3148 = vunpack.c.h.b16 %v3050
    %v3149 = vunpack.c.l.b16 %v3051
    %v3150 = vpack.c.b16 %v3105, %v3102
    %v3151 = vpack.c.b16 %v3106, %v3103
    %v3152 = vpack.c.b16 %v3107, %v3104
    %v3153 = vpack.c.b16 %v3111, %v3108
    %v3154 = vpack.c.b16 %v3112, %v3109
    %v3155 = vpack.c.b16 %v3113, %v3110
    %v3156 = vpack.c.b16 %v3117, %v3114
    %v3157 = vpack.c.b16 %v3118, %v3115
    %v3158 = vpack.c.b16 %v3119, %v3116
    %v3159 = vpack.c.b16 %v3123, %v3120
    %v3160 = vpack.c.b16 %v3124, %v3121
    %v3161 = vpack.c.b16 %v3125, %v3122
    %v3162 = vpack.c.b16 %v3129, %v3126
    %v3163 = vpack.c.b16 %v3130, %v3127
    %v3164 = vpack.c.b16 %v3131, %v3128
    %v3165 = vpack.c.b16 %v3135, %v3132
    %v3166 = vpack.c.b16 %v3136, %v3133
    %v3167 = vpack.c.b16 %v3137, %v3134
    %v3168 = vpack.c.b16 %v3141, %v3138
    %v3169 = vpack.c.b16 %v3142, %v3139
    %v3170 = vpack.c.b16 %v3143, %v3140
    %v3171 = vpack.c.b16 %v3147, %v3144
    %v3172 = vpack.c.b16 %v3148, %v3145
    %v3173 = vpack.c.b16 %v3149, %v3146
    %3198 = vmatprep.subr.bf16.mxu0 %v3172
    %3199 = vmatpush1.bf16.msra.mxu0 %v3171
    %3200 = vmatprep.subr.bf16.mxu0 %v3169
    %3201 = vmatpush1.bf16.msra.mxu0 %v3168
    %3202 = vmatprep.subr.bf16.mxu0 %v3166
    %3203 = vmatpush1.bf16.msra.mxu0 %v3165
    %3204 = vmatprep.subr.bf16.mxu0 %v3163
    %3205 = vmatpush1.bf16.msra.mxu0 %v3162
    %3206 = vmatprep.subr.bf16.mxu0 %v3160
    %3207 = vmatpush1.bf16.msra.mxu0 %v3159
    %3208 = vmatprep.subr.bf16.mxu0 %v3157
    %3209 = vmatpush1.bf16.msra.mxu0 %v3156
    %3210 = vmatprep.subr.bf16.mxu0 %v3154
    %3211 = vmatpush1.bf16.msra.mxu0 %v3153
    %3212 = vmatprep.subr.bf16.mxu0 %v3151
    %3213 = vmatpush1.bf16.msra.mxu0 %v3150
    %3214 = vmatprep.subr.bf16.mxu0 0
    %3215 = vmatpush2.bf16.msra.mxu0 0
    %3216 = vmatprep.subr.bf16.mxu0 0
    %3217 = vmatpush2.bf16.msra.mxu0 0
    %3218 = vmatprep.subr.bf16.mxu0 0
    %3219 = vmatpush2.bf16.msra.mxu0 0
    %3220 = vmatprep.subr.bf16.mxu0 0
    %3221 = vmatpush2.bf16.msra.mxu0 0
    %3222 = vmatprep.subr.bf16.mxu0 0
    %3223 = vmatpush2.bf16.msra.mxu0 0
    %3224 = vmatprep.subr.bf16.mxu0 0
    %3225 = vmatpush2.bf16.msra.mxu0 0
    %3226 = vmatprep.subr.bf16.mxu0 0
    %3227 = vmatpush2.bf16.msra.mxu0 0
    %3228 = vmatprep.subr.bf16.mxu0 0
    %3229 = vmatpush2.bf16.msra.mxu0 0
    %3230 = vmatprep.mubr.bf16.mxu0 0
    %3231 = vmatmul.mubr.bf16.gmra.mxu0 %v3018
    %v3232 = vpop.f32.mrf.mxu0
    %v3233 = vadd.f32 %v3058, %v3232
    %v3234 = vpop.f32.mrf.mxu0
    %v3235 = vadd.f32 %v3062, %v3234
    %v3236 = vpop.f32.mrf.mxu0
    %v3237 = vadd.f32 %v3058, %v3236
    %v3238 = vpop.f32.mrf.mxu0
    %v3239 = vadd.f32 %v3062, %v3238
    %3240 = vdwg.mxu0
    %3241 = vmatprep.subr.bf16.mxu0 0
    %3242 = vmatpush1.bf16.msra.mxu0 %v3173
    %3243 = vmatprep.subr.bf16.mxu0 0
    %3244 = vmatpush1.bf16.msra.mxu0 %v3170
    %3245 = vmatprep.subr.bf16.mxu0 0
    %3246 = vmatpush1.bf16.msra.mxu0 %v3167
    %3247 = vmatprep.subr.bf16.mxu0 0
    %3248 = vmatpush1.bf16.msra.mxu0 %v3164
    %3249 = vmatprep.subr.bf16.mxu0 0
    %3250 = vmatpush1.bf16.msra.mxu0 %v3161
    %3251 = vmatprep.subr.bf16.mxu0 0
    %3252 = vmatpush1.bf16.msra.mxu0 %v3158
    %3253 = vmatprep.subr.bf16.mxu0 0
    %3254 = vmatpush1.bf16.msra.mxu0 %v3155
    %3255 = vmatprep.subr.bf16.mxu0 0
    %3256 = vmatpush1.bf16.msra.mxu0 %v3152
    %3257 = vmatprep.subr.bf16.mxu0 0
    %3258 = vmatpush2.bf16.msra.mxu0 0
    %3259 = vmatprep.subr.bf16.mxu0 0
    %3260 = vmatpush2.bf16.msra.mxu0 0
    %3261 = vmatprep.subr.bf16.mxu0 0
    %3262 = vmatpush2.bf16.msra.mxu0 0
    %3263 = vmatprep.subr.bf16.mxu0 0
    %3264 = vmatpush2.bf16.msra.mxu0 0
    %3265 = vmatprep.subr.bf16.mxu0 0
    %3266 = vmatpush2.bf16.msra.mxu0 0
    %3267 = vmatprep.subr.bf16.mxu0 0
    %3268 = vmatpush2.bf16.msra.mxu0 0
    %3269 = vmatprep.subr.bf16.mxu0 0
    %3270 = vmatpush2.bf16.msra.mxu0 0
    %3271 = vmatprep.subr.bf16.mxu0 0
    %3272 = vmatpush2.bf16.msra.mxu0 0
    %3273 = vmatprep.mubr.bf16.mxu0 0
    %3274 = vmatmul.mubr.bf16.gmra.mxu0 %v3018
    %v3275 = vpop.f32.mrf.mxu0
    %v3276 = vadd.f32 %v3066, %v3275
    %v3277 = vpop.f32.mrf.mxu0
    %v3278 = vpop.f32.mrf.mxu0
    %v3279 = vadd.f32 %v3066, %v3278
    %v3280 = vpop.f32.mrf.mxu0
    %3281 = vdwg.mxu0
    %v3282 = vpack.c.bf16 %v3237, %v3233
    %v3283 = vpack.c.bf16 %v3239, %v3235
    %v3284 = vpack.c.bf16 %v3279, %v3276
    %v3285 = vmul.bf16 %v3282, %v181
    %3286 = vmatprep.subr.bf16.mxu0 0
    %3287 = vmatpush1.bf16.xpose.msra.mxu0 0
    %3288 = vmatprep.subr.bf16.mxu0 0
    %3289 = vmatpush1.bf16.xpose.msra.mxu0 0
    %3290 = vmatprep.subr.bf16.mxu0 0
    %3291 = vmatpush1.bf16.xpose.msra.mxu0 0
    %3292 = vmatprep.subr.bf16.mxu0 0
    %3293 = vmatpush1.bf16.xpose.msra.mxu0 0
    %3294 = vmatprep.subr.bf16.mxu0 0
    %3295 = vmatpush1.bf16.xpose.msra.mxu0 0
    %3296 = vmatprep.subr.bf16.mxu0 0
    %3297 = vmatpush1.bf16.xpose.msra.mxu0 0
    %3298 = vmatprep.subr.bf16.mxu0 0
    %3299 = vmatpush1.bf16.xpose.msra.mxu0 0
    %3300 = vmatprep.subr.bf16.mxu0 0
    %3301 = vmatpush1.bf16.xpose.msra.mxu0 %v3283
    %3302 = vmatprep.subr.bf16.mxu0 0
    %3303 = vmatpush2.bf16.xpose.msra.mxu0 0
    %3304 = vmatprep.subr.bf16.mxu0 0
    %3305 = vmatpush2.bf16.xpose.msra.mxu0 0
    %3306 = vmatprep.subr.bf16.mxu0 0
    %3307 = vmatpush2.bf16.xpose.msra.mxu0 0
    %3308 = vmatprep.subr.bf16.mxu0 0
    %3309 = vmatpush2.bf16.xpose.msra.mxu0 0
    %3310 = vmatprep.subr.bf16.mxu0 0
    %3311 = vmatpush2.bf16.xpose.msra.mxu0 0
    %3312 = vmatprep.subr.bf16.mxu0 0
    %3313 = vmatpush2.bf16.xpose.msra.mxu0 0
    %3314 = vmatprep.subr.bf16.mxu0 0
    %3315 = vmatpush2.bf16.xpose.msra.mxu0 0
    %3316 = vmatprep.subr.bf16.mxu0 0
    %3317 = vmatpush2.bf16.xpose.msra.mxu0 0
    %3318 = vmatprep.mubr.bf16.mxu0 0
    %3319 = vmatmul.mubr.bf16.gmra.mxu0 %v3285
    %v3320 = vpop.f32.mrf.mxu0
    %v3321 = vadd.f32 %v172, %v3320
    %v3322 = vpop.f32.mrf.mxu0
    %v3323 = vpop.f32.mrf.mxu0
    %v3324 = vadd.f32 %v173, %v3323
    %v3325 = vpop.f32.mrf.mxu0
    %3326 = vdwg.mxu0
    %v3327 = vsel %vm495, %v3321, -inf
    %3328 = vmax.xlane.f32.xlu0 %v3327
    %v3329 = vpop.xlane.xlu0 %3328
    %v3330 = vsel %vm495, %v3324, -inf
    %3331 = vmax.xlane.f32.xlu0 %v3330
    %v3332 = vpop.xlane.xlu0 %3331
    %v3333 = vsub.f32 %v3321, %v3329
    %v3334 = vsub.f32 %v3324, %v3332
    %v3335 = vmul.f32 %v3333, 1.442695
    %v3336 = vpow.pop %v3335
    %v3337 = vmul.f32 %v3334, 1.442695
    %v3338 = vpow.pop %v3337
    %v3339 = vsel %vm495, %v3336, 0.0
    %3340 = vadd.xlane.f32.xlu0 %v3339
    %v3341 = vpop.xlane.xlu0 %3340
    %v3342 = vsel %vm495, %v3338, 0.0
    %3343 = vadd.xlane.f32.xlu0 %v3342
    %v3344 = vpop.xlane.xlu0 %3343
    %v3345 = vrcp.pop %v3341
    %v3346 = vrcp.pop %v3344
    %v3347 = vmul.f32 %v3336, %v3345
    %v3348 = vmul.f32 %v3338, %v3346
    %v3349 = vpack.c.bf16 %v3348, %v3347
    %v3351 = vsel %vm495, %v3349, 0
    %3353 = vmatprep.subr.bf16.mxu0 0
    %3354 = vmatpush1.bf16.msra.mxu0 0
    %3355 = vmatprep.subr.bf16.mxu0 0
    %3356 = vmatpush1.bf16.msra.mxu0 0
    %3357 = vmatprep.subr.bf16.mxu0 0
    %3358 = vmatpush1.bf16.msra.mxu0 0
    %3359 = vmatprep.subr.bf16.mxu0 0
    %3360 = vmatpush1.bf16.msra.mxu0 0
    %3361 = vmatprep.subr.bf16.mxu0 0
    %3362 = vmatpush1.bf16.msra.mxu0 0
    %3363 = vmatprep.subr.bf16.mxu0 0
    %3364 = vmatpush1.bf16.msra.mxu0 0
    %3365 = vmatprep.subr.bf16.mxu0 0
    %3366 = vmatpush1.bf16.msra.mxu0 0
    %3367 = vmatprep.subr.bf16.mxu0 0
    %3368 = vmatpush1.bf16.msra.mxu0 %v3284
    %3369 = vmatprep.subr.bf16.mxu0 0
    %3370 = vmatpush2.bf16.msra.mxu0 0
    %3371 = vmatprep.subr.bf16.mxu0 0
    %3372 = vmatpush2.bf16.msra.mxu0 0
    %3373 = vmatprep.subr.bf16.mxu0 0
    %3374 = vmatpush2.bf16.msra.mxu0 0
    %3375 = vmatprep.subr.bf16.mxu0 0
    %3376 = vmatpush2.bf16.msra.mxu0 0
    %3377 = vmatprep.subr.bf16.mxu0 0
    %3378 = vmatpush2.bf16.msra.mxu0 0
    %3379 = vmatprep.subr.bf16.mxu0 0
    %3380 = vmatpush2.bf16.msra.mxu0 0
    %3381 = vmatprep.subr.bf16.mxu0 0
    %3382 = vmatpush2.bf16.msra.mxu0 0
    %3383 = vmatprep.subr.bf16.mxu0 0
    %3384 = vmatpush2.bf16.msra.mxu0 0
    %3385 = vmatprep.mubr.bf16.mxu0 0
    %3386 = vmatmul.mubr.bf16.gmra.mxu0 %v3351
    %v3387 = vpop.f32.mrf.mxu0
    %v3388 = vadd.f32 0.0, %v3387
    %v3389 = vpop.f32.mrf.mxu0
    %v3390 = vpop.f32.mrf.mxu0
    %v3391 = vadd.f32 0.0, %v3390
    %v3392 = vpop.f32.mrf.mxu0
    %3393 = vdwg.mxu0
    %v3394 = vmul.f32 %v3388, %v180
    %v3395 = vmul.f32 %v3391, %v180
    %v3396 = vmul.bf16 %v3282, %v187
    %3397 = vmatprep.subr.bf16.mxu0 0
    %3398 = vmatpush1.bf16.xpose.msra.mxu0 0
    %3399 = vmatprep.subr.bf16.mxu0 0
    %3400 = vmatpush1.bf16.xpose.msra.mxu0 0
    %3401 = vmatprep.subr.bf16.mxu0 0
    %3402 = vmatpush1.bf16.xpose.msra.mxu0 0
    %3403 = vmatprep.subr.bf16.mxu0 0
    %3404 = vmatpush1.bf16.xpose.msra.mxu0 0
    %3405 = vmatprep.subr.bf16.mxu0 0
    %3406 = vmatpush1.bf16.xpose.msra.mxu0 0
    %3407 = vmatprep.subr.bf16.mxu0 0
    %3408 = vmatpush1.bf16.xpose.msra.mxu0 0
    %3409 = vmatprep.subr.bf16.mxu0 0
    %3410 = vmatpush1.bf16.xpose.msra.mxu0 0
    %3411 = vmatprep.subr.bf16.mxu0 0
    %3412 = vmatpush1.bf16.xpose.msra.mxu0 %v3283
    %3413 = vmatprep.subr.bf16.mxu0 0
    %3414 = vmatpush2.bf16.xpose.msra.mxu0 0
    %3415 = vmatprep.subr.bf16.mxu0 0
    %3416 = vmatpush2.bf16.xpose.msra.mxu0 0
    %3417 = vmatprep.subr.bf16.mxu0 0
    %3418 = vmatpush2.bf16.xpose.msra.mxu0 0
    %3419 = vmatprep.subr.bf16.mxu0 0
    %3420 = vmatpush2.bf16.xpose.msra.mxu0 0
    %3421 = vmatprep.subr.bf16.mxu0 0
    %3422 = vmatpush2.bf16.xpose.msra.mxu0 0
    %3423 = vmatprep.subr.bf16.mxu0 0
    %3424 = vmatpush2.bf16.xpose.msra.mxu0 0
    %3425 = vmatprep.subr.bf16.mxu0 0
    %3426 = vmatpush2.bf16.xpose.msra.mxu0 0
    %3427 = vmatprep.subr.bf16.mxu0 0
    %3428 = vmatpush2.bf16.xpose.msra.mxu0 0
    %3429 = vmatprep.mubr.bf16.mxu0 0
    %3430 = vmatmul.mubr.bf16.gmra.mxu0 %v3396
    %v3431 = vpop.f32.mrf.mxu0
    %v3432 = vadd.f32 %v172, %v3431
    %v3433 = vpop.f32.mrf.mxu0
    %v3434 = vpop.f32.mrf.mxu0
    %v3435 = vadd.f32 %v173, %v3434
    %v3436 = vpop.f32.mrf.mxu0
    %3437 = vdwg.mxu0
    %v3438 = vsel %vm495, %v3432, -inf
    %3439 = vmax.xlane.f32.xlu0 %v3438
    %v3440 = vpop.xlane.xlu0 %3439
    %v3441 = vsel %vm495, %v3435, -inf
    %3442 = vmax.xlane.f32.xlu0 %v3441
    %v3443 = vpop.xlane.xlu0 %3442
    %v3444 = vsub.f32 %v3432, %v3440
    %v3445 = vsub.f32 %v3435, %v3443
    %v3446 = vmul.f32 %v3444, 1.442695
    %v3447 = vpow.pop %v3446
    %v3448 = vmul.f32 %v3445, 1.442695
    %v3449 = vpow.pop %v3448
    %v3450 = vsel %vm495, %v3447, 0.0
    %3451 = vadd.xlane.f32.xlu0 %v3450
    %v3452 = vpop.xlane.xlu0 %3451
    %v3453 = vsel %vm495, %v3449, 0.0
    %3454 = vadd.xlane.f32.xlu0 %v3453
    %v3455 = vpop.xlane.xlu0 %3454
    %v3456 = vrcp.pop %v3452
    %v3457 = vrcp.pop %v3455
    %v3458 = vmul.f32 %v3447, %v3456
    %v3459 = vmul.f32 %v3449, %v3457
    %v3460 = vpack.c.bf16 %v3459, %v3458
    %v3462 = vsel %vm495, %v3460, 0
    %3464 = vmatprep.subr.bf16.mxu0 0
    %3465 = vmatpush1.bf16.msra.mxu0 0
    %3466 = vmatprep.subr.bf16.mxu0 0
    %3467 = vmatpush1.bf16.msra.mxu0 0
    %3468 = vmatprep.subr.bf16.mxu0 0
    %3469 = vmatpush1.bf16.msra.mxu0 0
    %3470 = vmatprep.subr.bf16.mxu0 0
    %3471 = vmatpush1.bf16.msra.mxu0 0
    %3472 = vmatprep.subr.bf16.mxu0 0
    %3473 = vmatpush1.bf16.msra.mxu0 0
    %3474 = vmatprep.subr.bf16.mxu0 0
    %3475 = vmatpush1.bf16.msra.mxu0 0
    %3476 = vmatprep.subr.bf16.mxu0 0
    %3477 = vmatpush1.bf16.msra.mxu0 0
    %3478 = vmatprep.subr.bf16.mxu0 0
    %3479 = vmatpush1.bf16.msra.mxu0 %v3284
    %3480 = vmatprep.subr.bf16.mxu0 0
    %3481 = vmatpush2.bf16.msra.mxu0 0
    %3482 = vmatprep.subr.bf16.mxu0 0
    %3483 = vmatpush2.bf16.msra.mxu0 0
    %3484 = vmatprep.subr.bf16.mxu0 0
    %3485 = vmatpush2.bf16.msra.mxu0 0
    %3486 = vmatprep.subr.bf16.mxu0 0
    %3487 = vmatpush2.bf16.msra.mxu0 0
    %3488 = vmatprep.subr.bf16.mxu0 0
    %3489 = vmatpush2.bf16.msra.mxu0 0
    %3490 = vmatprep.subr.bf16.mxu0 0
    %3491 = vmatpush2.bf16.msra.mxu0 0
    %3492 = vmatprep.subr.bf16.mxu0 0
    %3493 = vmatpush2.bf16.msra.mxu0 0
    %3494 = vmatprep.subr.bf16.mxu0 0
    %3495 = vmatpush2.bf16.msra.mxu0 0
    %3496 = vmatprep.mubr.bf16.mxu0 0
    %3497 = vmatmul.mubr.bf16.gmra.mxu0 %v3462
    %v3498 = vpop.f32.mrf.mxu0
    %v3499 = vadd.f32 0.0, %v3498
    %v3500 = vpop.f32.mrf.mxu0
    %v3501 = vpop.f32.mrf.mxu0
    %v3502 = vadd.f32 0.0, %v3501
    %v3503 = vpop.f32.mrf.mxu0
    %3504 = vdwg.mxu0
    %v3505 = vmul.f32 %v3499, %v186
    %v3506 = vmul.f32 %v3502, %v186
    %v3507 = vadd.f32 %v3394, %v3505
    %v3508 = vadd.f32 %v3395, %v3506
    %v3509 = vpack.c.bf16 %v3508, %v3507
    %s3510 = scalar_lea.vmem %s4, 128
    %v3511 = vld [vmem:[%s3510] sm:$0xf]
    %v3512 = vld [vmem:[%s3510 + $0x4] sm:$0xf]
    %v3513 = vld [vmem:[%s3510 + $0x8] sm:$0xf]
    %v3514 = vld [vmem:[%s3510 + $0xc] sm:$0xf]
    %v3515 = vld [vmem:[%s3510 + $0x10] sm:$0xf]
    %v3516 = vld [vmem:[%s3510 + $0x14] sm:$0xf]
    %v3517 = vld [vmem:[%s3510 + $0x18] sm:$0xf]
    %v3518 = vld [vmem:[%s3510 + $0x1c] sm:$0xf]
    %v3519 = vld [vmem:[%s3510 + $0x20] sm:$0xf]
    %v3520 = vld [vmem:[%s3510 + $0x24] sm:$0xf]
    %v3521 = vld [vmem:[%s3510 + $0x28] sm:$0xf]
    %v3522 = vld [vmem:[%s3510 + $0x2c] sm:$0xf]
    %v3523 = vld [vmem:[%s3510 + $0x30] sm:$0xf]
    %v3524 = vld [vmem:[%s3510 + $0x34] sm:$0xf]
    %v3525 = vld [vmem:[%s3510 + $0x38] sm:$0xf]
    %v3526 = vld [vmem:[%s3510 + $0x3c] sm:$0xf]
    %s3527 = scalar_lea.vmem %s5, 2
    %v3528 = vld [vmem:[%s3527] sm:$0x1]
    %v3530 = vlaneseq
    %v3531 = vshrl.u32 %v3530, 7
    %v3532 = vsub.s32 0, %v3531
    %v3533 = vrot.slane %v3528, %v3532
    %v3551 = vunpack.c.l.b16 %v3511
    %v3552 = vunpack.c.l.b16 %v3512
    %v3553 = vunpack.c.l.b16 %v3513
    %v3554 = vunpack.c.l.b16 %v3514
    %v3555 = vunpack.c.l.b16 %v3515
    %v3556 = vunpack.c.l.b16 %v3516
    %v3557 = vunpack.c.l.b16 %v3517
    %v3558 = vunpack.c.l.b16 %v3518
    %v3559 = vunpack.c.l.b16 %v3519
    %v3560 = vunpack.c.l.b16 %v3520
    %v3561 = vunpack.c.l.b16 %v3521
    %v3562 = vunpack.c.l.b16 %v3522
    %v3563 = vunpack.c.l.b16 %v3523
    %v3564 = vunpack.c.l.b16 %v3524
    %v3565 = vunpack.c.l.b16 %v3525
    %v3566 = vunpack.c.l.b16 %v3526
    %v3567 = vpack.c.b16 %v3552, %v3551
    %v3568 = vpack.c.b16 %v3554, %v3553
    %v3569 = vpack.c.b16 %v3556, %v3555
    %v3570 = vpack.c.b16 %v3558, %v3557
    %v3571 = vpack.c.b16 %v3560, %v3559
    %v3572 = vpack.c.b16 %v3562, %v3561
    %v3573 = vpack.c.b16 %v3564, %v3563
    %v3574 = vpack.c.b16 %v3566, %v3565
    %3583 = vmatprep.subr.bf16.mxu0 0
    %3584 = vmatpush1.bf16.msra.mxu0 %v3574
    %3585 = vmatprep.subr.bf16.mxu0 0
    %3586 = vmatpush1.bf16.msra.mxu0 %v3573
    %3587 = vmatprep.subr.bf16.mxu0 0
    %3588 = vmatpush1.bf16.msra.mxu0 %v3572
    %3589 = vmatprep.subr.bf16.mxu0 0
    %3590 = vmatpush1.bf16.msra.mxu0 %v3571
    %3591 = vmatprep.subr.bf16.mxu0 0
    %3592 = vmatpush1.bf16.msra.mxu0 %v3570
    %3593 = vmatprep.subr.bf16.mxu0 0
    %3594 = vmatpush1.bf16.msra.mxu0 %v3569
    %3595 = vmatprep.subr.bf16.mxu0 0
    %3596 = vmatpush1.bf16.msra.mxu0 %v3568
    %3597 = vmatprep.subr.bf16.mxu0 0
    %3598 = vmatpush1.bf16.msra.mxu0 %v3567
    %3599 = vmatprep.subr.bf16.mxu0 0
    %3600 = vmatpush2.bf16.msra.mxu0 0
    %3601 = vmatprep.subr.bf16.mxu0 0
    %3602 = vmatpush2.bf16.msra.mxu0 0
    %3603 = vmatprep.subr.bf16.mxu0 0
    %3604 = vmatpush2.bf16.msra.mxu0 0
    %3605 = vmatprep.subr.bf16.mxu0 0
    %3606 = vmatpush2.bf16.msra.mxu0 0
    %3607 = vmatprep.subr.bf16.mxu0 0
    %3608 = vmatpush2.bf16.msra.mxu0 0
    %3609 = vmatprep.subr.bf16.mxu0 0
    %3610 = vmatpush2.bf16.msra.mxu0 0
    %3611 = vmatprep.subr.bf16.mxu0 0
    %3612 = vmatpush2.bf16.msra.mxu0 0
    %3613 = vmatprep.subr.bf16.mxu0 0
    %3614 = vmatpush2.bf16.msra.mxu0 0
    %3615 = vmatprep.mubr.bf16.mxu0 0
    %3616 = vmatmul.mubr.bf16.gmra.mxu0 %v3509
    %v3617 = vpop.f32.mrf.mxu0
    %v3618 = vadd.f32 %v3533, %v3617
    %v3619 = vpop.f32.mrf.mxu0
    %v3620 = vpop.f32.mrf.mxu0
    %v3621 = vadd.f32 %v3533, %v3620
    %v3622 = vpop.f32.mrf.mxu0
    %3623 = vdwg.mxu0
    %v3624 = vadd.f32 %v3618, %v3016
    %v3625 = vadd.f32 %v3621, %v3017
    %s3626 = scalar_lea.vmem %s6, 2
    %v3627 = vld [vmem:[%s3626] sm:$0x1]
    %s3628 = scalar_lea.vmem [#allocation4], 2
    %v3629 = vld [vmem:[%s3628] sm:$0x1]
    %3630 = vadd.xlane.f32.xlu0 %v3624
    %v3631 = vpop.xlane.xlu0 %3630
    %3632 = vadd.xlane.f32.xlu0 %v3625
    %v3633 = vpop.xlane.xlu0 %3632
    %v3634 = vmul.f32 %v3631, %v799
    %v3635 = vmul.f32 %v3633, %v799
    %v3636 = vsub.f32 %v3624, %v3634
    %v3637 = vsub.f32 %v3625, %v3635
    %v3638 = vmul.f32 %v3636, %v3636
    %v3639 = vmul.f32 %v3637, %v3637
    %3640 = vadd.xlane.f32.xlu0 %v3638
    %v3641 = vpop.xlane.xlu0 %3640
    %3642 = vadd.xlane.f32.xlu0 %v3639
    %v3643 = vpop.xlane.xlu0 %3642
    %v3644 = vmul.f32 %v3641, %v799
    %v3645 = vmul.f32 %v3643, %v799
    %v3646 = vadd.f32 %v3644, 1e-12
    %v3647 = vadd.f32 %v3645, 1e-12
    %v3648 = vrsqrt.pop %v3646
    %v3649 = vrsqrt.pop %v3647
    %v3650 = vmul.f32 %v3636, %v3648
    %v3651 = vmul.f32 %v3637, %v3649
    %v3653 = vlaneseq
    %v3654 = vshrl.u32 %v3653, 7
    %v3655 = vsub.s32 0, %v3654
    %v3656 = vrot.slane %v3627, %v3655
    %v3658 = vmul.f32 %v3650, %v3656
    %v3659 = vmul.f32 %v3651, %v3656
    %v3661 = vlaneseq
    %v3662 = vshrl.u32 %v3661, 7
    %v3663 = vsub.s32 0, %v3662
    %v3664 = vrot.slane %v3629, %v3663
    %v3666 = vadd.f32 %v3658, %v3664
    %v3667 = vadd.f32 %v3659, %v3664
    %v3668 = vpack.c.bf16 %v3667, %v3666
    %s3669 = scalar_lea.vmem [#allocation6], 512
    %v3670 = vld [vmem:[%s3669] sm:$0xff]
    %v3671 = vld [vmem:[%s3669 + $0x8] sm:$0xff]
    %v3672 = vld [vmem:[%s3669 + $0x10] sm:$0xff]
    %v3673 = vld [vmem:[%s3669 + $0x18] sm:$0xff]
    %v3674 = vld [vmem:[%s3669 + $0x20] sm:$0xff]
    %v3675 = vld [vmem:[%s3669 + $0x28] sm:$0xff]
    %v3676 = vld [vmem:[%s3669 + $0x30] sm:$0xff]
    %v3677 = vld [vmem:[%s3669 + $0x38] sm:$0xff]
    %v3678 = vld [vmem:[%s3669 + $0x40] sm:$0xff]
    %v3679 = vld [vmem:[%s3669 + $0x48] sm:$0xff]
    %v3680 = vld [vmem:[%s3669 + $0x50] sm:$0xff]
    %v3681 = vld [vmem:[%s3669 + $0x58] sm:$0xff]
    %v3682 = vld [vmem:[%s3669 + $0x60] sm:$0xff]
    %v3683 = vld [vmem:[%s3669 + $0x68] sm:$0xff]
    %v3684 = vld [vmem:[%s3669 + $0x70] sm:$0xff]
    %v3685 = vld [vmem:[%s3669 + $0x78] sm:$0xff]
    %v3686 = vld [vmem:[%s3669 + $0x80] sm:$0xff]
    %v3687 = vld [vmem:[%s3669 + $0x88] sm:$0xff]
    %v3688 = vld [vmem:[%s3669 + $0x90] sm:$0xff]
    %v3689 = vld [vmem:[%s3669 + $0x98] sm:$0xff]
    %v3690 = vld [vmem:[%s3669 + $0xa0] sm:$0xff]
    %v3691 = vld [vmem:[%s3669 + $0xa8] sm:$0xff]
    %v3692 = vld [vmem:[%s3669 + $0xb0] sm:$0xff]
    %v3693 = vld [vmem:[%s3669 + $0xb8] sm:$0xff]
    %v3694 = vld [vmem:[%s3669 + $0xc0] sm:$0xff]
    %v3695 = vld [vmem:[%s3669 + $0xc8] sm:$0xff]
    %v3696 = vld [vmem:[%s3669 + $0xd0] sm:$0xff]
    %v3697 = vld [vmem:[%s3669 + $0xd8] sm:$0xff]
    %v3698 = vld [vmem:[%s3669 + $0xe0] sm:$0xff]
    %v3699 = vld [vmem:[%s3669 + $0xe8] sm:$0xff]
    %v3700 = vld [vmem:[%s3669 + $0xf0] sm:$0xff]
    %v3701 = vld [vmem:[%s3669 + $0xf8] sm:$0xff]
    %s3702 = scalar_lea.vmem %s9, 8
    %v3703 = vld [vmem:[%s3702] sm:$0xf]
    %v3705 = vlaneseq
    %v3706 = vshrl.u32 %v3705, 7
    %v3707 = vsub.s32 0, %v3706
    %v3708 = vrot.slane %v3703, %v3707
    %v3709 = vlaneseq
    %v3710 = vshrl.u32 %v3709, 7
    %v3711 = vsub.s32 1, %v3710
    %v3712 = vrot.slane %v3703, %v3711
    %v3713 = vlaneseq
    %v3714 = vshrl.u32 %v3713, 7
    %v3715 = vsub.s32 2, %v3714
    %v3716 = vrot.slane %v3703, %v3715
    %v3717 = vlaneseq
    %v3718 = vshrl.u32 %v3717, 7
    %v3719 = vsub.s32 3, %v3718
    %v3720 = vrot.slane %v3703, %v3719
    %v3757 = vunpack.c.l.b16 %v3670
    %v3758 = vunpack.c.h.b16 %v3670
    %v3759 = vunpack.c.l.b16 %v3671
    %v3760 = vunpack.c.h.b16 %v3671
    %v3761 = vunpack.c.l.b16 %v3672
    %v3762 = vunpack.c.h.b16 %v3672
    %v3763 = vunpack.c.l.b16 %v3673
    %v3764 = vunpack.c.h.b16 %v3673
    %v3765 = vunpack.c.l.b16 %v3674
    %v3766 = vunpack.c.h.b16 %v3674
    %v3767 = vunpack.c.l.b16 %v3675
    %v3768 = vunpack.c.h.b16 %v3675
    %v3769 = vunpack.c.l.b16 %v3676
    %v3770 = vunpack.c.h.b16 %v3676
    %v3771 = vunpack.c.l.b16 %v3677
    %v3772 = vunpack.c.h.b16 %v3677
    %v3773 = vunpack.c.l.b16 %v3678
    %v3774 = vunpack.c.h.b16 %v3678
    %v3775 = vunpack.c.l.b16 %v3679
    %v3776 = vunpack.c.h.b16 %v3679
    %v3777 = vunpack.c.l.b16 %v3680
    %v3778 = vunpack.c.h.b16 %v3680
    %v3779 = vunpack.c.l.b16 %v3681
    %v3780 = vunpack.c.h.b16 %v3681
    %v3781 = vunpack.c.l.b16 %v3682
    %v3782 = vunpack.c.h.b16 %v3682
    %v3783 = vunpack.c.l.b16 %v3683
    %v3784 = vunpack.c.h.b16 %v3683
    %v3785 = vunpack.c.l.b16 %v3684
    %v3786 = vunpack.c.h.b16 %v3684
    %v3787 = vunpack.c.l.b16 %v3685
    %v3788 = vunpack.c.h.b16 %v3685
    %v3789 = vunpack.c.l.b16 %v3686
    %v3790 = vunpack.c.h.b16 %v3686
    %v3791 = vunpack.c.l.b16 %v3687
    %v3792 = vunpack.c.h.b16 %v3687
    %v3793 = vunpack.c.l.b16 %v3688
    %v3794 = vunpack.c.h.b16 %v3688
    %v3795 = vunpack.c.l.b16 %v3689
    %v3796 = vunpack.c.h.b16 %v3689
    %v3797 = vunpack.c.l.b16 %v3690
    %v3798 = vunpack.c.h.b16 %v3690
    %v3799 = vunpack.c.l.b16 %v3691
    %v3800 = vunpack.c.h.b16 %v3691
    %v3801 = vunpack.c.l.b16 %v3692
    %v3802 = vunpack.c.h.b16 %v3692
    %v3803 = vunpack.c.l.b16 %v3693
    %v3804 = vunpack.c.h.b16 %v3693
    %v3805 = vunpack.c.l.b16 %v3694
    %v3806 = vunpack.c.h.b16 %v3694
    %v3807 = vunpack.c.l.b16 %v3695
    %v3808 = vunpack.c.h.b16 %v3695
    %v3809 = vunpack.c.l.b16 %v3696
    %v3810 = vunpack.c.h.b16 %v3696
    %v3811 = vunpack.c.l.b16 %v3697
    %v3812 = vunpack.c.h.b16 %v3697
    %v3813 = vunpack.c.l.b16 %v3698
    %v3814 = vunpack.c.h.b16 %v3698
    %v3815 = vunpack.c.l.b16 %v3699
    %v3816 = vunpack.c.h.b16 %v3699
    %v3817 = vunpack.c.l.b16 %v3700
    %v3818 = vunpack.c.h.b16 %v3700
    %v3819 = vunpack.c.l.b16 %v3701
    %v3820 = vunpack.c.h.b16 %v3701
    %v3821 = vpack.c.b16 %v3761, %v3757
    %v3822 = vpack.c.b16 %v3762, %v3758
    %v3823 = vpack.c.b16 %v3763, %v3759
    %v3824 = vpack.c.b16 %v3764, %v3760
    %v3825 = vpack.c.b16 %v3769, %v3765
    %v3826 = vpack.c.b16 %v3770, %v3766
    %v3827 = vpack.c.b16 %v3771, %v3767
    %v3828 = vpack.c.b16 %v3772, %v3768
    %v3829 = vpack.c.b16 %v3777, %v3773
    %v3830 = vpack.c.b16 %v3778, %v3774
    %v3831 = vpack.c.b16 %v3779, %v3775
    %v3832 = vpack.c.b16 %v3780, %v3776
    %v3833 = vpack.c.b16 %v3785, %v3781
    %v3834 = vpack.c.b16 %v3786, %v3782
    %v3835 = vpack.c.b16 %v3787, %v3783
    %v3836 = vpack.c.b16 %v3788, %v3784
    %v3837 = vpack.c.b16 %v3793, %v3789
    %v3838 = vpack.c.b16 %v3794, %v3790
    %v3839 = vpack.c.b16 %v3795, %v3791
    %v3840 = vpack.c.b16 %v3796, %v3792
    %v3841 = vpack.c.b16 %v3801, %v3797
    %v3842 = vpack.c.b16 %v3802, %v3798
    %v3843 = vpack.c.b16 %v3803, %v3799
    %v3844 = vpack.c.b16 %v3804, %v3800
    %v3845 = vpack.c.b16 %v3809, %v3805
    %v3846 = vpack.c.b16 %v3810, %v3806
    %v3847 = vpack.c.b16 %v3811, %v3807
    %v3848 = vpack.c.b16 %v3812, %v3808
    %v3849 = vpack.c.b16 %v3817, %v3813
    %v3850 = vpack.c.b16 %v3818, %v3814
    %v3851 = vpack.c.b16 %v3819, %v3815
    %v3852 = vpack.c.b16 %v3820, %v3816
    %3885 = vmatprep.subr.bf16.mxu0 %v3850
    %3886 = vmatpush1.bf16.msra.mxu0 %v3849
    %3887 = vmatprep.subr.bf16.mxu0 %v3846
    %3888 = vmatpush1.bf16.msra.mxu0 %v3845
    %3889 = vmatprep.subr.bf16.mxu0 %v3842
    %3890 = vmatpush1.bf16.msra.mxu0 %v3841
    %3891 = vmatprep.subr.bf16.mxu0 %v3838
    %3892 = vmatpush1.bf16.msra.mxu0 %v3837
    %3893 = vmatprep.subr.bf16.mxu0 %v3834
    %3894 = vmatpush1.bf16.msra.mxu0 %v3833
    %3895 = vmatprep.subr.bf16.mxu0 %v3830
    %3896 = vmatpush1.bf16.msra.mxu0 %v3829
    %3897 = vmatprep.subr.bf16.mxu0 %v3826
    %3898 = vmatpush1.bf16.msra.mxu0 %v3825
    %3899 = vmatprep.subr.bf16.mxu0 %v3822
    %3900 = vmatpush1.bf16.msra.mxu0 %v3821
    %3901 = vmatprep.subr.bf16.mxu0 0
    %3902 = vmatpush2.bf16.msra.mxu0 0
    %3903 = vmatprep.subr.bf16.mxu0 0
    %3904 = vmatpush2.bf16.msra.mxu0 0
    %3905 = vmatprep.subr.bf16.mxu0 0
    %3906 = vmatpush2.bf16.msra.mxu0 0
    %3907 = vmatprep.subr.bf16.mxu0 0
    %3908 = vmatpush2.bf16.msra.mxu0 0
    %3909 = vmatprep.subr.bf16.mxu0 0
    %3910 = vmatpush2.bf16.msra.mxu0 0
    %3911 = vmatprep.subr.bf16.mxu0 0
    %3912 = vmatpush2.bf16.msra.mxu0 0
    %3913 = vmatprep.subr.bf16.mxu0 0
    %3914 = vmatpush2.bf16.msra.mxu0 0
    %3915 = vmatprep.subr.bf16.mxu0 0
    %3916 = vmatpush2.bf16.msra.mxu0 0
    %3917 = vmatprep.mubr.bf16.mxu0 0
    %3918 = vmatmul.mubr.bf16.gmra.mxu0 %v3668
    %v3919 = vpop.f32.mrf.mxu0
    %v3920 = vadd.f32 %v3708, %v3919
    %v3921 = vpop.f32.mrf.mxu0
    %v3922 = vadd.f32 %v3712, %v3921
    %v3923 = vpop.f32.mrf.mxu0
    %v3924 = vadd.f32 %v3708, %v3923
    %v3925 = vpop.f32.mrf.mxu0
    %v3926 = vadd.f32 %v3712, %v3925
    %3927 = vdwg.mxu0
    %3928 = vmatprep.subr.bf16.mxu0 %v3852
    %3929 = vmatpush1.bf16.msra.mxu0 %v3851
    %3930 = vmatprep.subr.bf16.mxu0 %v3848
    %3931 = vmatpush1.bf16.msra.mxu0 %v3847
    %3932 = vmatprep.subr.bf16.mxu0 %v3844
    %3933 = vmatpush1.bf16.msra.mxu0 %v3843
    %3934 = vmatprep.subr.bf16.mxu0 %v3840
    %3935 = vmatpush1.bf16.msra.mxu0 %v3839
    %3936 = vmatprep.subr.bf16.mxu0 %v3836
    %3937 = vmatpush1.bf16.msra.mxu0 %v3835
    %3938 = vmatprep.subr.bf16.mxu0 %v3832
    %3939 = vmatpush1.bf16.msra.mxu0 %v3831
    %3940 = vmatprep.subr.bf16.mxu0 %v3828
    %3941 = vmatpush1.bf16.msra.mxu0 %v3827
    %3942 = vmatprep.subr.bf16.mxu0 %v3824
    %3943 = vmatpush1.bf16.msra.mxu0 %v3823
    %3944 = vmatprep.subr.bf16.mxu0 0
    %3945 = vmatpush2.bf16.msra.mxu0 0
    %3946 = vmatprep.subr.bf16.mxu0 0
    %3947 = vmatpush2.bf16.msra.mxu0 0
    %3948 = vmatprep.subr.bf16.mxu0 0
    %3949 = vmatpush2.bf16.msra.mxu0 0
    %3950 = vmatprep.subr.bf16.mxu0 0
    %3951 = vmatpush2.bf16.msra.mxu0 0
    %3952 = vmatprep.subr.bf16.mxu0 0
    %3953 = vmatpush2.bf16.msra.mxu0 0
    %3954 = vmatprep.subr.bf16.mxu0 0
    %3955 = vmatpush2.bf16.msra.mxu0 0
    %3956 = vmatprep.subr.bf16.mxu0 0
    %3957 = vmatpush2.bf16.msra.mxu0 0
    %3958 = vmatprep.subr.bf16.mxu0 0
    %3959 = vmatpush2.bf16.msra.mxu0 0
    %3960 = vmatprep.mubr.bf16.mxu0 0
    %3961 = vmatmul.mubr.bf16.gmra.mxu0 %v3668
    %v3962 = vpop.f32.mrf.mxu0
    %v3963 = vadd.f32 %v3716, %v3962
    %v3964 = vpop.f32.mrf.mxu0
    %v3965 = vadd.f32 %v3720, %v3964
    %v3966 = vpop.f32.mrf.mxu0
    %v3967 = vadd.f32 %v3716, %v3966
    %v3968 = vpop.f32.mrf.mxu0
    %v3969 = vadd.f32 %v3720, %v3968
    %3970 = vdwg.mxu0
    %v3971 = vmul.f32 %v3920, 0.5
    %v3972 = vmul.f32 %v3922, 0.5
    %v3973 = vmul.f32 %v3963, 0.5
    %v3974 = vmul.f32 %v3965, 0.5
    %v3975 = vmul.f32 %v3924, 0.5
    %v3976 = vmul.f32 %v3926, 0.5
    %v3977 = vmul.f32 %v3967, 0.5
    %v3978 = vmul.f32 %v3969, 0.5
    %v3979 = vmul.f32 %v3920, 0.044715
    %v3980 = vmul.f32 %v3922, 0.044715
    %v3981 = vmul.f32 %v3963, 0.044715
    %v3982 = vmul.f32 %v3965, 0.044715
    %v3983 = vmul.f32 %v3924, 0.044715
    %v3984 = vmul.f32 %v3926, 0.044715
    %v3985 = vmul.f32 %v3967, 0.044715
    %v3986 = vmul.f32 %v3969, 0.044715
    %v3987 = vmul.f32 %v3979, %v3920
    %v3988 = vmul.f32 %v3980, %v3922
    %v3989 = vmul.f32 %v3981, %v3963
    %v3990 = vmul.f32 %v3982, %v3965
    %v3991 = vmul.f32 %v3983, %v3924
    %v3992 = vmul.f32 %v3984, %v3926
    %v3993 = vmul.f32 %v3985, %v3967
    %v3994 = vmul.f32 %v3986, %v3969
    %v3995 = vmul.f32 %v3987, %v3920
    %v3996 = vmul.f32 %v3988, %v3922
    %v3997 = vmul.f32 %v3989, %v3963
    %v3998 = vmul.f32 %v3990, %v3965
    %v3999 = vmul.f32 %v3991, %v3924
    %v4000 = vmul.f32 %v3992, %v3926
    %v4001 = vmul.f32 %v3993, %v3967
    %v4002 = vmul.f32 %v3994, %v3969
    %v4003 = vadd.f32 %v3920, %v3995
    %v4004 = vadd.f32 %v3922, %v3996
    %v4005 = vadd.f32 %v3963, %v3997
    %v4006 = vadd.f32 %v3965, %v3998
    %v4007 = vadd.f32 %v3924, %v3999
    %v4008 = vadd.f32 %v3926, %v4000
    %v4009 = vadd.f32 %v3967, %v4001
    %v4010 = vadd.f32 %v3969, %v4002
    %v4011 = vmul.f32 %v4003, 0.7978846
    %v4012 = vmul.f32 %v4004, 0.7978846
    %v4013 = vmul.f32 %v4005, 0.7978846
    %v4014 = vmul.f32 %v4006, 0.7978846
    %v4015 = vmul.f32 %v4007, 0.7978846
    %v4016 = vmul.f32 %v4008, 0.7978846
    %v4017 = vmul.f32 %v4009, 0.7978846
    %v4018 = vmul.f32 %v4010, 0.7978846
    %v4019 = vtanh.pop %v4011
    %v4020 = vtanh.pop %v4012
    %v4021 = vtanh.pop %v4013
    %v4022 = vtanh.pop %v4014
    %v4023 = vtanh.pop %v4015
    %v4024 = vtanh.pop %v4016
    %v4025 = vtanh.pop %v4017
    %v4026 = vtanh.pop %v4018
    %v4027 = vadd.f32 %v4019, 1.0
    %v4028 = vadd.f32 %v4020, 1.0
    %v4029 = vadd.f32 %v4021, 1.0
    %v4030 = vadd.f32 %v4022, 1.0
    %v4031 = vadd.f32 %v4023, 1.0
    %v4032 = vadd.f32 %v4024, 1.0
    %v4033 = vadd.f32 %v4025, 1.0
    %v4034 = vadd.f32 %v4026, 1.0
    %v4035 = vmul.f32 %v3971, %v4027
    %v4036 = vmul.f32 %v3972, %v4028
    %v4037 = vmul.f32 %v3973, %v4029
    %v4038 = vmul.f32 %v3974, %v4030
    %v4039 = vmul.f32 %v3975, %v4031
    %v4040 = vmul.f32 %v3976, %v4032
    %v4041 = vmul.f32 %v3977, %v4033
    %v4042 = vmul.f32 %v3978, %v4034
    %v4043 = vpack.c.bf16 %v4039, %v4035
    %v4044 = vpack.c.bf16 %v4040, %v4036
    %v4045 = vpack.c.bf16 %v4041, %v4037
    %v4046 = vpack.c.bf16 %v4042, %v4038
    %s4047 = scalar_lea.vmem [#allocation7], 512
    %v4048 = vld [vmem:[%s4047] sm:$0xf]
    %v4049 = vld [vmem:[%s4047 + $0x4] sm:$0xf]
    %v4050 = vld [vmem:[%s4047 + $0x8] sm:$0xf]
    %v4051 = vld [vmem:[%s4047 + $0xc] sm:$0xf]
    %v4052 = vld [vmem:[%s4047 + $0x10] sm:$0xf]
    %v4053 = vld [vmem:[%s4047 + $0x14] sm:$0xf]
    %v4054 = vld [vmem:[%s4047 + $0x18] sm:$0xf]
    %v4055 = vld [vmem:[%s4047 + $0x1c] sm:$0xf]
    %v4056 = vld [vmem:[%s4047 + $0x20] sm:$0xf]
    %v4057 = vld [vmem:[%s4047 + $0x24] sm:$0xf]
    %v4058 = vld [vmem:[%s4047 + $0x28] sm:$0xf]
    %v4059 = vld [vmem:[%s4047 + $0x2c] sm:$0xf]
    %v4060 = vld [vmem:[%s4047 + $0x30] sm:$0xf]
    %v4061 = vld [vmem:[%s4047 + $0x34] sm:$0xf]
    %v4062 = vld [vmem:[%s4047 + $0x38] sm:$0xf]
    %v4063 = vld [vmem:[%s4047 + $0x3c] sm:$0xf]
    %v4064 = vld [vmem:[%s4047 + $0x40] sm:$0xf]
    %v4065 = vld [vmem:[%s4047 + $0x44] sm:$0xf]
    %v4066 = vld [vmem:[%s4047 + $0x48] sm:$0xf]
    %v4067 = vld [vmem:[%s4047 + $0x4c] sm:$0xf]
    %v4068 = vld [vmem:[%s4047 + $0x50] sm:$0xf]
    %v4069 = vld [vmem:[%s4047 + $0x54] sm:$0xf]
    %v4070 = vld [vmem:[%s4047 + $0x58] sm:$0xf]
    %v4071 = vld [vmem:[%s4047 + $0x5c] sm:$0xf]
    %v4072 = vld [vmem:[%s4047 + $0x60] sm:$0xf]
    %v4073 = vld [vmem:[%s4047 + $0x64] sm:$0xf]
    %v4074 = vld [vmem:[%s4047 + $0x68] sm:$0xf]
    %v4075 = vld [vmem:[%s4047 + $0x6c] sm:$0xf]
    %v4076 = vld [vmem:[%s4047 + $0x70] sm:$0xf]
    %v4077 = vld [vmem:[%s4047 + $0x74] sm:$0xf]
    %v4078 = vld [vmem:[%s4047 + $0x78] sm:$0xf]
    %v4079 = vld [vmem:[%s4047 + $0x7c] sm:$0xf]
    %v4080 = vld [vmem:[%s4047 + $0x80] sm:$0xf]
    %v4081 = vld [vmem:[%s4047 + $0x84] sm:$0xf]
    %v4082 = vld [vmem:[%s4047 + $0x88] sm:$0xf]
    %v4083 = vld [vmem:[%s4047 + $0x8c] sm:$0xf]
    %v4084 = vld [vmem:[%s4047 + $0x90] sm:$0xf]
    %v4085 = vld [vmem:[%s4047 + $0x94] sm:$0xf]
    %v4086 = vld [vmem:[%s4047 + $0x98] sm:$0xf]
    %v4087 = vld [vmem:[%s4047 + $0x9c] sm:$0xf]
    %v4088 = vld [vmem:[%s4047 + $0xa0] sm:$0xf]
    %v4089 = vld [vmem:[%s4047 + $0xa4] sm:$0xf]
    %v4090 = vld [vmem:[%s4047 + $0xa8] sm:$0xf]
    %v4091 = vld [vmem:[%s4047 + $0xac] sm:$0xf]
    %v4092 = vld [vmem:[%s4047 + $0xb0] sm:$0xf]
    %v4093 = vld [vmem:[%s4047 + $0xb4] sm:$0xf]
    %v4094 = vld [vmem:[%s4047 + $0xb8] sm:$0xf]
    %v4095 = vld [vmem:[%s4047 + $0xbc] sm:$0xf]
    %v4096 = vld [vmem:[%s4047 + $0xc0] sm:$0xf]
    %v4097 = vld [vmem:[%s4047 + $0xc4] sm:$0xf]
    %v4098 = vld [vmem:[%s4047 + $0xc8] sm:$0xf]
    %v4099 = vld [vmem:[%s4047 + $0xcc] sm:$0xf]
    %v4100 = vld [vmem:[%s4047 + $0xd0] sm:$0xf]
    %v4101 = vld [vmem:[%s4047 + $0xd4] sm:$0xf]
    %v4102 = vld [vmem:[%s4047 + $0xd8] sm:$0xf]
    %v4103 = vld [vmem:[%s4047 + $0xdc] sm:$0xf]
    %v4104 = vld [vmem:[%s4047 + $0xe0] sm:$0xf]
    %v4105 = vld [vmem:[%s4047 + $0xe4] sm:$0xf]
    %v4106 = vld [vmem:[%s4047 + $0xe8] sm:$0xf]
    %v4107 = vld [vmem:[%s4047 + $0xec] sm:$0xf]
    %v4108 = vld [vmem:[%s4047 + $0xf0] sm:$0xf]
    %v4109 = vld [vmem:[%s4047 + $0xf4] sm:$0xf]
    %v4110 = vld [vmem:[%s4047 + $0xf8] sm:$0xf]
    %v4111 = vld [vmem:[%s4047 + $0xfc] sm:$0xf]
    %s4112 = scalar_lea.vmem %s11, 2
    %v4113 = vld [vmem:[%s4112] sm:$0x1]
    %v4115 = vlaneseq
    %v4116 = vshrl.u32 %v4115, 7
    %v4117 = vsub.s32 0, %v4116
    %v4118 = vrot.slane %v4113, %v4117
    %v4184 = vunpack.c.l.b16 %v4048
    %v4185 = vunpack.c.l.b16 %v4049
    %v4186 = vunpack.c.l.b16 %v4050
    %v4187 = vunpack.c.l.b16 %v4051
    %v4188 = vunpack.c.l.b16 %v4052
    %v4189 = vunpack.c.l.b16 %v4053
    %v4190 = vunpack.c.l.b16 %v4054
    %v4191 = vunpack.c.l.b16 %v4055
    %v4192 = vunpack.c.l.b16 %v4056
    %v4193 = vunpack.c.l.b16 %v4057
    %v4194 = vunpack.c.l.b16 %v4058
    %v4195 = vunpack.c.l.b16 %v4059
    %v4196 = vunpack.c.l.b16 %v4060
    %v4197 = vunpack.c.l.b16 %v4061
    %v4198 = vunpack.c.l.b16 %v4062
    %v4199 = vunpack.c.l.b16 %v4063
    %v4200 = vunpack.c.l.b16 %v4064
    %v4201 = vunpack.c.l.b16 %v4065
    %v4202 = vunpack.c.l.b16 %v4066
    %v4203 = vunpack.c.l.b16 %v4067
    %v4204 = vunpack.c.l.b16 %v4068
    %v4205 = vunpack.c.l.b16 %v4069
    %v4206 = vunpack.c.l.b16 %v4070
    %v4207 = vunpack.c.l.b16 %v4071
    %v4208 = vunpack.c.l.b16 %v4072
    %v4209 = vunpack.c.l.b16 %v4073
    %v4210 = vunpack.c.l.b16 %v4074
    %v4211 = vunpack.c.l.b16 %v4075
    %v4212 = vunpack.c.l.b16 %v4076
    %v4213 = vunpack.c.l.b16 %v4077
    %v4214 = vunpack.c.l.b16 %v4078
    %v4215 = vunpack.c.l.b16 %v4079
    %v4216 = vunpack.c.l.b16 %v4080
    %v4217 = vunpack.c.l.b16 %v4081
    %v4218 = vunpack.c.l.b16 %v4082
    %v4219 = vunpack.c.l.b16 %v4083
    %v4220 = vunpack.c.l.b16 %v4084
    %v4221 = vunpack.c.l.b16 %v4085
    %v4222 = vunpack.c.l.b16 %v4086
    %v4223 = vunpack.c.l.b16 %v4087
    %v4224 = vunpack.c.l.b16 %v4088
    %v4225 = vunpack.c.l.b16 %v4089
    %v4226 = vunpack.c.l.b16 %v4090
    %v4227 = vunpack.c.l.b16 %v4091
    %v4228 = vunpack.c.l.b16 %v4092
    %v4229 = vunpack.c.l.b16 %v4093
    %v4230 = vunpack.c.l.b16 %v4094
    %v4231 = vunpack.c.l.b16 %v4095
    %v4232 = vunpack.c.l.b16 %v4096
    %v4233 = vunpack.c.l.b16 %v4097
    %v4234 = vunpack.c.l.b16 %v4098
    %v4235 = vunpack.c.l.b16 %v4099
    %v4236 = vunpack.c.l.b16 %v4100
    %v4237 = vunpack.c.l.b16 %v4101
    %v4238 = vunpack.c.l.b16 %v4102
    %v4239 = vunpack.c.l.b16 %v4103
    %v4240 = vunpack.c.l.b16 %v4104
    %v4241 = vunpack.c.l.b16 %v4105
    %v4242 = vunpack.c.l.b16 %v4106
    %v4243 = vunpack.c.l.b16 %v4107
    %v4244 = vunpack.c.l.b16 %v4108
    %v4245 = vunpack.c.l.b16 %v4109
    %v4246 = vunpack.c.l.b16 %v4110
    %v4247 = vunpack.c.l.b16 %v4111
    %v4248 = vpack.c.b16 %v4185, %v4184
    %v4249 = vpack.c.b16 %v4187, %v4186
    %v4250 = vpack.c.b16 %v4189, %v4188
    %v4251 = vpack.c.b16 %v4191, %v4190
    %v4252 = vpack.c.b16 %v4193, %v4192
    %v4253 = vpack.c.b16 %v4195, %v4194
    %v4254 = vpack.c.b16 %v4197, %v4196
    %v4255 = vpack.c.b16 %v4199, %v4198
    %v4256 = vpack.c.b16 %v4201, %v4200
    %v4257 = vpack.c.b16 %v4203, %v4202
    %v4258 = vpack.c.b16 %v4205, %v4204
    %v4259 = vpack.c.b16 %v4207, %v4206
    %v4260 = vpack.c.b16 %v4209, %v4208
    %v4261 = vpack.c.b16 %v4211, %v4210
    %v4262 = vpack.c.b16 %v4213, %v4212
    %v4263 = vpack.c.b16 %v4215, %v4214
    %v4264 = vpack.c.b16 %v4217, %v4216
    %v4265 = vpack.c.b16 %v4219, %v4218
    %v4266 = vpack.c.b16 %v4221, %v4220
    %v4267 = vpack.c.b16 %v4223, %v4222
    %v4268 = vpack.c.b16 %v4225, %v4224
    %v4269 = vpack.c.b16 %v4227, %v4226
    %v4270 = vpack.c.b16 %v4229, %v4228
    %v4271 = vpack.c.b16 %v4231, %v4230
    %v4272 = vpack.c.b16 %v4233, %v4232
    %v4273 = vpack.c.b16 %v4235, %v4234
    %v4274 = vpack.c.b16 %v4237, %v4236
    %v4275 = vpack.c.b16 %v4239, %v4238
    %v4276 = vpack.c.b16 %v4241, %v4240
    %v4277 = vpack.c.b16 %v4243, %v4242
    %v4278 = vpack.c.b16 %v4245, %v4244
    %v4279 = vpack.c.b16 %v4247, %v4246
    %4312 = vmatprep.subr.bf16.mxu0 0
    %4313 = vmatpush1.bf16.msra.mxu0 %v4255
    %4314 = vmatprep.subr.bf16.mxu0 0
    %4315 = vmatpush1.bf16.msra.mxu0 %v4254
    %4316 = vmatprep.subr.bf16.mxu0 0
    %4317 = vmatpush1.bf16.msra.mxu0 %v4253
    %4318 = vmatprep.subr.bf16.mxu0 0
    %4319 = vmatpush1.bf16.msra.mxu0 %v4252
    %4320 = vmatprep.subr.bf16.mxu0 0
    %4321 = vmatpush1.bf16.msra.mxu0 %v4251
    %4322 = vmatprep.subr.bf16.mxu0 0
    %4323 = vmatpush1.bf16.msra.mxu0 %v4250
    %4324 = vmatprep.subr.bf16.mxu0 0
    %4325 = vmatpush1.bf16.msra.mxu0 %v4249
    %4326 = vmatprep.subr.bf16.mxu0 0
    %4327 = vmatpush1.bf16.msra.mxu0 %v4248
    %4328 = vmatprep.subr.bf16.mxu0 0
    %4329 = vmatpush2.bf16.msra.mxu0 %v4263
    %4330 = vmatprep.subr.bf16.mxu0 0
    %4331 = vmatpush2.bf16.msra.mxu0 %v4262
    %4332 = vmatprep.subr.bf16.mxu0 0
    %4333 = vmatpush2.bf16.msra.mxu0 %v4261
    %4334 = vmatprep.subr.bf16.mxu0 0
    %4335 = vmatpush2.bf16.msra.mxu0 %v4260
    %4336 = vmatprep.subr.bf16.mxu0 0
    %4337 = vmatpush2.bf16.msra.mxu0 %v4259
    %4338 = vmatprep.subr.bf16.mxu0 0
    %4339 = vmatpush2.bf16.msra.mxu0 %v4258
    %4340 = vmatprep.subr.bf16.mxu0 0
    %4341 = vmatpush2.bf16.msra.mxu0 %v4257
    %4342 = vmatprep.subr.bf16.mxu0 0
    %4343 = vmatpush2.bf16.msra.mxu0 %v4256
    %4344 = vmatprep.mubr.bf16.mxu0 %v4044
    %4345 = vmatmul.mubr.bf16.gmra.mxu0 %v4043
    %v4346 = vpop.f32.mrf.mxu0
    %v4347 = vadd.f32 %v4118, %v4346
    %v4348 = vpop.f32.mrf.mxu0
    %v4349 = vpop.f32.mrf.mxu0
    %v4350 = vadd.f32 %v4118, %v4349
    %v4351 = vpop.f32.mrf.mxu0
    %4352 = vdwg.mxu0
    %4353 = vmatprep.subr.bf16.mxu0 0
    %4354 = vmatpush1.bf16.msra.mxu0 %v4271
    %4355 = vmatprep.subr.bf16.mxu0 0
    %4356 = vmatpush1.bf16.msra.mxu0 %v4270
    %4357 = vmatprep.subr.bf16.mxu0 0
    %4358 = vmatpush1.bf16.msra.mxu0 %v4269
    %4359 = vmatprep.subr.bf16.mxu0 0
    %4360 = vmatpush1.bf16.msra.mxu0 %v4268
    %4361 = vmatprep.subr.bf16.mxu0 0
    %4362 = vmatpush1.bf16.msra.mxu0 %v4267
    %4363 = vmatprep.subr.bf16.mxu0 0
    %4364 = vmatpush1.bf16.msra.mxu0 %v4266
    %4365 = vmatprep.subr.bf16.mxu0 0
    %4366 = vmatpush1.bf16.msra.mxu0 %v4265
    %4367 = vmatprep.subr.bf16.mxu0 0
    %4368 = vmatpush1.bf16.msra.mxu0 %v4264
    %4369 = vmatprep.subr.bf16.mxu0 0
    %4370 = vmatpush2.bf16.msra.mxu0 %v4279
    %4371 = vmatprep.subr.bf16.mxu0 0
    %4372 = vmatpush2.bf16.msra.mxu0 %v4278
    %4373 = vmatprep.subr.bf16.mxu0 0
    %4374 = vmatpush2.bf16.msra.mxu0 %v4277
    %4375 = vmatprep.subr.bf16.mxu0 0
    %4376 = vmatpush2.bf16.msra.mxu0 %v4276
    %4377 = vmatprep.subr.bf16.mxu0 0
    %4378 = vmatpush2.bf16.msra.mxu0 %v4275
    %4379 = vmatprep.subr.bf16.mxu0 0
    %4380 = vmatpush2.bf16.msra.mxu0 %v4274
    %4381 = vmatprep.subr.bf16.mxu0 0
    %4382 = vmatpush2.bf16.msra.mxu0 %v4273
    %4383 = vmatprep.subr.bf16.mxu0 0
    %4384 = vmatpush2.bf16.msra.mxu0 %v4272
    %4385 = vmatprep.mubr.bf16.mxu0 %v4046
    %4386 = vmatmul.mubr.bf16.gmra.mxu0 %v4045
    %v4387 = vpop.f32.mrf.mxu0
    %v4388 = vadd.f32 %v4347, %v4387
    %v4389 = vpop.f32.mrf.mxu0
    %v4390 = vpop.f32.mrf.mxu0
    %v4391 = vadd.f32 %v4350, %v4390
    %v4392 = vpop.f32.mrf.mxu0
    %4393 = vdwg.mxu0
    %v4394 = vadd.f32 %v4388, %v3666
    %v4395 = vadd.f32 %v4391, %v3667
    %s4396 = scalar_lea.vmem [#allocation9], 2
    %v4397 = vld [vmem:[%s4396] sm:$0x1]
    %s4398 = scalar_lea.vmem [#allocation10], 2
    %v4399 = vld [vmem:[%s4398] sm:$0x1]
    %4400 = vadd.xlane.f32.xlu0 %v4394
    %v4401 = vpop.xlane.xlu0 %4400
    %4402 = vadd.xlane.f32.xlu0 %v4395
    %v4403 = vpop.xlane.xlu0 %4402
    %v4404 = vmul.f32 %v4401, %v799
    %v4405 = vmul.f32 %v4403, %v799
    %v4406 = vsub.f32 %v4394, %v4404
    %v4407 = vsub.f32 %v4395, %v4405
    %v4408 = vmul.f32 %v4406, %v4406
    %v4409 = vmul.f32 %v4407, %v4407
    %4410 = vadd.xlane.f32.xlu0 %v4408
    %v4411 = vpop.xlane.xlu0 %4410
    %4412 = vadd.xlane.f32.xlu0 %v4409
    %v4413 = vpop.xlane.xlu0 %4412
    %v4414 = vmul.f32 %v4411, %v799
    %v4415 = vmul.f32 %v4413, %v799
    %v4416 = vadd.f32 %v4414, 1e-12
    %v4417 = vadd.f32 %v4415, 1e-12
    %v4418 = vrsqrt.pop %v4416
    %v4419 = vrsqrt.pop %v4417
    %v4420 = vmul.f32 %v4406, %v4418
    %v4421 = vmul.f32 %v4407, %v4419
    %v4423 = vlaneseq
    %v4424 = vshrl.u32 %v4423, 7
    %v4425 = vsub.s32 0, %v4424
    %v4426 = vrot.slane %v4397, %v4425
    %v4428 = vmul.f32 %v4420, %v4426
    %v4429 = vmul.f32 %v4421, %v4426
    %v4431 = vlaneseq
    %v4432 = vshrl.u32 %v4431, 7
    %v4433 = vsub.s32 0, %v4432
    %v4434 = vrot.slane %v4399, %v4433
    %v4436 = vadd.f32 %v4428, %v4434
    %v4437 = vadd.f32 %v4429, %v4434
    %v4438 = vpack.c.bf16 %v4437, %v4436
    %s4439 = scalar_lea.vmem [#allocation2], 576
    %v4440 = vld [vmem:[%s4439] sm:$0xff]
    %v4441 = vld [vmem:[%s4439 + $0x8] sm:$0xf]
    %v4442 = vld [vmem:[%s4439 + $0xc] sm:$0xff]
    %v4443 = vld [vmem:[%s4439 + $0x14] sm:$0xf]
    %v4444 = vld [vmem:[%s4439 + $0x18] sm:$0xff]
    %v4445 = vld [vmem:[%s4439 + $0x20] sm:$0xf]
    %v4446 = vld [vmem:[%s4439 + $0x24] sm:$0xff]
    %v4447 = vld [vmem:[%s4439 + $0x2c] sm:$0xf]
    %v4448 = vld [vmem:[%s4439 + $0x30] sm:$0xff]
    %v4449 = vld [vmem:[%s4439 + $0x38] sm:$0xf]
    %v4450 = vld [vmem:[%s4439 + $0x3c] sm:$0xff]
    %v4451 = vld [vmem:[%s4439 + $0x44] sm:$0xf]
    %v4452 = vld [vmem:[%s4439 + $0x48] sm:$0xff]
    %v4453 = vld [vmem:[%s4439 + $0x50] sm:$0xf]
    %v4454 = vld [vmem:[%s4439 + $0x54] sm:$0xff]
    %v4455 = vld [vmem:[%s4439 + $0x5c] sm:$0xf]
    %v4456 = vld [vmem:[%s4439 + $0x60] sm:$0xff]
    %v4457 = vld [vmem:[%s4439 + $0x68] sm:$0xf]
    %v4458 = vld [vmem:[%s4439 + $0x6c] sm:$0xff]
    %v4459 = vld [vmem:[%s4439 + $0x74] sm:$0xf]
    %v4460 = vld [vmem:[%s4439 + $0x78] sm:$0xff]
    %v4461 = vld [vmem:[%s4439 + $0x80] sm:$0xf]
    %v4462 = vld [vmem:[%s4439 + $0x84] sm:$0xff]
    %v4463 = vld [vmem:[%s4439 + $0x8c] sm:$0xf]
    %v4464 = vld [vmem:[%s4439 + $0x90] sm:$0xff]
    %v4465 = vld [vmem:[%s4439 + $0x98] sm:$0xf]
    %v4466 = vld [vmem:[%s4439 + $0x9c] sm:$0xff]
    %v4467 = vld [vmem:[%s4439 + $0xa4] sm:$0xf]
    %v4468 = vld [vmem:[%s4439 + $0xa8] sm:$0xff]
    %v4469 = vld [vmem:[%s4439 + $0xb0] sm:$0xf]
    %v4470 = vld [vmem:[%s4439 + $0xb4] sm:$0xff]
    %v4471 = vld [vmem:[%s4439 + $0xbc] sm:$0xf]
    %s4472 = scalar_lea.vmem %s3, 9
    %v4473 = vld [vmem:[%s4472] sm:$0x7]
    %v4475 = vlaneseq
    %v4476 = vshrl.u32 %v4475, 7
    %v4477 = vsub.s32 0, %v4476
    %v4478 = vrot.slane %v4473, %v4477
    %v4479 = vlaneseq
    %v4480 = vshrl.u32 %v4479, 7
    %v4481 = vsub.s32 1, %v4480
    %v4482 = vrot.slane %v4473, %v4481
    %v4483 = vlaneseq
    %v4484 = vshrl.u32 %v4483, 7
    %v4485 = vsub.s32 2, %v4484
    %v4486 = vrot.slane %v4473, %v4485
    %v4522 = vunpack.c.l.b16 %v4440
    %v4523 = vunpack.c.h.b16 %v4440
    %v4524 = vunpack.c.l.b16 %v4441
    %v4525 = vunpack.c.l.b16 %v4442
    %v4526 = vunpack.c.h.b16 %v4442
    %v4527 = vunpack.c.l.b16 %v4443
    %v4528 = vunpack.c.l.b16 %v4444
    %v4529 = vunpack.c.h.b16 %v4444
    %v4530 = vunpack.c.l.b16 %v4445
    %v4531 = vunpack.c.l.b16 %v4446
    %v4532 = vunpack.c.h.b16 %v4446
    %v4533 = vunpack.c.l.b16 %v4447
    %v4534 = vunpack.c.l.b16 %v4448
    %v4535 = vunpack.c.h.b16 %v4448
    %v4536 = vunpack.c.l.b16 %v4449
    %v4537 = vunpack.c.l.b16 %v4450
    %v4538 = vunpack.c.h.b16 %v4450
    %v4539 = vunpack.c.l.b16 %v4451
    %v4540 = vunpack.c.l.b16 %v4452
    %v4541 = vunpack.c.h.b16 %v4452
    %v4542 = vunpack.c.l.b16 %v4453
    %v4543 = vunpack.c.l.b16 %v4454
    %v4544 = vunpack.c.h.b16 %v4454
    %v4545 = vunpack.c.l.b16 %v4455
    %v4546 = vunpack.c.l.b16 %v4456
    %v4547 = vunpack.c.h.b16 %v4456
    %v4548 = vunpack.c.l.b16 %v4457
    %v4549 = vunpack.c.l.b16 %v4458
    %v4550 = vunpack.c.h.b16 %v4458
    %v4551 = vunpack.c.l.b16 %v4459
    %v4552 = vunpack.c.l.b16 %v4460
    %v4553 = vunpack.c.h.b16 %v4460
    %v4554 = vunpack.c.l.b16 %v4461
    %v4555 = vunpack.c.l.b16 %v4462
    %v4556 = vunpack.c.h.b16 %v4462
    %v4557 = vunpack.c.l.b16 %v4463
    %v4558 = vunpack.c.l.b16 %v4464
    %v4559 = vunpack.c.h.b16 %v4464
    %v4560 = vunpack.c.l.b16 %v4465
    %v4561 = vunpack.c.l.b16 %v4466
    %v4562 = vunpack.c.h.b16 %v4466
    %v4563 = vunpack.c.l.b16 %v4467
    %v4564 = vunpack.c.l.b16 %v4468
    %v4565 = vunpack.c.h.b16 %v4468
    %v4566 = vunpack.c.l.b16 %v4469
    %v4567 = vunpack.c.l.b16 %v4470
    %v4568 = vunpack.c.h.b16 %v4470
    %v4569 = vunpack.c.l.b16 %v4471
    %v4570 = vpack.c.b16 %v4525, %v4522
    %v4571 = vpack.c.b16 %v4526, %v4523
    %v4572 = vpack.c.b16 %v4527, %v4524
    %v4573 = vpack.c.b16 %v4531, %v4528
    %v4574 = vpack.c.b16 %v4532, %v4529
    %v4575 = vpack.c.b16 %v4533, %v4530
    %v4576 = vpack.c.b16 %v4537, %v4534
    %v4577 = vpack.c.b16 %v4538, %v4535
    %v4578 = vpack.c.b16 %v4539, %v4536
    %v4579 = vpack.c.b16 %v4543, %v4540
    %v4580 = vpack.c.b16 %v4544, %v4541
    %v4581 = vpack.c.b16 %v4545, %v4542
    %v4582 = vpack.c.b16 %v4549, %v4546
    %v4583 = vpack.c.b16 %v4550, %v4547
    %v4584 = vpack.c.b16 %v4551, %v4548
    %v4585 = vpack.c.b16 %v4555, %v4552
    %v4586 = vpack.c.b16 %v4556, %v4553
    %v4587 = vpack.c.b16 %v4557, %v4554
    %v4588 = vpack.c.b16 %v4561, %v4558
    %v4589 = vpack.c.b16 %v4562, %v4559
    %v4590 = vpack.c.b16 %v4563, %v4560
    %v4591 = vpack.c.b16 %v4567, %v4564
    %v4592 = vpack.c.b16 %v4568, %v4565
    %v4593 = vpack.c.b16 %v4569, %v4566
    %4618 = vmatprep.subr.bf16.mxu0 %v4592
    %4619 = vmatpush1.bf16.msra.mxu0 %v4591
    %4620 = vmatprep.subr.bf16.mxu0 %v4589
    %4621 = vmatpush1.bf16.msra.mxu0 %v4588
    %4622 = vmatprep.subr.bf16.mxu0 %v4586
    %4623 = vmatpush1.bf16.msra.mxu0 %v4585
    %4624 = vmatprep.subr.bf16.mxu0 %v4583
    %4625 = vmatpush1.bf16.msra.mxu0 %v4582
    %4626 = vmatprep.subr.bf16.mxu0 %v4580
    %4627 = vmatpush1.bf16.msra.mxu0 %v4579
    %4628 = vmatprep.subr.bf16.mxu0 %v4577
    %4629 = vmatpush1.bf16.msra.mxu0 %v4576
    %4630 = vmatprep.subr.bf16.mxu0 %v4574
    %4631 = vmatpush1.bf16.msra.mxu0 %v4573
    %4632 = vmatprep.subr.bf16.mxu0 %v4571
    %4633 = vmatpush1.bf16.msra.mxu0 %v4570
    %4634 = vmatprep.subr.bf16.mxu0 0
    %4635 = vmatpush2.bf16.msra.mxu0 0
    %4636 = vmatprep.subr.bf16.mxu0 0
    %4637 = vmatpush2.bf16.msra.mxu0 0
    %4638 = vmatprep.subr.bf16.mxu0 0
    %4639 = vmatpush2.bf16.msra.mxu0 0
    %4640 = vmatprep.subr.bf16.mxu0 0
    %4641 = vmatpush2.bf16.msra.mxu0 0
    %4642 = vmatprep.subr.bf16.mxu0 0
    %4643 = vmatpush2.bf16.msra.mxu0 0
    %4644 = vmatprep.subr.bf16.mxu0 0
    %4645 = vmatpush2.bf16.msra.mxu0 0
    %4646 = vmatprep.subr.bf16.mxu0 0
    %4647 = vmatpush2.bf16.msra.mxu0 0
    %4648 = vmatprep.subr.bf16.mxu0 0
    %4649 = vmatpush2.bf16.msra.mxu0 0
    %4650 = vmatprep.mubr.bf16.mxu0 0
    %4651 = vmatmul.mubr.bf16.gmra.mxu0 %v4438
    %v4652 = vpop.f32.mrf.mxu0
    %v4653 = vadd.f32 %v4478, %v4652
    %v4654 = vpop.f32.mrf.mxu0
    %v4655 = vadd.f32 %v4482, %v4654
    %v4656 = vpop.f32.mrf.mxu0
    %v4657 = vadd.f32 %v4478, %v4656
    %v4658 = vpop.f32.mrf.mxu0
    %v4659 = vadd.f32 %v4482, %v4658
    %4660 = vdwg.mxu0
    %4661 = vmatprep.subr.bf16.mxu0 0
    %4662 = vmatpush1.bf16.msra.mxu0 %v4593
    %4663 = vmatprep.subr.bf16.mxu0 0
    %4664 = vmatpush1.bf16.msra.mxu0 %v4590
    %4665 = vmatprep.subr.bf16.mxu0 0
    %4666 = vmatpush1.bf16.msra.mxu0 %v4587
    %4667 = vmatprep.subr.bf16.mxu0 0
    %4668 = vmatpush1.bf16.msra.mxu0 %v4584
    %4669 = vmatprep.subr.bf16.mxu0 0
    %4670 = vmatpush1.bf16.msra.mxu0 %v4581
    %4671 = vmatprep.subr.bf16.mxu0 0
    %4672 = vmatpush1.bf16.msra.mxu0 %v4578
    %4673 = vmatprep.subr.bf16.mxu0 0
    %4674 = vmatpush1.bf16.msra.mxu0 %v4575
    %4675 = vmatprep.subr.bf16.mxu0 0
    %4676 = vmatpush1.bf16.msra.mxu0 %v4572
    %4677 = vmatprep.subr.bf16.mxu0 0
    %4678 = vmatpush2.bf16.msra.mxu0 0
    %4679 = vmatprep.subr.bf16.mxu0 0
    %4680 = vmatpush2.bf16.msra.mxu0 0
    %4681 = vmatprep.subr.bf16.mxu0 0
    %4682 = vmatpush2.bf16.msra.mxu0 0
    %4683 = vmatprep.subr.bf16.mxu0 0
    %4684 = vmatpush2.bf16.msra.mxu0 0
    %4685 = vmatprep.subr.bf16.mxu0 0
    %4686 = vmatpush2.bf16.msra.mxu0 0
    %4687 = vmatprep.subr.bf16.mxu0 0
    %4688 = vmatpush2.bf16.msra.mxu0 0
    %4689 = vmatprep.subr.bf16.mxu0 0
    %4690 = vmatpush2.bf16.msra.mxu0 0
    %4691 = vmatprep.subr.bf16.mxu0 0
    %4692 = vmatpush2.bf16.msra.mxu0 0
    %4693 = vmatprep.mubr.bf16.mxu0 0
    %4694 = vmatmul.mubr.bf16.gmra.mxu0 %v4438
    %v4695 = vpop.f32.mrf.mxu0
    %v4696 = vadd.f32 %v4486, %v4695
    %v4697 = vpop.f32.mrf.mxu0
    %v4698 = vpop.f32.mrf.mxu0
    %v4699 = vadd.f32 %v4486, %v4698
    %v4700 = vpop.f32.mrf.mxu0
    %4701 = vdwg.mxu0
    %v4702 = vpack.c.bf16 %v4657, %v4653
    %v4703 = vpack.c.bf16 %v4659, %v4655
    %v4704 = vpack.c.bf16 %v4699, %v4696
    %v4705 = vmul.bf16 %v4702, %v181
    %4706 = vmatprep.subr.bf16.mxu0 0
    %4707 = vmatpush1.bf16.xpose.msra.mxu0 0
    %4708 = vmatprep.subr.bf16.mxu0 0
    %4709 = vmatpush1.bf16.xpose.msra.mxu0 0
    %4710 = vmatprep.subr.bf16.mxu0 0
    %4711 = vmatpush1.bf16.xpose.msra.mxu0 0
    %4712 = vmatprep.subr.bf16.mxu0 0
    %4713 = vmatpush1.bf16.xpose.msra.mxu0 0
    %4714 = vmatprep.subr.bf16.mxu0 0
    %4715 = vmatpush1.bf16.xpose.msra.mxu0 0
    %4716 = vmatprep.subr.bf16.mxu0 0
    %4717 = vmatpush1.bf16.xpose.msra.mxu0 0
    %4718 = vmatprep.subr.bf16.mxu0 0
    %4719 = vmatpush1.bf16.xpose.msra.mxu0 0
    %4720 = vmatprep.subr.bf16.mxu0 0
    %4721 = vmatpush1.bf16.xpose.msra.mxu0 %v4703
    %4722 = vmatprep.subr.bf16.mxu0 0
    %4723 = vmatpush2.bf16.xpose.msra.mxu0 0
    %4724 = vmatprep.subr.bf16.mxu0 0
    %4725 = vmatpush2.bf16.xpose.msra.mxu0 0
    %4726 = vmatprep.subr.bf16.mxu0 0
    %4727 = vmatpush2.bf16.xpose.msra.mxu0 0
    %4728 = vmatprep.subr.bf16.mxu0 0
    %4729 = vmatpush2.bf16.xpose.msra.mxu0 0
    %4730 = vmatprep.subr.bf16.mxu0 0
    %4731 = vmatpush2.bf16.xpose.msra.mxu0 0
    %4732 = vmatprep.subr.bf16.mxu0 0
    %4733 = vmatpush2.bf16.xpose.msra.mxu0 0
    %4734 = vmatprep.subr.bf16.mxu0 0
    %4735 = vmatpush2.bf16.xpose.msra.mxu0 0
    %4736 = vmatprep.subr.bf16.mxu0 0
    %4737 = vmatpush2.bf16.xpose.msra.mxu0 0
    %4738 = vmatprep.mubr.bf16.mxu0 0
    %4739 = vmatmul.mubr.bf16.gmra.mxu0 %v4705
    %v4740 = vpop.f32.mrf.mxu0
    %v4741 = vadd.f32 %v172, %v4740
    %v4742 = vpop.f32.mrf.mxu0
    %v4743 = vpop.f32.mrf.mxu0
    %v4744 = vadd.f32 %v173, %v4743
    %v4745 = vpop.f32.mrf.mxu0
    %4746 = vdwg.mxu0
    %v4747 = vsel %vm495, %v4741, -inf
    %4748 = vmax.xlane.f32.xlu0 %v4747
    %v4749 = vpop.xlane.xlu0 %4748
    %v4750 = vsel %vm495, %v4744, -inf
    %4751 = vmax.xlane.f32.xlu0 %v4750
    %v4752 = vpop.xlane.xlu0 %4751
    %v4753 = vsub.f32 %v4741, %v4749
    %v4754 = vsub.f32 %v4744, %v4752
    %v4755 = vmul.f32 %v4753, 1.442695
    %v4756 = vpow.pop %v4755
    %v4757 = vmul.f32 %v4754, 1.442695
    %v4758 = vpow.pop %v4757
    %v4759 = vsel %vm495, %v4756, 0.0
    %4760 = vadd.xlane.f32.xlu0 %v4759
    %v4761 = vpop.xlane.xlu0 %4760
    %v4762 = vsel %vm495, %v4758, 0.0
    %4763 = vadd.xlane.f32.xlu0 %v4762
    %v4764 = vpop.xlane.xlu0 %4763
    %v4765 = vrcp.pop %v4761
    %v4766 = vrcp.pop %v4764
    %v4767 = vmul.f32 %v4756, %v4765
    %v4768 = vmul.f32 %v4758, %v4766
    %v4769 = vpack.c.bf16 %v4768, %v4767
    %v4771 = vsel %vm495, %v4769, 0
    %4773 = vmatprep.subr.bf16.mxu0 0
    %4774 = vmatpush1.bf16.msra.mxu0 0
    %4775 = vmatprep.subr.bf16.mxu0 0
    %4776 = vmatpush1.bf16.msra.mxu0 0
    %4777 = vmatprep.subr.bf16.mxu0 0
    %4778 = vmatpush1.bf16.msra.mxu0 0
    %4779 = vmatprep.subr.bf16.mxu0 0
    %4780 = vmatpush1.bf16.msra.mxu0 0
    %4781 = vmatprep.subr.bf16.mxu0 0
    %4782 = vmatpush1.bf16.msra.mxu0 0
    %4783 = vmatprep.subr.bf16.mxu0 0
    %4784 = vmatpush1.bf16.msra.mxu0 0
    %4785 = vmatprep.subr.bf16.mxu0 0
    %4786 = vmatpush1.bf16.msra.mxu0 0
    %4787 = vmatprep.subr.bf16.mxu0 0
    %4788 = vmatpush1.bf16.msra.mxu0 %v4704
    %4789 = vmatprep.subr.bf16.mxu0 0
    %4790 = vmatpush2.bf16.msra.mxu0 0
    %4791 = vmatprep.subr.bf16.mxu0 0
    %4792 = vmatpush2.bf16.msra.mxu0 0
    %4793 = vmatprep.subr.bf16.mxu0 0
    %4794 = vmatpush2.bf16.msra.mxu0 0
    %4795 = vmatprep.subr.bf16.mxu0 0
    %4796 = vmatpush2.bf16.msra.mxu0 0
    %4797 = vmatprep.subr.bf16.mxu0 0
    %4798 = vmatpush2.bf16.msra.mxu0 0
    %4799 = vmatprep.subr.bf16.mxu0 0
    %4800 = vmatpush2.bf16.msra.mxu0 0
    %4801 = vmatprep.subr.bf16.mxu0 0
    %4802 = vmatpush2.bf16.msra.mxu0 0
    %4803 = vmatprep.subr.bf16.mxu0 0
    %4804 = vmatpush2.bf16.msra.mxu0 0
    %4805 = vmatprep.mubr.bf16.mxu0 0
    %4806 = vmatmul.mubr.bf16.gmra.mxu0 %v4771
    %v4807 = vpop.f32.mrf.mxu0
    %v4808 = vadd.f32 0.0, %v4807
    %v4809 = vpop.f32.mrf.mxu0
    %v4810 = vpop.f32.mrf.mxu0
    %v4811 = vadd.f32 0.0, %v4810
    %v4812 = vpop.f32.mrf.mxu0
    %4813 = vdwg.mxu0
    %v4814 = vmul.f32 %v4808, %v180
    %v4815 = vmul.f32 %v4811, %v180
    %v4816 = vmul.bf16 %v4702, %v187
    %4817 = vmatprep.subr.bf16.mxu0 0
    %4818 = vmatpush1.bf16.xpose.msra.mxu0 0
    %4819 = vmatprep.subr.bf16.mxu0 0
    %4820 = vmatpush1.bf16.xpose.msra.mxu0 0
    %4821 = vmatprep.subr.bf16.mxu0 0
    %4822 = vmatpush1.bf16.xpose.msra.mxu0 0
    %4823 = vmatprep.subr.bf16.mxu0 0
    %4824 = vmatpush1.bf16.xpose.msra.mxu0 0
    %4825 = vmatprep.subr.bf16.mxu0 0
    %4826 = vmatpush1.bf16.xpose.msra.mxu0 0
    %4827 = vmatprep.subr.bf16.mxu0 0
    %4828 = vmatpush1.bf16.xpose.msra.mxu0 0
    %4829 = vmatprep.subr.bf16.mxu0 0
    %4830 = vmatpush1.bf16.xpose.msra.mxu0 0
    %4831 = vmatprep.subr.bf16.mxu0 0
    %4832 = vmatpush1.bf16.xpose.msra.mxu0 %v4703
    %4833 = vmatprep.subr.bf16.mxu0 0
    %4834 = vmatpush2.bf16.xpose.msra.mxu0 0
    %4835 = vmatprep.subr.bf16.mxu0 0
    %4836 = vmatpush2.bf16.xpose.msra.mxu0 0
    %4837 = vmatprep.subr.bf16.mxu0 0
    %4838 = vmatpush2.bf16.xpose.msra.mxu0 0
    %4839 = vmatprep.subr.bf16.mxu0 0
    %4840 = vmatpush2.bf16.xpose.msra.mxu0 0
    %4841 = vmatprep.subr.bf16.mxu0 0
    %4842 = vmatpush2.bf16.xpose.msra.mxu0 0
    %4843 = vmatprep.subr.bf16.mxu0 0
    %4844 = vmatpush2.bf16.xpose.msra.mxu0 0
    %4845 = vmatprep.subr.bf16.mxu0 0
    %4846 = vmatpush2.bf16.xpose.msra.mxu0 0
    %4847 = vmatprep.subr.bf16.mxu0 0
    %4848 = vmatpush2.bf16.xpose.msra.mxu0 0
    %4849 = vmatprep.mubr.bf16.mxu0 0
    %4850 = vmatmul.mubr.bf16.gmra.mxu0 %v4816
    %v4851 = vpop.f32.mrf.mxu0
    %v4852 = vadd.f32 %v172, %v4851
    %v4853 = vpop.f32.mrf.mxu0
    %v4854 = vpop.f32.mrf.mxu0
    %v4855 = vadd.f32 %v173, %v4854
    %v4856 = vpop.f32.mrf.mxu0
    %4857 = vdwg.mxu0
    %v4858 = vsel %vm495, %v4852, -inf
    %4859 = vmax.xlane.f32.xlu0 %v4858
    %v4860 = vpop.xlane.xlu0 %4859
    %v4861 = vsel %vm495, %v4855, -inf
    %4862 = vmax.xlane.f32.xlu0 %v4861
    %v4863 = vpop.xlane.xlu0 %4862
    %v4864 = vsub.f32 %v4852, %v4860
    %v4865 = vsub.f32 %v4855, %v4863
    %v4866 = vmul.f32 %v4864, 1.442695
    %v4867 = vpow.pop %v4866
    %v4868 = vmul.f32 %v4865, 1.442695
    %v4869 = vpow.pop %v4868
    %v4870 = vsel %vm495, %v4867, 0.0
    %4871 = vadd.xlane.f32.xlu0 %v4870
    %v4872 = vpop.xlane.xlu0 %4871
    %v4873 = vsel %vm495, %v4869, 0.0
    %4874 = vadd.xlane.f32.xlu0 %v4873
    %v4875 = vpop.xlane.xlu0 %4874
    %v4876 = vrcp.pop %v4872
    %v4877 = vrcp.pop %v4875
    %v4878 = vmul.f32 %v4867, %v4876
    %v4879 = vmul.f32 %v4869, %v4877
    %v4880 = vpack.c.bf16 %v4879, %v4878
    %v4882 = vsel %vm495, %v4880, 0
    %4884 = vmatprep.subr.bf16.mxu0 0
    %4885 = vmatpush1.bf16.msra.mxu0 0
    %4886 = vmatprep.subr.bf16.mxu0 0
    %4887 = vmatpush1.bf16.msra.mxu0 0
    %4888 = vmatprep.subr.bf16.mxu0 0
    %4889 = vmatpush1.bf16.msra.mxu0 0
    %4890 = vmatprep.subr.bf16.mxu0 0
    %4891 = vmatpush1.bf16.msra.mxu0 0
    %4892 = vmatprep.subr.bf16.mxu0 0
    %4893 = vmatpush1.bf16.msra.mxu0 0
    %4894 = vmatprep.subr.bf16.mxu0 0
    %4895 = vmatpush1.bf16.msra.mxu0 0
    %4896 = vmatprep.subr.bf16.mxu0 0
    %4897 = vmatpush1.bf16.msra.mxu0 0
    %4898 = vmatprep.subr.bf16.mxu0 0
    %4899 = vmatpush1.bf16.msra.mxu0 %v4704
    %4900 = vmatprep.subr.bf16.mxu0 0
    %4901 = vmatpush2.bf16.msra.mxu0 0
    %4902 = vmatprep.subr.bf16.mxu0 0
    %4903 = vmatpush2.bf16.msra.mxu0 0
    %4904 = vmatprep.subr.bf16.mxu0 0
    %4905 = vmatpush2.bf16.msra.mxu0 0
    %4906 = vmatprep.subr.bf16.mxu0 0
    %4907 = vmatpush2.bf16.msra.mxu0 0
    %4908 = vmatprep.subr.bf16.mxu0 0
    %4909 = vmatpush2.bf16.msra.mxu0 0
    %4910 = vmatprep.subr.bf16.mxu0 0
    %4911 = vmatpush2.bf16.msra.mxu0 0
    %4912 = vmatprep.subr.bf16.mxu0 0
    %4913 = vmatpush2.bf16.msra.mxu0 0
    %4914 = vmatprep.subr.bf16.mxu0 0
    %4915 = vmatpush2.bf16.msra.mxu0 0
    %4916 = vmatprep.mubr.bf16.mxu0 0
    %4917 = vmatmul.mubr.bf16.gmra.mxu0 %v4882
    %v4918 = vpop.f32.mrf.mxu0
    %v4919 = vadd.f32 0.0, %v4918
    %v4920 = vpop.f32.mrf.mxu0
    %v4921 = vpop.f32.mrf.mxu0
    %v4922 = vadd.f32 0.0, %v4921
    %v4923 = vpop.f32.mrf.mxu0
    %4924 = vdwg.mxu0
    %v4925 = vmul.f32 %v4919, %v186
    %v4926 = vmul.f32 %v4922, %v186
    %v4927 = vadd.f32 %v4814, %v4925
    %v4928 = vadd.f32 %v4815, %v4926
    %v4929 = vpack.c.bf16 %v4928, %v4927
    %s4930 = scalar_lea.vmem %s4, 192
    %v4931 = vld [vmem:[%s4930] sm:$0xf]
    %v4932 = vld [vmem:[%s4930 + $0x4] sm:$0xf]
    %v4933 = vld [vmem:[%s4930 + $0x8] sm:$0xf]
    %v4934 = vld [vmem:[%s4930 + $0xc] sm:$0xf]
    %v4935 = vld [vmem:[%s4930 + $0x10] sm:$0xf]
    %v4936 = vld [vmem:[%s4930 + $0x14] sm:$0xf]
    %v4937 = vld [vmem:[%s4930 + $0x18] sm:$0xf]
    %v4938 = vld [vmem:[%s4930 + $0x1c] sm:$0xf]
    %v4939 = vld [vmem:[%s4930 + $0x20] sm:$0xf]
    %v4940 = vld [vmem:[%s4930 + $0x24] sm:$0xf]
    %v4941 = vld [vmem:[%s4930 + $0x28] sm:$0xf]
    %v4942 = vld [vmem:[%s4930 + $0x2c] sm:$0xf]
    %v4943 = vld [vmem:[%s4930 + $0x30] sm:$0xf]
    %v4944 = vld [vmem:[%s4930 + $0x34] sm:$0xf]
    %v4945 = vld [vmem:[%s4930 + $0x38] sm:$0xf]
    %v4946 = vld [vmem:[%s4930 + $0x3c] sm:$0xf]
    %s4947 = scalar_lea.vmem %s5, 3
    %v4948 = vld [vmem:[%s4947] sm:$0x1]
    %v4950 = vlaneseq
    %v4951 = vshrl.u32 %v4950, 7
    %v4952 = vsub.s32 0, %v4951
    %v4953 = vrot.slane %v4948, %v4952
    %v4971 = vunpack.c.l.b16 %v4931
    %v4972 = vunpack.c.l.b16 %v4932
    %v4973 = vunpack.c.l.b16 %v4933
    %v4974 = vunpack.c.l.b16 %v4934
    %v4975 = vunpack.c.l.b16 %v4935
    %v4976 = vunpack.c.l.b16 %v4936
    %v4977 = vunpack.c.l.b16 %v4937
    %v4978 = vunpack.c.l.b16 %v4938
    %v4979 = vunpack.c.l.b16 %v4939
    %v4980 = vunpack.c.l.b16 %v4940
    %v4981 = vunpack.c.l.b16 %v4941
    %v4982 = vunpack.c.l.b16 %v4942
    %v4983 = vunpack.c.l.b16 %v4943
    %v4984 = vunpack.c.l.b16 %v4944
    %v4985 = vunpack.c.l.b16 %v4945
    %v4986 = vunpack.c.l.b16 %v4946
    %v4987 = vpack.c.b16 %v4972, %v4971
    %v4988 = vpack.c.b16 %v4974, %v4973
    %v4989 = vpack.c.b16 %v4976, %v4975
    %v4990 = vpack.c.b16 %v4978, %v4977
    %v4991 = vpack.c.b16 %v4980, %v4979
    %v4992 = vpack.c.b16 %v4982, %v4981
    %v4993 = vpack.c.b16 %v4984, %v4983
    %v4994 = vpack.c.b16 %v4986, %v4985
    %5003 = vmatprep.subr.bf16.mxu0 0
    %5004 = vmatpush1.bf16.msra.mxu0 %v4994
    %5005 = vmatprep.subr.bf16.mxu0 0
    %5006 = vmatpush1.bf16.msra.mxu0 %v4993
    %5007 = vmatprep.subr.bf16.mxu0 0
    %5008 = vmatpush1.bf16.msra.mxu0 %v4992
    %5009 = vmatprep.subr.bf16.mxu0 0
    %5010 = vmatpush1.bf16.msra.mxu0 %v4991
    %5011 = vmatprep.subr.bf16.mxu0 0
    %5012 = vmatpush1.bf16.msra.mxu0 %v4990
    %5013 = vmatprep.subr.bf16.mxu0 0
    %5014 = vmatpush1.bf16.msra.mxu0 %v4989
    %5015 = vmatprep.subr.bf16.mxu0 0
    %5016 = vmatpush1.bf16.msra.mxu0 %v4988
    %5017 = vmatprep.subr.bf16.mxu0 0
    %5018 = vmatpush1.bf16.msra.mxu0 %v4987
    %5019 = vmatprep.subr.bf16.mxu0 0
    %5020 = vmatpush2.bf16.msra.mxu0 0
    %5021 = vmatprep.subr.bf16.mxu0 0
    %5022 = vmatpush2.bf16.msra.mxu0 0
    %5023 = vmatprep.subr.bf16.mxu0 0
    %5024 = vmatpush2.bf16.msra.mxu0 0
    %5025 = vmatprep.subr.bf16.mxu0 0
    %5026 = vmatpush2.bf16.msra.mxu0 0
    %5027 = vmatprep.subr.bf16.mxu0 0
    %5028 = vmatpush2.bf16.msra.mxu0 0
    %5029 = vmatprep.subr.bf16.mxu0 0
    %5030 = vmatpush2.bf16.msra.mxu0 0
    %5031 = vmatprep.subr.bf16.mxu0 0
    %5032 = vmatpush2.bf16.msra.mxu0 0
    %5033 = vmatprep.subr.bf16.mxu0 0
    %5034 = vmatpush2.bf16.msra.mxu0 0
    %5035 = vmatprep.mubr.bf16.mxu0 0
    %5036 = vmatmul.mubr.bf16.gmra.mxu0 %v4929
    %v5037 = vpop.f32.mrf.mxu0
    %v5038 = vadd.f32 %v4953, %v5037
    %v5039 = vpop.f32.mrf.mxu0
    %v5040 = vpop.f32.mrf.mxu0
    %v5041 = vadd.f32 %v4953, %v5040
    %v5042 = vpop.f32.mrf.mxu0
    %5043 = vdwg.mxu0
    %v5044 = vadd.f32 %v5038, %v4436
    %v5045 = vadd.f32 %v5041, %v4437
    %s5046 = scalar_lea.vmem %s6, 3
    %v5047 = vld [vmem:[%s5046] sm:$0x1]
    %s5048 = scalar_lea.vmem [#allocation4], 3
    %v5049 = vld [vmem:[%s5048] sm:$0x1]
    %5050 = vadd.xlane.f32.xlu0 %v5044
    %v5051 = vpop.xlane.xlu0 %5050
    %5052 = vadd.xlane.f32.xlu0 %v5045
    %v5053 = vpop.xlane.xlu0 %5052
    %v5054 = vmul.f32 %v5051, %v799
    %v5055 = vmul.f32 %v5053, %v799
    %v5056 = vsub.f32 %v5044, %v5054
    %v5057 = vsub.f32 %v5045, %v5055
    %v5058 = vmul.f32 %v5056, %v5056
    %v5059 = vmul.f32 %v5057, %v5057
    %5060 = vadd.xlane.f32.xlu0 %v5058
    %v5061 = vpop.xlane.xlu0 %5060
    %5062 = vadd.xlane.f32.xlu0 %v5059
    %v5063 = vpop.xlane.xlu0 %5062
    %v5064 = vmul.f32 %v5061, %v799
    %v5065 = vmul.f32 %v5063, %v799
    %v5066 = vadd.f32 %v5064, 1e-12
    %v5067 = vadd.f32 %v5065, 1e-12
    %v5068 = vrsqrt.pop %v5066
    %v5069 = vrsqrt.pop %v5067
    %v5070 = vmul.f32 %v5056, %v5068
    %v5071 = vmul.f32 %v5057, %v5069
    %v5073 = vlaneseq
    %v5074 = vshrl.u32 %v5073, 7
    %v5075 = vsub.s32 0, %v5074
    %v5076 = vrot.slane %v5047, %v5075
    %v5078 = vmul.f32 %v5070, %v5076
    %v5079 = vmul.f32 %v5071, %v5076
    %v5081 = vlaneseq
    %v5082 = vshrl.u32 %v5081, 7
    %v5083 = vsub.s32 0, %v5082
    %v5084 = vrot.slane %v5049, %v5083
    %v5086 = vadd.f32 %v5078, %v5084
    %v5087 = vadd.f32 %v5079, %v5084
    %v5088 = vpack.c.bf16 %v5087, %v5086
    %s5089 = scalar_lea.vmem [#allocation6], 768
    %v5090 = vld [vmem:[%s5089] sm:$0xff]
    %v5091 = vld [vmem:[%s5089 + $0x8] sm:$0xff]
    %v5092 = vld [vmem:[%s5089 + $0x10] sm:$0xff]
    %v5093 = vld [vmem:[%s5089 + $0x18] sm:$0xff]
    %v5094 = vld [vmem:[%s5089 + $0x20] sm:$0xff]
    %v5095 = vld [vmem:[%s5089 + $0x28] sm:$0xff]
    %v5096 = vld [vmem:[%s5089 + $0x30] sm:$0xff]
    %v5097 = vld [vmem:[%s5089 + $0x38] sm:$0xff]
    %v5098 = vld [vmem:[%s5089 + $0x40] sm:$0xff]
    %v5099 = vld [vmem:[%s5089 + $0x48] sm:$0xff]
    %v5100 = vld [vmem:[%s5089 + $0x50] sm:$0xff]
    %v5101 = vld [vmem:[%s5089 + $0x58] sm:$0xff]
    %v5102 = vld [vmem:[%s5089 + $0x60] sm:$0xff]
    %v5103 = vld [vmem:[%s5089 + $0x68] sm:$0xff]
    %v5104 = vld [vmem:[%s5089 + $0x70] sm:$0xff]
    %v5105 = vld [vmem:[%s5089 + $0x78] sm:$0xff]
    %v5106 = vld [vmem:[%s5089 + $0x80] sm:$0xff]
    %v5107 = vld [vmem:[%s5089 + $0x88] sm:$0xff]
    %v5108 = vld [vmem:[%s5089 + $0x90] sm:$0xff]
    %v5109 = vld [vmem:[%s5089 + $0x98] sm:$0xff]
    %v5110 = vld [vmem:[%s5089 + $0xa0] sm:$0xff]
    %v5111 = vld [vmem:[%s5089 + $0xa8] sm:$0xff]
    %v5112 = vld [vmem:[%s5089 + $0xb0] sm:$0xff]
    %v5113 = vld [vmem:[%s5089 + $0xb8] sm:$0xff]
    %v5114 = vld [vmem:[%s5089 + $0xc0] sm:$0xff]
    %v5115 = vld [vmem:[%s5089 + $0xc8] sm:$0xff]
    %v5116 = vld [vmem:[%s5089 + $0xd0] sm:$0xff]
    %v5117 = vld [vmem:[%s5089 + $0xd8] sm:$0xff]
    %v5118 = vld [vmem:[%s5089 + $0xe0] sm:$0xff]
    %v5119 = vld [vmem:[%s5089 + $0xe8] sm:$0xff]
    %v5120 = vld [vmem:[%s5089 + $0xf0] sm:$0xff]
    %v5121 = vld [vmem:[%s5089 + $0xf8] sm:$0xff]
    %s5122 = scalar_lea.vmem %s9, 12
    %v5123 = vld [vmem:[%s5122] sm:$0xf]
    %v5125 = vlaneseq
    %v5126 = vshrl.u32 %v5125, 7
    %v5127 = vsub.s32 0, %v5126
    %v5128 = vrot.slane %v5123, %v5127
    %v5129 = vlaneseq
    %v5130 = vshrl.u32 %v5129, 7
    %v5131 = vsub.s32 1, %v5130
    %v5132 = vrot.slane %v5123, %v5131
    %v5133 = vlaneseq
    %v5134 = vshrl.u32 %v5133, 7
    %v5135 = vsub.s32 2, %v5134
    %v5136 = vrot.slane %v5123, %v5135
    %v5137 = vlaneseq
    %v5138 = vshrl.u32 %v5137, 7
    %v5139 = vsub.s32 3, %v5138
    %v5140 = vrot.slane %v5123, %v5139
    %v5177 = vunpack.c.l.b16 %v5090
    %v5178 = vunpack.c.h.b16 %v5090
    %v5179 = vunpack.c.l.b16 %v5091
    %v5180 = vunpack.c.h.b16 %v5091
    %v5181 = vunpack.c.l.b16 %v5092
    %v5182 = vunpack.c.h.b16 %v5092
    %v5183 = vunpack.c.l.b16 %v5093
    %v5184 = vunpack.c.h.b16 %v5093
    %v5185 = vunpack.c.l.b16 %v5094
    %v5186 = vunpack.c.h.b16 %v5094
    %v5187 = vunpack.c.l.b16 %v5095
    %v5188 = vunpack.c.h.b16 %v5095
    %v5189 = vunpack.c.l.b16 %v5096
    %v5190 = vunpack.c.h.b16 %v5096
    %v5191 = vunpack.c.l.b16 %v5097
    %v5192 = vunpack.c.h.b16 %v5097
    %v5193 = vunpack.c.l.b16 %v5098
    %v5194 = vunpack.c.h.b16 %v5098
    %v5195 = vunpack.c.l.b16 %v5099
    %v5196 = vunpack.c.h.b16 %v5099
    %v5197 = vunpack.c.l.b16 %v5100
    %v5198 = vunpack.c.h.b16 %v5100
    %v5199 = vunpack.c.l.b16 %v5101
    %v5200 = vunpack.c.h.b16 %v5101
    %v5201 = vunpack.c.l.b16 %v5102
    %v5202 = vunpack.c.h.b16 %v5102
    %v5203 = vunpack.c.l.b16 %v5103
    %v5204 = vunpack.c.h.b16 %v5103
    %v5205 = vunpack.c.l.b16 %v5104
    %v5206 = vunpack.c.h.b16 %v5104
    %v5207 = vunpack.c.l.b16 %v5105
    %v5208 = vunpack.c.h.b16 %v5105
    %v5209 = vunpack.c.l.b16 %v5106
    %v5210 = vunpack.c.h.b16 %v5106
    %v5211 = vunpack.c.l.b16 %v5107
    %v5212 = vunpack.c.h.b16 %v5107
    %v5213 = vunpack.c.l.b16 %v5108
    %v5214 = vunpack.c.h.b16 %v5108
    %v5215 = vunpack.c.l.b16 %v5109
    %v5216 = vunpack.c.h.b16 %v5109
    %v5217 = vunpack.c.l.b16 %v5110
    %v5218 = vunpack.c.h.b16 %v5110
    %v5219 = vunpack.c.l.b16 %v5111
    %v5220 = vunpack.c.h.b16 %v5111
    %v5221 = vunpack.c.l.b16 %v5112
    %v5222 = vunpack.c.h.b16 %v5112
    %v5223 = vunpack.c.l.b16 %v5113
    %v5224 = vunpack.c.h.b16 %v5113
    %v5225 = vunpack.c.l.b16 %v5114
    %v5226 = vunpack.c.h.b16 %v5114
    %v5227 = vunpack.c.l.b16 %v5115
    %v5228 = vunpack.c.h.b16 %v5115
    %v5229 = vunpack.c.l.b16 %v5116
    %v5230 = vunpack.c.h.b16 %v5116
    %v5231 = vunpack.c.l.b16 %v5117
    %v5232 = vunpack.c.h.b16 %v5117
    %v5233 = vunpack.c.l.b16 %v5118
    %v5234 = vunpack.c.h.b16 %v5118
    %v5235 = vunpack.c.l.b16 %v5119
    %v5236 = vunpack.c.h.b16 %v5119
    %v5237 = vunpack.c.l.b16 %v5120
    %v5238 = vunpack.c.h.b16 %v5120
    %v5239 = vunpack.c.l.b16 %v5121
    %v5240 = vunpack.c.h.b16 %v5121
    %v5241 = vpack.c.b16 %v5181, %v5177
    %v5242 = vpack.c.b16 %v5182, %v5178
    %v5243 = vpack.c.b16 %v5183, %v5179
    %v5244 = vpack.c.b16 %v5184, %v5180
    %v5245 = vpack.c.b16 %v5189, %v5185
    %v5246 = vpack.c.b16 %v5190, %v5186
    %v5247 = vpack.c.b16 %v5191, %v5187
    %v5248 = vpack.c.b16 %v5192, %v5188
    %v5249 = vpack.c.b16 %v5197, %v5193
    %v5250 = vpack.c.b16 %v5198, %v5194
    %v5251 = vpack.c.b16 %v5199, %v5195
    %v5252 = vpack.c.b16 %v5200, %v5196
    %v5253 = vpack.c.b16 %v5205, %v5201
    %v5254 = vpack.c.b16 %v5206, %v5202
    %v5255 = vpack.c.b16 %v5207, %v5203
    %v5256 = vpack.c.b16 %v5208, %v5204
    %v5257 = vpack.c.b16 %v5213, %v5209
    %v5258 = vpack.c.b16 %v5214, %v5210
    %v5259 = vpack.c.b16 %v5215, %v5211
    %v5260 = vpack.c.b16 %v5216, %v5212
    %v5261 = vpack.c.b16 %v5221, %v5217
    %v5262 = vpack.c.b16 %v5222, %v5218
    %v5263 = vpack.c.b16 %v5223, %v5219
    %v5264 = vpack.c.b16 %v5224, %v5220
    %v5265 = vpack.c.b16 %v5229, %v5225
    %v5266 = vpack.c.b16 %v5230, %v5226
    %v5267 = vpack.c.b16 %v5231, %v5227
    %v5268 = vpack.c.b16 %v5232, %v5228
    %v5269 = vpack.c.b16 %v5237, %v5233
    %v5270 = vpack.c.b16 %v5238, %v5234
    %v5271 = vpack.c.b16 %v5239, %v5235
    %v5272 = vpack.c.b16 %v5240, %v5236
    %5305 = vmatprep.subr.bf16.mxu0 %v5270
    %5306 = vmatpush1.bf16.msra.mxu0 %v5269
    %5307 = vmatprep.subr.bf16.mxu0 %v5266
    %5308 = vmatpush1.bf16.msra.mxu0 %v5265
    %5309 = vmatprep.subr.bf16.mxu0 %v5262
    %5310 = vmatpush1.bf16.msra.mxu0 %v5261
    %5311 = vmatprep.subr.bf16.mxu0 %v5258
    %5312 = vmatpush1.bf16.msra.mxu0 %v5257
    %5313 = vmatprep.subr.bf16.mxu0 %v5254
    %5314 = vmatpush1.bf16.msra.mxu0 %v5253
    %5315 = vmatprep.subr.bf16.mxu0 %v5250
    %5316 = vmatpush1.bf16.msra.mxu0 %v5249
    %5317 = vmatprep.subr.bf16.mxu0 %v5246
    %5318 = vmatpush1.bf16.msra.mxu0 %v5245
    %5319 = vmatprep.subr.bf16.mxu0 %v5242
    %5320 = vmatpush1.bf16.msra.mxu0 %v5241
    %5321 = vmatprep.subr.bf16.mxu0 0
    %5322 = vmatpush2.bf16.msra.mxu0 0
    %5323 = vmatprep.subr.bf16.mxu0 0
    %5324 = vmatpush2.bf16.msra.mxu0 0
    %5325 = vmatprep.subr.bf16.mxu0 0
    %5326 = vmatpush2.bf16.msra.mxu0 0
    %5327 = vmatprep.subr.bf16.mxu0 0
    %5328 = vmatpush2.bf16.msra.mxu0 0
    %5329 = vmatprep.subr.bf16.mxu0 0
    %5330 = vmatpush2.bf16.msra.mxu0 0
    %5331 = vmatprep.subr.bf16.mxu0 0
    %5332 = vmatpush2.bf16.msra.mxu0 0
    %5333 = vmatprep.subr.bf16.mxu0 0
    %5334 = vmatpush2.bf16.msra.mxu0 0
    %5335 = vmatprep.subr.bf16.mxu0 0
    %5336 = vmatpush2.bf16.msra.mxu0 0
    %5337 = vmatprep.mubr.bf16.mxu0 0
    %5338 = vmatmul.mubr.bf16.gmra.mxu0 %v5088
    %v5339 = vpop.f32.mrf.mxu0
    %v5340 = vadd.f32 %v5128, %v5339
    %v5341 = vpop.f32.mrf.mxu0
    %v5342 = vadd.f32 %v5132, %v5341
    %v5343 = vpop.f32.mrf.mxu0
    %v5344 = vadd.f32 %v5128, %v5343
    %v5345 = vpop.f32.mrf.mxu0
    %v5346 = vadd.f32 %v5132, %v5345
    %5347 = vdwg.mxu0
    %5348 = vmatprep.subr.bf16.mxu0 %v5272
    %5349 = vmatpush1.bf16.msra.mxu0 %v5271
    %5350 = vmatprep.subr.bf16.mxu0 %v5268
    %5351 = vmatpush1.bf16.msra.mxu0 %v5267
    %5352 = vmatprep.subr.bf16.mxu0 %v5264
    %5353 = vmatpush1.bf16.msra.mxu0 %v5263
    %5354 = vmatprep.subr.bf16.mxu0 %v5260
    %5355 = vmatpush1.bf16.msra.mxu0 %v5259
    %5356 = vmatprep.subr.bf16.mxu0 %v5256
    %5357 = vmatpush1.bf16.msra.mxu0 %v5255
    %5358 = vmatprep.subr.bf16.mxu0 %v5252
    %5359 = vmatpush1.bf16.msra.mxu0 %v5251
    %5360 = vmatprep.subr.bf16.mxu0 %v5248
    %5361 = vmatpush1.bf16.msra.mxu0 %v5247
    %5362 = vmatprep.subr.bf16.mxu0 %v5244
    %5363 = vmatpush1.bf16.msra.mxu0 %v5243
    %5364 = vmatprep.subr.bf16.mxu0 0
    %5365 = vmatpush2.bf16.msra.mxu0 0
    %5366 = vmatprep.subr.bf16.mxu0 0
    %5367 = vmatpush2.bf16.msra.mxu0 0
    %5368 = vmatprep.subr.bf16.mxu0 0
    %5369 = vmatpush2.bf16.msra.mxu0 0
    %5370 = vmatprep.subr.bf16.mxu0 0
    %5371 = vmatpush2.bf16.msra.mxu0 0
    %5372 = vmatprep.subr.bf16.mxu0 0
    %5373 = vmatpush2.bf16.msra.mxu0 0
    %5374 = vmatprep.subr.bf16.mxu0 0
    %5375 = vmatpush2.bf16.msra.mxu0 0
    %5376 = vmatprep.subr.bf16.mxu0 0
    %5377 = vmatpush2.bf16.msra.mxu0 0
    %5378 = vmatprep.subr.bf16.mxu0 0
    %5379 = vmatpush2.bf16.msra.mxu0 0
    %5380 = vmatprep.mubr.bf16.mxu0 0
    %5381 = vmatmul.mubr.bf16.gmra.mxu0 %v5088
    %v5382 = vpop.f32.mrf.mxu0
    %v5383 = vadd.f32 %v5136, %v5382
    %v5384 = vpop.f32.mrf.mxu0
    %v5385 = vadd.f32 %v5140, %v5384
    %v5386 = vpop.f32.mrf.mxu0
    %v5387 = vadd.f32 %v5136, %v5386
    %v5388 = vpop.f32.mrf.mxu0
    %v5389 = vadd.f32 %v5140, %v5388
    %5390 = vdwg.mxu0
    %v5391 = vmul.f32 %v5340, 0.5
    %v5392 = vmul.f32 %v5342, 0.5
    %v5393 = vmul.f32 %v5383, 0.5
    %v5394 = vmul.f32 %v5385, 0.5
    %v5395 = vmul.f32 %v5344, 0.5
    %v5396 = vmul.f32 %v5346, 0.5
    %v5397 = vmul.f32 %v5387, 0.5
    %v5398 = vmul.f32 %v5389, 0.5
    %v5399 = vmul.f32 %v5340, 0.044715
    %v5400 = vmul.f32 %v5342, 0.044715
    %v5401 = vmul.f32 %v5383, 0.044715
    %v5402 = vmul.f32 %v5385, 0.044715
    %v5403 = vmul.f32 %v5344, 0.044715
    %v5404 = vmul.f32 %v5346, 0.044715
    %v5405 = vmul.f32 %v5387, 0.044715
    %v5406 = vmul.f32 %v5389, 0.044715
    %v5407 = vmul.f32 %v5399, %v5340
    %v5408 = vmul.f32 %v5400, %v5342
    %v5409 = vmul.f32 %v5401, %v5383
    %v5410 = vmul.f32 %v5402, %v5385
    %v5411 = vmul.f32 %v5403, %v5344
    %v5412 = vmul.f32 %v5404, %v5346
    %v5413 = vmul.f32 %v5405, %v5387
    %v5414 = vmul.f32 %v5406, %v5389
    %v5415 = vmul.f32 %v5407, %v5340
    %v5416 = vmul.f32 %v5408, %v5342
    %v5417 = vmul.f32 %v5409, %v5383
    %v5418 = vmul.f32 %v5410, %v5385
    %v5419 = vmul.f32 %v5411, %v5344
    %v5420 = vmul.f32 %v5412, %v5346
    %v5421 = vmul.f32 %v5413, %v5387
    %v5422 = vmul.f32 %v5414, %v5389
    %v5423 = vadd.f32 %v5340, %v5415
    %v5424 = vadd.f32 %v5342, %v5416
    %v5425 = vadd.f32 %v5383, %v5417
    %v5426 = vadd.f32 %v5385, %v5418
    %v5427 = vadd.f32 %v5344, %v5419
    %v5428 = vadd.f32 %v5346, %v5420
    %v5429 = vadd.f32 %v5387, %v5421
    %v5430 = vadd.f32 %v5389, %v5422
    %v5431 = vmul.f32 %v5423, 0.7978846
    %v5432 = vmul.f32 %v5424, 0.7978846
    %v5433 = vmul.f32 %v5425, 0.7978846
    %v5434 = vmul.f32 %v5426, 0.7978846
    %v5435 = vmul.f32 %v5427, 0.7978846
    %v5436 = vmul.f32 %v5428, 0.7978846
    %v5437 = vmul.f32 %v5429, 0.7978846
    %v5438 = vmul.f32 %v5430, 0.7978846
    %v5439 = vtanh.pop %v5431
    %v5440 = vtanh.pop %v5432
    %v5441 = vtanh.pop %v5433
    %v5442 = vtanh.pop %v5434
    %v5443 = vtanh.pop %v5435
    %v5444 = vtanh.pop %v5436
    %v5445 = vtanh.pop %v5437
    %v5446 = vtanh.pop %v5438
    %v5447 = vadd.f32 %v5439, 1.0
    %v5448 = vadd.f32 %v5440, 1.0
    %v5449 = vadd.f32 %v5441, 1.0
    %v5450 = vadd.f32 %v5442, 1.0
    %v5451 = vadd.f32 %v5443, 1.0
    %v5452 = vadd.f32 %v5444, 1.0
    %v5453 = vadd.f32 %v5445, 1.0
    %v5454 = vadd.f32 %v5446, 1.0
    %v5455 = vmul.f32 %v5391, %v5447
    %v5456 = vmul.f32 %v5392, %v5448
    %v5457 = vmul.f32 %v5393, %v5449
    %v5458 = vmul.f32 %v5394, %v5450
    %v5459 = vmul.f32 %v5395, %v5451
    %v5460 = vmul.f32 %v5396, %v5452
    %v5461 = vmul.f32 %v5397, %v5453
    %v5462 = vmul.f32 %v5398, %v5454
    %v5463 = vpack.c.bf16 %v5459, %v5455
    %v5464 = vpack.c.bf16 %v5460, %v5456
    %v5465 = vpack.c.bf16 %v5461, %v5457
    %v5466 = vpack.c.bf16 %v5462, %v5458
    %s5467 = scalar_lea.vmem [#allocation7], 768
    %v5468 = vld [vmem:[%s5467] sm:$0xf]
    %v5469 = vld [vmem:[%s5467 + $0x4] sm:$0xf]
    %v5470 = vld [vmem:[%s5467 + $0x8] sm:$0xf]
    %v5471 = vld [vmem:[%s5467 + $0xc] sm:$0xf]
    %v5472 = vld [vmem:[%s5467 + $0x10] sm:$0xf]
    %v5473 = vld [vmem:[%s5467 + $0x14] sm:$0xf]
    %v5474 = vld [vmem:[%s5467 + $0x18] sm:$0xf]
    %v5475 = vld [vmem:[%s5467 + $0x1c] sm:$0xf]
    %v5476 = vld [vmem:[%s5467 + $0x20] sm:$0xf]
    %v5477 = vld [vmem:[%s5467 + $0x24] sm:$0xf]
    %v5478 = vld [vmem:[%s5467 + $0x28] sm:$0xf]
    %v5479 = vld [vmem:[%s5467 + $0x2c] sm:$0xf]
    %v5480 = vld [vmem:[%s5467 + $0x30] sm:$0xf]
    %v5481 = vld [vmem:[%s5467 + $0x34] sm:$0xf]
    %v5482 = vld [vmem:[%s5467 + $0x38] sm:$0xf]
    %v5483 = vld [vmem:[%s5467 + $0x3c] sm:$0xf]
    %v5484 = vld [vmem:[%s5467 + $0x40] sm:$0xf]
    %v5485 = vld [vmem:[%s5467 + $0x44] sm:$0xf]
    %v5486 = vld [vmem:[%s5467 + $0x48] sm:$0xf]
    %v5487 = vld [vmem:[%s5467 + $0x4c] sm:$0xf]
    %v5488 = vld [vmem:[%s5467 + $0x50] sm:$0xf]
    %v5489 = vld [vmem:[%s5467 + $0x54] sm:$0xf]
    %v5490 = vld [vmem:[%s5467 + $0x58] sm:$0xf]
    %v5491 = vld [vmem:[%s5467 + $0x5c] sm:$0xf]
    %v5492 = vld [vmem:[%s5467 + $0x60] sm:$0xf]
    %v5493 = vld [vmem:[%s5467 + $0x64] sm:$0xf]
    %v5494 = vld [vmem:[%s5467 + $0x68] sm:$0xf]
    %v5495 = vld [vmem:[%s5467 + $0x6c] sm:$0xf]
    %v5496 = vld [vmem:[%s5467 + $0x70] sm:$0xf]
    %v5497 = vld [vmem:[%s5467 + $0x74] sm:$0xf]
    %v5498 = vld [vmem:[%s5467 + $0x78] sm:$0xf]
    %v5499 = vld [vmem:[%s5467 + $0x7c] sm:$0xf]
    %v5500 = vld [vmem:[%s5467 + $0x80] sm:$0xf]
    %v5501 = vld [vmem:[%s5467 + $0x84] sm:$0xf]
    %v5502 = vld [vmem:[%s5467 + $0x88] sm:$0xf]
    %v5503 = vld [vmem:[%s5467 + $0x8c] sm:$0xf]
    %v5504 = vld [vmem:[%s5467 + $0x90] sm:$0xf]
    %v5505 = vld [vmem:[%s5467 + $0x94] sm:$0xf]
    %v5506 = vld [vmem:[%s5467 + $0x98] sm:$0xf]
    %v5507 = vld [vmem:[%s5467 + $0x9c] sm:$0xf]
    %v5508 = vld [vmem:[%s5467 + $0xa0] sm:$0xf]
    %v5509 = vld [vmem:[%s5467 + $0xa4] sm:$0xf]
    %v5510 = vld [vmem:[%s5467 + $0xa8] sm:$0xf]
    %v5511 = vld [vmem:[%s5467 + $0xac] sm:$0xf]
    %v5512 = vld [vmem:[%s5467 + $0xb0] sm:$0xf]
    %v5513 = vld [vmem:[%s5467 + $0xb4] sm:$0xf]
    %v5514 = vld [vmem:[%s5467 + $0xb8] sm:$0xf]
    %v5515 = vld [vmem:[%s5467 + $0xbc] sm:$0xf]
    %v5516 = vld [vmem:[%s5467 + $0xc0] sm:$0xf]
    %v5517 = vld [vmem:[%s5467 + $0xc4] sm:$0xf]
    %v5518 = vld [vmem:[%s5467 + $0xc8] sm:$0xf]
    %v5519 = vld [vmem:[%s5467 + $0xcc] sm:$0xf]
    %v5520 = vld [vmem:[%s5467 + $0xd0] sm:$0xf]
    %v5521 = vld [vmem:[%s5467 + $0xd4] sm:$0xf]
    %v5522 = vld [vmem:[%s5467 + $0xd8] sm:$0xf]
    %v5523 = vld [vmem:[%s5467 + $0xdc] sm:$0xf]
    %v5524 = vld [vmem:[%s5467 + $0xe0] sm:$0xf]
    %v5525 = vld [vmem:[%s5467 + $0xe4] sm:$0xf]
    %v5526 = vld [vmem:[%s5467 + $0xe8] sm:$0xf]
    %v5527 = vld [vmem:[%s5467 + $0xec] sm:$0xf]
    %v5528 = vld [vmem:[%s5467 + $0xf0] sm:$0xf]
    %v5529 = vld [vmem:[%s5467 + $0xf4] sm:$0xf]
    %v5530 = vld [vmem:[%s5467 + $0xf8] sm:$0xf]
    %v5531 = vld [vmem:[%s5467 + $0xfc] sm:$0xf]
    %s5532 = scalar_lea.vmem %s11, 3
    %v5533 = vld [vmem:[%s5532] sm:$0x1]
    %v5535 = vlaneseq
    %v5536 = vshrl.u32 %v5535, 7
    %v5537 = vsub.s32 0, %v5536
    %v5538 = vrot.slane %v5533, %v5537
    %v5604 = vunpack.c.l.b16 %v5468
    %v5605 = vunpack.c.l.b16 %v5469
    %v5606 = vunpack.c.l.b16 %v5470
    %v5607 = vunpack.c.l.b16 %v5471
    %v5608 = vunpack.c.l.b16 %v5472
    %v5609 = vunpack.c.l.b16 %v5473
    %v5610 = vunpack.c.l.b16 %v5474
    %v5611 = vunpack.c.l.b16 %v5475
    %v5612 = vunpack.c.l.b16 %v5476
    %v5613 = vunpack.c.l.b16 %v5477
    %v5614 = vunpack.c.l.b16 %v5478
    %v5615 = vunpack.c.l.b16 %v5479
    %v5616 = vunpack.c.l.b16 %v5480
    %v5617 = vunpack.c.l.b16 %v5481
    %v5618 = vunpack.c.l.b16 %v5482
    %v5619 = vunpack.c.l.b16 %v5483
    %v5620 = vunpack.c.l.b16 %v5484
    %v5621 = vunpack.c.l.b16 %v5485
    %v5622 = vunpack.c.l.b16 %v5486
    %v5623 = vunpack.c.l.b16 %v5487
    %v5624 = vunpack.c.l.b16 %v5488
    %v5625 = vunpack.c.l.b16 %v5489
    %v5626 = vunpack.c.l.b16 %v5490
    %v5627 = vunpack.c.l.b16 %v5491
    %v5628 = vunpack.c.l.b16 %v5492
    %v5629 = vunpack.c.l.b16 %v5493
    %v5630 = vunpack.c.l.b16 %v5494
    %v5631 = vunpack.c.l.b16 %v5495
    %v5632 = vunpack.c.l.b16 %v5496
    %v5633 = vunpack.c.l.b16 %v5497
    %v5634 = vunpack.c.l.b16 %v5498
    %v5635 = vunpack.c.l.b16 %v5499
    %v5636 = vunpack.c.l.b16 %v5500
    %v5637 = vunpack.c.l.b16 %v5501
    %v5638 = vunpack.c.l.b16 %v5502
    %v5639 = vunpack.c.l.b16 %v5503
    %v5640 = vunpack.c.l.b16 %v5504
    %v5641 = vunpack.c.l.b16 %v5505
    %v5642 = vunpack.c.l.b16 %v5506
    %v5643 = vunpack.c.l.b16 %v5507
    %v5644 = vunpack.c.l.b16 %v5508
    %v5645 = vunpack.c.l.b16 %v5509
    %v5646 = vunpack.c.l.b16 %v5510
    %v5647 = vunpack.c.l.b16 %v5511
    %v5648 = vunpack.c.l.b16 %v5512
    %v5649 = vunpack.c.l.b16 %v5513
    %v5650 = vunpack.c.l.b16 %v5514
    %v5651 = vunpack.c.l.b16 %v5515
    %v5652 = vunpack.c.l.b16 %v5516
    %v5653 = vunpack.c.l.b16 %v5517
    %v5654 = vunpack.c.l.b16 %v5518
    %v5655 = vunpack.c.l.b16 %v5519
    %v5656 = vunpack.c.l.b16 %v5520
    %v5657 = vunpack.c.l.b16 %v5521
    %v5658 = vunpack.c.l.b16 %v5522
    %v5659 = vunpack.c.l.b16 %v5523
    %v5660 = vunpack.c.l.b16 %v5524
    %v5661 = vunpack.c.l.b16 %v5525
    %v5662 = vunpack.c.l.b16 %v5526
    %v5663 = vunpack.c.l.b16 %v5527
    %v5664 = vunpack.c.l.b16 %v5528
    %v5665 = vunpack.c.l.b16 %v5529
    %v5666 = vunpack.c.l.b16 %v5530
    %v5667 = vunpack.c.l.b16 %v5531
    %v5668 = vpack.c.b16 %v5605, %v5604
    %v5669 = vpack.c.b16 %v5607, %v5606
    %v5670 = vpack.c.b16 %v5609, %v5608
    %v5671 = vpack.c.b16 %v5611, %v5610
    %v5672 = vpack.c.b16 %v5613, %v5612
    %v5673 = vpack.c.b16 %v5615, %v5614
    %v5674 = vpack.c.b16 %v5617, %v5616
    %v5675 = vpack.c.b16 %v5619, %v5618
    %v5676 = vpack.c.b16 %v5621, %v5620
    %v5677 = vpack.c.b16 %v5623, %v5622
    %v5678 = vpack.c.b16 %v5625, %v5624
    %v5679 = vpack.c.b16 %v5627, %v5626
    %v5680 = vpack.c.b16 %v5629, %v5628
    %v5681 = vpack.c.b16 %v5631, %v5630
    %v5682 = vpack.c.b16 %v5633, %v5632
    %v5683 = vpack.c.b16 %v5635, %v5634
    %v5684 = vpack.c.b16 %v5637, %v5636
    %v5685 = vpack.c.b16 %v5639, %v5638
    %v5686 = vpack.c.b16 %v5641, %v5640
    %v5687 = vpack.c.b16 %v5643, %v5642
    %v5688 = vpack.c.b16 %v5645, %v5644
    %v5689 = vpack.c.b16 %v5647, %v5646
    %v5690 = vpack.c.b16 %v5649, %v5648
    %v5691 = vpack.c.b16 %v5651, %v5650
    %v5692 = vpack.c.b16 %v5653, %v5652
    %v5693 = vpack.c.b16 %v5655, %v5654
    %v5694 = vpack.c.b16 %v5657, %v5656
    %v5695 = vpack.c.b16 %v5659, %v5658
    %v5696 = vpack.c.b16 %v5661, %v5660
    %v5697 = vpack.c.b16 %v5663, %v5662
    %v5698 = vpack.c.b16 %v5665, %v5664
    %v5699 = vpack.c.b16 %v5667, %v5666
    %5732 = vmatprep.subr.bf16.mxu0 0
    %5733 = vmatpush1.bf16.msra.mxu0 %v5675
    %5734 = vmatprep.subr.bf16.mxu0 0
    %5735 = vmatpush1.bf16.msra.mxu0 %v5674
    %5736 = vmatprep.subr.bf16.mxu0 0
    %5737 = vmatpush1.bf16.msra.mxu0 %v5673
    %5738 = vmatprep.subr.bf16.mxu0 0
    %5739 = vmatpush1.bf16.msra.mxu0 %v5672
    %5740 = vmatprep.subr.bf16.mxu0 0
    %5741 = vmatpush1.bf16.msra.mxu0 %v5671
    %5742 = vmatprep.subr.bf16.mxu0 0
    %5743 = vmatpush1.bf16.msra.mxu0 %v5670
    %5744 = vmatprep.subr.bf16.mxu0 0
    %5745 = vmatpush1.bf16.msra.mxu0 %v5669
    %5746 = vmatprep.subr.bf16.mxu0 0
    %5747 = vmatpush1.bf16.msra.mxu0 %v5668
    %5748 = vmatprep.subr.bf16.mxu0 0
    %5749 = vmatpush2.bf16.msra.mxu0 %v5683
    %5750 = vmatprep.subr.bf16.mxu0 0
    %5751 = vmatpush2.bf16.msra.mxu0 %v5682
    %5752 = vmatprep.subr.bf16.mxu0 0
    %5753 = vmatpush2.bf16.msra.mxu0 %v5681
    %5754 = vmatprep.subr.bf16.mxu0 0
    %5755 = vmatpush2.bf16.msra.mxu0 %v5680
    %5756 = vmatprep.subr.bf16.mxu0 0
    %5757 = vmatpush2.bf16.msra.mxu0 %v5679
    %5758 = vmatprep.subr.bf16.mxu0 0
    %5759 = vmatpush2.bf16.msra.mxu0 %v5678
    %5760 = vmatprep.subr.bf16.mxu0 0
    %5761 = vmatpush2.bf16.msra.mxu0 %v5677
    %5762 = vmatprep.subr.bf16.mxu0 0
    %5763 = vmatpush2.bf16.msra.mxu0 %v5676
    %5764 = vmatprep.mubr.bf16.mxu0 %v5464
    %5765 = vmatmul.mubr.bf16.gmra.mxu0 %v5463
    %v5766 = vpop.f32.mrf.mxu0
    %v5767 = vadd.f32 %v5538, %v5766
    %v5768 = vpop.f32.mrf.mxu0
    %v5769 = vpop.f32.mrf.mxu0
    %v5770 = vadd.f32 %v5538, %v5769
    %v5771 = vpop.f32.mrf.mxu0
    %5772 = vdwg.mxu0
    %5773 = vmatprep.subr.bf16.mxu0 0
    %5774 = vmatpush1.bf16.msra.mxu0 %v5691
    %5775 = vmatprep.subr.bf16.mxu0 0
    %5776 = vmatpush1.bf16.msra.mxu0 %v5690
    %5777 = vmatprep.subr.bf16.mxu0 0
    %5778 = vmatpush1.bf16.msra.mxu0 %v5689
    %5779 = vmatprep.subr.bf16.mxu0 0
    %5780 = vmatpush1.bf16.msra.mxu0 %v5688
    %5781 = vmatprep.subr.bf16.mxu0 0
    %5782 = vmatpush1.bf16.msra.mxu0 %v5687
    %5783 = vmatprep.subr.bf16.mxu0 0
    %5784 = vmatpush1.bf16.msra.mxu0 %v5686
    %5785 = vmatprep.subr.bf16.mxu0 0
    %5786 = vmatpush1.bf16.msra.mxu0 %v5685
    %5787 = vmatprep.subr.bf16.mxu0 0
    %5788 = vmatpush1.bf16.msra.mxu0 %v5684
    %5789 = vmatprep.subr.bf16.mxu0 0
    %5790 = vmatpush2.bf16.msra.mxu0 %v5699
    %5791 = vmatprep.subr.bf16.mxu0 0
    %5792 = vmatpush2.bf16.msra.mxu0 %v5698
    %5793 = vmatprep.subr.bf16.mxu0 0
    %5794 = vmatpush2.bf16.msra.mxu0 %v5697
    %5795 = vmatprep.subr.bf16.mxu0 0
    %5796 = vmatpush2.bf16.msra.mxu0 %v5696
    %5797 = vmatprep.subr.bf16.mxu0 0
    %5798 = vmatpush2.bf16.msra.mxu0 %v5695
    %5799 = vmatprep.subr.bf16.mxu0 0
    %5800 = vmatpush2.bf16.msra.mxu0 %v5694
    %5801 = vmatprep.subr.bf16.mxu0 0
    %5802 = vmatpush2.bf16.msra.mxu0 %v5693
    %5803 = vmatprep.subr.bf16.mxu0 0
    %5804 = vmatpush2.bf16.msra.mxu0 %v5692
    %5805 = vmatprep.mubr.bf16.mxu0 %v5466
    %5806 = vmatmul.mubr.bf16.gmra.mxu0 %v5465
    %v5807 = vpop.f32.mrf.mxu0
    %v5808 = vadd.f32 %v5767, %v5807
    %v5809 = vpop.f32.mrf.mxu0
    %v5810 = vpop.f32.mrf.mxu0
    %v5811 = vadd.f32 %v5770, %v5810
    %v5812 = vpop.f32.mrf.mxu0
    %5813 = vdwg.mxu0
    %v5814 = vadd.f32 %v5808, %v5086
    %v5815 = vadd.f32 %v5811, %v5087
    %s5816 = scalar_lea.vmem [#allocation9], 3
    %v5817 = vld [vmem:[%s5816] sm:$0x1]
    %s5818 = scalar_lea.vmem [#allocation10], 3
    %v5819 = vld [vmem:[%s5818] sm:$0x1]
    %5820 = vadd.xlane.f32.xlu0 %v5814
    %v5821 = vpop.xlane.xlu0 %5820
    %5822 = vadd.xlane.f32.xlu0 %v5815
    %v5823 = vpop.xlane.xlu0 %5822
    %v5824 = vmul.f32 %v5821, %v799
    %v5825 = vmul.f32 %v5823, %v799
    %v5826 = vsub.f32 %v5814, %v5824
    %v5827 = vsub.f32 %v5815, %v5825
    %v5828 = vmul.f32 %v5826, %v5826
    %v5829 = vmul.f32 %v5827, %v5827
    %5830 = vadd.xlane.f32.xlu0 %v5828
    %v5831 = vpop.xlane.xlu0 %5830
    %5832 = vadd.xlane.f32.xlu0 %v5829
    %v5833 = vpop.xlane.xlu0 %5832
    %v5834 = vmul.f32 %v5831, %v799
    %v5835 = vmul.f32 %v5833, %v799
    %v5836 = vadd.f32 %v5834, 1e-12
    %v5837 = vadd.f32 %v5835, 1e-12
    %v5838 = vrsqrt.pop %v5836
    %v5839 = vrsqrt.pop %v5837
    %v5840 = vmul.f32 %v5826, %v5838
    %v5841 = vmul.f32 %v5827, %v5839
    %v5843 = vlaneseq
    %v5844 = vshrl.u32 %v5843, 7
    %v5845 = vsub.s32 0, %v5844
    %v5846 = vrot.slane %v5817, %v5845
    %v5848 = vmul.f32 %v5840, %v5846
    %v5849 = vmul.f32 %v5841, %v5846
    %v5851 = vlaneseq
    %v5852 = vshrl.u32 %v5851, 7
    %v5853 = vsub.s32 0, %v5852
    %v5854 = vrot.slane %v5819, %v5853
    %v5856 = vadd.f32 %v5848, %v5854
    %v5857 = vadd.f32 %v5849, %v5854
    %v5858 = vpack.c.bf16 %v5857, %v5856
    %v5859 = vld [vmem:[%s14] sm:$0xff]
    %v5860 = vld [vmem:[%s14 + $0x8] sm:$0xff]
    %v5861 = vld [vmem:[%s14 + $0x10] sm:$0xff]
    %v5862 = vld [vmem:[%s14 + $0x18] sm:$0xff]
    %v5863 = vld [vmem:[%s14 + $0x20] sm:$0xff]
    %v5864 = vld [vmem:[%s14 + $0x28] sm:$0xff]
    %v5865 = vld [vmem:[%s14 + $0x30] sm:$0xff]
    %v5866 = vld [vmem:[%s14 + $0x38] sm:$0xff]
    %v5867 = vld [vmem:[%s14 + $0x40] sm:$0xff]
    %v5868 = vld [vmem:[%s14 + $0x48] sm:$0xff]
    %v5869 = vld [vmem:[%s14 + $0x50] sm:$0xff]
    %v5870 = vld [vmem:[%s14 + $0x58] sm:$0xff]
    %v5871 = vld [vmem:[%s14 + $0x60] sm:$0xff]
    %v5872 = vld [vmem:[%s14 + $0x68] sm:$0xff]
    %v5873 = vld [vmem:[%s14 + $0x70] sm:$0xff]
    %v5874 = vld [vmem:[%s14 + $0x78] sm:$0xff]
    %v5875 = vld [vmem:[%s15] sm:$0xff]
    %v5876 = vld [vmem:[%s15 + $0x8] sm:$0xff]
    %v5877 = vld [vmem:[%s15 + $0x10] sm:$0xff]
    %v5878 = vld [vmem:[%s15 + $0x18] sm:$0xff]
    %v5879 = vld [vmem:[%s15 + $0x20] sm:$0xff]
    %v5880 = vld [vmem:[%s15 + $0x28] sm:$0xff]
    %v5881 = vld [vmem:[%s15 + $0x30] sm:$0xff]
    %v5882 = vld [vmem:[%s15 + $0x38] sm:$0xff]
    %v5883 = vld [vmem:[%s15 + $0x40] sm:$0xff]
    %v5884 = vld [vmem:[%s15 + $0x48] sm:$0xff]
    %v5885 = vld [vmem:[%s15 + $0x50] sm:$0xff]
    %v5886 = vld [vmem:[%s15 + $0x58] sm:$0xff]
    %v5887 = vld [vmem:[%s15 + $0x60] sm:$0xff]
    %v5888 = vld [vmem:[%s15 + $0x68] sm:$0xff]
    %v5889 = vld [vmem:[%s15 + $0x70] sm:$0xff]
    %v5890 = vld [vmem:[%s15 + $0x78] sm:$0xff]
    %v5907 = vunpack.c.l.b16 %v5875
    %v5908 = vunpack.c.h.b16 %v5875
    %v5909 = vunpack.c.l.b16 %v5876
    %v5910 = vunpack.c.h.b16 %v5876
    %v5911 = vunpack.c.l.b16 %v5877
    %v5912 = vunpack.c.h.b16 %v5877
    %v5913 = vunpack.c.l.b16 %v5878
    %v5914 = vunpack.c.h.b16 %v5878
    %v5915 = vunpack.c.l.b16 %v5879
    %v5916 = vunpack.c.h.b16 %v5879
    %v5917 = vunpack.c.l.b16 %v5880
    %v5918 = vunpack.c.h.b16 %v5880
    %v5919 = vunpack.c.l.b16 %v5881
    %v5920 = vunpack.c.h.b16 %v5881
    %v5921 = vunpack.c.l.b16 %v5882
    %v5922 = vunpack.c.h.b16 %v5882
    %v5923 = vunpack.c.l.b16 %v5883
    %v5924 = vunpack.c.h.b16 %v5883
    %v5925 = vunpack.c.l.b16 %v5884
    %v5926 = vunpack.c.h.b16 %v5884
    %v5927 = vunpack.c.l.b16 %v5885
    %v5928 = vunpack.c.h.b16 %v5885
    %v5929 = vunpack.c.l.b16 %v5886
    %v5930 = vunpack.c.h.b16 %v5886
    %v5931 = vunpack.c.l.b16 %v5887
    %v5932 = vunpack.c.h.b16 %v5887
    %v5933 = vunpack.c.l.b16 %v5888
    %v5934 = vunpack.c.h.b16 %v5888
    %v5935 = vunpack.c.l.b16 %v5889
    %v5936 = vunpack.c.h.b16 %v5889
    %v5937 = vunpack.c.l.b16 %v5890
    %v5938 = vunpack.c.h.b16 %v5890
    %v5939 = vpack.c.b16 %v5909, %v5907
    %v5940 = vpack.c.b16 %v5910, %v5908
    %v5941 = vpack.c.b16 %v5913, %v5911
    %v5942 = vpack.c.b16 %v5914, %v5912
    %v5943 = vpack.c.b16 %v5917, %v5915
    %v5944 = vpack.c.b16 %v5918, %v5916
    %v5945 = vpack.c.b16 %v5921, %v5919
    %v5946 = vpack.c.b16 %v5922, %v5920
    %v5947 = vpack.c.b16 %v5925, %v5923
    %v5948 = vpack.c.b16 %v5926, %v5924
    %v5949 = vpack.c.b16 %v5929, %v5927
    %v5950 = vpack.c.b16 %v5930, %v5928
    %v5951 = vpack.c.b16 %v5933, %v5931
    %v5952 = vpack.c.b16 %v5934, %v5932
    %v5953 = vpack.c.b16 %v5937, %v5935
    %v5954 = vpack.c.b16 %v5938, %v5936
    %5971 = vmatprep.subr.bf16.mxu0 %v5954
    %5972 = vmatpush1.bf16.msra.mxu0 %v5953
    %5973 = vmatprep.subr.bf16.mxu0 %v5952
    %5974 = vmatpush1.bf16.msra.mxu0 %v5951
    %5975 = vmatprep.subr.bf16.mxu0 %v5950
    %5976 = vmatpush1.bf16.msra.mxu0 %v5949
    %5977 = vmatprep.subr.bf16.mxu0 %v5948
    %5978 = vmatpush1.bf16.msra.mxu0 %v5947
    %5979 = vmatprep.subr.bf16.mxu0 %v5946
    %5980 = vmatpush1.bf16.msra.mxu0 %v5945
    %5981 = vmatprep.subr.bf16.mxu0 %v5944
    %5982 = vmatpush1.bf16.msra.mxu0 %v5943
    %5983 = vmatprep.subr.bf16.mxu0 %v5942
    %5984 = vmatpush1.bf16.msra.mxu0 %v5941
    %5985 = vmatprep.subr.bf16.mxu0 %v5940
    %5986 = vmatpush1.bf16.msra.mxu0 %v5939
    %5987 = vmatprep.subr.bf16.mxu0 0
    %5988 = vmatpush2.bf16.msra.mxu0 0
    %5989 = vmatprep.subr.bf16.mxu0 0
    %5990 = vmatpush2.bf16.msra.mxu0 0
    %5991 = vmatprep.subr.bf16.mxu0 0
    %5992 = vmatpush2.bf16.msra.mxu0 0
    %5993 = vmatprep.subr.bf16.mxu0 0
    %5994 = vmatpush2.bf16.msra.mxu0 0
    %5995 = vmatprep.subr.bf16.mxu0 0
    %5996 = vmatpush2.bf16.msra.mxu0 0
    %5997 = vmatprep.subr.bf16.mxu0 0
    %5998 = vmatpush2.bf16.msra.mxu0 0
    %5999 = vmatprep.subr.bf16.mxu0 0
    %6000 = vmatpush2.bf16.msra.mxu0 0
    %6001 = vmatprep.subr.bf16.mxu0 0
    %6002 = vmatpush2.bf16.msra.mxu0 0
    %6003 = vmatprep.mubr.bf16.mxu0 0
    %6004 = vmatmul.mubr.bf16.gmra.mxu0 %v3018
    %v6005 = vpop.f32.mrf.mxu0
    %v6006 = vadd.f32 0.0, %v6005
    %v6007 = vpop.f32.mrf.mxu0
    %v6008 = vadd.f32 0.0, %v6007
    %v6009 = vpop.f32.mrf.mxu0
    %v6010 = vadd.f32 0.0, %v6009
    %v6011 = vpop.f32.mrf.mxu0
    %v6012 = vadd.f32 0.0, %v6011
    %6013 = vdwg.mxu0
    %v6030 = vunpack.c.l.b16 %v5859
    %v6031 = vunpack.c.h.b16 %v5859
    %v6032 = vunpack.c.l.b16 %v5860
    %v6033 = vunpack.c.h.b16 %v5860
    %v6034 = vunpack.c.l.b16 %v5861
    %v6035 = vunpack.c.h.b16 %v5861
    %v6036 = vunpack.c.l.b16 %v5862
    %v6037 = vunpack.c.h.b16 %v5862
    %v6038 = vunpack.c.l.b16 %v5863
    %v6039 = vunpack.c.h.b16 %v5863
    %v6040 = vunpack.c.l.b16 %v5864
    %v6041 = vunpack.c.h.b16 %v5864
    %v6042 = vunpack.c.l.b16 %v5865
    %v6043 = vunpack.c.h.b16 %v5865
    %v6044 = vunpack.c.l.b16 %v5866
    %v6045 = vunpack.c.h.b16 %v5866
    %v6046 = vunpack.c.l.b16 %v5867
    %v6047 = vunpack.c.h.b16 %v5867
    %v6048 = vunpack.c.l.b16 %v5868
    %v6049 = vunpack.c.h.b16 %v5868
    %v6050 = vunpack.c.l.b16 %v5869
    %v6051 = vunpack.c.h.b16 %v5869
    %v6052 = vunpack.c.l.b16 %v5870
    %v6053 = vunpack.c.h.b16 %v5870
    %v6054 = vunpack.c.l.b16 %v5871
    %v6055 = vunpack.c.h.b16 %v5871
    %v6056 = vunpack.c.l.b16 %v5872
    %v6057 = vunpack.c.h.b16 %v5872
    %v6058 = vunpack.c.l.b16 %v5873
    %v6059 = vunpack.c.h.b16 %v5873
    %v6060 = vunpack.c.l.b16 %v5874
    %v6061 = vunpack.c.h.b16 %v5874
    %v6062 = vpack.c.b16 %v6032, %v6030
    %v6063 = vpack.c.b16 %v6033, %v6031
    %v6064 = vpack.c.b16 %v6036, %v6034
    %v6065 = vpack.c.b16 %v6037, %v6035
    %v6066 = vpack.c.b16 %v6040, %v6038
    %v6067 = vpack.c.b16 %v6041, %v6039
    %v6068 = vpack.c.b16 %v6044, %v6042
    %v6069 = vpack.c.b16 %v6045, %v6043
    %v6070 = vpack.c.b16 %v6048, %v6046
    %v6071 = vpack.c.b16 %v6049, %v6047
    %v6072 = vpack.c.b16 %v6052, %v6050
    %v6073 = vpack.c.b16 %v6053, %v6051
    %v6074 = vpack.c.b16 %v6056, %v6054
    %v6075 = vpack.c.b16 %v6057, %v6055
    %v6076 = vpack.c.b16 %v6060, %v6058
    %v6077 = vpack.c.b16 %v6061, %v6059
    %6094 = vmatprep.subr.bf16.mxu0 %v6077
    %6095 = vmatpush1.bf16.msra.mxu0 %v6076
    %6096 = vmatprep.subr.bf16.mxu0 %v6075
    %6097 = vmatpush1.bf16.msra.mxu0 %v6074
    %6098 = vmatprep.subr.bf16.mxu0 %v6073
    %6099 = vmatpush1.bf16.msra.mxu0 %v6072
    %6100 = vmatprep.subr.bf16.mxu0 %v6071
    %6101 = vmatpush1.bf16.msra.mxu0 %v6070
    %6102 = vmatprep.subr.bf16.mxu0 %v6069
    %6103 = vmatpush1.bf16.msra.mxu0 %v6068
    %6104 = vmatprep.subr.bf16.mxu0 %v6067
    %6105 = vmatpush1.bf16.msra.mxu0 %v6066
    %6106 = vmatprep.subr.bf16.mxu0 %v6065
    %6107 = vmatpush1.bf16.msra.mxu0 %v6064
    %6108 = vmatprep.subr.bf16.mxu0 %v6063
    %6109 = vmatpush1.bf16.msra.mxu0 %v6062
    %6110 = vmatprep.subr.bf16.mxu0 0
    %6111 = vmatpush2.bf16.msra.mxu0 0
    %6112 = vmatprep.subr.bf16.mxu0 0
    %6113 = vmatpush2.bf16.msra.mxu0 0
    %6114 = vmatprep.subr.bf16.mxu0 0
    %6115 = vmatpush2.bf16.msra.mxu0 0
    %6116 = vmatprep.subr.bf16.mxu0 0
    %6117 = vmatpush2.bf16.msra.mxu0 0
    %6118 = vmatprep.subr.bf16.mxu0 0
    %6119 = vmatpush2.bf16.msra.mxu0 0
    %6120 = vmatprep.subr.bf16.mxu0 0
    %6121 = vmatpush2.bf16.msra.mxu0 0
    %6122 = vmatprep.subr.bf16.mxu0 0
    %6123 = vmatpush2.bf16.msra.mxu0 0
    %6124 = vmatprep.subr.bf16.mxu0 0
    %6125 = vmatpush2.bf16.msra.mxu0 0
    %6126 = vmatprep.mubr.bf16.mxu0 0
    %6127 = vmatmul.mubr.bf16.gmra.mxu0 %v5858
    %v6128 = vpop.f32.mrf.mxu0
    %v6129 = vadd.f32 %v6006, %v6128
    %v6130 = vpop.f32.mrf.mxu0
    %v6131 = vadd.f32 %v6008, %v6130
    %v6132 = vpop.f32.mrf.mxu0
    %v6133 = vadd.f32 %v6010, %v6132
    %v6134 = vpop.f32.mrf.mxu0
    %v6135 = vadd.f32 %v6012, %v6134
    %6136 = vdwg.mxu0
    %v6137 = vld [vmem:[%s16] sm:$0x3]
    %v6139 = vlaneseq
    %v6140 = vshrl.u32 %v6139, 7
    %v6141 = vsub.s32 0, %v6140
    %v6142 = vrot.slane %v6137, %v6141
    %v6143 = vlaneseq
    %v6144 = vshrl.u32 %v6143, 7
    %v6145 = vsub.s32 1, %v6144
    %v6146 = vrot.slane %v6137, %v6145
    %v6149 = vadd.f32 %v6129, %v6142
    %v6150 = vadd.f32 %v6131, %v6146
    %v6151 = vadd.f32 %v6133, %v6142
    %v6152 = vadd.f32 %v6135, %v6146
    %vm6153 = vcmp.gt.f32.partialorder %v6149, 0.0
    %vm6154 = vcmp.gt.f32.partialorder %v6150, 0.0
    %vm6155 = vcmp.gt.f32.partialorder %v6151, 0.0
    %vm6156 = vcmp.gt.f32.partialorder %v6152, 0.0
    %v6157 = vmul.f32 %v6149, 0.01
    %v6158 = vmul.f32 %v6150, 0.01
    %v6159 = vmul.f32 %v6151, 0.01
    %v6160 = vmul.f32 %v6152, 0.01
    %v6161 = vsel %vm6153, %v6149, %v6157
    %v6162 = vsel %vm6154, %v6150, %v6158
    %v6163 = vsel %vm6155, %v6151, %v6159
    %v6164 = vsel %vm6156, %v6152, %v6160
    %v6165 = vpack.c.bf16 %v6163, %v6161
    %v6166 = vpack.c.bf16 %v6164, %v6162
    %v6167 = vld [vmem:[#allocation12] sm:$0xf]
    %v6168 = vld [vmem:[#allocation12 + $0x4] sm:$0xf]
    %v6169 = vld [vmem:[#allocation12 + $0x8] sm:$0xf]
    %v6170 = vld [vmem:[#allocation12 + $0xc] sm:$0xf]
    %v6171 = vld [vmem:[#allocation12 + $0x10] sm:$0xf]
    %v6172 = vld [vmem:[#allocation12 + $0x14] sm:$0xf]
    %v6173 = vld [vmem:[#allocation12 + $0x18] sm:$0xf]
    %v6174 = vld [vmem:[#allocation12 + $0x1c] sm:$0xf]
    %v6175 = vld [vmem:[#allocation12 + $0x20] sm:$0xf]
    %v6176 = vld [vmem:[#allocation12 + $0x24] sm:$0xf]
    %v6177 = vld [vmem:[#allocation12 + $0x28] sm:$0xf]
    %v6178 = vld [vmem:[#allocation12 + $0x2c] sm:$0xf]
    %v6179 = vld [vmem:[#allocation12 + $0x30] sm:$0xf]
    %v6180 = vld [vmem:[#allocation12 + $0x34] sm:$0xf]
    %v6181 = vld [vmem:[#allocation12 + $0x38] sm:$0xf]
    %v6182 = vld [vmem:[#allocation12 + $0x3c] sm:$0xf]
    %v6183 = vld [vmem:[#allocation12 + $0x40] sm:$0xf]
    %v6184 = vld [vmem:[#allocation12 + $0x44] sm:$0xf]
    %v6185 = vld [vmem:[#allocation12 + $0x48] sm:$0xf]
    %v6186 = vld [vmem:[#allocation12 + $0x4c] sm:$0xf]
    %v6187 = vld [vmem:[#allocation12 + $0x50] sm:$0xf]
    %v6188 = vld [vmem:[#allocation12 + $0x54] sm:$0xf]
    %v6189 = vld [vmem:[#allocation12 + $0x58] sm:$0xf]
    %v6190 = vld [vmem:[#allocation12 + $0x5c] sm:$0xf]
    %v6191 = vld [vmem:[#allocation12 + $0x60] sm:$0xf]
    %v6192 = vld [vmem:[#allocation12 + $0x64] sm:$0xf]
    %v6193 = vld [vmem:[#allocation12 + $0x68] sm:$0xf]
    %v6194 = vld [vmem:[#allocation12 + $0x6c] sm:$0xf]
    %v6195 = vld [vmem:[#allocation12 + $0x70] sm:$0xf]
    %v6196 = vld [vmem:[#allocation12 + $0x74] sm:$0xf]
    %v6197 = vld [vmem:[#allocation12 + $0x78] sm:$0xf]
    %v6198 = vld [vmem:[#allocation12 + $0x7c] sm:$0xf]
    %v6199 = vld [vmem:[#allocation13] sm:$0x1]
    %v6201 = vlaneseq
    %v6202 = vshrl.u32 %v6201, 7
    %v6203 = vsub.s32 0, %v6202
    %v6204 = vrot.slane %v6199, %v6203
    %v6238 = vunpack.c.l.b16 %v6167
    %v6239 = vunpack.c.l.b16 %v6168
    %v6240 = vunpack.c.l.b16 %v6169
    %v6241 = vunpack.c.l.b16 %v6170
    %v6242 = vunpack.c.l.b16 %v6171
    %v6243 = vunpack.c.l.b16 %v6172
    %v6244 = vunpack.c.l.b16 %v6173
    %v6245 = vunpack.c.l.b16 %v6174
    %v6246 = vunpack.c.l.b16 %v6175
    %v6247 = vunpack.c.l.b16 %v6176
    %v6248 = vunpack.c.l.b16 %v6177
    %v6249 = vunpack.c.l.b16 %v6178
    %v6250 = vunpack.c.l.b16 %v6179
    %v6251 = vunpack.c.l.b16 %v6180
    %v6252 = vunpack.c.l.b16 %v6181
    %v6253 = vunpack.c.l.b16 %v6182
    %v6254 = vunpack.c.l.b16 %v6183
    %v6255 = vunpack.c.l.b16 %v6184
    %v6256 = vunpack.c.l.b16 %v6185
    %v6257 = vunpack.c.l.b16 %v6186
    %v6258 = vunpack.c.l.b16 %v6187
    %v6259 = vunpack.c.l.b16 %v6188
    %v6260 = vunpack.c.l.b16 %v6189
    %v6261 = vunpack.c.l.b16 %v6190
    %v6262 = vunpack.c.l.b16 %v6191
    %v6263 = vunpack.c.l.b16 %v6192
    %v6264 = vunpack.c.l.b16 %v6193
    %v6265 = vunpack.c.l.b16 %v6194
    %v6266 = vunpack.c.l.b16 %v6195
    %v6267 = vunpack.c.l.b16 %v6196
    %v6268 = vunpack.c.l.b16 %v6197
    %v6269 = vunpack.c.l.b16 %v6198
    %v6270 = vpack.c.b16 %v6239, %v6238
    %v6271 = vpack.c.b16 %v6241, %v6240
    %v6272 = vpack.c.b16 %v6243, %v6242
    %v6273 = vpack.c.b16 %v6245, %v6244
    %v6274 = vpack.c.b16 %v6247, %v6246
    %v6275 = vpack.c.b16 %v6249, %v6248
    %v6276 = vpack.c.b16 %v6251, %v6250
    %v6277 = vpack.c.b16 %v6253, %v6252
    %v6278 = vpack.c.b16 %v6255, %v6254
    %v6279 = vpack.c.b16 %v6257, %v6256
    %v6280 = vpack.c.b16 %v6259, %v6258
    %v6281 = vpack.c.b16 %v6261, %v6260
    %v6282 = vpack.c.b16 %v6263, %v6262
    %v6283 = vpack.c.b16 %v6265, %v6264
    %v6284 = vpack.c.b16 %v6267, %v6266
    %v6285 = vpack.c.b16 %v6269, %v6268
    %6302 = vmatprep.subr.bf16.mxu0 0
    %6303 = vmatpush1.bf16.msra.mxu0 %v6277
    %6304 = vmatprep.subr.bf16.mxu0 0
    %6305 = vmatpush1.bf16.msra.mxu0 %v6276
    %6306 = vmatprep.subr.bf16.mxu0 0
    %6307 = vmatpush1.bf16.msra.mxu0 %v6275
    %6308 = vmatprep.subr.bf16.mxu0 0
    %6309 = vmatpush1.bf16.msra.mxu0 %v6274
    %6310 = vmatprep.subr.bf16.mxu0 0
    %6311 = vmatpush1.bf16.msra.mxu0 %v6273
    %6312 = vmatprep.subr.bf16.mxu0 0
    %6313 = vmatpush1.bf16.msra.mxu0 %v6272
    %6314 = vmatprep.subr.bf16.mxu0 0
    %6315 = vmatpush1.bf16.msra.mxu0 %v6271
    %6316 = vmatprep.subr.bf16.mxu0 0
    %6317 = vmatpush1.bf16.msra.mxu0 %v6270
    %6318 = vmatprep.subr.bf16.mxu0 0
    %6319 = vmatpush2.bf16.msra.mxu0 %v6285
    %6320 = vmatprep.subr.bf16.mxu0 0
    %6321 = vmatpush2.bf16.msra.mxu0 %v6284
    %6322 = vmatprep.subr.bf16.mxu0 0
    %6323 = vmatpush2.bf16.msra.mxu0 %v6283
    %6324 = vmatprep.subr.bf16.mxu0 0
    %6325 = vmatpush2.bf16.msra.mxu0 %v6282
    %6326 = vmatprep.subr.bf16.mxu0 0
    %6327 = vmatpush2.bf16.msra.mxu0 %v6281
    %6328 = vmatprep.subr.bf16.mxu0 0
    %6329 = vmatpush2.bf16.msra.mxu0 %v6280
    %6330 = vmatprep.subr.bf16.mxu0 0
    %6331 = vmatpush2.bf16.msra.mxu0 %v6279
    %6332 = vmatprep.subr.bf16.mxu0 0
    %6333 = vmatpush2.bf16.msra.mxu0 %v6278
    %6334 = vmatprep.mubr.bf16.mxu0 %v6166
    %6335 = vmatmul.mubr.bf16.gmra.mxu0 %v6165
    %v6336 = vpop.f32.mrf.mxu0
    %v6337 = vadd.f32 %v6204, %v6336
    %v6338 = vpop.f32.mrf.mxu0
    %v6339 = vpop.f32.mrf.mxu0
    %v6340 = vadd.f32 %v6204, %v6339
    %v6341 = vpop.f32.mrf.mxu0
    %6342 = vdwg.mxu0
    %6343 = vst [vmem:[%s19] sm:$0xff] %v6337
    %6344 = vst [vmem:[%s19 + $0x8] sm:$0xff] %v6340
    // Predicated region
    $region110: #{qa_forward.1} parent=1 // pred_check
      _
    $region111: #{qa_forward.1} parent=1 // pred_check_branch
      %6346 = sbr.rel (0) target = $region113
    $region112: #{qa_forward.1} parent=1 // pred_region
      _
    $region113: #{qa_forward.1} parent=1 // pred_fallthru
      _
    // Predicated region
    $region114: #{qa_forward.1} parent=1 // pred_check
      _
    $region115: #{qa_forward.1} parent=1 // pred_check_branch
      %6348 = sbr.rel (0) target = $region117
    $region116: #{qa_forward.1} parent=1 // pred_region
      _
    $region117: #{qa_forward.1} parent=1 // pred_fallthru
      _
    %6349 = vsyncpa [#allocation3], 1
    %6350 = vsyncpa [#allocation5], 1
    %6351 = vsyncpa [#allocation8], 1
    %6352 = vsyncpa [#allocation11], 1
    %6353 = vsyncpa [#allocation14], 1

</llo_original>
